<compile_context>
chip_gen: v7x
topology: tpu7x:2x2x1
jax: 0.10.0
libtpu: 0.0.40
codegen_flags: <defaults>
</compile_context>

<pallas_src>
import math
import functools

import jax
import jax.numpy as jnp
from jax.experimental import pallas as pl
from jax.experimental.pallas import tpu as pltpu


# row indices of the coalesced per-layer (depth, 6, dim) f32 parameter pack
_BO, _LN1W, _LN1B, _B2, _LN2W, _LN2B = range(6)


# ----------------------------------------------------------------------------
# in-kernel helpers
# ----------------------------------------------------------------------------
def _layer_norm(x, w, b, eps=1e-5):
    mu = jnp.mean(x, axis=-1, keepdims=True)
    var = jnp.mean(jnp.square(x - mu), axis=-1, keepdims=True)
    return (x - mu) * jax.lax.rsqrt(var + eps) * w + b


# ----------------------------------------------------------------------------
# fused Pallas kernel: full ViT forward for the whole batch
# ----------------------------------------------------------------------------
def vit_forward_kernel(patches_ref, pe_w_ref, pos_ref,
                       wqkv_ref, bqkv_ref, wo_ref,
                       w1_ref, b1_ref, w2_ref, lnp_ref,
                       hd_lnw_ref, hd_lnb_ref, hd_w_ref, hd_b_ref,
                       out_ref, *, depth, heads, eps=1e-5):
    bf16 = jnp.bfloat16
    f32 = jnp.float32
    B, N, PD = patches_ref.shape
    D = pos_ref.shape[-1]
    hd = D // heads
    M = B * N
    out_pd = out_ref.shape[-1]

    # patch embedding: whole batch folded into the matmul M dimension
    x = jnp.dot(patches_ref[...].reshape(M, PD), pe_w_ref[...],
                preferred_element_type=f32)                       # (M, D) f32
    # positional embedding (patch-embed bias folded into `pos` at pack time);
    # leading-dim reshapes only -> no relayout
    x = (x.reshape(B, N, D) + pos_ref[...]).reshape(M, D)

    # statically unrolled encoder (fine for the depth=2 toy config).
    # TODO(synk): for large depth, switch to lax.fori_loop over the
    # depth-stacked weights or stream layer weights over an 'arbitrary' grid
    # axis with pl.Buffered(2) (required on v7x, 64 MiB VMEM / TC).
    for l in range(depth):
        lp = lnp_ref[l]                                           # (6, D) f32
        xb = x.astype(bf16)

        # ---- multi-head self-attention ----
        # Head split is done at PACK TIME on the weights; the kernel only does
        # clean matmuls + free leading-dim reshapes (no lane slicing / stack /
        # concat / transpose).  The 1/sqrt(hd) scale is folded into q.
        # TODO(synk): for real image sizes (large N) tile the KV dimension
        # flash-style instead of materializing (B, N, N) scores.
        attn = jnp.zeros((M, D), f32)
        for h in range(heads):
            q = jnp.dot(xb, wqkv_ref[l, 0, h],
                        preferred_element_type=f32) + bqkv_ref[l, 0, h]
            k = jnp.dot(xb, wqkv_ref[l, 1, h],
                        preferred_element_type=f32) + bqkv_ref[l, 1, h]
            v = jnp.dot(xb, wqkv_ref[l, 2, h],
                        preferred_element_type=f32) + bqkv_ref[l, 2, h]
            q3 = q.astype(bf16).reshape(B, N, hd)
            k3 = k.astype(bf16).reshape(B, N, hd)
            v3 = v.astype(bf16).reshape(B, N, hd)
            s = jnp.einsum('bqc,bkc->bqk', q3, k3,
                           preferred_element_type=f32)            # (B, N, N)
            s = s - jnp.max(s, axis=-1, keepdims=True)
            e = jnp.exp(s)
            # deliberate EUP approximation of the softmax denominator
            p = e * pl.reciprocal(jnp.sum(e, axis=-1, keepdims=True),
                                  approx=True)
            ctx = jnp.einsum('bqk,bkc->bqc', p.astype(bf16), v3,
                             preferred_element_type=f32)          # (B, N, hd)
            # exact per-head fold of the output projection (removes concat)
            attn = attn + jnp.dot(ctx.astype(bf16).reshape(M, hd),
                                  wo_ref[l, h], preferred_element_type=f32)
        attn = attn + lp[_BO:_BO + 1]
        x = _layer_norm(x + attn, lp[_LN1W:_LN1W + 1],
                        lp[_LN1B:_LN1B + 1], eps)

        # ---- feed-forward (ReLU) ----
        h1 = jnp.maximum(jnp.dot(x.astype(bf16), w1_ref[l],
                                 preferred_element_type=f32) + b1_ref[l], 0.0)
        ff = jnp.dot(h1.astype(bf16), w2_ref[l],
                     preferred_element_type=f32) + lp[_B2:_B2 + 1]
        x = _layer_norm(x + ff, lp[_LN2W:_LN2W + 1],
                        lp[_LN2B:_LN2B + 1], eps)

    # ---- head: LayerNorm + Linear (1x1 output conv folded in exactly) ----
    y = _layer_norm(x, hd_lnw_ref[...], hd_lnb_ref[...], eps)
    out = jnp.dot(y.astype(bf16), hd_w_ref[...],
                  preferred_element_type=f32) + hd_b_ref[...]     # (M, out_pd)
    # TODO(synk): for larger models emit a lane-dense (B, N*out_pd) slab; with
    # a single un-gridded invocation the writeback is one DMA, so the gain at
    # this toy size is negligible.
    out_ref[...] = out.reshape(B, N, out_pd)


# ----------------------------------------------------------------------------
# pallas_call wrapper
# ----------------------------------------------------------------------------
def _cost_estimate(B, N, PD, D, depth, heads, mlp, out_pd, io_bytes):
    hd = D // heads
    flops = 2 * B * N * PD * D                               # patch embed
    flops += depth * (2 * B * N * D * 3 * D                  # qkv projection
                      + 2 * B * heads * N * N * hd * 2       # scores + context
                      + 2 * B * N * D * D                    # output projection
                      + 2 * B * N * D * mlp + 2 * B * N * mlp * D)   # FFN
    flops += 2 * B * N * D * out_pd                          # head (+conv)
    trans = B * N * (2 * depth + 1)                          # layer-norm rsqrt
    trans += depth * B * heads * N * (N + 1)                 # exp + softmax 1/x
    return pl.CostEstimate(flops=int(flops), transcendentals=int(trans),
                           bytes_accessed=int(io_bytes))


def vit_forward(packed, x, t_emb, *, patch_size, heads, depth):
    """LargeVisionTransformer.forward (eval semantics), fully fused."""
    B, C, H, W = x.shape
    patches = patchify(x + t_emb, patch_size).astype(jnp.bfloat16)  # bf16 DMA
    N, PD = patches.shape[1], patches.shape[2]
    D = packed["pos"].shape[-1]
    mlp = packed["w1"].shape[-1]
    out_pd = packed["hd_w"].shape[-1]
    out_ch = out_pd // (patch_size * patch_size)

    args = (patches, packed["pe_w"], packed["pos"],
            packed["wqkv"], packed["bqkv"], packed["wo"],
            packed["w1"], packed["b1"], packed["w2"], packed["lnp"],
            packed["hd_lnw"], packed["hd_lnb"], packed["hd_w"], packed["hd_b"])
    io_bytes = (sum(a.size * a.dtype.itemsize for a in args)
                + B * N * out_pd * 4)
    vmem_spec = pl.BlockSpec(memory_space=pltpu.MemorySpace.VMEM)

    tokens_out = pl.pallas_call(
        functools.partial(vit_forward_kernel, depth=depth, heads=heads),
        out_shape=jax.ShapeDtypeStruct((B, N, out_pd), jnp.float32),
        in_specs=[vmem_spec] * len(args),
        out_specs=vmem_spec,
        compiler_params=pltpu.CompilerParams(
            vmem_limit_bytes=32 * 1024 * 1024),      # safe on v5e/v6e/v7x
        cost_estimate=_cost_estimate(B, N, PD, D, depth, heads, mlp, out_pd,
                                     io_bytes),
    )(*args)
    return unpatchify(tokens_out, B, out_ch, H, W, patch_size)


# ----------------------------------------------------------------------------
# plain-JAX glue: patch extraction / reassembly (matches torch unfold/view)
# ----------------------------------------------------------------------------
def patchify(x, p):
    B, C, H, W = x.shape
    x = x.reshape(B, C, H // p, p, W // p, p)
    x = x.transpose(0, 1, 2, 4, 3, 5)                  # (B, C, H/p, W/p, p, p)
    x = x.reshape(B, C, -1, p, p)
    x = x.transpose(0, 2, 1, 3, 4).reshape(B, -1, C * p * p)
    return x                                           # (B, N, C*p*p)


def unpatchify(out, B, C, H, W, p):
    out = out.reshape(B, H // p, W // p, C, p, p)
    out = out.transpose(0, 3, 1, 4, 2, 5)
    return out.reshape(B, C, H, W)


# ----------------------------------------------------------------------------
# parameter init + one-time packing: pre-transposed bf16 matmul weights,
# per-head qkv/out-proj splits, scale & bias folds, 1x1 conv folded into head
# ----------------------------------------------------------------------------
def init_and_pack_vit(key, *, in_ch, out_ch, img_size, patch_size,
                      dim, depth, heads, mlp_dim):
    num_patches = (img_size // patch_size) ** 2
    pp = patch_size * patch_size
    patch_dim = in_ch * pp
    hd = dim // heads
    scale = 1.0 / math.sqrt(hd)
    bf16 = jnp.bfloat16
    keys = jax.random.split(key, 6 + depth)
    nrm = lambda k, s: 0.02 * jax.random.normal(k, s, jnp.float32)
    zeros = lambda s: jnp.zeros(s, jnp.float32)
    ones = lambda s: jnp.ones(s, jnp.float32)

    # torch-like layouts (nn.Linear weight = (out, in)); transposed/split ONCE.
    patch_w = nrm(keys[0], (dim, patch_dim))
    patch_b = zeros((dim,))
    pos = nrm(keys[1], (num_patches, dim))
    head_w = nrm(keys[2], (patch_dim, dim))
    head_b = zeros((patch_dim,))
    conv_w = nrm(keys[3], (out_ch, in_ch))             # 1x1 conv kernel
    conv_b = zeros((out_ch,))
    # NOTE: cls_token exists in __init__ but is unused in forward -> omitted.

    # exact fold: conv1x1 ∘ unpatchify ∘ head  ==  unpatchify ∘ fused-head
    hw = head_w.reshape(in_ch, pp, dim)
    fused_w = jnp.einsum('oc,cld->old', conv_w, hw).reshape(out_ch * pp, dim)
    fused_b = (jnp.einsum('oc,cl->ol', conv_w, head_b.reshape(in_ch, pp))
               + conv_b[:, None]).reshape(1, out_ch * pp)

    wqkv_l, bqkv_l, wo_l, w1_l, b1_l, w2_l, lnp_l = [], [], [], [], [], [], []
    for l in range(depth):
        kq, ko, ka, kb = jax.random.split(keys[6 + l], 4)
        in_proj_w = nrm(kq, (3 * dim, dim))            # torch MHA in_proj
        in_proj_b = zeros((3 * dim,))
        out_proj_w = nrm(ko, (dim, dim))
        out_proj_b = zeros((dim,))
        lin1_w, lin1_b = nrm(ka, (mlp_dim, dim)), zeros((mlp_dim,))
        lin2_w, lin2_b = nrm(kb, (dim, mlp_dim)), zeros((dim,))

        # per-head qkv split -> (3, heads, dim, hd); 1/sqrt(hd) folded into q
        w = in_proj_w.reshape(3, heads, hd, dim).transpose(0, 1, 3, 2)
        b = in_proj_b.reshape(3, heads, 1, hd)
        w = w.at[0].multiply(scale)
        b = b.at[0].multiply(scale)
        wqkv_l.append(w)
        bqkv_l.append(b)
        # per-head out-proj split: ctx @ Wo.T == sum_h ctx_h @ Wo.T[h*hd:, :]
        wo_l.append(out_proj_w.T.reshape(heads, hd, dim))
        w1_l.append(lin1_w.T)
        b1_l.append(lin1_b.reshape(1, mlp_dim))
        w2_l.append(lin2_w.T)
        # coalesced small f32 vectors: [bo, ln1w, ln1b, b2, ln2w, ln2b]
        lnp_l.append(jnp.stack([out_proj_b, ones((dim,)), zeros((dim,)),
                                lin2_b, ones((dim,)), zeros((dim,))], axis=0))

    st = lambda xs: jnp.stack(xs, axis=0)
    return {
        "pe_w": patch_w.T.astype(bf16),                # (patch_dim, dim)
        "pos": pos + patch_b[None, :],                 # pe bias folded in, f32
        "wqkv": st(wqkv_l).astype(bf16),               # (depth, 3, H, dim, hd)
        "bqkv": st(bqkv_l),                            # (depth, 3, H, 1, hd)
        "wo": st(wo_l).astype(bf16),                   # (depth, H, hd, dim)
        "w1": st(w1_l).astype(bf16),                   # (depth, dim, mlp)
        "b1": st(b1_l),                                # (depth, 1, mlp)
        "w2": st(w2_l).astype(bf16),                   # (depth, mlp, dim)
        "lnp": st(lnp_l),                              # (depth, 6, dim)
        "hd_lnw": ones((1, dim)),
        "hd_lnb": zeros((1, dim)),
        "hd_w": fused_w.T.astype(bf16),                # (dim, out_ch*p*p)
        "hd_b": fused_b,                               # (1, out_ch*p*p)
    }


# ----------------------------------------------------------------------------
# JointRainDiffuser forward (training-time loss semantics).  Diffusion
# sampling, time embedding and losses are host-side plain-JAX glue around the
# two fused ViT Pallas kernels (unet_mask / unet_rain backbones).
# ----------------------------------------------------------------------------
def time_embedding(t, H, W):
    half = 32
    freqs = jnp.exp(-math.log(10000.0) *
                    jnp.arange(half, dtype=jnp.float32) / half)
    tf = t[:, None].astype(jnp.float32)
    emb = jnp.concatenate([jnp.sin(tf * freqs), jnp.cos(tf * freqs)], axis=1)
    emb = emb.mean(axis=1, keepdims=True)
    return emb[:, :, None, None]                       # (B, 1, 1, 1)


def make_alpha_bar(T, beta0=1e-4, betaT=0.02):
    beta = jnp.linspace(beta0, betaT, T + 1)
    return jnp.cumprod(1.0 - beta)


def joint_forward(params_mask, params_rain, alpha_bar, batch, key, T, *,
                  patch_size, heads, depth):
    x_amt = batch
    x0_mask = (x_amt > 0).astype(jnp.float32)
    B, _, H, W = x_amt.shape
    k1, k2, k3, k4, k5 = jax.random.split(key, 5)

    # --- discrete (mask) branch: BinaryD3PM.q_sample + unet_mask + CE loss
    t_d = jax.random.randint(k1, (B,), 1, T + 1)
    keep_prob = jnp.broadcast_to(alpha_bar[t_d].reshape(B, 1, 1, 1),
                                 x0_mask.shape)
    keep = jax.random.bernoulli(k2, keep_prob)
    rand_bits = jax.random.bernoulli(k3, 0.5, x0_mask.shape).astype(jnp.float32)
    x_t_mask = jnp.where(keep, x0_mask, rand_bits)
    t_emb = time_embedding(t_d, H, W)
    logits = vit_forward(params_mask, x_t_mask, t_emb,
                         patch_size=patch_size, heads=heads, depth=depth)
    x0_long = x0_mask[:, 0].astype(jnp.int32)
    logp = jax.nn.log_softmax(logits, axis=1)
    ce = -jnp.take_along_axis(logp, x0_long[:, None, :, :], axis=1)[:, 0]
    loss_mask = ce.mean()

    # --- continuous (amount) branch: GaussianDDPM.q_sample + unet_rain + MSE
    t_c = jax.random.randint(k4, (B,), 1, T + 1)
    noise = jax.random.normal(k5, x_amt.shape, jnp.float32)
    sqrt_ab = jnp.sqrt(alpha_bar[t_c]).reshape(-1, 1, 1, 1)
    sqrt_om = jnp.sqrt(1.0 - alpha_bar[t_c]).reshape(-1, 1, 1, 1)
    x_t_amt = sqrt_ab * x_amt + sqrt_om * noise
    cond = jnp.concatenate([x_t_amt, x0_mask], axis=1)
    t_emb2 = time_embedding(t_c, H, W)
    eps_hat = vit_forward(params_rain, cond, t_emb2,
                          patch_size=patch_size, heads=heads, depth=depth)
    mse = jnp.square(eps_hat - noise) * x0_mask
    loss_amt = mse.sum() / jnp.maximum(x0_mask.sum(), 1.0)
    return loss_mask, loss_amt


if __name__ == "__main__":
    # small-but-consistent hyperparameters ('large_vit' backbones, shrunk)
    IMG, PATCH = 16, 4
    DIM, DEPTH, HEADS, MLP = 64, 2, 4, 128
    B, T = 2, 1000

    key = jax.random.PRNGKey(0)
    k_mask, k_rain, k_data, k_fwd = jax.random.split(key, 4)
    params_mask = init_and_pack_vit(k_mask, in_ch=1, out_ch=2, img_size=IMG,
                                    patch_size=PATCH, dim=DIM, depth=DEPTH,
                                    heads=HEADS, mlp_dim=MLP)
    params_rain = init_and_pack_vit(k_rain, in_ch=2, out_ch=1, img_size=IMG,
                                    patch_size=PATCH, dim=DIM, depth=DEPTH,
                                    heads=HEADS, mlp_dim=MLP)
    alpha_bar = make_alpha_bar(T)

    # synthetic rain amounts: non-negative with plenty of exact zeros
    batch = jnp.maximum(jax.random.normal(k_data, (B, 1, IMG, IMG),
                                          jnp.float32), 0.0)

    loss_mask, loss_amt = joint_forward(params_mask, params_rain, alpha_bar,
                                        batch, k_fwd, T, patch_size=PATCH,
                                        heads=HEADS, depth=DEPTH)
    loss_mask, loss_amt = jax.block_until_ready((loss_mask, loss_amt))
    assert loss_mask.shape == () and loss_amt.shape == ()
    assert bool(jnp.isfinite(loss_mask)) and bool(jnp.isfinite(loss_amt))
    print("KERNEL_OK")
</pallas_src>

<mosaic_0001>
module attributes {stable_mosaic.version = 11 : i64} {
  func.func @vit_forward_kernel(%arg0: memref<2x16x16xbf16, #tpu.memory_space<vmem>>, %arg1: memref<16x64xbf16, #tpu.memory_space<vmem>>, %arg2: memref<16x64xf32, #tpu.memory_space<vmem>>, %arg3: memref<2x3x4x64x16xbf16, #tpu.memory_space<vmem>>, %arg4: memref<2x3x4x1x16xf32, #tpu.memory_space<vmem>>, %arg5: memref<2x4x16x64xbf16, #tpu.memory_space<vmem>>, %arg6: memref<2x64x128xbf16, #tpu.memory_space<vmem>>, %arg7: memref<2x1x128xf32, #tpu.memory_space<vmem>>, %arg8: memref<2x128x64xbf16, #tpu.memory_space<vmem>>, %arg9: memref<2x6x64xf32, #tpu.memory_space<vmem>>, %arg10: memref<1x64xf32, #tpu.memory_space<vmem>>, %arg11: memref<1x64xf32, #tpu.memory_space<vmem>>, %arg12: memref<64x32xbf16, #tpu.memory_space<vmem>>, %arg13: memref<1x32xf32, #tpu.memory_space<vmem>>, %arg14: memref<2x16x32xf32, #tpu.memory_space<vmem>>) attributes {dimension_semantics = [], scalar_prefetch = 0 : i64, scratch_operands = 0 : i64, tpu.core_type = #tpu.core_type<tc>} {
    %c0 = arith.constant 0 : index
    %c0_0 = arith.constant 0 : index
    %c0_1 = arith.constant 0 : index
    %0 = vector.load %arg0[%c0, %c0_0, %c0_1] : memref<2x16x16xbf16, #tpu.memory_space<vmem>>, vector<2x16x16xbf16>
    %1 = vector.shape_cast %0 : vector<2x16x16xbf16> to vector<32x16xbf16>
    %c0_2 = arith.constant 0 : index
    %c0_3 = arith.constant 0 : index
    %2 = vector.load %arg1[%c0_2, %c0_3] : memref<16x64xbf16, #tpu.memory_space<vmem>>, vector<16x64xbf16>
    %cst = arith.constant dense<0.000000e+00> : vector<32x64xf32>
    %3 = tpu.matmul %1, %2, %cst {dimension_numbers = #tpu.dot_dimension_numbers<[1], [0], [0], [1], [0, 0, 1, 1], [], []>} : vector<32x16xbf16>, vector<16x64xbf16>, vector<32x64xf32> -> vector<32x64xf32>
    %4 = vector.shape_cast %3 : vector<32x64xf32> to vector<2x16x64xf32>
    %c0_4 = arith.constant 0 : index
    %c0_5 = arith.constant 0 : index
    %5 = vector.load %arg2[%c0_4, %c0_5] : memref<16x64xf32, #tpu.memory_space<vmem>>, vector<16x64xf32>
    %6 = vector.shape_cast %5 : vector<16x64xf32> to vector<1x16x64xf32>
    %7 = vector.broadcast %6 : vector<1x16x64xf32> to vector<2x16x64xf32>
    %8 = arith.addf %4, %7 : vector<2x16x64xf32>
    %9 = vector.shape_cast %8 : vector<2x16x64xf32> to vector<32x64xf32>
    %c0_6 = arith.constant 0 : index
    %c0_7 = arith.constant 0 : index
    %c0_8 = arith.constant 0 : index
    %10 = vector.load %arg9[%c0_6, %c0_7, %c0_8] : memref<2x6x64xf32, #tpu.memory_space<vmem>>, vector<1x6x64xf32>
    %11 = vector.shape_cast %10 : vector<1x6x64xf32> to vector<6x64xf32>
    %12 = arith.truncf %9 : vector<32x64xf32> to vector<32x64xbf16>
    %cst_9 = arith.constant 0.000000e+00 : f32
    %13 = vector.broadcast %cst_9 : f32 to vector<32x64xf32>
    %c0_10 = arith.constant 0 : index
    %c0_11 = arith.constant 0 : index
    %c0_12 = arith.constant 0 : index
    %c0_13 = arith.constant 0 : index
    %c0_14 = arith.constant 0 : index
    %14 = vector.load %arg3[%c0_10, %c0_11, %c0_12, %c0_13, %c0_14] : memref<2x3x4x64x16xbf16, #tpu.memory_space<vmem>>, vector<1x1x1x64x16xbf16>
    %15 = vector.shape_cast %14 : vector<1x1x1x64x16xbf16> to vector<64x16xbf16>
    %cst_15 = arith.constant dense<0.000000e+00> : vector<32x16xf32>
    %16 = tpu.matmul %12, %15, %cst_15 {dimension_numbers = #tpu.dot_dimension_numbers<[1], [0], [0], [1], [0, 0, 1, 1], [], []>} : vector<32x64xbf16>, vector<64x16xbf16>, vector<32x16xf32> -> vector<32x16xf32>
    %c0_16 = arith.constant 0 : index
    %c0_17 = arith.constant 0 : index
    %c0_18 = arith.constant 0 : index
    %c0_19 = arith.constant 0 : index
    %c0_20 = arith.constant 0 : index
    %17 = vector.load %arg4[%c0_16, %c0_17, %c0_18, %c0_19, %c0_20] : memref<2x3x4x1x16xf32, #tpu.memory_space<vmem>>, vector<1x1x1x1x16xf32>
    %18 = vector.shape_cast %17 : vector<1x1x1x1x16xf32> to vector<1x16xf32>
    %19 = vector.broadcast %18 : vector<1x16xf32> to vector<32x16xf32>
    %20 = arith.addf %16, %19 : vector<32x16xf32>
    %c0_21 = arith.constant 0 : index
    %c1 = arith.constant 1 : index
    %c0_22 = arith.constant 0 : index
    %c0_23 = arith.constant 0 : index
    %c0_24 = arith.constant 0 : index
    %21 = vector.load %arg3[%c0_21, %c1, %c0_22, %c0_23, %c0_24] : memref<2x3x4x64x16xbf16, #tpu.memory_space<vmem>>, vector<1x1x1x64x16xbf16>
    %22 = vector.shape_cast %21 : vector<1x1x1x64x16xbf16> to vector<64x16xbf16>
    %cst_25 = arith.constant dense<0.000000e+00> : vector<32x16xf32>
    %23 = tpu.matmul %12, %22, %cst_25 {dimension_numbers = #tpu.dot_dimension_numbers<[1], [0], [0], [1], [0, 0, 1, 1], [], []>} : vector<32x64xbf16>, vector<64x16xbf16>, vector<32x16xf32> -> vector<32x16xf32>
    %c0_26 = arith.constant 0 : index
    %c1_27 = arith.constant 1 : index
    %c0_28 = arith.constant 0 : index
    %c0_29 = arith.constant 0 : index
    %c0_30 = arith.constant 0 : index
    %24 = vector.load %arg4[%c0_26, %c1_27, %c0_28, %c0_29, %c0_30] : memref<2x3x4x1x16xf32, #tpu.memory_space<vmem>>, vector<1x1x1x1x16xf32>
    %25 = vector.shape_cast %24 : vector<1x1x1x1x16xf32> to vector<1x16xf32>
    %26 = vector.broadcast %25 : vector<1x16xf32> to vector<32x16xf32>
    %27 = arith.addf %23, %26 : vector<32x16xf32>
    %c0_31 = arith.constant 0 : index
    %c2 = arith.constant 2 : index
    %c0_32 = arith.constant 0 : index
    %c0_33 = arith.constant 0 : index
    %c0_34 = arith.constant 0 : index
    %28 = vector.load %arg3[%c0_31, %c2, %c0_32, %c0_33, %c0_34] : memref<2x3x4x64x16xbf16, #tpu.memory_space<vmem>>, vector<1x1x1x64x16xbf16>
    %29 = vector.shape_cast %28 : vector<1x1x1x64x16xbf16> to vector<64x16xbf16>
    %cst_35 = arith.constant dense<0.000000e+00> : vector<32x16xf32>
    %30 = tpu.matmul %12, %29, %cst_35 {dimension_numbers = #tpu.dot_dimension_numbers<[1], [0], [0], [1], [0, 0, 1, 1], [], []>} : vector<32x64xbf16>, vector<64x16xbf16>, vector<32x16xf32> -> vector<32x16xf32>
    %c0_36 = arith.constant 0 : index
    %c2_37 = arith.constant 2 : index
    %c0_38 = arith.constant 0 : index
    %c0_39 = arith.constant 0 : index
    %c0_40 = arith.constant 0 : index
    %31 = vector.load %arg4[%c0_36, %c2_37, %c0_38, %c0_39, %c0_40] : memref<2x3x4x1x16xf32, #tpu.memory_space<vmem>>, vector<1x1x1x1x16xf32>
    %32 = vector.shape_cast %31 : vector<1x1x1x1x16xf32> to vector<1x16xf32>
    %33 = vector.broadcast %32 : vector<1x16xf32> to vector<32x16xf32>
    %34 = arith.addf %30, %33 : vector<32x16xf32>
    %35 = arith.truncf %20 : vector<32x16xf32> to vector<32x16xbf16>
    %36 = vector.shape_cast %35 : vector<32x16xbf16> to vector<2x16x16xbf16>
    %37 = arith.truncf %27 : vector<32x16xf32> to vector<32x16xbf16>
    %38 = vector.shape_cast %37 : vector<32x16xbf16> to vector<2x16x16xbf16>
    %39 = arith.truncf %34 : vector<32x16xf32> to vector<32x16xbf16>
    %40 = vector.shape_cast %39 : vector<32x16xbf16> to vector<2x16x16xbf16>
    "tpu.trace_start"() <{level = 10 : i32, message = "bqc,bkc->bqk"}> : () -> ()
    %cst_41 = arith.constant dense<0.000000e+00> : vector<2x16x16xf32>
    %41 = tpu.matmul %36, %38, %cst_41 {dimension_numbers = #tpu.dot_dimension_numbers<[2], [2], [1], [1], [0, 0, 0, 1, 1, 1], [0], [0]>} : vector<2x16x16xbf16>, vector<2x16x16xbf16>, vector<2x16x16xf32> -> vector<2x16x16xf32>
    "tpu.trace_stop"() : () -> ()
    %cst_42 = arith.constant dense<0xFF800000> : vector<2x16xf32>
    %42 = vector.multi_reduction <maximumf>, %41, %cst_42 [2] : vector<2x16x16xf32> to vector<2x16xf32>
    %43 = vector.shape_cast %42 : vector<2x16xf32> to vector<2x16x1xf32>
    %44 = vector.broadcast %43 : vector<2x16x1xf32> to vector<2x16x16xf32>
    %45 = arith.subf %41, %44 : vector<2x16x16xf32>
    %46 = math.exp %45 : vector<2x16x16xf32>
    %cst_43 = arith.constant dense<0.000000e+00> : vector<2x16xf32>
    %47 = vector.multi_reduction <add>, %46, %cst_43 [2] : vector<2x16x16xf32> to vector<2x16xf32>
    %48 = vector.shape_cast %47 : vector<2x16xf32> to vector<2x16x1xf32>
    %49 = tpu.reciprocal %48 {approx = true} : vector<2x16x1xf32> -> vector<2x16x1xf32>
    %50 = vector.broadcast %49 : vector<2x16x1xf32> to vector<2x16x16xf32>
    %51 = arith.mulf %46, %50 : vector<2x16x16xf32>
    %52 = arith.truncf %51 : vector<2x16x16xf32> to vector<2x16x16xbf16>
    "tpu.trace_start"() <{level = 10 : i32, message = "bqk,bkc->bqc"}> : () -> ()
    %cst_44 = arith.constant dense<0.000000e+00> : vector<2x16x16xf32>
    %53 = tpu.matmul %52, %40, %cst_44 {dimension_numbers = #tpu.dot_dimension_numbers<[2], [1], [1], [2], [0, 0, 0, 1, 1, 2], [0], [0]>} : vector<2x16x16xbf16>, vector<2x16x16xbf16>, vector<2x16x16xf32> -> vector<2x16x16xf32>
    "tpu.trace_stop"() : () -> ()
    %54 = arith.truncf %53 : vector<2x16x16xf32> to vector<2x16x16xbf16>
    %55 = vector.shape_cast %54 : vector<2x16x16xbf16> to vector<32x16xbf16>
    %c0_45 = arith.constant 0 : index
    %c0_46 = arith.constant 0 : index
    %c0_47 = arith.constant 0 : index
    %c0_48 = arith.constant 0 : index
    %56 = vector.load %arg5[%c0_45, %c0_46, %c0_47, %c0_48] : memref<2x4x16x64xbf16, #tpu.memory_space<vmem>>, vector<1x1x16x64xbf16>
    %57 = vector.shape_cast %56 : vector<1x1x16x64xbf16> to vector<16x64xbf16>
    %cst_49 = arith.constant dense<0.000000e+00> : vector<32x64xf32>
    %58 = tpu.matmul %55, %57, %cst_49 {dimension_numbers = #tpu.dot_dimension_numbers<[1], [0], [0], [1], [0, 0, 1, 1], [], []>} : vector<32x16xbf16>, vector<16x64xbf16>, vector<32x64xf32> -> vector<32x64xf32>
    %59 = arith.addf %13, %58 : vector<32x64xf32>
    %c0_50 = arith.constant 0 : index
    %c0_51 = arith.constant 0 : index
    %c1_52 = arith.constant 1 : index
    %c0_53 = arith.constant 0 : index
    %c0_54 = arith.constant 0 : index
    %60 = vector.load %arg3[%c0_50, %c0_51, %c1_52, %c0_53, %c0_54] : memref<2x3x4x64x16xbf16, #tpu.memory_space<vmem>>, vector<1x1x1x64x16xbf16>
    %61 = vector.shape_cast %60 : vector<1x1x1x64x16xbf16> to vector<64x16xbf16>
    %cst_55 = arith.constant dense<0.000000e+00> : vector<32x16xf32>
    %62 = tpu.matmul %12, %61, %cst_55 {dimension_numbers = #tpu.dot_dimension_numbers<[1], [0], [0], [1], [0, 0, 1, 1], [], []>} : vector<32x64xbf16>, vector<64x16xbf16>, vector<32x16xf32> -> vector<32x16xf32>
    %c0_56 = arith.constant 0 : index
    %c0_57 = arith.constant 0 : index
    %c1_58 = arith.constant 1 : index
    %c0_59 = arith.constant 0 : index
    %c0_60 = arith.constant 0 : index
    %63 = vector.load %arg4[%c0_56, %c0_57, %c1_58, %c0_59, %c0_60] : memref<2x3x4x1x16xf32, #tpu.memory_space<vmem>>, vector<1x1x1x1x16xf32>
    %64 = vector.shape_cast %63 : vector<1x1x1x1x16xf32> to vector<1x16xf32>
    %65 = vector.broadcast %64 : vector<1x16xf32> to vector<32x16xf32>
    %66 = arith.addf %62, %65 : vector<32x16xf32>
    %c0_61 = arith.constant 0 : index
    %c1_62 = arith.constant 1 : index
    %c1_63 = arith.constant 1 : index
    %c0_64 = arith.constant 0 : index
    %c0_65 = arith.constant 0 : index
    %67 = vector.load %arg3[%c0_61, %c1_62, %c1_63, %c0_64, %c0_65] : memref<2x3x4x64x16xbf16, #tpu.memory_space<vmem>>, vector<1x1x1x64x16xbf16>
    %68 = vector.shape_cast %67 : vector<1x1x1x64x16xbf16> to vector<64x16xbf16>
    %cst_66 = arith.constant dense<0.000000e+00> : vector<32x16xf32>
    %69 = tpu.matmul %12, %68, %cst_66 {dimension_numbers = #tpu.dot_dimension_numbers<[1], [0], [0], [1], [0, 0, 1, 1], [], []>} : vector<32x64xbf16>, vector<64x16xbf16>, vector<32x16xf32> -> vector<32x16xf32>
    %c0_67 = arith.constant 0 : index
    %c1_68 = arith.constant 1 : index
    %c1_69 = arith.constant 1 : index
    %c0_70 = arith.constant 0 : index
    %c0_71 = arith.constant 0 : index
    %70 = vector.load %arg4[%c0_67, %c1_68, %c1_69, %c0_70, %c0_71] : memref<2x3x4x1x16xf32, #tpu.memory_space<vmem>>, vector<1x1x1x1x16xf32>
    %71 = vector.shape_cast %70 : vector<1x1x1x1x16xf32> to vector<1x16xf32>
    %72 = vector.broadcast %71 : vector<1x16xf32> to vector<32x16xf32>
    %73 = arith.addf %69, %72 : vector<32x16xf32>
    %c0_72 = arith.constant 0 : index
    %c2_73 = arith.constant 2 : index
    %c1_74 = arith.constant 1 : index
    %c0_75 = arith.constant 0 : index
    %c0_76 = arith.constant 0 : index
    %74 = vector.load %arg3[%c0_72, %c2_73, %c1_74, %c0_75, %c0_76] : memref<2x3x4x64x16xbf16, #tpu.memory_space<vmem>>, vector<1x1x1x64x16xbf16>
    %75 = vector.shape_cast %74 : vector<1x1x1x64x16xbf16> to vector<64x16xbf16>
    %cst_77 = arith.constant dense<0.000000e+00> : vector<32x16xf32>
    %76 = tpu.matmul %12, %75, %cst_77 {dimension_numbers = #tpu.dot_dimension_numbers<[1], [0], [0], [1], [0, 0, 1, 1], [], []>} : vector<32x64xbf16>, vector<64x16xbf16>, vector<32x16xf32> -> vector<32x16xf32>
    %c0_78 = arith.constant 0 : index
    %c2_79 = arith.constant 2 : index
    %c1_80 = arith.constant 1 : index
    %c0_81 = arith.constant 0 : index
    %c0_82 = arith.constant 0 : index
    %77 = vector.load %arg4[%c0_78, %c2_79, %c1_80, %c0_81, %c0_82] : memref<2x3x4x1x16xf32, #tpu.memory_space<vmem>>, vector<1x1x1x1x16xf32>
    %78 = vector.shape_cast %77 : vector<1x1x1x1x16xf32> to vector<1x16xf32>
    %79 = vector.broadcast %78 : vector<1x16xf32> to vector<32x16xf32>
    %80 = arith.addf %76, %79 : vector<32x16xf32>
    %81 = arith.truncf %66 : vector<32x16xf32> to vector<32x16xbf16>
    %82 = vector.shape_cast %81 : vector<32x16xbf16> to vector<2x16x16xbf16>
    %83 = arith.truncf %73 : vector<32x16xf32> to vector<32x16xbf16>
    %84 = vector.shape_cast %83 : vector<32x16xbf16> to vector<2x16x16xbf16>
    %85 = arith.truncf %80 : vector<32x16xf32> to vector<32x16xbf16>
    %86 = vector.shape_cast %85 : vector<32x16xbf16> to vector<2x16x16xbf16>
    "tpu.trace_start"() <{level = 10 : i32, message = "bqc,bkc->bqk"}> : () -> ()
    %cst_83 = arith.constant dense<0.000000e+00> : vector<2x16x16xf32>
    %87 = tpu.matmul %82, %84, %cst_83 {dimension_numbers = #tpu.dot_dimension_numbers<[2], [2], [1], [1], [0, 0, 0, 1, 1, 1], [0], [0]>} : vector<2x16x16xbf16>, vector<2x16x16xbf16>, vector<2x16x16xf32> -> vector<2x16x16xf32>
    "tpu.trace_stop"() : () -> ()
    %cst_84 = arith.constant dense<0xFF800000> : vector<2x16xf32>
    %88 = vector.multi_reduction <maximumf>, %87, %cst_84 [2] : vector<2x16x16xf32> to vector<2x16xf32>
    %89 = vector.shape_cast %88 : vector<2x16xf32> to vector<2x16x1xf32>
    %90 = vector.broadcast %89 : vector<2x16x1xf32> to vector<2x16x16xf32>
    %91 = arith.subf %87, %90 : vector<2x16x16xf32>
    %92 = math.exp %91 : vector<2x16x16xf32>
    %cst_85 = arith.constant dense<0.000000e+00> : vector<2x16xf32>
    %93 = vector.multi_reduction <add>, %92, %cst_85 [2] : vector<2x16x16xf32> to vector<2x16xf32>
    %94 = vector.shape_cast %93 : vector<2x16xf32> to vector<2x16x1xf32>
    %95 = tpu.reciprocal %94 {approx = true} : vector<2x16x1xf32> -> vector<2x16x1xf32>
    %96 = vector.broadcast %95 : vector<2x16x1xf32> to vector<2x16x16xf32>
    %97 = arith.mulf %92, %96 : vector<2x16x16xf32>
    %98 = arith.truncf %97 : vector<2x16x16xf32> to vector<2x16x16xbf16>
    "tpu.trace_start"() <{level = 10 : i32, message = "bqk,bkc->bqc"}> : () -> ()
    %cst_86 = arith.constant dense<0.000000e+00> : vector<2x16x16xf32>
    %99 = tpu.matmul %98, %86, %cst_86 {dimension_numbers = #tpu.dot_dimension_numbers<[2], [1], [1], [2], [0, 0, 0, 1, 1, 2], [0], [0]>} : vector<2x16x16xbf16>, vector<2x16x16xbf16>, vector<2x16x16xf32> -> vector<2x16x16xf32>
    "tpu.trace_stop"() : () -> ()
    %100 = arith.truncf %99 : vector<2x16x16xf32> to vector<2x16x16xbf16>
    %101 = vector.shape_cast %100 : vector<2x16x16xbf16> to vector<32x16xbf16>
    %c0_87 = arith.constant 0 : index
    %c1_88 = arith.constant 1 : index
    %c0_89 = arith.constant 0 : index
    %c0_90 = arith.constant 0 : index
    %102 = vector.load %arg5[%c0_87, %c1_88, %c0_89, %c0_90] : memref<2x4x16x64xbf16, #tpu.memory_space<vmem>>, vector<1x1x16x64xbf16>
    %103 = vector.shape_cast %102 : vector<1x1x16x64xbf16> to vector<16x64xbf16>
    %cst_91 = arith.constant dense<0.000000e+00> : vector<32x64xf32>
    %104 = tpu.matmul %101, %103, %cst_91 {dimension_numbers = #tpu.dot_dimension_numbers<[1], [0], [0], [1], [0, 0, 1, 1], [], []>} : vector<32x16xbf16>, vector<16x64xbf16>, vector<32x64xf32> -> vector<32x64xf32>
    %105 = arith.addf %59, %104 : vector<32x64xf32>
    %c0_92 = arith.constant 0 : index
    %c0_93 = arith.constant 0 : index
    %c2_94 = arith.constant 2 : index
    %c0_95 = arith.constant 0 : index
    %c0_96 = arith.constant 0 : index
    %106 = vector.load %arg3[%c0_92, %c0_93, %c2_94, %c0_95, %c0_96] : memref<2x3x4x64x16xbf16, #tpu.memory_space<vmem>>, vector<1x1x1x64x16xbf16>
    %107 = vector.shape_cast %106 : vector<1x1x1x64x16xbf16> to vector<64x16xbf16>
    %cst_97 = arith.constant dense<0.000000e+00> : vector<32x16xf32>
    %108 = tpu.matmul %12, %107, %cst_97 {dimension_numbers = #tpu.dot_dimension_numbers<[1], [0], [0], [1], [0, 0, 1, 1], [], []>} : vector<32x64xbf16>, vector<64x16xbf16>, vector<32x16xf32> -> vector<32x16xf32>
    %c0_98 = arith.constant 0 : index
    %c0_99 = arith.constant 0 : index
    %c2_100 = arith.constant 2 : index
    %c0_101 = arith.constant 0 : index
    %c0_102 = arith.constant 0 : index
    %109 = vector.load %arg4[%c0_98, %c0_99, %c2_100, %c0_101, %c0_102] : memref<2x3x4x1x16xf32, #tpu.memory_space<vmem>>, vector<1x1x1x1x16xf32>
    %110 = vector.shape_cast %109 : vector<1x1x1x1x16xf32> to vector<1x16xf32>
    %111 = vector.broadcast %110 : vector<1x16xf32> to vector<32x16xf32>
    %112 = arith.addf %108, %111 : vector<32x16xf32>
    %c0_103 = arith.constant 0 : index
    %c1_104 = arith.constant 1 : index
    %c2_105 = arith.constant 2 : index
    %c0_106 = arith.constant 0 : index
    %c0_107 = arith.constant 0 : index
    %113 = vector.load %arg3[%c0_103, %c1_104, %c2_105, %c0_106, %c0_107] : memref<2x3x4x64x16xbf16, #tpu.memory_space<vmem>>, vector<1x1x1x64x16xbf16>
    %114 = vector.shape_cast %113 : vector<1x1x1x64x16xbf16> to vector<64x16xbf16>
    %cst_108 = arith.constant dense<0.000000e+00> : vector<32x16xf32>
    %115 = tpu.matmul %12, %114, %cst_108 {dimension_numbers = #tpu.dot_dimension_numbers<[1], [0], [0], [1], [0, 0, 1, 1], [], []>} : vector<32x64xbf16>, vector<64x16xbf16>, vector<32x16xf32> -> vector<32x16xf32>
    %c0_109 = arith.constant 0 : index
    %c1_110 = arith.constant 1 : index
    %c2_111 = arith.constant 2 : index
    %c0_112 = arith.constant 0 : index
    %c0_113 = arith.constant 0 : index
    %116 = vector.load %arg4[%c0_109, %c1_110, %c2_111, %c0_112, %c0_113] : memref<2x3x4x1x16xf32, #tpu.memory_space<vmem>>, vector<1x1x1x1x16xf32>
    %117 = vector.shape_cast %116 : vector<1x1x1x1x16xf32> to vector<1x16xf32>
    %118 = vector.broadcast %117 : vector<1x16xf32> to vector<32x16xf32>
    %119 = arith.addf %115, %118 : vector<32x16xf32>
    %c0_114 = arith.constant 0 : index
    %c2_115 = arith.constant 2 : index
    %c2_116 = arith.constant 2 : index
    %c0_117 = arith.constant 0 : index
    %c0_118 = arith.constant 0 : index
    %120 = vector.load %arg3[%c0_114, %c2_115, %c2_116, %c0_117, %c0_118] : memref<2x3x4x64x16xbf16, #tpu.memory_space<vmem>>, vector<1x1x1x64x16xbf16>
    %121 = vector.shape_cast %120 : vector<1x1x1x64x16xbf16> to vector<64x16xbf16>
    %cst_119 = arith.constant dense<0.000000e+00> : vector<32x16xf32>
    %122 = tpu.matmul %12, %121, %cst_119 {dimension_numbers = #tpu.dot_dimension_numbers<[1], [0], [0], [1], [0, 0, 1, 1], [], []>} : vector<32x64xbf16>, vector<64x16xbf16>, vector<32x16xf32> -> vector<32x16xf32>
    %c0_120 = arith.constant 0 : index
    %c2_121 = arith.constant 2 : index
    %c2_122 = arith.constant 2 : index
    %c0_123 = arith.constant 0 : index
    %c0_124 = arith.constant 0 : index
    %123 = vector.load %arg4[%c0_120, %c2_121, %c2_122, %c0_123, %c0_124] : memref<2x3x4x1x16xf32, #tpu.memory_space<vmem>>, vector<1x1x1x1x16xf32>
    %124 = vector.shape_cast %123 : vector<1x1x1x1x16xf32> to vector<1x16xf32>
    %125 = vector.broadcast %124 : vector<1x16xf32> to vector<32x16xf32>
    %126 = arith.addf %122, %125 : vector<32x16xf32>
    %127 = arith.truncf %112 : vector<32x16xf32> to vector<32x16xbf16>
    %128 = vector.shape_cast %127 : vector<32x16xbf16> to vector<2x16x16xbf16>
    %129 = arith.truncf %119 : vector<32x16xf32> to vector<32x16xbf16>
    %130 = vector.shape_cast %129 : vector<32x16xbf16> to vector<2x16x16xbf16>
    %131 = arith.truncf %126 : vector<32x16xf32> to vector<32x16xbf16>
    %132 = vector.shape_cast %131 : vector<32x16xbf16> to vector<2x16x16xbf16>
    "tpu.trace_start"() <{level = 10 : i32, message = "bqc,bkc->bqk"}> : () -> ()
    %cst_125 = arith.constant dense<0.000000e+00> : vector<2x16x16xf32>
    %133 = tpu.matmul %128, %130, %cst_125 {dimension_numbers = #tpu.dot_dimension_numbers<[2], [2], [1], [1], [0, 0, 0, 1, 1, 1], [0], [0]>} : vector<2x16x16xbf16>, vector<2x16x16xbf16>, vector<2x16x16xf32> -> vector<2x16x16xf32>
    "tpu.trace_stop"() : () -> ()
    %cst_126 = arith.constant dense<0xFF800000> : vector<2x16xf32>
    %134 = vector.multi_reduction <maximumf>, %133, %cst_126 [2] : vector<2x16x16xf32> to vector<2x16xf32>
    %135 = vector.shape_cast %134 : vector<2x16xf32> to vector<2x16x1xf32>
    %136 = vector.broadcast %135 : vector<2x16x1xf32> to vector<2x16x16xf32>
    %137 = arith.subf %133, %136 : vector<2x16x16xf32>
    %138 = math.exp %137 : vector<2x16x16xf32>
    %cst_127 = arith.constant dense<0.000000e+00> : vector<2x16xf32>
    %139 = vector.multi_reduction <add>, %138, %cst_127 [2] : vector<2x16x16xf32> to vector<2x16xf32>
    %140 = vector.shape_cast %139 : vector<2x16xf32> to vector<2x16x1xf32>
    %141 = tpu.reciprocal %140 {approx = true} : vector<2x16x1xf32> -> vector<2x16x1xf32>
    %142 = vector.broadcast %141 : vector<2x16x1xf32> to vector<2x16x16xf32>
    %143 = arith.mulf %138, %142 : vector<2x16x16xf32>
    %144 = arith.truncf %143 : vector<2x16x16xf32> to vector<2x16x16xbf16>
    "tpu.trace_start"() <{level = 10 : i32, message = "bqk,bkc->bqc"}> : () -> ()
    %cst_128 = arith.constant dense<0.000000e+00> : vector<2x16x16xf32>
    %145 = tpu.matmul %144, %132, %cst_128 {dimension_numbers = #tpu.dot_dimension_numbers<[2], [1], [1], [2], [0, 0, 0, 1, 1, 2], [0], [0]>} : vector<2x16x16xbf16>, vector<2x16x16xbf16>, vector<2x16x16xf32> -> vector<2x16x16xf32>
    "tpu.trace_stop"() : () -> ()
    %146 = arith.truncf %145 : vector<2x16x16xf32> to vector<2x16x16xbf16>
    %147 = vector.shape_cast %146 : vector<2x16x16xbf16> to vector<32x16xbf16>
    %c0_129 = arith.constant 0 : index
    %c2_130 = arith.constant 2 : index
    %c0_131 = arith.constant 0 : index
    %c0_132 = arith.constant 0 : index
    %148 = vector.load %arg5[%c0_129, %c2_130, %c0_131, %c0_132] : memref<2x4x16x64xbf16, #tpu.memory_space<vmem>>, vector<1x1x16x64xbf16>
    %149 = vector.shape_cast %148 : vector<1x1x16x64xbf16> to vector<16x64xbf16>
    %cst_133 = arith.constant dense<0.000000e+00> : vector<32x64xf32>
    %150 = tpu.matmul %147, %149, %cst_133 {dimension_numbers = #tpu.dot_dimension_numbers<[1], [0], [0], [1], [0, 0, 1, 1], [], []>} : vector<32x16xbf16>, vector<16x64xbf16>, vector<32x64xf32> -> vector<32x64xf32>
    %151 = arith.addf %105, %150 : vector<32x64xf32>
    %c0_134 = arith.constant 0 : index
    %c0_135 = arith.constant 0 : index
    %c3 = arith.constant 3 : index
    %c0_136 = arith.constant 0 : index
    %c0_137 = arith.constant 0 : index
    %152 = vector.load %arg3[%c0_134, %c0_135, %c3, %c0_136, %c0_137] : memref<2x3x4x64x16xbf16, #tpu.memory_space<vmem>>, vector<1x1x1x64x16xbf16>
    %153 = vector.shape_cast %152 : vector<1x1x1x64x16xbf16> to vector<64x16xbf16>
    %cst_138 = arith.constant dense<0.000000e+00> : vector<32x16xf32>
    %154 = tpu.matmul %12, %153, %cst_138 {dimension_numbers = #tpu.dot_dimension_numbers<[1], [0], [0], [1], [0, 0, 1, 1], [], []>} : vector<32x64xbf16>, vector<64x16xbf16>, vector<32x16xf32> -> vector<32x16xf32>
    %c0_139 = arith.constant 0 : index
    %c0_140 = arith.constant 0 : index
    %c3_141 = arith.constant 3 : index
    %c0_142 = arith.constant 0 : index
    %c0_143 = arith.constant 0 : index
    %155 = vector.load %arg4[%c0_139, %c0_140, %c3_141, %c0_142, %c0_143] : memref<2x3x4x1x16xf32, #tpu.memory_space<vmem>>, vector<1x1x1x1x16xf32>
    %156 = vector.shape_cast %155 : vector<1x1x1x1x16xf32> to vector<1x16xf32>
    %157 = vector.broadcast %156 : vector<1x16xf32> to vector<32x16xf32>
    %158 = arith.addf %154, %157 : vector<32x16xf32>
    %c0_144 = arith.constant 0 : index
    %c1_145 = arith.constant 1 : index
    %c3_146 = arith.constant 3 : index
    %c0_147 = arith.constant 0 : index
    %c0_148 = arith.constant 0 : index
    %159 = vector.load %arg3[%c0_144, %c1_145, %c3_146, %c0_147, %c0_148] : memref<2x3x4x64x16xbf16, #tpu.memory_space<vmem>>, vector<1x1x1x64x16xbf16>
    %160 = vector.shape_cast %159 : vector<1x1x1x64x16xbf16> to vector<64x16xbf16>
    %cst_149 = arith.constant dense<0.000000e+00> : vector<32x16xf32>
    %161 = tpu.matmul %12, %160, %cst_149 {dimension_numbers = #tpu.dot_dimension_numbers<[1], [0], [0], [1], [0, 0, 1, 1], [], []>} : vector<32x64xbf16>, vector<64x16xbf16>, vector<32x16xf32> -> vector<32x16xf32>
    %c0_150 = arith.constant 0 : index
    %c1_151 = arith.constant 1 : index
    %c3_152 = arith.constant 3 : index
    %c0_153 = arith.constant 0 : index
    %c0_154 = arith.constant 0 : index
    %162 = vector.load %arg4[%c0_150, %c1_151, %c3_152, %c0_153, %c0_154] : memref<2x3x4x1x16xf32, #tpu.memory_space<vmem>>, vector<1x1x1x1x16xf32>
    %163 = vector.shape_cast %162 : vector<1x1x1x1x16xf32> to vector<1x16xf32>
    %164 = vector.broadcast %163 : vector<1x16xf32> to vector<32x16xf32>
    %165 = arith.addf %161, %164 : vector<32x16xf32>
    %c0_155 = arith.constant 0 : index
    %c2_156 = arith.constant 2 : index
    %c3_157 = arith.constant 3 : index
    %c0_158 = arith.constant 0 : index
    %c0_159 = arith.constant 0 : index
    %166 = vector.load %arg3[%c0_155, %c2_156, %c3_157, %c0_158, %c0_159] : memref<2x3x4x64x16xbf16, #tpu.memory_space<vmem>>, vector<1x1x1x64x16xbf16>
    %167 = vector.shape_cast %166 : vector<1x1x1x64x16xbf16> to vector<64x16xbf16>
    %cst_160 = arith.constant dense<0.000000e+00> : vector<32x16xf32>
    %168 = tpu.matmul %12, %167, %cst_160 {dimension_numbers = #tpu.dot_dimension_numbers<[1], [0], [0], [1], [0, 0, 1, 1], [], []>} : vector<32x64xbf16>, vector<64x16xbf16>, vector<32x16xf32> -> vector<32x16xf32>
    %c0_161 = arith.constant 0 : index
    %c2_162 = arith.constant 2 : index
    %c3_163 = arith.constant 3 : index
    %c0_164 = arith.constant 0 : index
    %c0_165 = arith.constant 0 : index
    %169 = vector.load %arg4[%c0_161, %c2_162, %c3_163, %c0_164, %c0_165] : memref<2x3x4x1x16xf32, #tpu.memory_space<vmem>>, vector<1x1x1x1x16xf32>
    %170 = vector.shape_cast %169 : vector<1x1x1x1x16xf32> to vector<1x16xf32>
    %171 = vector.broadcast %170 : vector<1x16xf32> to vector<32x16xf32>
    %172 = arith.addf %168, %171 : vector<32x16xf32>
    %173 = arith.truncf %158 : vector<32x16xf32> to vector<32x16xbf16>
    %174 = vector.shape_cast %173 : vector<32x16xbf16> to vector<2x16x16xbf16>
    %175 = arith.truncf %165 : vector<32x16xf32> to vector<32x16xbf16>
    %176 = vector.shape_cast %175 : vector<32x16xbf16> to vector<2x16x16xbf16>
    %177 = arith.truncf %172 : vector<32x16xf32> to vector<32x16xbf16>
    %178 = vector.shape_cast %177 : vector<32x16xbf16> to vector<2x16x16xbf16>
    "tpu.trace_start"() <{level = 10 : i32, message = "bqc,bkc->bqk"}> : () -> ()
    %cst_166 = arith.constant dense<0.000000e+00> : vector<2x16x16xf32>
    %179 = tpu.matmul %174, %176, %cst_166 {dimension_numbers = #tpu.dot_dimension_numbers<[2], [2], [1], [1], [0, 0, 0, 1, 1, 1], [0], [0]>} : vector<2x16x16xbf16>, vector<2x16x16xbf16>, vector<2x16x16xf32> -> vector<2x16x16xf32>
    "tpu.trace_stop"() : () -> ()
    %cst_167 = arith.constant dense<0xFF800000> : vector<2x16xf32>
    %180 = vector.multi_reduction <maximumf>, %179, %cst_167 [2] : vector<2x16x16xf32> to vector<2x16xf32>
    %181 = vector.shape_cast %180 : vector<2x16xf32> to vector<2x16x1xf32>
    %182 = vector.broadcast %181 : vector<2x16x1xf32> to vector<2x16x16xf32>
    %183 = arith.subf %179, %182 : vector<2x16x16xf32>
    %184 = math.exp %183 : vector<2x16x16xf32>
    %cst_168 = arith.constant dense<0.000000e+00> : vector<2x16xf32>
    %185 = vector.multi_reduction <add>, %184, %cst_168 [2] : vector<2x16x16xf32> to vector<2x16xf32>
    %186 = vector.shape_cast %185 : vector<2x16xf32> to vector<2x16x1xf32>
    %187 = tpu.reciprocal %186 {approx = true} : vector<2x16x1xf32> -> vector<2x16x1xf32>
    %188 = vector.broadcast %187 : vector<2x16x1xf32> to vector<2x16x16xf32>
    %189 = arith.mulf %184, %188 : vector<2x16x16xf32>
    %190 = arith.truncf %189 : vector<2x16x16xf32> to vector<2x16x16xbf16>
    "tpu.trace_start"() <{level = 10 : i32, message = "bqk,bkc->bqc"}> : () -> ()
    %cst_169 = arith.constant dense<0.000000e+00> : vector<2x16x16xf32>
    %191 = tpu.matmul %190, %178, %cst_169 {dimension_numbers = #tpu.dot_dimension_numbers<[2], [1], [1], [2], [0, 0, 0, 1, 1, 2], [0], [0]>} : vector<2x16x16xbf16>, vector<2x16x16xbf16>, vector<2x16x16xf32> -> vector<2x16x16xf32>
    "tpu.trace_stop"() : () -> ()
    %192 = arith.truncf %191 : vector<2x16x16xf32> to vector<2x16x16xbf16>
    %193 = vector.shape_cast %192 : vector<2x16x16xbf16> to vector<32x16xbf16>
    %c0_170 = arith.constant 0 : index
    %c3_171 = arith.constant 3 : index
    %c0_172 = arith.constant 0 : index
    %c0_173 = arith.constant 0 : index
    %194 = vector.load %arg5[%c0_170, %c3_171, %c0_172, %c0_173] : memref<2x4x16x64xbf16, #tpu.memory_space<vmem>>, vector<1x1x16x64xbf16>
    %195 = vector.shape_cast %194 : vector<1x1x16x64xbf16> to vector<16x64xbf16>
    %cst_174 = arith.constant dense<0.000000e+00> : vector<32x64xf32>
    %196 = tpu.matmul %193, %195, %cst_174 {dimension_numbers = #tpu.dot_dimension_numbers<[1], [0], [0], [1], [0, 0, 1, 1], [], []>} : vector<32x16xbf16>, vector<16x64xbf16>, vector<32x64xf32> -> vector<32x64xf32>
    %197 = arith.addf %151, %196 : vector<32x64xf32>
    %198 = vector.extract_strided_slice %11 {offsets = [0, 0], sizes = [1, 64], strides = [1, 1]} : vector<6x64xf32> to vector<1x64xf32>
    %199 = vector.broadcast %198 : vector<1x64xf32> to vector<32x64xf32>
    %200 = arith.addf %197, %199 : vector<32x64xf32>
    %201 = arith.addf %9, %200 : vector<32x64xf32>
    %202 = vector.extract_strided_slice %11 {offsets = [1, 0], sizes = [1, 64], strides = [1, 1]} : vector<6x64xf32> to vector<1x64xf32>
    %203 = vector.extract_strided_slice %11 {offsets = [2, 0], sizes = [1, 64], strides = [1, 1]} : vector<6x64xf32> to vector<1x64xf32>
    %cst_175 = arith.constant dense<0.000000e+00> : vector<32xf32>
    %204 = vector.multi_reduction <add>, %201, %cst_175 [1] : vector<32x64xf32> to vector<32xf32>
    %205 = vector.shape_cast %204 : vector<32xf32> to vector<32x1xf32>
    %cst_176 = arith.constant 6.400000e+01 : f32
    %206 = vector.broadcast %cst_176 : f32 to vector<32x1xf32>
    %207 = arith.divf %205, %206 : vector<32x1xf32>
    %208 = vector.broadcast %207 : vector<32x1xf32> to vector<32x64xf32>
    %209 = arith.subf %201, %208 : vector<32x64xf32>
    %210 = arith.mulf %209, %209 : vector<32x64xf32>
    %cst_177 = arith.constant dense<0.000000e+00> : vector<32xf32>
    %211 = vector.multi_reduction <add>, %210, %cst_177 [1] : vector<32x64xf32> to vector<32xf32>
    %212 = vector.shape_cast %211 : vector<32xf32> to vector<32x1xf32>
    %cst_178 = arith.constant 6.400000e+01 : f32
    %213 = vector.broadcast %cst_178 : f32 to vector<32x1xf32>
    %214 = arith.divf %212, %213 : vector<32x1xf32>
    %215 = vector.broadcast %207 : vector<32x1xf32> to vector<32x64xf32>
    %216 = arith.subf %201, %215 : vector<32x64xf32>
    %cst_179 = arith.constant 9.99999974E-6 : f32
    %217 = vector.broadcast %cst_179 : f32 to vector<32x1xf32>
    %218 = arith.addf %214, %217 : vector<32x1xf32>
    %219 = math.rsqrt %218 : vector<32x1xf32>
    %220 = vector.broadcast %219 : vector<32x1xf32> to vector<32x64xf32>
    %221 = arith.mulf %216, %220 : vector<32x64xf32>
    %222 = vector.broadcast %202 : vector<1x64xf32> to vector<32x64xf32>
    %223 = arith.mulf %221, %222 : vector<32x64xf32>
    %224 = vector.broadcast %203 : vector<1x64xf32> to vector<32x64xf32>
    %225 = arith.addf %223, %224 : vector<32x64xf32>
    %226 = arith.truncf %225 : vector<32x64xf32> to vector<32x64xbf16>
    %c0_180 = arith.constant 0 : index
    %c0_181 = arith.constant 0 : index
    %c0_182 = arith.constant 0 : index
    %227 = vector.load %arg6[%c0_180, %c0_181, %c0_182] : memref<2x64x128xbf16, #tpu.memory_space<vmem>>, vector<1x64x128xbf16>
    %228 = vector.shape_cast %227 : vector<1x64x128xbf16> to vector<64x128xbf16>
    %cst_183 = arith.constant dense<0.000000e+00> : vector<32x128xf32>
    %229 = tpu.matmul %226, %228, %cst_183 {dimension_numbers = #tpu.dot_dimension_numbers<[1], [0], [0], [1], [0, 0, 1, 1], [], []>} : vector<32x64xbf16>, vector<64x128xbf16>, vector<32x128xf32> -> vector<32x128xf32>
    %c0_184 = arith.constant 0 : index
    %c0_185 = arith.constant 0 : index
    %c0_186 = arith.constant 0 : index
    %230 = vector.load %arg7[%c0_184, %c0_185, %c0_186] : memref<2x1x128xf32, #tpu.memory_space<vmem>>, vector<1x1x128xf32>
    %231 = vector.shape_cast %230 : vector<1x1x128xf32> to vector<1x128xf32>
    %232 = vector.broadcast %231 : vector<1x128xf32> to vector<32x128xf32>
    %233 = arith.addf %229, %232 : vector<32x128xf32>
    %cst_187 = arith.constant 0.000000e+00 : f32
    %234 = vector.broadcast %cst_187 : f32 to vector<32x128xf32>
    %235 = arith.maximumf %233, %234 : vector<32x128xf32>
    %236 = arith.truncf %235 : vector<32x128xf32> to vector<32x128xbf16>
    %c0_188 = arith.constant 0 : index
    %c0_189 = arith.constant 0 : index
    %c0_190 = arith.constant 0 : index
    %237 = vector.load %arg8[%c0_188, %c0_189, %c0_190] : memref<2x128x64xbf16, #tpu.memory_space<vmem>>, vector<1x128x64xbf16>
    %238 = vector.shape_cast %237 : vector<1x128x64xbf16> to vector<128x64xbf16>
    %cst_191 = arith.constant dense<0.000000e+00> : vector<32x64xf32>
    %239 = tpu.matmul %236, %238, %cst_191 {dimension_numbers = #tpu.dot_dimension_numbers<[1], [0], [0], [1], [0, 0, 1, 1], [], []>} : vector<32x128xbf16>, vector<128x64xbf16>, vector<32x64xf32> -> vector<32x64xf32>
    %240 = vector.extract_strided_slice %11 {offsets = [3, 0], sizes = [1, 64], strides = [1, 1]} : vector<6x64xf32> to vector<1x64xf32>
    %241 = vector.broadcast %240 : vector<1x64xf32> to vector<32x64xf32>
    %242 = arith.addf %239, %241 : vector<32x64xf32>
    %243 = arith.addf %225, %242 : vector<32x64xf32>
    %244 = vector.extract_strided_slice %11 {offsets = [4, 0], sizes = [1, 64], strides = [1, 1]} : vector<6x64xf32> to vector<1x64xf32>
    %245 = vector.extract_strided_slice %11 {offsets = [5, 0], sizes = [1, 64], strides = [1, 1]} : vector<6x64xf32> to vector<1x64xf32>
    %cst_192 = arith.constant dense<0.000000e+00> : vector<32xf32>
    %246 = vector.multi_reduction <add>, %243, %cst_192 [1] : vector<32x64xf32> to vector<32xf32>
    %247 = vector.shape_cast %246 : vector<32xf32> to vector<32x1xf32>
    %cst_193 = arith.constant 6.400000e+01 : f32
    %248 = vector.broadcast %cst_193 : f32 to vector<32x1xf32>
    %249 = arith.divf %247, %248 : vector<32x1xf32>
    %250 = vector.broadcast %249 : vector<32x1xf32> to vector<32x64xf32>
    %251 = arith.subf %243, %250 : vector<32x64xf32>
    %252 = arith.mulf %251, %251 : vector<32x64xf32>
    %cst_194 = arith.constant dense<0.000000e+00> : vector<32xf32>
    %253 = vector.multi_reduction <add>, %252, %cst_194 [1] : vector<32x64xf32> to vector<32xf32>
    %254 = vector.shape_cast %253 : vector<32xf32> to vector<32x1xf32>
    %cst_195 = arith.constant 6.400000e+01 : f32
    %255 = vector.broadcast %cst_195 : f32 to vector<32x1xf32>
    %256 = arith.divf %254, %255 : vector<32x1xf32>
    %257 = vector.broadcast %249 : vector<32x1xf32> to vector<32x64xf32>
    %258 = arith.subf %243, %257 : vector<32x64xf32>
    %cst_196 = arith.constant 9.99999974E-6 : f32
    %259 = vector.broadcast %cst_196 : f32 to vector<32x1xf32>
    %260 = arith.addf %256, %259 : vector<32x1xf32>
    %261 = math.rsqrt %260 : vector<32x1xf32>
    %262 = vector.broadcast %261 : vector<32x1xf32> to vector<32x64xf32>
    %263 = arith.mulf %258, %262 : vector<32x64xf32>
    %264 = vector.broadcast %244 : vector<1x64xf32> to vector<32x64xf32>
    %265 = arith.mulf %263, %264 : vector<32x64xf32>
    %266 = vector.broadcast %245 : vector<1x64xf32> to vector<32x64xf32>
    %267 = arith.addf %265, %266 : vector<32x64xf32>
    %c1_197 = arith.constant 1 : index
    %c0_198 = arith.constant 0 : index
    %c0_199 = arith.constant 0 : index
    %268 = vector.load %arg9[%c1_197, %c0_198, %c0_199] : memref<2x6x64xf32, #tpu.memory_space<vmem>>, vector<1x6x64xf32>
    %269 = vector.shape_cast %268 : vector<1x6x64xf32> to vector<6x64xf32>
    %270 = arith.truncf %267 : vector<32x64xf32> to vector<32x64xbf16>
    %cst_200 = arith.constant 0.000000e+00 : f32
    %271 = vector.broadcast %cst_200 : f32 to vector<32x64xf32>
    %c1_201 = arith.constant 1 : index
    %c0_202 = arith.constant 0 : index
    %c0_203 = arith.constant 0 : index
    %c0_204 = arith.constant 0 : index
    %c0_205 = arith.constant 0 : index
    %272 = vector.load %arg3[%c1_201, %c0_202, %c0_203, %c0_204, %c0_205] : memref<2x3x4x64x16xbf16, #tpu.memory_space<vmem>>, vector<1x1x1x64x16xbf16>
    %273 = vector.shape_cast %272 : vector<1x1x1x64x16xbf16> to vector<64x16xbf16>
    %cst_206 = arith.constant dense<0.000000e+00> : vector<32x16xf32>
    %274 = tpu.matmul %270, %273, %cst_206 {dimension_numbers = #tpu.dot_dimension_numbers<[1], [0], [0], [1], [0, 0, 1, 1], [], []>} : vector<32x64xbf16>, vector<64x16xbf16>, vector<32x16xf32> -> vector<32x16xf32>
    %c1_207 = arith.constant 1 : index
    %c0_208 = arith.constant 0 : index
    %c0_209 = arith.constant 0 : index
    %c0_210 = arith.constant 0 : index
    %c0_211 = arith.constant 0 : index
    %275 = vector.load %arg4[%c1_207, %c0_208, %c0_209, %c0_210, %c0_211] : memref<2x3x4x1x16xf32, #tpu.memory_space<vmem>>, vector<1x1x1x1x16xf32>
    %276 = vector.shape_cast %275 : vector<1x1x1x1x16xf32> to vector<1x16xf32>
    %277 = vector.broadcast %276 : vector<1x16xf32> to vector<32x16xf32>
    %278 = arith.addf %274, %277 : vector<32x16xf32>
    %c1_212 = arith.constant 1 : index
    %c1_213 = arith.constant 1 : index
    %c0_214 = arith.constant 0 : index
    %c0_215 = arith.constant 0 : index
    %c0_216 = arith.constant 0 : index
    %279 = vector.load %arg3[%c1_212, %c1_213, %c0_214, %c0_215, %c0_216] : memref<2x3x4x64x16xbf16, #tpu.memory_space<vmem>>, vector<1x1x1x64x16xbf16>
    %280 = vector.shape_cast %279 : vector<1x1x1x64x16xbf16> to vector<64x16xbf16>
    %cst_217 = arith.constant dense<0.000000e+00> : vector<32x16xf32>
    %281 = tpu.matmul %270, %280, %cst_217 {dimension_numbers = #tpu.dot_dimension_numbers<[1], [0], [0], [1], [0, 0, 1, 1], [], []>} : vector<32x64xbf16>, vector<64x16xbf16>, vector<32x16xf32> -> vector<32x16xf32>
    %c1_218 = arith.constant 1 : index
    %c1_219 = arith.constant 1 : index
    %c0_220 = arith.constant 0 : index
    %c0_221 = arith.constant 0 : index
    %c0_222 = arith.constant 0 : index
    %282 = vector.load %arg4[%c1_218, %c1_219, %c0_220, %c0_221, %c0_222] : memref<2x3x4x1x16xf32, #tpu.memory_space<vmem>>, vector<1x1x1x1x16xf32>
    %283 = vector.shape_cast %282 : vector<1x1x1x1x16xf32> to vector<1x16xf32>
    %284 = vector.broadcast %283 : vector<1x16xf32> to vector<32x16xf32>
    %285 = arith.addf %281, %284 : vector<32x16xf32>
    %c1_223 = arith.constant 1 : index
    %c2_224 = arith.constant 2 : index
    %c0_225 = arith.constant 0 : index
    %c0_226 = arith.constant 0 : index
    %c0_227 = arith.constant 0 : index
    %286 = vector.load %arg3[%c1_223, %c2_224, %c0_225, %c0_226, %c0_227] : memref<2x3x4x64x16xbf16, #tpu.memory_space<vmem>>, vector<1x1x1x64x16xbf16>
    %287 = vector.shape_cast %286 : vector<1x1x1x64x16xbf16> to vector<64x16xbf16>
    %cst_228 = arith.constant dense<0.000000e+00> : vector<32x16xf32>
    %288 = tpu.matmul %270, %287, %cst_228 {dimension_numbers = #tpu.dot_dimension_numbers<[1], [0], [0], [1], [0, 0, 1, 1], [], []>} : vector<32x64xbf16>, vector<64x16xbf16>, vector<32x16xf32> -> vector<32x16xf32>
    %c1_229 = arith.constant 1 : index
    %c2_230 = arith.constant 2 : index
    %c0_231 = arith.constant 0 : index
    %c0_232 = arith.constant 0 : index
    %c0_233 = arith.constant 0 : index
    %289 = vector.load %arg4[%c1_229, %c2_230, %c0_231, %c0_232, %c0_233] : memref<2x3x4x1x16xf32, #tpu.memory_space<vmem>>, vector<1x1x1x1x16xf32>
    %290 = vector.shape_cast %289 : vector<1x1x1x1x16xf32> to vector<1x16xf32>
    %291 = vector.broadcast %290 : vector<1x16xf32> to vector<32x16xf32>
    %292 = arith.addf %288, %291 : vector<32x16xf32>
    %293 = arith.truncf %278 : vector<32x16xf32> to vector<32x16xbf16>
    %294 = vector.shape_cast %293 : vector<32x16xbf16> to vector<2x16x16xbf16>
    %295 = arith.truncf %285 : vector<32x16xf32> to vector<32x16xbf16>
    %296 = vector.shape_cast %295 : vector<32x16xbf16> to vector<2x16x16xbf16>
    %297 = arith.truncf %292 : vector<32x16xf32> to vector<32x16xbf16>
    %298 = vector.shape_cast %297 : vector<32x16xbf16> to vector<2x16x16xbf16>
    "tpu.trace_start"() <{level = 10 : i32, message = "bqc,bkc->bqk"}> : () -> ()
    %cst_234 = arith.constant dense<0.000000e+00> : vector<2x16x16xf32>
    %299 = tpu.matmul %294, %296, %cst_234 {dimension_numbers = #tpu.dot_dimension_numbers<[2], [2], [1], [1], [0, 0, 0, 1, 1, 1], [0], [0]>} : vector<2x16x16xbf16>, vector<2x16x16xbf16>, vector<2x16x16xf32> -> vector<2x16x16xf32>
    "tpu.trace_stop"() : () -> ()
    %cst_235 = arith.constant dense<0xFF800000> : vector<2x16xf32>
    %300 = vector.multi_reduction <maximumf>, %299, %cst_235 [2] : vector<2x16x16xf32> to vector<2x16xf32>
    %301 = vector.shape_cast %300 : vector<2x16xf32> to vector<2x16x1xf32>
    %302 = vector.broadcast %301 : vector<2x16x1xf32> to vector<2x16x16xf32>
    %303 = arith.subf %299, %302 : vector<2x16x16xf32>
    %304 = math.exp %303 : vector<2x16x16xf32>
    %cst_236 = arith.constant dense<0.000000e+00> : vector<2x16xf32>
    %305 = vector.multi_reduction <add>, %304, %cst_236 [2] : vector<2x16x16xf32> to vector<2x16xf32>
    %306 = vector.shape_cast %305 : vector<2x16xf32> to vector<2x16x1xf32>
    %307 = tpu.reciprocal %306 {approx = true} : vector<2x16x1xf32> -> vector<2x16x1xf32>
    %308 = vector.broadcast %307 : vector<2x16x1xf32> to vector<2x16x16xf32>
    %309 = arith.mulf %304, %308 : vector<2x16x16xf32>
    %310 = arith.truncf %309 : vector<2x16x16xf32> to vector<2x16x16xbf16>
    "tpu.trace_start"() <{level = 10 : i32, message = "bqk,bkc->bqc"}> : () -> ()
    %cst_237 = arith.constant dense<0.000000e+00> : vector<2x16x16xf32>
    %311 = tpu.matmul %310, %298, %cst_237 {dimension_numbers = #tpu.dot_dimension_numbers<[2], [1], [1], [2], [0, 0, 0, 1, 1, 2], [0], [0]>} : vector<2x16x16xbf16>, vector<2x16x16xbf16>, vector<2x16x16xf32> -> vector<2x16x16xf32>
    "tpu.trace_stop"() : () -> ()
    %312 = arith.truncf %311 : vector<2x16x16xf32> to vector<2x16x16xbf16>
    %313 = vector.shape_cast %312 : vector<2x16x16xbf16> to vector<32x16xbf16>
    %c1_238 = arith.constant 1 : index
    %c0_239 = arith.constant 0 : index
    %c0_240 = arith.constant 0 : index
    %c0_241 = arith.constant 0 : index
    %314 = vector.load %arg5[%c1_238, %c0_239, %c0_240, %c0_241] : memref<2x4x16x64xbf16, #tpu.memory_space<vmem>>, vector<1x1x16x64xbf16>
    %315 = vector.shape_cast %314 : vector<1x1x16x64xbf16> to vector<16x64xbf16>
    %cst_242 = arith.constant dense<0.000000e+00> : vector<32x64xf32>
    %316 = tpu.matmul %313, %315, %cst_242 {dimension_numbers = #tpu.dot_dimension_numbers<[1], [0], [0], [1], [0, 0, 1, 1], [], []>} : vector<32x16xbf16>, vector<16x64xbf16>, vector<32x64xf32> -> vector<32x64xf32>
    %317 = arith.addf %271, %316 : vector<32x64xf32>
    %c1_243 = arith.constant 1 : index
    %c0_244 = arith.constant 0 : index
    %c1_245 = arith.constant 1 : index
    %c0_246 = arith.constant 0 : index
    %c0_247 = arith.constant 0 : index
    %318 = vector.load %arg3[%c1_243, %c0_244, %c1_245, %c0_246, %c0_247] : memref<2x3x4x64x16xbf16, #tpu.memory_space<vmem>>, vector<1x1x1x64x16xbf16>
    %319 = vector.shape_cast %318 : vector<1x1x1x64x16xbf16> to vector<64x16xbf16>
    %cst_248 = arith.constant dense<0.000000e+00> : vector<32x16xf32>
    %320 = tpu.matmul %270, %319, %cst_248 {dimension_numbers = #tpu.dot_dimension_numbers<[1], [0], [0], [1], [0, 0, 1, 1], [], []>} : vector<32x64xbf16>, vector<64x16xbf16>, vector<32x16xf32> -> vector<32x16xf32>
    %c1_249 = arith.constant 1 : index
    %c0_250 = arith.constant 0 : index
    %c1_251 = arith.constant 1 : index
    %c0_252 = arith.constant 0 : index
    %c0_253 = arith.constant 0 : index
    %321 = vector.load %arg4[%c1_249, %c0_250, %c1_251, %c0_252, %c0_253] : memref<2x3x4x1x16xf32, #tpu.memory_space<vmem>>, vector<1x1x1x1x16xf32>
    %322 = vector.shape_cast %321 : vector<1x1x1x1x16xf32> to vector<1x16xf32>
    %323 = vector.broadcast %322 : vector<1x16xf32> to vector<32x16xf32>
    %324 = arith.addf %320, %323 : vector<32x16xf32>
    %c1_254 = arith.constant 1 : index
    %c1_255 = arith.constant 1 : index
    %c1_256 = arith.constant 1 : index
    %c0_257 = arith.constant 0 : index
    %c0_258 = arith.constant 0 : index
    %325 = vector.load %arg3[%c1_254, %c1_255, %c1_256, %c0_257, %c0_258] : memref<2x3x4x64x16xbf16, #tpu.memory_space<vmem>>, vector<1x1x1x64x16xbf16>
    %326 = vector.shape_cast %325 : vector<1x1x1x64x16xbf16> to vector<64x16xbf16>
    %cst_259 = arith.constant dense<0.000000e+00> : vector<32x16xf32>
    %327 = tpu.matmul %270, %326, %cst_259 {dimension_numbers = #tpu.dot_dimension_numbers<[1], [0], [0], [1], [0, 0, 1, 1], [], []>} : vector<32x64xbf16>, vector<64x16xbf16>, vector<32x16xf32> -> vector<32x16xf32>
    %c1_260 = arith.constant 1 : index
    %c1_261 = arith.constant 1 : index
    %c1_262 = arith.constant 1 : index
    %c0_263 = arith.constant 0 : index
    %c0_264 = arith.constant 0 : index
    %328 = vector.load %arg4[%c1_260, %c1_261, %c1_262, %c0_263, %c0_264] : memref<2x3x4x1x16xf32, #tpu.memory_space<vmem>>, vector<1x1x1x1x16xf32>
    %329 = vector.shape_cast %328 : vector<1x1x1x1x16xf32> to vector<1x16xf32>
    %330 = vector.broadcast %329 : vector<1x16xf32> to vector<32x16xf32>
    %331 = arith.addf %327, %330 : vector<32x16xf32>
    %c1_265 = arith.constant 1 : index
    %c2_266 = arith.constant 2 : index
    %c1_267 = arith.constant 1 : index
    %c0_268 = arith.constant 0 : index
    %c0_269 = arith.constant 0 : index
    %332 = vector.load %arg3[%c1_265, %c2_266, %c1_267, %c0_268, %c0_269] : memref<2x3x4x64x16xbf16, #tpu.memory_space<vmem>>, vector<1x1x1x64x16xbf16>
    %333 = vector.shape_cast %332 : vector<1x1x1x64x16xbf16> to vector<64x16xbf16>
    %cst_270 = arith.constant dense<0.000000e+00> : vector<32x16xf32>
    %334 = tpu.matmul %270, %333, %cst_270 {dimension_numbers = #tpu.dot_dimension_numbers<[1], [0], [0], [1], [0, 0, 1, 1], [], []>} : vector<32x64xbf16>, vector<64x16xbf16>, vector<32x16xf32> -> vector<32x16xf32>
    %c1_271 = arith.constant 1 : index
    %c2_272 = arith.constant 2 : index
    %c1_273 = arith.constant 1 : index
    %c0_274 = arith.constant 0 : index
    %c0_275 = arith.constant 0 : index
    %335 = vector.load %arg4[%c1_271, %c2_272, %c1_273, %c0_274, %c0_275] : memref<2x3x4x1x16xf32, #tpu.memory_space<vmem>>, vector<1x1x1x1x16xf32>
    %336 = vector.shape_cast %335 : vector<1x1x1x1x16xf32> to vector<1x16xf32>
    %337 = vector.broadcast %336 : vector<1x16xf32> to vector<32x16xf32>
    %338 = arith.addf %334, %337 : vector<32x16xf32>
    %339 = arith.truncf %324 : vector<32x16xf32> to vector<32x16xbf16>
    %340 = vector.shape_cast %339 : vector<32x16xbf16> to vector<2x16x16xbf16>
    %341 = arith.truncf %331 : vector<32x16xf32> to vector<32x16xbf16>
    %342 = vector.shape_cast %341 : vector<32x16xbf16> to vector<2x16x16xbf16>
    %343 = arith.truncf %338 : vector<32x16xf32> to vector<32x16xbf16>
    %344 = vector.shape_cast %343 : vector<32x16xbf16> to vector<2x16x16xbf16>
    "tpu.trace_start"() <{level = 10 : i32, message = "bqc,bkc->bqk"}> : () -> ()
    %cst_276 = arith.constant dense<0.000000e+00> : vector<2x16x16xf32>
    %345 = tpu.matmul %340, %342, %cst_276 {dimension_numbers = #tpu.dot_dimension_numbers<[2], [2], [1], [1], [0, 0, 0, 1, 1, 1], [0], [0]>} : vector<2x16x16xbf16>, vector<2x16x16xbf16>, vector<2x16x16xf32> -> vector<2x16x16xf32>
    "tpu.trace_stop"() : () -> ()
    %cst_277 = arith.constant dense<0xFF800000> : vector<2x16xf32>
    %346 = vector.multi_reduction <maximumf>, %345, %cst_277 [2] : vector<2x16x16xf32> to vector<2x16xf32>
    %347 = vector.shape_cast %346 : vector<2x16xf32> to vector<2x16x1xf32>
    %348 = vector.broadcast %347 : vector<2x16x1xf32> to vector<2x16x16xf32>
    %349 = arith.subf %345, %348 : vector<2x16x16xf32>
    %350 = math.exp %349 : vector<2x16x16xf32>
    %cst_278 = arith.constant dense<0.000000e+00> : vector<2x16xf32>
    %351 = vector.multi_reduction <add>, %350, %cst_278 [2] : vector<2x16x16xf32> to vector<2x16xf32>
    %352 = vector.shape_cast %351 : vector<2x16xf32> to vector<2x16x1xf32>
    %353 = tpu.reciprocal %352 {approx = true} : vector<2x16x1xf32> -> vector<2x16x1xf32>
    %354 = vector.broadcast %353 : vector<2x16x1xf32> to vector<2x16x16xf32>
    %355 = arith.mulf %350, %354 : vector<2x16x16xf32>
    %356 = arith.truncf %355 : vector<2x16x16xf32> to vector<2x16x16xbf16>
    "tpu.trace_start"() <{level = 10 : i32, message = "bqk,bkc->bqc"}> : () -> ()
    %cst_279 = arith.constant dense<0.000000e+00> : vector<2x16x16xf32>
    %357 = tpu.matmul %356, %344, %cst_279 {dimension_numbers = #tpu.dot_dimension_numbers<[2], [1], [1], [2], [0, 0, 0, 1, 1, 2], [0], [0]>} : vector<2x16x16xbf16>, vector<2x16x16xbf16>, vector<2x16x16xf32> -> vector<2x16x16xf32>
    "tpu.trace_stop"() : () -> ()
    %358 = arith.truncf %357 : vector<2x16x16xf32> to vector<2x16x16xbf16>
    %359 = vector.shape_cast %358 : vector<2x16x16xbf16> to vector<32x16xbf16>
    %c1_280 = arith.constant 1 : index
    %c1_281 = arith.constant 1 : index
    %c0_282 = arith.constant 0 : index
    %c0_283 = arith.constant 0 : index
    %360 = vector.load %arg5[%c1_280, %c1_281, %c0_282, %c0_283] : memref<2x4x16x64xbf16, #tpu.memory_space<vmem>>, vector<1x1x16x64xbf16>
    %361 = vector.shape_cast %360 : vector<1x1x16x64xbf16> to vector<16x64xbf16>
    %cst_284 = arith.constant dense<0.000000e+00> : vector<32x64xf32>
    %362 = tpu.matmul %359, %361, %cst_284 {dimension_numbers = #tpu.dot_dimension_numbers<[1], [0], [0], [1], [0, 0, 1, 1], [], []>} : vector<32x16xbf16>, vector<16x64xbf16>, vector<32x64xf32> -> vector<32x64xf32>
    %363 = arith.addf %317, %362 : vector<32x64xf32>
    %c1_285 = arith.constant 1 : index
    %c0_286 = arith.constant 0 : index
    %c2_287 = arith.constant 2 : index
    %c0_288 = arith.constant 0 : index
    %c0_289 = arith.constant 0 : index
    %364 = vector.load %arg3[%c1_285, %c0_286, %c2_287, %c0_288, %c0_289] : memref<2x3x4x64x16xbf16, #tpu.memory_space<vmem>>, vector<1x1x1x64x16xbf16>
    %365 = vector.shape_cast %364 : vector<1x1x1x64x16xbf16> to vector<64x16xbf16>
    %cst_290 = arith.constant dense<0.000000e+00> : vector<32x16xf32>
    %366 = tpu.matmul %270, %365, %cst_290 {dimension_numbers = #tpu.dot_dimension_numbers<[1], [0], [0], [1], [0, 0, 1, 1], [], []>} : vector<32x64xbf16>, vector<64x16xbf16>, vector<32x16xf32> -> vector<32x16xf32>
    %c1_291 = arith.constant 1 : index
    %c0_292 = arith.constant 0 : index
    %c2_293 = arith.constant 2 : index
    %c0_294 = arith.constant 0 : index
    %c0_295 = arith.constant 0 : index
    %367 = vector.load %arg4[%c1_291, %c0_292, %c2_293, %c0_294, %c0_295] : memref<2x3x4x1x16xf32, #tpu.memory_space<vmem>>, vector<1x1x1x1x16xf32>
    %368 = vector.shape_cast %367 : vector<1x1x1x1x16xf32> to vector<1x16xf32>
    %369 = vector.broadcast %368 : vector<1x16xf32> to vector<32x16xf32>
    %370 = arith.addf %366, %369 : vector<32x16xf32>
    %c1_296 = arith.constant 1 : index
    %c1_297 = arith.constant 1 : index
    %c2_298 = arith.constant 2 : index
    %c0_299 = arith.constant 0 : index
    %c0_300 = arith.constant 0 : index
    %371 = vector.load %arg3[%c1_296, %c1_297, %c2_298, %c0_299, %c0_300] : memref<2x3x4x64x16xbf16, #tpu.memory_space<vmem>>, vector<1x1x1x64x16xbf16>
    %372 = vector.shape_cast %371 : vector<1x1x1x64x16xbf16> to vector<64x16xbf16>
    %cst_301 = arith.constant dense<0.000000e+00> : vector<32x16xf32>
    %373 = tpu.matmul %270, %372, %cst_301 {dimension_numbers = #tpu.dot_dimension_numbers<[1], [0], [0], [1], [0, 0, 1, 1], [], []>} : vector<32x64xbf16>, vector<64x16xbf16>, vector<32x16xf32> -> vector<32x16xf32>
    %c1_302 = arith.constant 1 : index
    %c1_303 = arith.constant 1 : index
    %c2_304 = arith.constant 2 : index
    %c0_305 = arith.constant 0 : index
    %c0_306 = arith.constant 0 : index
    %374 = vector.load %arg4[%c1_302, %c1_303, %c2_304, %c0_305, %c0_306] : memref<2x3x4x1x16xf32, #tpu.memory_space<vmem>>, vector<1x1x1x1x16xf32>
    %375 = vector.shape_cast %374 : vector<1x1x1x1x16xf32> to vector<1x16xf32>
    %376 = vector.broadcast %375 : vector<1x16xf32> to vector<32x16xf32>
    %377 = arith.addf %373, %376 : vector<32x16xf32>
    %c1_307 = arith.constant 1 : index
    %c2_308 = arith.constant 2 : index
    %c2_309 = arith.constant 2 : index
    %c0_310 = arith.constant 0 : index
    %c0_311 = arith.constant 0 : index
    %378 = vector.load %arg3[%c1_307, %c2_308, %c2_309, %c0_310, %c0_311] : memref<2x3x4x64x16xbf16, #tpu.memory_space<vmem>>, vector<1x1x1x64x16xbf16>
    %379 = vector.shape_cast %378 : vector<1x1x1x64x16xbf16> to vector<64x16xbf16>
    %cst_312 = arith.constant dense<0.000000e+00> : vector<32x16xf32>
    %380 = tpu.matmul %270, %379, %cst_312 {dimension_numbers = #tpu.dot_dimension_numbers<[1], [0], [0], [1], [0, 0, 1, 1], [], []>} : vector<32x64xbf16>, vector<64x16xbf16>, vector<32x16xf32> -> vector<32x16xf32>
    %c1_313 = arith.constant 1 : index
    %c2_314 = arith.constant 2 : index
    %c2_315 = arith.constant 2 : index
    %c0_316 = arith.constant 0 : index
    %c0_317 = arith.constant 0 : index
    %381 = vector.load %arg4[%c1_313, %c2_314, %c2_315, %c0_316, %c0_317] : memref<2x3x4x1x16xf32, #tpu.memory_space<vmem>>, vector<1x1x1x1x16xf32>
    %382 = vector.shape_cast %381 : vector<1x1x1x1x16xf32> to vector<1x16xf32>
    %383 = vector.broadcast %382 : vector<1x16xf32> to vector<32x16xf32>
    %384 = arith.addf %380, %383 : vector<32x16xf32>
    %385 = arith.truncf %370 : vector<32x16xf32> to vector<32x16xbf16>
    %386 = vector.shape_cast %385 : vector<32x16xbf16> to vector<2x16x16xbf16>
    %387 = arith.truncf %377 : vector<32x16xf32> to vector<32x16xbf16>
    %388 = vector.shape_cast %387 : vector<32x16xbf16> to vector<2x16x16xbf16>
    %389 = arith.truncf %384 : vector<32x16xf32> to vector<32x16xbf16>
    %390 = vector.shape_cast %389 : vector<32x16xbf16> to vector<2x16x16xbf16>
    "tpu.trace_start"() <{level = 10 : i32, message = "bqc,bkc->bqk"}> : () -> ()
    %cst_318 = arith.constant dense<0.000000e+00> : vector<2x16x16xf32>
    %391 = tpu.matmul %386, %388, %cst_318 {dimension_numbers = #tpu.dot_dimension_numbers<[2], [2], [1], [1], [0, 0, 0, 1, 1, 1], [0], [0]>} : vector<2x16x16xbf16>, vector<2x16x16xbf16>, vector<2x16x16xf32> -> vector<2x16x16xf32>
    "tpu.trace_stop"() : () -> ()
    %cst_319 = arith.constant dense<0xFF800000> : vector<2x16xf32>
    %392 = vector.multi_reduction <maximumf>, %391, %cst_319 [2] : vector<2x16x16xf32> to vector<2x16xf32>
    %393 = vector.shape_cast %392 : vector<2x16xf32> to vector<2x16x1xf32>
    %394 = vector.broadcast %393 : vector<2x16x1xf32> to vector<2x16x16xf32>
    %395 = arith.subf %391, %394 : vector<2x16x16xf32>
    %396 = math.exp %395 : vector<2x16x16xf32>
    %cst_320 = arith.constant dense<0.000000e+00> : vector<2x16xf32>
    %397 = vector.multi_reduction <add>, %396, %cst_320 [2] : vector<2x16x16xf32> to vector<2x16xf32>
    %398 = vector.shape_cast %397 : vector<2x16xf32> to vector<2x16x1xf32>
    %399 = tpu.reciprocal %398 {approx = true} : vector<2x16x1xf32> -> vector<2x16x1xf32>
    %400 = vector.broadcast %399 : vector<2x16x1xf32> to vector<2x16x16xf32>
    %401 = arith.mulf %396, %400 : vector<2x16x16xf32>
    %402 = arith.truncf %401 : vector<2x16x16xf32> to vector<2x16x16xbf16>
    "tpu.trace_start"() <{level = 10 : i32, message = "bqk,bkc->bqc"}> : () -> ()
    %cst_321 = arith.constant dense<0.000000e+00> : vector<2x16x16xf32>
    %403 = tpu.matmul %402, %390, %cst_321 {dimension_numbers = #tpu.dot_dimension_numbers<[2], [1], [1], [2], [0, 0, 0, 1, 1, 2], [0], [0]>} : vector<2x16x16xbf16>, vector<2x16x16xbf16>, vector<2x16x16xf32> -> vector<2x16x16xf32>
    "tpu.trace_stop"() : () -> ()
    %404 = arith.truncf %403 : vector<2x16x16xf32> to vector<2x16x16xbf16>
    %405 = vector.shape_cast %404 : vector<2x16x16xbf16> to vector<32x16xbf16>
    %c1_322 = arith.constant 1 : index
    %c2_323 = arith.constant 2 : index
    %c0_324 = arith.constant 0 : index
    %c0_325 = arith.constant 0 : index
    %406 = vector.load %arg5[%c1_322, %c2_323, %c0_324, %c0_325] : memref<2x4x16x64xbf16, #tpu.memory_space<vmem>>, vector<1x1x16x64xbf16>
    %407 = vector.shape_cast %406 : vector<1x1x16x64xbf16> to vector<16x64xbf16>
    %cst_326 = arith.constant dense<0.000000e+00> : vector<32x64xf32>
    %408 = tpu.matmul %405, %407, %cst_326 {dimension_numbers = #tpu.dot_dimension_numbers<[1], [0], [0], [1], [0, 0, 1, 1], [], []>} : vector<32x16xbf16>, vector<16x64xbf16>, vector<32x64xf32> -> vector<32x64xf32>
    %409 = arith.addf %363, %408 : vector<32x64xf32>
    %c1_327 = arith.constant 1 : index
    %c0_328 = arith.constant 0 : index
    %c3_329 = arith.constant 3 : index
    %c0_330 = arith.constant 0 : index
    %c0_331 = arith.constant 0 : index
    %410 = vector.load %arg3[%c1_327, %c0_328, %c3_329, %c0_330, %c0_331] : memref<2x3x4x64x16xbf16, #tpu.memory_space<vmem>>, vector<1x1x1x64x16xbf16>
    %411 = vector.shape_cast %410 : vector<1x1x1x64x16xbf16> to vector<64x16xbf16>
    %cst_332 = arith.constant dense<0.000000e+00> : vector<32x16xf32>
    %412 = tpu.matmul %270, %411, %cst_332 {dimension_numbers = #tpu.dot_dimension_numbers<[1], [0], [0], [1], [0, 0, 1, 1], [], []>} : vector<32x64xbf16>, vector<64x16xbf16>, vector<32x16xf32> -> vector<32x16xf32>
    %c1_333 = arith.constant 1 : index
    %c0_334 = arith.constant 0 : index
    %c3_335 = arith.constant 3 : index
    %c0_336 = arith.constant 0 : index
    %c0_337 = arith.constant 0 : index
    %413 = vector.load %arg4[%c1_333, %c0_334, %c3_335, %c0_336, %c0_337] : memref<2x3x4x1x16xf32, #tpu.memory_space<vmem>>, vector<1x1x1x1x16xf32>
    %414 = vector.shape_cast %413 : vector<1x1x1x1x16xf32> to vector<1x16xf32>
    %415 = vector.broadcast %414 : vector<1x16xf32> to vector<32x16xf32>
    %416 = arith.addf %412, %415 : vector<32x16xf32>
    %c1_338 = arith.constant 1 : index
    %c1_339 = arith.constant 1 : index
    %c3_340 = arith.constant 3 : index
    %c0_341 = arith.constant 0 : index
    %c0_342 = arith.constant 0 : index
    %417 = vector.load %arg3[%c1_338, %c1_339, %c3_340, %c0_341, %c0_342] : memref<2x3x4x64x16xbf16, #tpu.memory_space<vmem>>, vector<1x1x1x64x16xbf16>
    %418 = vector.shape_cast %417 : vector<1x1x1x64x16xbf16> to vector<64x16xbf16>
    %cst_343 = arith.constant dense<0.000000e+00> : vector<32x16xf32>
    %419 = tpu.matmul %270, %418, %cst_343 {dimension_numbers = #tpu.dot_dimension_numbers<[1], [0], [0], [1], [0, 0, 1, 1], [], []>} : vector<32x64xbf16>, vector<64x16xbf16>, vector<32x16xf32> -> vector<32x16xf32>
    %c1_344 = arith.constant 1 : index
    %c1_345 = arith.constant 1 : index
    %c3_346 = arith.constant 3 : index
    %c0_347 = arith.constant 0 : index
    %c0_348 = arith.constant 0 : index
    %420 = vector.load %arg4[%c1_344, %c1_345, %c3_346, %c0_347, %c0_348] : memref<2x3x4x1x16xf32, #tpu.memory_space<vmem>>, vector<1x1x1x1x16xf32>
    %421 = vector.shape_cast %420 : vector<1x1x1x1x16xf32> to vector<1x16xf32>
    %422 = vector.broadcast %421 : vector<1x16xf32> to vector<32x16xf32>
    %423 = arith.addf %419, %422 : vector<32x16xf32>
    %c1_349 = arith.constant 1 : index
    %c2_350 = arith.constant 2 : index
    %c3_351 = arith.constant 3 : index
    %c0_352 = arith.constant 0 : index
    %c0_353 = arith.constant 0 : index
    %424 = vector.load %arg3[%c1_349, %c2_350, %c3_351, %c0_352, %c0_353] : memref<2x3x4x64x16xbf16, #tpu.memory_space<vmem>>, vector<1x1x1x64x16xbf16>
    %425 = vector.shape_cast %424 : vector<1x1x1x64x16xbf16> to vector<64x16xbf16>
    %cst_354 = arith.constant dense<0.000000e+00> : vector<32x16xf32>
    %426 = tpu.matmul %270, %425, %cst_354 {dimension_numbers = #tpu.dot_dimension_numbers<[1], [0], [0], [1], [0, 0, 1, 1], [], []>} : vector<32x64xbf16>, vector<64x16xbf16>, vector<32x16xf32> -> vector<32x16xf32>
    %c1_355 = arith.constant 1 : index
    %c2_356 = arith.constant 2 : index
    %c3_357 = arith.constant 3 : index
    %c0_358 = arith.constant 0 : index
    %c0_359 = arith.constant 0 : index
    %427 = vector.load %arg4[%c1_355, %c2_356, %c3_357, %c0_358, %c0_359] : memref<2x3x4x1x16xf32, #tpu.memory_space<vmem>>, vector<1x1x1x1x16xf32>
    %428 = vector.shape_cast %427 : vector<1x1x1x1x16xf32> to vector<1x16xf32>
    %429 = vector.broadcast %428 : vector<1x16xf32> to vector<32x16xf32>
    %430 = arith.addf %426, %429 : vector<32x16xf32>
    %431 = arith.truncf %416 : vector<32x16xf32> to vector<32x16xbf16>
    %432 = vector.shape_cast %431 : vector<32x16xbf16> to vector<2x16x16xbf16>
    %433 = arith.truncf %423 : vector<32x16xf32> to vector<32x16xbf16>
    %434 = vector.shape_cast %433 : vector<32x16xbf16> to vector<2x16x16xbf16>
    %435 = arith.truncf %430 : vector<32x16xf32> to vector<32x16xbf16>
    %436 = vector.shape_cast %435 : vector<32x16xbf16> to vector<2x16x16xbf16>
    "tpu.trace_start"() <{level = 10 : i32, message = "bqc,bkc->bqk"}> : () -> ()
    %cst_360 = arith.constant dense<0.000000e+00> : vector<2x16x16xf32>
    %437 = tpu.matmul %432, %434, %cst_360 {dimension_numbers = #tpu.dot_dimension_numbers<[2], [2], [1], [1], [0, 0, 0, 1, 1, 1], [0], [0]>} : vector<2x16x16xbf16>, vector<2x16x16xbf16>, vector<2x16x16xf32> -> vector<2x16x16xf32>
    "tpu.trace_stop"() : () -> ()
    %cst_361 = arith.constant dense<0xFF800000> : vector<2x16xf32>
    %438 = vector.multi_reduction <maximumf>, %437, %cst_361 [2] : vector<2x16x16xf32> to vector<2x16xf32>
    %439 = vector.shape_cast %438 : vector<2x16xf32> to vector<2x16x1xf32>
    %440 = vector.broadcast %439 : vector<2x16x1xf32> to vector<2x16x16xf32>
    %441 = arith.subf %437, %440 : vector<2x16x16xf32>
    %442 = math.exp %441 : vector<2x16x16xf32>
    %cst_362 = arith.constant dense<0.000000e+00> : vector<2x16xf32>
    %443 = vector.multi_reduction <add>, %442, %cst_362 [2] : vector<2x16x16xf32> to vector<2x16xf32>
    %444 = vector.shape_cast %443 : vector<2x16xf32> to vector<2x16x1xf32>
    %445 = tpu.reciprocal %444 {approx = true} : vector<2x16x1xf32> -> vector<2x16x1xf32>
    %446 = vector.broadcast %445 : vector<2x16x1xf32> to vector<2x16x16xf32>
    %447 = arith.mulf %442, %446 : vector<2x16x16xf32>
    %448 = arith.truncf %447 : vector<2x16x16xf32> to vector<2x16x16xbf16>
    "tpu.trace_start"() <{level = 10 : i32, message = "bqk,bkc->bqc"}> : () -> ()
    %cst_363 = arith.constant dense<0.000000e+00> : vector<2x16x16xf32>
    %449 = tpu.matmul %448, %436, %cst_363 {dimension_numbers = #tpu.dot_dimension_numbers<[2], [1], [1], [2], [0, 0, 0, 1, 1, 2], [0], [0]>} : vector<2x16x16xbf16>, vector<2x16x16xbf16>, vector<2x16x16xf32> -> vector<2x16x16xf32>
    "tpu.trace_stop"() : () -> ()
    %450 = arith.truncf %449 : vector<2x16x16xf32> to vector<2x16x16xbf16>
    %451 = vector.shape_cast %450 : vector<2x16x16xbf16> to vector<32x16xbf16>
    %c1_364 = arith.constant 1 : index
    %c3_365 = arith.constant 3 : index
    %c0_366 = arith.constant 0 : index
    %c0_367 = arith.constant 0 : index
    %452 = vector.load %arg5[%c1_364, %c3_365, %c0_366, %c0_367] : memref<2x4x16x64xbf16, #tpu.memory_space<vmem>>, vector<1x1x16x64xbf16>
    %453 = vector.shape_cast %452 : vector<1x1x16x64xbf16> to vector<16x64xbf16>
    %cst_368 = arith.constant dense<0.000000e+00> : vector<32x64xf32>
    %454 = tpu.matmul %451, %453, %cst_368 {dimension_numbers = #tpu.dot_dimension_numbers<[1], [0], [0], [1], [0, 0, 1, 1], [], []>} : vector<32x16xbf16>, vector<16x64xbf16>, vector<32x64xf32> -> vector<32x64xf32>
    %455 = arith.addf %409, %454 : vector<32x64xf32>
    %456 = vector.extract_strided_slice %269 {offsets = [0, 0], sizes = [1, 64], strides = [1, 1]} : vector<6x64xf32> to vector<1x64xf32>
    %457 = vector.broadcast %456 : vector<1x64xf32> to vector<32x64xf32>
    %458 = arith.addf %455, %457 : vector<32x64xf32>
    %459 = arith.addf %267, %458 : vector<32x64xf32>
    %460 = vector.extract_strided_slice %269 {offsets = [1, 0], sizes = [1, 64], strides = [1, 1]} : vector<6x64xf32> to vector<1x64xf32>
    %461 = vector.extract_strided_slice %269 {offsets = [2, 0], sizes = [1, 64], strides = [1, 1]} : vector<6x64xf32> to vector<1x64xf32>
    %cst_369 = arith.constant dense<0.000000e+00> : vector<32xf32>
    %462 = vector.multi_reduction <add>, %459, %cst_369 [1] : vector<32x64xf32> to vector<32xf32>
    %463 = vector.shape_cast %462 : vector<32xf32> to vector<32x1xf32>
    %cst_370 = arith.constant 6.400000e+01 : f32
    %464 = vector.broadcast %cst_370 : f32 to vector<32x1xf32>
    %465 = arith.divf %463, %464 : vector<32x1xf32>
    %466 = vector.broadcast %465 : vector<32x1xf32> to vector<32x64xf32>
    %467 = arith.subf %459, %466 : vector<32x64xf32>
    %468 = arith.mulf %467, %467 : vector<32x64xf32>
    %cst_371 = arith.constant dense<0.000000e+00> : vector<32xf32>
    %469 = vector.multi_reduction <add>, %468, %cst_371 [1] : vector<32x64xf32> to vector<32xf32>
    %470 = vector.shape_cast %469 : vector<32xf32> to vector<32x1xf32>
    %cst_372 = arith.constant 6.400000e+01 : f32
    %471 = vector.broadcast %cst_372 : f32 to vector<32x1xf32>
    %472 = arith.divf %470, %471 : vector<32x1xf32>
    %473 = vector.broadcast %465 : vector<32x1xf32> to vector<32x64xf32>
    %474 = arith.subf %459, %473 : vector<32x64xf32>
    %cst_373 = arith.constant 9.99999974E-6 : f32
    %475 = vector.broadcast %cst_373 : f32 to vector<32x1xf32>
    %476 = arith.addf %472, %475 : vector<32x1xf32>
    %477 = math.rsqrt %476 : vector<32x1xf32>
    %478 = vector.broadcast %477 : vector<32x1xf32> to vector<32x64xf32>
    %479 = arith.mulf %474, %478 : vector<32x64xf32>
    %480 = vector.broadcast %460 : vector<1x64xf32> to vector<32x64xf32>
    %481 = arith.mulf %479, %480 : vector<32x64xf32>
    %482 = vector.broadcast %461 : vector<1x64xf32> to vector<32x64xf32>
    %483 = arith.addf %481, %482 : vector<32x64xf32>
    %484 = arith.truncf %483 : vector<32x64xf32> to vector<32x64xbf16>
    %c1_374 = arith.constant 1 : index
    %c0_375 = arith.constant 0 : index
    %c0_376 = arith.constant 0 : index
    %485 = vector.load %arg6[%c1_374, %c0_375, %c0_376] : memref<2x64x128xbf16, #tpu.memory_space<vmem>>, vector<1x64x128xbf16>
    %486 = vector.shape_cast %485 : vector<1x64x128xbf16> to vector<64x128xbf16>
    %cst_377 = arith.constant dense<0.000000e+00> : vector<32x128xf32>
    %487 = tpu.matmul %484, %486, %cst_377 {dimension_numbers = #tpu.dot_dimension_numbers<[1], [0], [0], [1], [0, 0, 1, 1], [], []>} : vector<32x64xbf16>, vector<64x128xbf16>, vector<32x128xf32> -> vector<32x128xf32>
    %c1_378 = arith.constant 1 : index
    %c0_379 = arith.constant 0 : index
    %c0_380 = arith.constant 0 : index
    %488 = vector.load %arg7[%c1_378, %c0_379, %c0_380] : memref<2x1x128xf32, #tpu.memory_space<vmem>>, vector<1x1x128xf32>
    %489 = vector.shape_cast %488 : vector<1x1x128xf32> to vector<1x128xf32>
    %490 = vector.broadcast %489 : vector<1x128xf32> to vector<32x128xf32>
    %491 = arith.addf %487, %490 : vector<32x128xf32>
    %cst_381 = arith.constant 0.000000e+00 : f32
    %492 = vector.broadcast %cst_381 : f32 to vector<32x128xf32>
    %493 = arith.maximumf %491, %492 : vector<32x128xf32>
    %494 = arith.truncf %493 : vector<32x128xf32> to vector<32x128xbf16>
    %c1_382 = arith.constant 1 : index
    %c0_383 = arith.constant 0 : index
    %c0_384 = arith.constant 0 : index
    %495 = vector.load %arg8[%c1_382, %c0_383, %c0_384] : memref<2x128x64xbf16, #tpu.memory_space<vmem>>, vector<1x128x64xbf16>
    %496 = vector.shape_cast %495 : vector<1x128x64xbf16> to vector<128x64xbf16>
    %cst_385 = arith.constant dense<0.000000e+00> : vector<32x64xf32>
    %497 = tpu.matmul %494, %496, %cst_385 {dimension_numbers = #tpu.dot_dimension_numbers<[1], [0], [0], [1], [0, 0, 1, 1], [], []>} : vector<32x128xbf16>, vector<128x64xbf16>, vector<32x64xf32> -> vector<32x64xf32>
    %498 = vector.extract_strided_slice %269 {offsets = [3, 0], sizes = [1, 64], strides = [1, 1]} : vector<6x64xf32> to vector<1x64xf32>
    %499 = vector.broadcast %498 : vector<1x64xf32> to vector<32x64xf32>
    %500 = arith.addf %497, %499 : vector<32x64xf32>
    %501 = arith.addf %483, %500 : vector<32x64xf32>
    %502 = vector.extract_strided_slice %269 {offsets = [4, 0], sizes = [1, 64], strides = [1, 1]} : vector<6x64xf32> to vector<1x64xf32>
    %503 = vector.extract_strided_slice %269 {offsets = [5, 0], sizes = [1, 64], strides = [1, 1]} : vector<6x64xf32> to vector<1x64xf32>
    %cst_386 = arith.constant dense<0.000000e+00> : vector<32xf32>
    %504 = vector.multi_reduction <add>, %501, %cst_386 [1] : vector<32x64xf32> to vector<32xf32>
    %505 = vector.shape_cast %504 : vector<32xf32> to vector<32x1xf32>
    %cst_387 = arith.constant 6.400000e+01 : f32
    %506 = vector.broadcast %cst_387 : f32 to vector<32x1xf32>
    %507 = arith.divf %505, %506 : vector<32x1xf32>
    %508 = vector.broadcast %507 : vector<32x1xf32> to vector<32x64xf32>
    %509 = arith.subf %501, %508 : vector<32x64xf32>
    %510 = arith.mulf %509, %509 : vector<32x64xf32>
    %cst_388 = arith.constant dense<0.000000e+00> : vector<32xf32>
    %511 = vector.multi_reduction <add>, %510, %cst_388 [1] : vector<32x64xf32> to vector<32xf32>
    %512 = vector.shape_cast %511 : vector<32xf32> to vector<32x1xf32>
    %cst_389 = arith.constant 6.400000e+01 : f32
    %513 = vector.broadcast %cst_389 : f32 to vector<32x1xf32>
    %514 = arith.divf %512, %513 : vector<32x1xf32>
    %515 = vector.broadcast %507 : vector<32x1xf32> to vector<32x64xf32>
    %516 = arith.subf %501, %515 : vector<32x64xf32>
    %cst_390 = arith.constant 9.99999974E-6 : f32
    %517 = vector.broadcast %cst_390 : f32 to vector<32x1xf32>
    %518 = arith.addf %514, %517 : vector<32x1xf32>
    %519 = math.rsqrt %518 : vector<32x1xf32>
    %520 = vector.broadcast %519 : vector<32x1xf32> to vector<32x64xf32>
    %521 = arith.mulf %516, %520 : vector<32x64xf32>
    %522 = vector.broadcast %502 : vector<1x64xf32> to vector<32x64xf32>
    %523 = arith.mulf %521, %522 : vector<32x64xf32>
    %524 = vector.broadcast %503 : vector<1x64xf32> to vector<32x64xf32>
    %525 = arith.addf %523, %524 : vector<32x64xf32>
    %c0_391 = arith.constant 0 : index
    %c0_392 = arith.constant 0 : index
    %526 = vector.load %arg10[%c0_391, %c0_392] : memref<1x64xf32, #tpu.memory_space<vmem>>, vector<1x64xf32>
    %c0_393 = arith.constant 0 : index
    %c0_394 = arith.constant 0 : index
    %527 = vector.load %arg11[%c0_393, %c0_394] : memref<1x64xf32, #tpu.memory_space<vmem>>, vector<1x64xf32>
    %cst_395 = arith.constant dense<0.000000e+00> : vector<32xf32>
    %528 = vector.multi_reduction <add>, %525, %cst_395 [1] : vector<32x64xf32> to vector<32xf32>
    %529 = vector.shape_cast %528 : vector<32xf32> to vector<32x1xf32>
    %cst_396 = arith.constant 6.400000e+01 : f32
    %530 = vector.broadcast %cst_396 : f32 to vector<32x1xf32>
    %531 = arith.divf %529, %530 : vector<32x1xf32>
    %532 = vector.broadcast %531 : vector<32x1xf32> to vector<32x64xf32>
    %533 = arith.subf %525, %532 : vector<32x64xf32>
    %534 = arith.mulf %533, %533 : vector<32x64xf32>
    %cst_397 = arith.constant dense<0.000000e+00> : vector<32xf32>
    %535 = vector.multi_reduction <add>, %534, %cst_397 [1] : vector<32x64xf32> to vector<32xf32>
    %536 = vector.shape_cast %535 : vector<32xf32> to vector<32x1xf32>
    %cst_398 = arith.constant 6.400000e+01 : f32
    %537 = vector.broadcast %cst_398 : f32 to vector<32x1xf32>
    %538 = arith.divf %536, %537 : vector<32x1xf32>
    %539 = vector.broadcast %531 : vector<32x1xf32> to vector<32x64xf32>
    %540 = arith.subf %525, %539 : vector<32x64xf32>
    %cst_399 = arith.constant 9.99999974E-6 : f32
    %541 = vector.broadcast %cst_399 : f32 to vector<32x1xf32>
    %542 = arith.addf %538, %541 : vector<32x1xf32>
    %543 = math.rsqrt %542 : vector<32x1xf32>
    %544 = vector.broadcast %543 : vector<32x1xf32> to vector<32x64xf32>
    %545 = arith.mulf %540, %544 : vector<32x64xf32>
    %546 = vector.broadcast %526 : vector<1x64xf32> to vector<32x64xf32>
    %547 = arith.mulf %545, %546 : vector<32x64xf32>
    %548 = vector.broadcast %527 : vector<1x64xf32> to vector<32x64xf32>
    %549 = arith.addf %547, %548 : vector<32x64xf32>
    %550 = arith.truncf %549 : vector<32x64xf32> to vector<32x64xbf16>
    %c0_400 = arith.constant 0 : index
    %c0_401 = arith.constant 0 : index
    %551 = vector.load %arg12[%c0_400, %c0_401] : memref<64x32xbf16, #tpu.memory_space<vmem>>, vector<64x32xbf16>
    %cst_402 = arith.constant dense<0.000000e+00> : vector<32x32xf32>
    %552 = tpu.matmul %550, %551, %cst_402 {dimension_numbers = #tpu.dot_dimension_numbers<[1], [0], [0], [1], [0, 0, 1, 1], [], []>} : vector<32x64xbf16>, vector<64x32xbf16>, vector<32x32xf32> -> vector<32x32xf32>
    %c0_403 = arith.constant 0 : index
    %c0_404 = arith.constant 0 : index
    %553 = vector.load %arg13[%c0_403, %c0_404] : memref<1x32xf32, #tpu.memory_space<vmem>>, vector<1x32xf32>
    %554 = vector.broadcast %553 : vector<1x32xf32> to vector<32x32xf32>
    %555 = arith.addf %552, %554 : vector<32x32xf32>
    %556 = vector.shape_cast %555 : vector<32x32xf32> to vector<2x16x32xf32>
    %c0_405 = arith.constant 0 : index
    %c0_406 = arith.constant 0 : index
    %c0_407 = arith.constant 0 : index
    %557 = vector.load %arg14[%c0_405, %c0_406, %c0_407] : memref<2x16x32xf32, #tpu.memory_space<vmem>>, vector<2x16x32xf32>
    tpu.vector_store %arg14[%c0_405, %c0_406, %c0_407], %556 {strides = array<i32>} : memref<2x16x32xf32, #tpu.memory_space<vmem>>, vector<2x16x32xf32>,
    return
  }
}

</mosaic_0001>

<llo_original>
// kernel: tpu_custom_call.1
$region0: #{tpu_custom_call.1}
  #allocation0 [shape = 'u32[]', space=smem, size = 0x4, offset = 0x4, fixed_abs, tag = 'smem constant byte address 0x4 - core index']
  #allocation1 [shape = 'u32[144,128]{1,0:T(1,128)}', space=vmem, size = 0x12000, scoped, tag = 'internal scratch']
  %s0 = inlined_call_operand.vmem [shape: bf16[2,16,16], index: 0, kind: input, shape index: {}]
  %s1 = inlined_call_operand.vmem [shape: bf16[16,64], index: 1, kind: input, shape index: {}]
  %s2 = inlined_call_operand.vmem [shape: f32[16,64], index: 2, kind: input, shape index: {}]
  %s3 = inlined_call_operand.vmem [shape: bf16[2,3,4,64,16], index: 3, kind: input, shape index: {}]
  %s4 = inlined_call_operand.vmem [shape: f32[2,3,4,1,16], index: 4, kind: input, shape index: {}]
  %s5 = inlined_call_operand.vmem [shape: bf16[2,4,16,64], index: 5, kind: input, shape index: {}]
  %s6 = inlined_call_operand.vmem [shape: bf16[2,64,128], index: 6, kind: input, shape index: {}]
  %s7 = inlined_call_operand.vmem [shape: f32[2,1,128], index: 7, kind: input, shape index: {}]
  %s8 = inlined_call_operand.vmem [shape: bf16[2,128,64], index: 8, kind: input, shape index: {}]
  %s9 = inlined_call_operand.vmem [shape: f32[2,6,64], index: 9, kind: input, shape index: {}]
  %s10 = inlined_call_operand.vmem [shape: f32[1,64], index: 10, kind: input, shape index: {}]
  %s11 = inlined_call_operand.vmem [shape: f32[1,64], index: 11, kind: input, shape index: {}]
  %s12 = inlined_call_operand.vmem [shape: bf16[64,32], index: 12, kind: input, shape index: {}]
  %s13 = inlined_call_operand.vmem [shape: f32[1,32], index: 13, kind: input, shape index: {}]
  %s14 = inlined_call_operand.hbm [shape: f32[2,16,32], index: 14, kind: output, shape index: {}]
  %s15 = sld [smem:[#allocation0]]
  $region66: #{tpu_custom_call.1} parent=0
    _
  %s17 = ssub.s32 1, %s15
  %s18 = scalar_select 0, %s17, %s15
  $region1: #{tpu_custom_call.1} parent=0
    #allocation2 [shape = 'u8[16384]{0}', space=vmem, size = 0x4000, scoped, tag = 'output window, operand 0, single buffered']
    #allocation3 [shape = 's32[1]{0}', space=sflag, size = 0x4, scoped, tag = 'scoped memory for tpu_custom_call.1']
    %19 = vsyncpa [#allocation3], 0
    // Predicated region
    $region2: #{tpu_custom_call.1} parent=1 // pred_check
      _
    $region3: #{tpu_custom_call.1} parent=1 // pred_check_branch
      %21 = sbr.rel (0) target = $region5
    $region4: #{tpu_custom_call.1} parent=1 // pred_region
      _
    $region5: #{tpu_custom_call.1} parent=1 // pred_fallthru
      _
    // Predicated region
    $region6: #{tpu_custom_call.1} parent=1 // pred_check
      _
    $region7: #{tpu_custom_call.1} parent=1 // pred_check_branch
      %23 = sbr.rel (0) target = $region9
    $region8: #{tpu_custom_call.1} parent=1 // pred_region
      _
    $region9: #{tpu_custom_call.1} parent=1 // pred_fallthru
      _
    // Predicated region
    $region10: #{tpu_custom_call.1} parent=1 // pred_check
      _
    $region11: #{tpu_custom_call.1} parent=1 // pred_check_branch
      %25 = sbr.rel (0) target = $region13
    $region12: #{tpu_custom_call.1} parent=1 // pred_region
      _
    $region13: #{tpu_custom_call.1} parent=1 // pred_fallthru
      _
    // Predicated region
    $region14: #{tpu_custom_call.1} parent=1 // pred_check
      _
    $region15: #{tpu_custom_call.1} parent=1 // pred_check_branch
      %27 = sbr.rel (0) target = $region17
    $region16: #{tpu_custom_call.1} parent=1 // pred_region
      _
    $region17: #{tpu_custom_call.1} parent=1 // pred_fallthru
      _
    // Predicated region
    $region18: #{tpu_custom_call.1} parent=1 // pred_check
      _
    $region19: #{tpu_custom_call.1} parent=1 // pred_check_branch
      %29 = sbr.rel (0) target = $region21
    $region20: #{tpu_custom_call.1} parent=1 // pred_region
      _
    $region21: #{tpu_custom_call.1} parent=1 // pred_fallthru
      _
    // Predicated region
    $region22: #{tpu_custom_call.1} parent=1 // pred_check
      _
    $region23: #{tpu_custom_call.1} parent=1 // pred_check_branch
      %31 = sbr.rel (0) target = $region25
    $region24: #{tpu_custom_call.1} parent=1 // pred_region
      _
    $region25: #{tpu_custom_call.1} parent=1 // pred_fallthru
      _
    // Predicated region
    $region26: #{tpu_custom_call.1} parent=1 // pred_check
      _
    $region27: #{tpu_custom_call.1} parent=1 // pred_check_branch
      %33 = sbr.rel (0) target = $region29
    $region28: #{tpu_custom_call.1} parent=1 // pred_region
      _
    $region29: #{tpu_custom_call.1} parent=1 // pred_fallthru
      _
    // Predicated region
    $region30: #{tpu_custom_call.1} parent=1 // pred_check
      _
    $region31: #{tpu_custom_call.1} parent=1 // pred_check_branch
      %35 = sbr.rel (0) target = $region33
    $region32: #{tpu_custom_call.1} parent=1 // pred_region
      _
    $region33: #{tpu_custom_call.1} parent=1 // pred_fallthru
      _
    // Predicated region
    $region34: #{tpu_custom_call.1} parent=1 // pred_check
      _
    $region35: #{tpu_custom_call.1} parent=1 // pred_check_branch
      %37 = sbr.rel (0) target = $region37
    $region36: #{tpu_custom_call.1} parent=1 // pred_region
      _
    $region37: #{tpu_custom_call.1} parent=1 // pred_fallthru
      _
    // Predicated region
    $region38: #{tpu_custom_call.1} parent=1 // pred_check
      _
    $region39: #{tpu_custom_call.1} parent=1 // pred_check_branch
      %39 = sbr.rel (0) target = $region41
    $region40: #{tpu_custom_call.1} parent=1 // pred_region
      _
    $region41: #{tpu_custom_call.1} parent=1 // pred_fallthru
      _
    // Predicated region
    $region42: #{tpu_custom_call.1} parent=1 // pred_check
      _
    $region43: #{tpu_custom_call.1} parent=1 // pred_check_branch
      %41 = sbr.rel (0) target = $region45
    $region44: #{tpu_custom_call.1} parent=1 // pred_region
      _
    $region45: #{tpu_custom_call.1} parent=1 // pred_fallthru
      _
    // Predicated region
    $region46: #{tpu_custom_call.1} parent=1 // pred_check
      _
    $region47: #{tpu_custom_call.1} parent=1 // pred_check_branch
      %43 = sbr.rel (0) target = $region49
    $region48: #{tpu_custom_call.1} parent=1 // pred_region
      _
    $region49: #{tpu_custom_call.1} parent=1 // pred_fallthru
      _
    // Predicated region
    $region50: #{tpu_custom_call.1} parent=1 // pred_check
      _
    $region51: #{tpu_custom_call.1} parent=1 // pred_check_branch
      %45 = sbr.rel (0) target = $region53
    $region52: #{tpu_custom_call.1} parent=1 // pred_region
      _
    $region53: #{tpu_custom_call.1} parent=1 // pred_fallthru
      _
    // Predicated region
    $region54: #{tpu_custom_call.1} parent=1 // pred_check
      _
    $region55: #{tpu_custom_call.1} parent=1 // pred_check_branch
      %47 = sbr.rel (0) target = $region57
    $region56: #{tpu_custom_call.1} parent=1 // pred_region
      _
    $region57: #{tpu_custom_call.1} parent=1 // pred_fallthru
      _
    %v49 = vld [vmem:[%s0] sm:$0xf]
    %v50 = vld [vmem:[%s0 + $0x4] sm:$0xf]
    %v51 = vld [vmem:[%s0 + $0x8] sm:$0xf]
    %v52 = vld [vmem:[%s0 + $0xc] sm:$0xf]
    %v53 = vld [vmem:[%s1] sm:$0xf]
    %v54 = vld [vmem:[%s1 + $0x4] sm:$0xf]
    %v59 = vunpack.c.l.b16 %v49
    %v60 = vunpack.c.l.b16 %v50
    %v61 = vunpack.c.l.b16 %v51
    %v62 = vunpack.c.l.b16 %v52
    %v63 = vpack.c.b16 %v60, %v59
    %v64 = vpack.c.b16 %v62, %v61
    %v67 = vunpack.c.l.b16 %v53
    %v68 = vunpack.c.l.b16 %v54
    %v69 = vpack.c.b16 %v68, %v67
    %vm71 = vcmask 130048
    %v73 = vsel %vm71, %v63, 0
    %v76 = vsel %vm71, %v64, 0
    %78 = vmatprep.subr.bf16.mxu0 0
    %79 = vmatpush1.bf16.msra.mxu0 %v69
    %80 = vmatprep.subr.bf16.mxu0 0
    %81 = vmatpush1.bf16.msra.mxu0 0
    %82 = vmatprep.subr.bf16.mxu0 0
    %83 = vmatpush1.bf16.msra.mxu0 0
    %84 = vmatprep.subr.bf16.mxu0 0
    %85 = vmatpush1.bf16.msra.mxu0 0
    %86 = vmatprep.subr.bf16.mxu0 0
    %87 = vmatpush1.bf16.msra.mxu0 0
    %88 = vmatprep.subr.bf16.mxu0 0
    %89 = vmatpush1.bf16.msra.mxu0 0
    %90 = vmatprep.subr.bf16.mxu0 0
    %91 = vmatpush1.bf16.msra.mxu0 0
    %92 = vmatprep.subr.bf16.mxu0 0
    %93 = vmatpush1.bf16.msra.mxu0 0
    %94 = vmatprep.subr.bf16.mxu0 0
    %95 = vmatpush1.bf16.msra.mxu0 0
    %96 = vmatprep.subr.bf16.mxu0 0
    %97 = vmatpush1.bf16.msra.mxu0 0
    %98 = vmatprep.subr.bf16.mxu0 0
    %99 = vmatpush1.bf16.msra.mxu0 0
    %100 = vmatprep.subr.bf16.mxu0 0
    %101 = vmatpush1.bf16.msra.mxu0 0
    %102 = vmatprep.subr.bf16.mxu0 0
    %103 = vmatpush1.bf16.msra.mxu0 0
    %104 = vmatprep.subr.bf16.mxu0 0
    %105 = vmatpush1.bf16.msra.mxu0 0
    %106 = vmatprep.subr.bf16.mxu0 0
    %107 = vmatpush1.bf16.msra.mxu0 0
    %108 = vmatprep.subr.bf16.mxu0 0
    %109 = vmatpush1.bf16.msra.mxu0 0
    %110 = vmatprep.mubr.bf16.mxu0 0
    %111 = vmatmul.mubr.bf16.gmra.mrb[0].mxu0 %v73
    %v112 = vpop.f32.mrb[0].mxu0
    %v113 = vadd.f32 0.0, %v112
    %v114 = vpop.f32.mrb[0].mxu0
    %v115 = vpop.f32.mrb[0].mxu0
    %v116 = vadd.f32 0.0, %v115
    %v117 = vpop.f32.mrb[0].mxu0
    %118 = vmatprep.mubr.bf16.mxu0 0
    %119 = vmatmul.mubr.bf16.gmra.mrb[0].mxu0 %v76
    %v120 = vpop.f32.mrb[0].mxu0
    %v121 = vadd.f32 0.0, %v120
    %v122 = vpop.f32.mrb[0].mxu0
    %v123 = vpop.f32.mrb[0].mxu0
    %v124 = vadd.f32 0.0, %v123
    %v125 = vpop.f32.mrb[0].mxu0
    %126 = vdwg.mxu0
    %v127 = vld [vmem:[%s2] sm:$0xff]
    %v128 = vld [vmem:[%s2 + $0x8] sm:$0xff]
    %v129 = vadd.f32 %v113, %v127
    %v130 = vadd.f32 %v116, %v128
    %v131 = vadd.f32 %v121, %v127
    %v132 = vadd.f32 %v124, %v128
    %v133 = vld [vmem:[%s9] sm:$0x3f]
    %v134 = vpack.c.bf16 %v130, %v129
    %v135 = vpack.c.bf16 %v132, %v131
    %v136 = vld [vmem:[%s3] sm:$0xf]
    %v137 = vld [vmem:[%s3 + $0x4] sm:$0xf]
    %v138 = vld [vmem:[%s3 + $0x8] sm:$0xf]
    %v139 = vld [vmem:[%s3 + $0xc] sm:$0xf]
    %v140 = vld [vmem:[%s3 + $0x10] sm:$0xf]
    %v141 = vld [vmem:[%s3 + $0x14] sm:$0xf]
    %v142 = vld [vmem:[%s3 + $0x18] sm:$0xf]
    %v143 = vld [vmem:[%s3 + $0x1c] sm:$0xf]
    %v144 = vld [vmem:[%s4] sm:$0x1]
    %v146 = vlaneseq
    %v147 = vshrl.u32 %v146, 7
    %v148 = vsub.s32 0, %v147
    %v149 = vrot.slane %v144, %v148
    %v159 = vunpack.c.l.b16 %v136
    %v160 = vunpack.c.l.b16 %v137
    %v161 = vunpack.c.l.b16 %v138
    %v162 = vunpack.c.l.b16 %v139
    %v163 = vunpack.c.l.b16 %v140
    %v164 = vunpack.c.l.b16 %v141
    %v165 = vunpack.c.l.b16 %v142
    %v166 = vunpack.c.l.b16 %v143
    %v167 = vpack.c.b16 %v160, %v159
    %v168 = vpack.c.b16 %v162, %v161
    %v169 = vpack.c.b16 %v164, %v163
    %v170 = vpack.c.b16 %v166, %v165
    %vm175 = vcmask 523264
    %v177 = vsel %vm175, %v134, 0
    %v180 = vsel %vm175, %v135, 0
    %182 = vmatprep.subr.bf16.mxu0 0
    %183 = vmatpush1.bf16.msra.mxu0 %v167
    %184 = vmatprep.subr.bf16.mxu0 0
    %185 = vmatpush1.bf16.msra.mxu0 %v168
    %186 = vmatprep.subr.bf16.mxu0 0
    %187 = vmatpush1.bf16.msra.mxu0 %v169
    %188 = vmatprep.subr.bf16.mxu0 0
    %189 = vmatpush1.bf16.msra.mxu0 %v170
    %190 = vmatprep.subr.bf16.mxu0 0
    %191 = vmatpush1.bf16.msra.mxu0 0
    %192 = vmatprep.subr.bf16.mxu0 0
    %193 = vmatpush1.bf16.msra.mxu0 0
    %194 = vmatprep.subr.bf16.mxu0 0
    %195 = vmatpush1.bf16.msra.mxu0 0
    %196 = vmatprep.subr.bf16.mxu0 0
    %197 = vmatpush1.bf16.msra.mxu0 0
    %198 = vmatprep.subr.bf16.mxu0 0
    %199 = vmatpush1.bf16.msra.mxu0 0
    %200 = vmatprep.subr.bf16.mxu0 0
    %201 = vmatpush1.bf16.msra.mxu0 0
    %202 = vmatprep.subr.bf16.mxu0 0
    %203 = vmatpush1.bf16.msra.mxu0 0
    %204 = vmatprep.subr.bf16.mxu0 0
    %205 = vmatpush1.bf16.msra.mxu0 0
    %206 = vmatprep.subr.bf16.mxu0 0
    %207 = vmatpush1.bf16.msra.mxu0 0
    %208 = vmatprep.subr.bf16.mxu0 0
    %209 = vmatpush1.bf16.msra.mxu0 0
    %210 = vmatprep.subr.bf16.mxu0 0
    %211 = vmatpush1.bf16.msra.mxu0 0
    %212 = vmatprep.subr.bf16.mxu0 0
    %213 = vmatpush1.bf16.msra.mxu0 0
    %214 = vmatprep.mubr.bf16.mxu0 0
    %215 = vmatmul.mubr.bf16.gmra.mrb[0].mxu0 %v177
    %v216 = vpop.f32.mrb[0].mxu0
    %v217 = vadd.f32 %v149, %v216
    %v218 = vpop.f32.mrb[0].mxu0
    %v219 = vpop.f32.mrb[0].mxu0
    %v220 = vadd.f32 %v149, %v219
    %v221 = vpop.f32.mrb[0].mxu0
    %222 = vmatprep.mubr.bf16.mxu0 0
    %223 = vmatmul.mubr.bf16.gmra.mrb[0].mxu0 %v180
    %v224 = vpop.f32.mrb[0].mxu0
    %v225 = vadd.f32 %v149, %v224
    %v226 = vpop.f32.mrb[0].mxu0
    %v227 = vpop.f32.mrb[0].mxu0
    %v228 = vadd.f32 %v149, %v227
    %v229 = vpop.f32.mrb[0].mxu0
    %230 = vdwg.mxu0
    %s231 = scalar_lea.vmem %s3, 128
    %v232 = vld [vmem:[%s231] sm:$0xf]
    %v233 = vld [vmem:[%s231 + $0x4] sm:$0xf]
    %v234 = vld [vmem:[%s231 + $0x8] sm:$0xf]
    %v235 = vld [vmem:[%s231 + $0xc] sm:$0xf]
    %v236 = vld [vmem:[%s231 + $0x10] sm:$0xf]
    %v237 = vld [vmem:[%s231 + $0x14] sm:$0xf]
    %v238 = vld [vmem:[%s231 + $0x18] sm:$0xf]
    %v239 = vld [vmem:[%s231 + $0x1c] sm:$0xf]
    %s240 = scalar_lea.vmem %s4, 4
    %v241 = vld [vmem:[%s240] sm:$0x1]
    %v243 = vlaneseq
    %v244 = vshrl.u32 %v243, 7
    %v245 = vsub.s32 0, %v244
    %v246 = vrot.slane %v241, %v245
    %v256 = vunpack.c.l.b16 %v232
    %v257 = vunpack.c.l.b16 %v233
    %v258 = vunpack.c.l.b16 %v234
    %v259 = vunpack.c.l.b16 %v235
    %v260 = vunpack.c.l.b16 %v236
    %v261 = vunpack.c.l.b16 %v237
    %v262 = vunpack.c.l.b16 %v238
    %v263 = vunpack.c.l.b16 %v239
    %v264 = vpack.c.b16 %v257, %v256
    %v265 = vpack.c.b16 %v259, %v258
    %v266 = vpack.c.b16 %v261, %v260
    %v267 = vpack.c.b16 %v263, %v262
    %272 = vmatprep.subr.bf16.mxu0 0
    %273 = vmatpush1.bf16.msra.mxu0 %v264
    %274 = vmatprep.subr.bf16.mxu0 0
    %275 = vmatpush1.bf16.msra.mxu0 %v265
    %276 = vmatprep.subr.bf16.mxu0 0
    %277 = vmatpush1.bf16.msra.mxu0 %v266
    %278 = vmatprep.subr.bf16.mxu0 0
    %279 = vmatpush1.bf16.msra.mxu0 %v267
    %280 = vmatprep.subr.bf16.mxu0 0
    %281 = vmatpush1.bf16.msra.mxu0 0
    %282 = vmatprep.subr.bf16.mxu0 0
    %283 = vmatpush1.bf16.msra.mxu0 0
    %284 = vmatprep.subr.bf16.mxu0 0
    %285 = vmatpush1.bf16.msra.mxu0 0
    %286 = vmatprep.subr.bf16.mxu0 0
    %287 = vmatpush1.bf16.msra.mxu0 0
    %288 = vmatprep.subr.bf16.mxu0 0
    %289 = vmatpush1.bf16.msra.mxu0 0
    %290 = vmatprep.subr.bf16.mxu0 0
    %291 = vmatpush1.bf16.msra.mxu0 0
    %292 = vmatprep.subr.bf16.mxu0 0
    %293 = vmatpush1.bf16.msra.mxu0 0
    %294 = vmatprep.subr.bf16.mxu0 0
    %295 = vmatpush1.bf16.msra.mxu0 0
    %296 = vmatprep.subr.bf16.mxu0 0
    %297 = vmatpush1.bf16.msra.mxu0 0
    %298 = vmatprep.subr.bf16.mxu0 0
    %299 = vmatpush1.bf16.msra.mxu0 0
    %300 = vmatprep.subr.bf16.mxu0 0
    %301 = vmatpush1.bf16.msra.mxu0 0
    %302 = vmatprep.subr.bf16.mxu0 0
    %303 = vmatpush1.bf16.msra.mxu0 0
    %304 = vmatprep.mubr.bf16.mxu0 0
    %305 = vmatmul.mubr.bf16.gmra.mrb[0].mxu0 %v177
    %v306 = vpop.f32.mrb[0].mxu0
    %v307 = vadd.f32 %v246, %v306
    %v308 = vpop.f32.mrb[0].mxu0
    %v309 = vpop.f32.mrb[0].mxu0
    %v310 = vadd.f32 %v246, %v309
    %v311 = vpop.f32.mrb[0].mxu0
    %312 = vmatprep.mubr.bf16.mxu0 0
    %313 = vmatmul.mubr.bf16.gmra.mrb[0].mxu0 %v180
    %v314 = vpop.f32.mrb[0].mxu0
    %v315 = vadd.f32 %v246, %v314
    %v316 = vpop.f32.mrb[0].mxu0
    %v317 = vpop.f32.mrb[0].mxu0
    %v318 = vadd.f32 %v246, %v317
    %v319 = vpop.f32.mrb[0].mxu0
    %320 = vdwg.mxu0
    %s321 = scalar_lea.vmem %s3, 256
    %v322 = vld [vmem:[%s321] sm:$0xf]
    %v323 = vld [vmem:[%s321 + $0x4] sm:$0xf]
    %v324 = vld [vmem:[%s321 + $0x8] sm:$0xf]
    %v325 = vld [vmem:[%s321 + $0xc] sm:$0xf]
    %v326 = vld [vmem:[%s321 + $0x10] sm:$0xf]
    %v327 = vld [vmem:[%s321 + $0x14] sm:$0xf]
    %v328 = vld [vmem:[%s321 + $0x18] sm:$0xf]
    %v329 = vld [vmem:[%s321 + $0x1c] sm:$0xf]
    %s330 = scalar_lea.vmem %s4, 8
    %v331 = vld [vmem:[%s330] sm:$0x1]
    %v333 = vlaneseq
    %v334 = vshrl.u32 %v333, 7
    %v335 = vsub.s32 0, %v334
    %v336 = vrot.slane %v331, %v335
    %v346 = vunpack.c.l.b16 %v322
    %v347 = vunpack.c.l.b16 %v323
    %v348 = vunpack.c.l.b16 %v324
    %v349 = vunpack.c.l.b16 %v325
    %v350 = vunpack.c.l.b16 %v326
    %v351 = vunpack.c.l.b16 %v327
    %v352 = vunpack.c.l.b16 %v328
    %v353 = vunpack.c.l.b16 %v329
    %v354 = vpack.c.b16 %v347, %v346
    %v355 = vpack.c.b16 %v349, %v348
    %v356 = vpack.c.b16 %v351, %v350
    %v357 = vpack.c.b16 %v353, %v352
    %362 = vmatprep.subr.bf16.mxu0 0
    %363 = vmatpush1.bf16.msra.mxu0 %v354
    %364 = vmatprep.subr.bf16.mxu0 0
    %365 = vmatpush1.bf16.msra.mxu0 %v355
    %366 = vmatprep.subr.bf16.mxu0 0
    %367 = vmatpush1.bf16.msra.mxu0 %v356
    %368 = vmatprep.subr.bf16.mxu0 0
    %369 = vmatpush1.bf16.msra.mxu0 %v357
    %370 = vmatprep.subr.bf16.mxu0 0
    %371 = vmatpush1.bf16.msra.mxu0 0
    %372 = vmatprep.subr.bf16.mxu0 0
    %373 = vmatpush1.bf16.msra.mxu0 0
    %374 = vmatprep.subr.bf16.mxu0 0
    %375 = vmatpush1.bf16.msra.mxu0 0
    %376 = vmatprep.subr.bf16.mxu0 0
    %377 = vmatpush1.bf16.msra.mxu0 0
    %378 = vmatprep.subr.bf16.mxu0 0
    %379 = vmatpush1.bf16.msra.mxu0 0
    %380 = vmatprep.subr.bf16.mxu0 0
    %381 = vmatpush1.bf16.msra.mxu0 0
    %382 = vmatprep.subr.bf16.mxu0 0
    %383 = vmatpush1.bf16.msra.mxu0 0
    %384 = vmatprep.subr.bf16.mxu0 0
    %385 = vmatpush1.bf16.msra.mxu0 0
    %386 = vmatprep.subr.bf16.mxu0 0
    %387 = vmatpush1.bf16.msra.mxu0 0
    %388 = vmatprep.subr.bf16.mxu0 0
    %389 = vmatpush1.bf16.msra.mxu0 0
    %390 = vmatprep.subr.bf16.mxu0 0
    %391 = vmatpush1.bf16.msra.mxu0 0
    %392 = vmatprep.subr.bf16.mxu0 0
    %393 = vmatpush1.bf16.msra.mxu0 0
    %394 = vmatprep.mubr.bf16.mxu0 0
    %395 = vmatmul.mubr.bf16.gmra.mrb[0].mxu0 %v177
    %v396 = vpop.f32.mrb[0].mxu0
    %v397 = vadd.f32 %v336, %v396
    %v398 = vpop.f32.mrb[0].mxu0
    %v399 = vpop.f32.mrb[0].mxu0
    %v400 = vadd.f32 %v336, %v399
    %v401 = vpop.f32.mrb[0].mxu0
    %402 = vmatprep.mubr.bf16.mxu0 0
    %403 = vmatmul.mubr.bf16.gmra.mrb[0].mxu0 %v180
    %v404 = vpop.f32.mrb[0].mxu0
    %v405 = vadd.f32 %v336, %v404
    %v406 = vpop.f32.mrb[0].mxu0
    %v407 = vpop.f32.mrb[0].mxu0
    %v408 = vadd.f32 %v336, %v407
    %v409 = vpop.f32.mrb[0].mxu0
    %410 = vdwg.mxu0
    %v411 = vpack.c.bf16 %v220, %v217
    %v412 = vpack.c.bf16 %v228, %v225
    %v413 = vpack.c.bf16 %v310, %v307
    %v414 = vpack.c.bf16 %v318, %v315
    %v415 = vpack.c.bf16 %v400, %v397
    %v416 = vpack.c.bf16 %v408, %v405
    %v418 = vsel %vm71, %v411, 0
    %v421 = vsel %vm71, %v413, 0
    %423 = vmatprep.subr.bf16.mxu0 0
    %424 = vmatpush1.bf16.xpose.msra.mxu0 %v421
    %425 = vmatprep.subr.bf16.mxu0 0
    %426 = vmatpush1.bf16.xpose.msra.mxu0 0
    %427 = vmatprep.subr.bf16.mxu0 0
    %428 = vmatpush1.bf16.xpose.msra.mxu0 0
    %429 = vmatprep.subr.bf16.mxu0 0
    %430 = vmatpush1.bf16.xpose.msra.mxu0 0
    %431 = vmatprep.subr.bf16.mxu0 0
    %432 = vmatpush1.bf16.xpose.msra.mxu0 0
    %433 = vmatprep.subr.bf16.mxu0 0
    %434 = vmatpush1.bf16.xpose.msra.mxu0 0
    %435 = vmatprep.subr.bf16.mxu0 0
    %436 = vmatpush1.bf16.xpose.msra.mxu0 0
    %437 = vmatprep.subr.bf16.mxu0 0
    %438 = vmatpush1.bf16.xpose.msra.mxu0 0
    %439 = vmatprep.subr.bf16.mxu0 0
    %440 = vmatpush1.bf16.xpose.msra.mxu0 0
    %441 = vmatprep.subr.bf16.mxu0 0
    %442 = vmatpush1.bf16.xpose.msra.mxu0 0
    %443 = vmatprep.subr.bf16.mxu0 0
    %444 = vmatpush1.bf16.xpose.msra.mxu0 0
    %445 = vmatprep.subr.bf16.mxu0 0
    %446 = vmatpush1.bf16.xpose.msra.mxu0 0
    %447 = vmatprep.subr.bf16.mxu0 0
    %448 = vmatpush1.bf16.xpose.msra.mxu0 0
    %449 = vmatprep.subr.bf16.mxu0 0
    %450 = vmatpush1.bf16.xpose.msra.mxu0 0
    %451 = vmatprep.subr.bf16.mxu0 0
    %452 = vmatpush1.bf16.xpose.msra.mxu0 0
    %453 = vmatprep.subr.bf16.mxu0 0
    %454 = vmatpush1.bf16.xpose.msra.mxu0 0
    %455 = vmatprep.mubr.bf16.mxu0 0
    %456 = vmatmul.mubr.bf16.gmra.mrb[0].mxu0 %v418
    %v457 = vpop.f32.mrb[0].mxu0
    %v458 = vadd.f32 0.0, %v457
    %v459 = vpop.f32.mrb[0].mxu0
    %v460 = vpop.f32.mrb[0].mxu0
    %v461 = vadd.f32 0.0, %v460
    %v462 = vpop.f32.mrb[0].mxu0
    %463 = vdwg.mxu0
    %v465 = vsel %vm71, %v412, 0
    %v468 = vsel %vm71, %v414, 0
    %470 = vmatprep.subr.bf16.mxu0 0
    %471 = vmatpush1.bf16.xpose.msra.mxu0 %v468
    %472 = vmatprep.subr.bf16.mxu0 0
    %473 = vmatpush1.bf16.xpose.msra.mxu0 0
    %474 = vmatprep.subr.bf16.mxu0 0
    %475 = vmatpush1.bf16.xpose.msra.mxu0 0
    %476 = vmatprep.subr.bf16.mxu0 0
    %477 = vmatpush1.bf16.xpose.msra.mxu0 0
    %478 = vmatprep.subr.bf16.mxu0 0
    %479 = vmatpush1.bf16.xpose.msra.mxu0 0
    %480 = vmatprep.subr.bf16.mxu0 0
    %481 = vmatpush1.bf16.xpose.msra.mxu0 0
    %482 = vmatprep.subr.bf16.mxu0 0
    %483 = vmatpush1.bf16.xpose.msra.mxu0 0
    %484 = vmatprep.subr.bf16.mxu0 0
    %485 = vmatpush1.bf16.xpose.msra.mxu0 0
    %486 = vmatprep.subr.bf16.mxu0 0
    %487 = vmatpush1.bf16.xpose.msra.mxu0 0
    %488 = vmatprep.subr.bf16.mxu0 0
    %489 = vmatpush1.bf16.xpose.msra.mxu0 0
    %490 = vmatprep.subr.bf16.mxu0 0
    %491 = vmatpush1.bf16.xpose.msra.mxu0 0
    %492 = vmatprep.subr.bf16.mxu0 0
    %493 = vmatpush1.bf16.xpose.msra.mxu0 0
    %494 = vmatprep.subr.bf16.mxu0 0
    %495 = vmatpush1.bf16.xpose.msra.mxu0 0
    %496 = vmatprep.subr.bf16.mxu0 0
    %497 = vmatpush1.bf16.xpose.msra.mxu0 0
    %498 = vmatprep.subr.bf16.mxu0 0
    %499 = vmatpush1.bf16.xpose.msra.mxu0 0
    %500 = vmatprep.subr.bf16.mxu0 0
    %501 = vmatpush1.bf16.xpose.msra.mxu0 0
    %502 = vmatprep.mubr.bf16.mxu0 0
    %503 = vmatmul.mubr.bf16.gmra.mrb[0].mxu0 %v465
    %v504 = vpop.f32.mrb[0].mxu0
    %v505 = vadd.f32 0.0, %v504
    %v506 = vpop.f32.mrb[0].mxu0
    %v507 = vpop.f32.mrb[0].mxu0
    %v508 = vadd.f32 0.0, %v507
    %v509 = vpop.f32.mrb[0].mxu0
    %510 = vdwg.mxu0
    %v511 = vsel %vm71, %v458, -inf
    %512 = vmax.xlane.f32.xlu0 %v511
    %v513 = vpop.xlane.xlu0 %512
    %v514 = vsel %vm71, %v461, -inf
    %515 = vmax.xlane.f32.xlu0 %v514
    %v516 = vpop.xlane.xlu0 %515
    %v517 = vsel %vm71, %v505, -inf
    %518 = vmax.xlane.f32.xlu0 %v517
    %v519 = vpop.xlane.xlu0 %518
    %v520 = vsel %vm71, %v508, -inf
    %521 = vmax.xlane.f32.xlu0 %v520
    %v522 = vpop.xlane.xlu0 %521
    %v523 = vsub.f32 %v458, %v513
    %v524 = vsub.f32 %v461, %v516
    %v525 = vsub.f32 %v505, %v519
    %v526 = vsub.f32 %v508, %v522
    %v527 = vmul.f32 %v523, 1.442695
    %v528 = vpow.pop %v527
    %v529 = vmul.f32 %v524, 1.442695
    %v530 = vpow.pop %v529
    %v531 = vmul.f32 %v525, 1.442695
    %v532 = vpow.pop %v531
    %v533 = vmul.f32 %v526, 1.442695
    %v534 = vpow.pop %v533
    %v535 = vsel %vm71, %v528, 0.0
    %536 = vadd.xlane.f32.xlu0 %v535
    %v537 = vpop.xlane.xlu0 %536
    %v538 = vsel %vm71, %v530, 0.0
    %539 = vadd.xlane.f32.xlu0 %v538
    %v540 = vpop.xlane.xlu0 %539
    %v541 = vsel %vm71, %v532, 0.0
    %542 = vadd.xlane.f32.xlu0 %v541
    %v543 = vpop.xlane.xlu0 %542
    %v544 = vsel %vm71, %v534, 0.0
    %545 = vadd.xlane.f32.xlu0 %v544
    %v546 = vpop.xlane.xlu0 %545
    %v547 = vrcp.pop %v537
    %v548 = vrcp.pop %v540
    %v549 = vrcp.pop %v543
    %v550 = vrcp.pop %v546
    %v551 = vmul.f32 %v528, %v547
    %v552 = vmul.f32 %v530, %v548
    %v553 = vmul.f32 %v532, %v549
    %v554 = vmul.f32 %v534, %v550
    %v555 = vpack.c.bf16 %v552, %v551
    %v556 = vpack.c.bf16 %v554, %v553
    %v558 = vsel %vm71, %v555, 0
    %560 = vmatprep.subr.bf16.mxu0 0
    %561 = vmatpush1.bf16.msra.mxu0 %v415
    %562 = vmatprep.subr.bf16.mxu0 0
    %563 = vmatpush1.bf16.msra.mxu0 0
    %564 = vmatprep.subr.bf16.mxu0 0
    %565 = vmatpush1.bf16.msra.mxu0 0
    %566 = vmatprep.subr.bf16.mxu0 0
    %567 = vmatpush1.bf16.msra.mxu0 0
    %568 = vmatprep.subr.bf16.mxu0 0
    %569 = vmatpush1.bf16.msra.mxu0 0
    %570 = vmatprep.subr.bf16.mxu0 0
    %571 = vmatpush1.bf16.msra.mxu0 0
    %572 = vmatprep.subr.bf16.mxu0 0
    %573 = vmatpush1.bf16.msra.mxu0 0
    %574 = vmatprep.subr.bf16.mxu0 0
    %575 = vmatpush1.bf16.msra.mxu0 0
    %576 = vmatprep.subr.bf16.mxu0 0
    %577 = vmatpush1.bf16.msra.mxu0 0
    %578 = vmatprep.subr.bf16.mxu0 0
    %579 = vmatpush1.bf16.msra.mxu0 0
    %580 = vmatprep.subr.bf16.mxu0 0
    %581 = vmatpush1.bf16.msra.mxu0 0
    %582 = vmatprep.subr.bf16.mxu0 0
    %583 = vmatpush1.bf16.msra.mxu0 0
    %584 = vmatprep.subr.bf16.mxu0 0
    %585 = vmatpush1.bf16.msra.mxu0 0
    %586 = vmatprep.subr.bf16.mxu0 0
    %587 = vmatpush1.bf16.msra.mxu0 0
    %588 = vmatprep.subr.bf16.mxu0 0
    %589 = vmatpush1.bf16.msra.mxu0 0
    %590 = vmatprep.subr.bf16.mxu0 0
    %591 = vmatpush1.bf16.msra.mxu0 0
    %592 = vmatprep.mubr.bf16.mxu0 0
    %593 = vmatmul.mubr.bf16.gmra.mrb[0].mxu0 %v558
    %v594 = vpop.f32.mrb[0].mxu0
    %v595 = vadd.f32 0.0, %v594
    %v596 = vpop.f32.mrb[0].mxu0
    %v597 = vpop.f32.mrb[0].mxu0
    %v598 = vadd.f32 0.0, %v597
    %v599 = vpop.f32.mrb[0].mxu0
    %600 = vdwg.mxu0
    %v602 = vsel %vm71, %v556, 0
    %604 = vmatprep.subr.bf16.mxu0 0
    %605 = vmatpush1.bf16.msra.mxu0 %v416
    %606 = vmatprep.subr.bf16.mxu0 0
    %607 = vmatpush1.bf16.msra.mxu0 0
    %608 = vmatprep.subr.bf16.mxu0 0
    %609 = vmatpush1.bf16.msra.mxu0 0
    %610 = vmatprep.subr.bf16.mxu0 0
    %611 = vmatpush1.bf16.msra.mxu0 0
    %612 = vmatprep.subr.bf16.mxu0 0
    %613 = vmatpush1.bf16.msra.mxu0 0
    %614 = vmatprep.subr.bf16.mxu0 0
    %615 = vmatpush1.bf16.msra.mxu0 0
    %616 = vmatprep.subr.bf16.mxu0 0
    %617 = vmatpush1.bf16.msra.mxu0 0
    %618 = vmatprep.subr.bf16.mxu0 0
    %619 = vmatpush1.bf16.msra.mxu0 0
    %620 = vmatprep.subr.bf16.mxu0 0
    %621 = vmatpush1.bf16.msra.mxu0 0
    %622 = vmatprep.subr.bf16.mxu0 0
    %623 = vmatpush1.bf16.msra.mxu0 0
    %624 = vmatprep.subr.bf16.mxu0 0
    %625 = vmatpush1.bf16.msra.mxu0 0
    %626 = vmatprep.subr.bf16.mxu0 0
    %627 = vmatpush1.bf16.msra.mxu0 0
    %628 = vmatprep.subr.bf16.mxu0 0
    %629 = vmatpush1.bf16.msra.mxu0 0
    %630 = vmatprep.subr.bf16.mxu0 0
    %631 = vmatpush1.bf16.msra.mxu0 0
    %632 = vmatprep.subr.bf16.mxu0 0
    %633 = vmatpush1.bf16.msra.mxu0 0
    %634 = vmatprep.subr.bf16.mxu0 0
    %635 = vmatpush1.bf16.msra.mxu0 0
    %636 = vmatprep.mubr.bf16.mxu0 0
    %637 = vmatmul.mubr.bf16.gmra.mrb[0].mxu0 %v602
    %v638 = vpop.f32.mrb[0].mxu0
    %v639 = vadd.f32 0.0, %v638
    %v640 = vpop.f32.mrb[0].mxu0
    %v641 = vpop.f32.mrb[0].mxu0
    %v642 = vadd.f32 0.0, %v641
    %v643 = vpop.f32.mrb[0].mxu0
    %644 = vdwg.mxu0
    %v645 = vpack.c.bf16 %v598, %v595
    %v646 = vpack.c.bf16 %v642, %v639
    %v647 = vld [vmem:[%s5] sm:$0xf]
    %v648 = vld [vmem:[%s5 + $0x4] sm:$0xf]
    %s649 = scalar_lea.vmem %s3, 32
    %v650 = vld [vmem:[%s649] sm:$0xf]
    %v651 = vld [vmem:[%s649 + $0x4] sm:$0xf]
    %v652 = vld [vmem:[%s649 + $0x8] sm:$0xf]
    %v653 = vld [vmem:[%s649 + $0xc] sm:$0xf]
    %v654 = vld [vmem:[%s649 + $0x10] sm:$0xf]
    %v655 = vld [vmem:[%s649 + $0x14] sm:$0xf]
    %v656 = vld [vmem:[%s649 + $0x18] sm:$0xf]
    %v657 = vld [vmem:[%s649 + $0x1c] sm:$0xf]
    %s658 = scalar_lea.vmem %s4, 1
    %v659 = vld [vmem:[%s658] sm:$0x1]
    %v661 = vlaneseq
    %v662 = vshrl.u32 %v661, 7
    %v663 = vsub.s32 0, %v662
    %v664 = vrot.slane %v659, %v663
    %v674 = vunpack.c.l.b16 %v650
    %v675 = vunpack.c.l.b16 %v651
    %v676 = vunpack.c.l.b16 %v652
    %v677 = vunpack.c.l.b16 %v653
    %v678 = vunpack.c.l.b16 %v654
    %v679 = vunpack.c.l.b16 %v655
    %v680 = vunpack.c.l.b16 %v656
    %v681 = vunpack.c.l.b16 %v657
    %v682 = vpack.c.b16 %v675, %v674
    %v683 = vpack.c.b16 %v677, %v676
    %v684 = vpack.c.b16 %v679, %v678
    %v685 = vpack.c.b16 %v681, %v680
    %690 = vmatprep.subr.bf16.mxu0 0
    %691 = vmatpush1.bf16.msra.mxu0 %v682
    %692 = vmatprep.subr.bf16.mxu0 0
    %693 = vmatpush1.bf16.msra.mxu0 %v683
    %694 = vmatprep.subr.bf16.mxu0 0
    %695 = vmatpush1.bf16.msra.mxu0 %v684
    %696 = vmatprep.subr.bf16.mxu0 0
    %697 = vmatpush1.bf16.msra.mxu0 %v685
    %698 = vmatprep.subr.bf16.mxu0 0
    %699 = vmatpush1.bf16.msra.mxu0 0
    %700 = vmatprep.subr.bf16.mxu0 0
    %701 = vmatpush1.bf16.msra.mxu0 0
    %702 = vmatprep.subr.bf16.mxu0 0
    %703 = vmatpush1.bf16.msra.mxu0 0
    %704 = vmatprep.subr.bf16.mxu0 0
    %705 = vmatpush1.bf16.msra.mxu0 0
    %706 = vmatprep.subr.bf16.mxu0 0
    %707 = vmatpush1.bf16.msra.mxu0 0
    %708 = vmatprep.subr.bf16.mxu0 0
    %709 = vmatpush1.bf16.msra.mxu0 0
    %710 = vmatprep.subr.bf16.mxu0 0
    %711 = vmatpush1.bf16.msra.mxu0 0
    %712 = vmatprep.subr.bf16.mxu0 0
    %713 = vmatpush1.bf16.msra.mxu0 0
    %714 = vmatprep.subr.bf16.mxu0 0
    %715 = vmatpush1.bf16.msra.mxu0 0
    %716 = vmatprep.subr.bf16.mxu0 0
    %717 = vmatpush1.bf16.msra.mxu0 0
    %718 = vmatprep.subr.bf16.mxu0 0
    %719 = vmatpush1.bf16.msra.mxu0 0
    %720 = vmatprep.subr.bf16.mxu0 0
    %721 = vmatpush1.bf16.msra.mxu0 0
    %722 = vmatprep.mubr.bf16.mxu0 0
    %723 = vmatmul.mubr.bf16.gmra.mrb[0].mxu0 %v177
    %v724 = vpop.f32.mrb[0].mxu0
    %v725 = vadd.f32 %v664, %v724
    %v726 = vpop.f32.mrb[0].mxu0
    %v727 = vpop.f32.mrb[0].mxu0
    %v728 = vadd.f32 %v664, %v727
    %v729 = vpop.f32.mrb[0].mxu0
    %730 = vmatprep.mubr.bf16.mxu0 0
    %731 = vmatmul.mubr.bf16.gmra.mrb[0].mxu0 %v180
    %v732 = vpop.f32.mrb[0].mxu0
    %v733 = vadd.f32 %v664, %v732
    %v734 = vpop.f32.mrb[0].mxu0
    %v735 = vpop.f32.mrb[0].mxu0
    %v736 = vadd.f32 %v664, %v735
    %v737 = vpop.f32.mrb[0].mxu0
    %738 = vdwg.mxu0
    %s739 = scalar_lea.vmem %s3, 160
    %v740 = vld [vmem:[%s739] sm:$0xf]
    %v741 = vld [vmem:[%s739 + $0x4] sm:$0xf]
    %v742 = vld [vmem:[%s739 + $0x8] sm:$0xf]
    %v743 = vld [vmem:[%s739 + $0xc] sm:$0xf]
    %v744 = vld [vmem:[%s739 + $0x10] sm:$0xf]
    %v745 = vld [vmem:[%s739 + $0x14] sm:$0xf]
    %v746 = vld [vmem:[%s739 + $0x18] sm:$0xf]
    %v747 = vld [vmem:[%s739 + $0x1c] sm:$0xf]
    %s748 = scalar_lea.vmem %s4, 5
    %v749 = vld [vmem:[%s748] sm:$0x1]
    %v751 = vlaneseq
    %v752 = vshrl.u32 %v751, 7
    %v753 = vsub.s32 0, %v752
    %v754 = vrot.slane %v749, %v753
    %v764 = vunpack.c.l.b16 %v740
    %v765 = vunpack.c.l.b16 %v741
    %v766 = vunpack.c.l.b16 %v742
    %v767 = vunpack.c.l.b16 %v743
    %v768 = vunpack.c.l.b16 %v744
    %v769 = vunpack.c.l.b16 %v745
    %v770 = vunpack.c.l.b16 %v746
    %v771 = vunpack.c.l.b16 %v747
    %v772 = vpack.c.b16 %v765, %v764
    %v773 = vpack.c.b16 %v767, %v766
    %v774 = vpack.c.b16 %v769, %v768
    %v775 = vpack.c.b16 %v771, %v770
    %780 = vmatprep.subr.bf16.mxu0 0
    %781 = vmatpush1.bf16.msra.mxu0 %v772
    %782 = vmatprep.subr.bf16.mxu0 0
    %783 = vmatpush1.bf16.msra.mxu0 %v773
    %784 = vmatprep.subr.bf16.mxu0 0
    %785 = vmatpush1.bf16.msra.mxu0 %v774
    %786 = vmatprep.subr.bf16.mxu0 0
    %787 = vmatpush1.bf16.msra.mxu0 %v775
    %788 = vmatprep.subr.bf16.mxu0 0
    %789 = vmatpush1.bf16.msra.mxu0 0
    %790 = vmatprep.subr.bf16.mxu0 0
    %791 = vmatpush1.bf16.msra.mxu0 0
    %792 = vmatprep.subr.bf16.mxu0 0
    %793 = vmatpush1.bf16.msra.mxu0 0
    %794 = vmatprep.subr.bf16.mxu0 0
    %795 = vmatpush1.bf16.msra.mxu0 0
    %796 = vmatprep.subr.bf16.mxu0 0
    %797 = vmatpush1.bf16.msra.mxu0 0
    %798 = vmatprep.subr.bf16.mxu0 0
    %799 = vmatpush1.bf16.msra.mxu0 0
    %800 = vmatprep.subr.bf16.mxu0 0
    %801 = vmatpush1.bf16.msra.mxu0 0
    %802 = vmatprep.subr.bf16.mxu0 0
    %803 = vmatpush1.bf16.msra.mxu0 0
    %804 = vmatprep.subr.bf16.mxu0 0
    %805 = vmatpush1.bf16.msra.mxu0 0
    %806 = vmatprep.subr.bf16.mxu0 0
    %807 = vmatpush1.bf16.msra.mxu0 0
    %808 = vmatprep.subr.bf16.mxu0 0
    %809 = vmatpush1.bf16.msra.mxu0 0
    %810 = vmatprep.subr.bf16.mxu0 0
    %811 = vmatpush1.bf16.msra.mxu0 0
    %812 = vmatprep.mubr.bf16.mxu0 0
    %813 = vmatmul.mubr.bf16.gmra.mrb[0].mxu0 %v177
    %v814 = vpop.f32.mrb[0].mxu0
    %v815 = vadd.f32 %v754, %v814
    %v816 = vpop.f32.mrb[0].mxu0
    %v817 = vpop.f32.mrb[0].mxu0
    %v818 = vadd.f32 %v754, %v817
    %v819 = vpop.f32.mrb[0].mxu0
    %820 = vmatprep.mubr.bf16.mxu0 0
    %821 = vmatmul.mubr.bf16.gmra.mrb[0].mxu0 %v180
    %v822 = vpop.f32.mrb[0].mxu0
    %v823 = vadd.f32 %v754, %v822
    %v824 = vpop.f32.mrb[0].mxu0
    %v825 = vpop.f32.mrb[0].mxu0
    %v826 = vadd.f32 %v754, %v825
    %v827 = vpop.f32.mrb[0].mxu0
    %828 = vdwg.mxu0
    %s829 = scalar_lea.vmem %s3, 288
    %v830 = vld [vmem:[%s829] sm:$0xf]
    %v831 = vld [vmem:[%s829 + $0x4] sm:$0xf]
    %v832 = vld [vmem:[%s829 + $0x8] sm:$0xf]
    %v833 = vld [vmem:[%s829 + $0xc] sm:$0xf]
    %v834 = vld [vmem:[%s829 + $0x10] sm:$0xf]
    %v835 = vld [vmem:[%s829 + $0x14] sm:$0xf]
    %v836 = vld [vmem:[%s829 + $0x18] sm:$0xf]
    %v837 = vld [vmem:[%s829 + $0x1c] sm:$0xf]
    %s838 = scalar_lea.vmem %s4, 9
    %v839 = vld [vmem:[%s838] sm:$0x1]
    %v841 = vlaneseq
    %v842 = vshrl.u32 %v841, 7
    %v843 = vsub.s32 0, %v842
    %v844 = vrot.slane %v839, %v843
    %v854 = vunpack.c.l.b16 %v830
    %v855 = vunpack.c.l.b16 %v831
    %v856 = vunpack.c.l.b16 %v832
    %v857 = vunpack.c.l.b16 %v833
    %v858 = vunpack.c.l.b16 %v834
    %v859 = vunpack.c.l.b16 %v835
    %v860 = vunpack.c.l.b16 %v836
    %v861 = vunpack.c.l.b16 %v837
    %v862 = vpack.c.b16 %v855, %v854
    %v863 = vpack.c.b16 %v857, %v856
    %v864 = vpack.c.b16 %v859, %v858
    %v865 = vpack.c.b16 %v861, %v860
    %870 = vmatprep.subr.bf16.mxu0 0
    %871 = vmatpush1.bf16.msra.mxu0 %v862
    %872 = vmatprep.subr.bf16.mxu0 0
    %873 = vmatpush1.bf16.msra.mxu0 %v863
    %874 = vmatprep.subr.bf16.mxu0 0
    %875 = vmatpush1.bf16.msra.mxu0 %v864
    %876 = vmatprep.subr.bf16.mxu0 0
    %877 = vmatpush1.bf16.msra.mxu0 %v865
    %878 = vmatprep.subr.bf16.mxu0 0
    %879 = vmatpush1.bf16.msra.mxu0 0
    %880 = vmatprep.subr.bf16.mxu0 0
    %881 = vmatpush1.bf16.msra.mxu0 0
    %882 = vmatprep.subr.bf16.mxu0 0
    %883 = vmatpush1.bf16.msra.mxu0 0
    %884 = vmatprep.subr.bf16.mxu0 0
    %885 = vmatpush1.bf16.msra.mxu0 0
    %886 = vmatprep.subr.bf16.mxu0 0
    %887 = vmatpush1.bf16.msra.mxu0 0
    %888 = vmatprep.subr.bf16.mxu0 0
    %889 = vmatpush1.bf16.msra.mxu0 0
    %890 = vmatprep.subr.bf16.mxu0 0
    %891 = vmatpush1.bf16.msra.mxu0 0
    %892 = vmatprep.subr.bf16.mxu0 0
    %893 = vmatpush1.bf16.msra.mxu0 0
    %894 = vmatprep.subr.bf16.mxu0 0
    %895 = vmatpush1.bf16.msra.mxu0 0
    %896 = vmatprep.subr.bf16.mxu0 0
    %897 = vmatpush1.bf16.msra.mxu0 0
    %898 = vmatprep.subr.bf16.mxu0 0
    %899 = vmatpush1.bf16.msra.mxu0 0
    %900 = vmatprep.subr.bf16.mxu0 0
    %901 = vmatpush1.bf16.msra.mxu0 0
    %902 = vmatprep.mubr.bf16.mxu0 0
    %903 = vmatmul.mubr.bf16.gmra.mrb[0].mxu0 %v177
    %v904 = vpop.f32.mrb[0].mxu0
    %v905 = vadd.f32 %v844, %v904
    %v906 = vpop.f32.mrb[0].mxu0
    %v907 = vpop.f32.mrb[0].mxu0
    %v908 = vadd.f32 %v844, %v907
    %v909 = vpop.f32.mrb[0].mxu0
    %910 = vmatprep.mubr.bf16.mxu0 0
    %911 = vmatmul.mubr.bf16.gmra.mrb[0].mxu0 %v180
    %v912 = vpop.f32.mrb[0].mxu0
    %v913 = vadd.f32 %v844, %v912
    %v914 = vpop.f32.mrb[0].mxu0
    %v915 = vpop.f32.mrb[0].mxu0
    %v916 = vadd.f32 %v844, %v915
    %v917 = vpop.f32.mrb[0].mxu0
    %918 = vdwg.mxu0
    %v919 = vpack.c.bf16 %v728, %v725
    %v920 = vpack.c.bf16 %v736, %v733
    %v921 = vpack.c.bf16 %v818, %v815
    %v922 = vpack.c.bf16 %v826, %v823
    %v923 = vpack.c.bf16 %v908, %v905
    %v924 = vpack.c.bf16 %v916, %v913
    %v926 = vsel %vm71, %v919, 0
    %v929 = vsel %vm71, %v921, 0
    %931 = vmatprep.subr.bf16.mxu0 0
    %932 = vmatpush1.bf16.xpose.msra.mxu0 %v929
    %933 = vmatprep.subr.bf16.mxu0 0
    %934 = vmatpush1.bf16.xpose.msra.mxu0 0
    %935 = vmatprep.subr.bf16.mxu0 0
    %936 = vmatpush1.bf16.xpose.msra.mxu0 0
    %937 = vmatprep.subr.bf16.mxu0 0
    %938 = vmatpush1.bf16.xpose.msra.mxu0 0
    %939 = vmatprep.subr.bf16.mxu0 0
    %940 = vmatpush1.bf16.xpose.msra.mxu0 0
    %941 = vmatprep.subr.bf16.mxu0 0
    %942 = vmatpush1.bf16.xpose.msra.mxu0 0
    %943 = vmatprep.subr.bf16.mxu0 0
    %944 = vmatpush1.bf16.xpose.msra.mxu0 0
    %945 = vmatprep.subr.bf16.mxu0 0
    %946 = vmatpush1.bf16.xpose.msra.mxu0 0
    %947 = vmatprep.subr.bf16.mxu0 0
    %948 = vmatpush1.bf16.xpose.msra.mxu0 0
    %949 = vmatprep.subr.bf16.mxu0 0
    %950 = vmatpush1.bf16.xpose.msra.mxu0 0
    %951 = vmatprep.subr.bf16.mxu0 0
    %952 = vmatpush1.bf16.xpose.msra.mxu0 0
    %953 = vmatprep.subr.bf16.mxu0 0
    %954 = vmatpush1.bf16.xpose.msra.mxu0 0
    %955 = vmatprep.subr.bf16.mxu0 0
    %956 = vmatpush1.bf16.xpose.msra.mxu0 0
    %957 = vmatprep.subr.bf16.mxu0 0
    %958 = vmatpush1.bf16.xpose.msra.mxu0 0
    %959 = vmatprep.subr.bf16.mxu0 0
    %960 = vmatpush1.bf16.xpose.msra.mxu0 0
    %961 = vmatprep.subr.bf16.mxu0 0
    %962 = vmatpush1.bf16.xpose.msra.mxu0 0
    %963 = vmatprep.mubr.bf16.mxu0 0
    %964 = vmatmul.mubr.bf16.gmra.mrb[0].mxu0 %v926
    %v965 = vpop.f32.mrb[0].mxu0
    %v966 = vadd.f32 0.0, %v965
    %v967 = vpop.f32.mrb[0].mxu0
    %v968 = vpop.f32.mrb[0].mxu0
    %v969 = vadd.f32 0.0, %v968
    %v970 = vpop.f32.mrb[0].mxu0
    %971 = vdwg.mxu0
    %v973 = vsel %vm71, %v920, 0
    %v976 = vsel %vm71, %v922, 0
    %978 = vmatprep.subr.bf16.mxu0 0
    %979 = vmatpush1.bf16.xpose.msra.mxu0 %v976
    %980 = vmatprep.subr.bf16.mxu0 0
    %981 = vmatpush1.bf16.xpose.msra.mxu0 0
    %982 = vmatprep.subr.bf16.mxu0 0
    %983 = vmatpush1.bf16.xpose.msra.mxu0 0
    %984 = vmatprep.subr.bf16.mxu0 0
    %985 = vmatpush1.bf16.xpose.msra.mxu0 0
    %986 = vmatprep.subr.bf16.mxu0 0
    %987 = vmatpush1.bf16.xpose.msra.mxu0 0
    %988 = vmatprep.subr.bf16.mxu0 0
    %989 = vmatpush1.bf16.xpose.msra.mxu0 0
    %990 = vmatprep.subr.bf16.mxu0 0
    %991 = vmatpush1.bf16.xpose.msra.mxu0 0
    %992 = vmatprep.subr.bf16.mxu0 0
    %993 = vmatpush1.bf16.xpose.msra.mxu0 0
    %994 = vmatprep.subr.bf16.mxu0 0
    %995 = vmatpush1.bf16.xpose.msra.mxu0 0
    %996 = vmatprep.subr.bf16.mxu0 0
    %997 = vmatpush1.bf16.xpose.msra.mxu0 0
    %998 = vmatprep.subr.bf16.mxu0 0
    %999 = vmatpush1.bf16.xpose.msra.mxu0 0
    %1000 = vmatprep.subr.bf16.mxu0 0
    %1001 = vmatpush1.bf16.xpose.msra.mxu0 0
    %1002 = vmatprep.subr.bf16.mxu0 0
    %1003 = vmatpush1.bf16.xpose.msra.mxu0 0
    %1004 = vmatprep.subr.bf16.mxu0 0
    %1005 = vmatpush1.bf16.xpose.msra.mxu0 0
    %1006 = vmatprep.subr.bf16.mxu0 0
    %1007 = vmatpush1.bf16.xpose.msra.mxu0 0
    %1008 = vmatprep.subr.bf16.mxu0 0
    %1009 = vmatpush1.bf16.xpose.msra.mxu0 0
    %1010 = vmatprep.mubr.bf16.mxu0 0
    %1011 = vmatmul.mubr.bf16.gmra.mrb[0].mxu0 %v973
    %v1012 = vpop.f32.mrb[0].mxu0
    %v1013 = vadd.f32 0.0, %v1012
    %v1014 = vpop.f32.mrb[0].mxu0
    %v1015 = vpop.f32.mrb[0].mxu0
    %v1016 = vadd.f32 0.0, %v1015
    %v1017 = vpop.f32.mrb[0].mxu0
    %1018 = vdwg.mxu0
    %v1019 = vsel %vm71, %v966, -inf
    %1020 = vmax.xlane.f32.xlu0 %v1019
    %v1021 = vpop.xlane.xlu0 %1020
    %v1022 = vsel %vm71, %v969, -inf
    %1023 = vmax.xlane.f32.xlu0 %v1022
    %v1024 = vpop.xlane.xlu0 %1023
    %v1025 = vsel %vm71, %v1013, -inf
    %1026 = vmax.xlane.f32.xlu0 %v1025
    %v1027 = vpop.xlane.xlu0 %1026
    %v1028 = vsel %vm71, %v1016, -inf
    %1029 = vmax.xlane.f32.xlu0 %v1028
    %v1030 = vpop.xlane.xlu0 %1029
    %v1031 = vsub.f32 %v966, %v1021
    %v1032 = vsub.f32 %v969, %v1024
    %v1033 = vsub.f32 %v1013, %v1027
    %v1034 = vsub.f32 %v1016, %v1030
    %v1035 = vmul.f32 %v1031, 1.442695
    %v1036 = vpow.pop %v1035
    %v1037 = vmul.f32 %v1032, 1.442695
    %v1038 = vpow.pop %v1037
    %v1039 = vmul.f32 %v1033, 1.442695
    %v1040 = vpow.pop %v1039
    %v1041 = vmul.f32 %v1034, 1.442695
    %v1042 = vpow.pop %v1041
    %v1043 = vsel %vm71, %v1036, 0.0
    %1044 = vadd.xlane.f32.xlu0 %v1043
    %v1045 = vpop.xlane.xlu0 %1044
    %v1046 = vsel %vm71, %v1038, 0.0
    %1047 = vadd.xlane.f32.xlu0 %v1046
    %v1048 = vpop.xlane.xlu0 %1047
    %v1049 = vsel %vm71, %v1040, 0.0
    %1050 = vadd.xlane.f32.xlu0 %v1049
    %v1051 = vpop.xlane.xlu0 %1050
    %v1052 = vsel %vm71, %v1042, 0.0
    %1053 = vadd.xlane.f32.xlu0 %v1052
    %v1054 = vpop.xlane.xlu0 %1053
    %v1055 = vrcp.pop %v1045
    %v1056 = vrcp.pop %v1048
    %v1057 = vrcp.pop %v1051
    %v1058 = vrcp.pop %v1054
    %v1059 = vmul.f32 %v1036, %v1055
    %v1060 = vmul.f32 %v1038, %v1056
    %v1061 = vmul.f32 %v1040, %v1057
    %v1062 = vmul.f32 %v1042, %v1058
    %v1063 = vpack.c.bf16 %v1060, %v1059
    %v1064 = vpack.c.bf16 %v1062, %v1061
    %v1066 = vsel %vm71, %v1063, 0
    %1068 = vmatprep.subr.bf16.mxu0 0
    %1069 = vmatpush1.bf16.msra.mxu0 %v923
    %1070 = vmatprep.subr.bf16.mxu0 0
    %1071 = vmatpush1.bf16.msra.mxu0 0
    %1072 = vmatprep.subr.bf16.mxu0 0
    %1073 = vmatpush1.bf16.msra.mxu0 0
    %1074 = vmatprep.subr.bf16.mxu0 0
    %1075 = vmatpush1.bf16.msra.mxu0 0
    %1076 = vmatprep.subr.bf16.mxu0 0
    %1077 = vmatpush1.bf16.msra.mxu0 0
    %1078 = vmatprep.subr.bf16.mxu0 0
    %1079 = vmatpush1.bf16.msra.mxu0 0
    %1080 = vmatprep.subr.bf16.mxu0 0
    %1081 = vmatpush1.bf16.msra.mxu0 0
    %1082 = vmatprep.subr.bf16.mxu0 0
    %1083 = vmatpush1.bf16.msra.mxu0 0
    %1084 = vmatprep.subr.bf16.mxu0 0
    %1085 = vmatpush1.bf16.msra.mxu0 0
    %1086 = vmatprep.subr.bf16.mxu0 0
    %1087 = vmatpush1.bf16.msra.mxu0 0
    %1088 = vmatprep.subr.bf16.mxu0 0
    %1089 = vmatpush1.bf16.msra.mxu0 0
    %1090 = vmatprep.subr.bf16.mxu0 0
    %1091 = vmatpush1.bf16.msra.mxu0 0
    %1092 = vmatprep.subr.bf16.mxu0 0
    %1093 = vmatpush1.bf16.msra.mxu0 0
    %1094 = vmatprep.subr.bf16.mxu0 0
    %1095 = vmatpush1.bf16.msra.mxu0 0
    %1096 = vmatprep.subr.bf16.mxu0 0
    %1097 = vmatpush1.bf16.msra.mxu0 0
    %1098 = vmatprep.subr.bf16.mxu0 0
    %1099 = vmatpush1.bf16.msra.mxu0 0
    %1100 = vmatprep.mubr.bf16.mxu0 0
    %1101 = vmatmul.mubr.bf16.gmra.mrb[0].mxu0 %v1066
    %v1102 = vpop.f32.mrb[0].mxu0
    %v1103 = vadd.f32 0.0, %v1102
    %v1104 = vpop.f32.mrb[0].mxu0
    %v1105 = vpop.f32.mrb[0].mxu0
    %v1106 = vadd.f32 0.0, %v1105
    %v1107 = vpop.f32.mrb[0].mxu0
    %1108 = vdwg.mxu0
    %v1110 = vsel %vm71, %v1064, 0
    %1112 = vmatprep.subr.bf16.mxu0 0
    %1113 = vmatpush1.bf16.msra.mxu0 %v924
    %1114 = vmatprep.subr.bf16.mxu0 0
    %1115 = vmatpush1.bf16.msra.mxu0 0
    %1116 = vmatprep.subr.bf16.mxu0 0
    %1117 = vmatpush1.bf16.msra.mxu0 0
    %1118 = vmatprep.subr.bf16.mxu0 0
    %1119 = vmatpush1.bf16.msra.mxu0 0
    %1120 = vmatprep.subr.bf16.mxu0 0
    %1121 = vmatpush1.bf16.msra.mxu0 0
    %1122 = vmatprep.subr.bf16.mxu0 0
    %1123 = vmatpush1.bf16.msra.mxu0 0
    %1124 = vmatprep.subr.bf16.mxu0 0
    %1125 = vmatpush1.bf16.msra.mxu0 0
    %1126 = vmatprep.subr.bf16.mxu0 0
    %1127 = vmatpush1.bf16.msra.mxu0 0
    %1128 = vmatprep.subr.bf16.mxu0 0
    %1129 = vmatpush1.bf16.msra.mxu0 0
    %1130 = vmatprep.subr.bf16.mxu0 0
    %1131 = vmatpush1.bf16.msra.mxu0 0
    %1132 = vmatprep.subr.bf16.mxu0 0
    %1133 = vmatpush1.bf16.msra.mxu0 0
    %1134 = vmatprep.subr.bf16.mxu0 0
    %1135 = vmatpush1.bf16.msra.mxu0 0
    %1136 = vmatprep.subr.bf16.mxu0 0
    %1137 = vmatpush1.bf16.msra.mxu0 0
    %1138 = vmatprep.subr.bf16.mxu0 0
    %1139 = vmatpush1.bf16.msra.mxu0 0
    %1140 = vmatprep.subr.bf16.mxu0 0
    %1141 = vmatpush1.bf16.msra.mxu0 0
    %1142 = vmatprep.subr.bf16.mxu0 0
    %1143 = vmatpush1.bf16.msra.mxu0 0
    %1144 = vmatprep.mubr.bf16.mxu0 0
    %1145 = vmatmul.mubr.bf16.gmra.mrb[0].mxu0 %v1110
    %v1146 = vpop.f32.mrb[0].mxu0
    %v1147 = vadd.f32 0.0, %v1146
    %v1148 = vpop.f32.mrb[0].mxu0
    %v1149 = vpop.f32.mrb[0].mxu0
    %v1150 = vadd.f32 0.0, %v1149
    %v1151 = vpop.f32.mrb[0].mxu0
    %1152 = vdwg.mxu0
    %v1153 = vpack.c.bf16 %v1106, %v1103
    %v1154 = vpack.c.bf16 %v1150, %v1147
    %s1155 = scalar_lea.vmem %s5, 8
    %v1156 = vld [vmem:[%s1155] sm:$0xf]
    %v1157 = vld [vmem:[%s1155 + $0x4] sm:$0xf]
    %v1160 = vunpack.c.l.b16 %v1156
    %v1161 = vunpack.c.l.b16 %v1157
    %v1162 = vpack.c.b16 %v1161, %v1160
    %v1165 = vsel %vm71, %v1153, 0
    %v1168 = vsel %vm71, %v1154, 0
    %1170 = vmatprep.subr.bf16.mxu0 0
    %1171 = vmatpush1.bf16.msra.mxu0 %v1162
    %1172 = vmatprep.subr.bf16.mxu0 0
    %1173 = vmatpush1.bf16.msra.mxu0 0
    %1174 = vmatprep.subr.bf16.mxu0 0
    %1175 = vmatpush1.bf16.msra.mxu0 0
    %1176 = vmatprep.subr.bf16.mxu0 0
    %1177 = vmatpush1.bf16.msra.mxu0 0
    %1178 = vmatprep.subr.bf16.mxu0 0
    %1179 = vmatpush1.bf16.msra.mxu0 0
    %1180 = vmatprep.subr.bf16.mxu0 0
    %1181 = vmatpush1.bf16.msra.mxu0 0
    %1182 = vmatprep.subr.bf16.mxu0 0
    %1183 = vmatpush1.bf16.msra.mxu0 0
    %1184 = vmatprep.subr.bf16.mxu0 0
    %1185 = vmatpush1.bf16.msra.mxu0 0
    %1186 = vmatprep.subr.bf16.mxu0 0
    %1187 = vmatpush1.bf16.msra.mxu0 0
    %1188 = vmatprep.subr.bf16.mxu0 0
    %1189 = vmatpush1.bf16.msra.mxu0 0
    %1190 = vmatprep.subr.bf16.mxu0 0
    %1191 = vmatpush1.bf16.msra.mxu0 0
    %1192 = vmatprep.subr.bf16.mxu0 0
    %1193 = vmatpush1.bf16.msra.mxu0 0
    %1194 = vmatprep.subr.bf16.mxu0 0
    %1195 = vmatpush1.bf16.msra.mxu0 0
    %1196 = vmatprep.subr.bf16.mxu0 0
    %1197 = vmatpush1.bf16.msra.mxu0 0
    %1198 = vmatprep.subr.bf16.mxu0 0
    %1199 = vmatpush1.bf16.msra.mxu0 0
    %1200 = vmatprep.subr.bf16.mxu0 0
    %1201 = vmatpush1.bf16.msra.mxu0 0
    %1202 = vmatprep.mubr.bf16.mxu0 0
    %1203 = vmatmul.mubr.bf16.gmra.mrb[0].mxu0 %v1165
    %v1204 = vpop.f32.mrb[0].mxu0
    %v1205 = vadd.f32 0.0, %v1204
    %v1206 = vpop.f32.mrb[0].mxu0
    %v1207 = vpop.f32.mrb[0].mxu0
    %v1208 = vadd.f32 0.0, %v1207
    %v1209 = vpop.f32.mrb[0].mxu0
    %1210 = vmatprep.mubr.bf16.mxu0 0
    %1211 = vmatmul.mubr.bf16.gmra.mrb[0].mxu0 %v1168
    %v1212 = vpop.f32.mrb[0].mxu0
    %v1213 = vadd.f32 0.0, %v1212
    %v1214 = vpop.f32.mrb[0].mxu0
    %v1215 = vpop.f32.mrb[0].mxu0
    %v1216 = vadd.f32 0.0, %v1215
    %v1217 = vpop.f32.mrb[0].mxu0
    %1218 = vdwg.mxu0
    %v1221 = vunpack.c.l.b16 %v647
    %v1222 = vunpack.c.l.b16 %v648
    %v1223 = vpack.c.b16 %v1222, %v1221
    %v1226 = vsel %vm71, %v645, 0
    %v1229 = vsel %vm71, %v646, 0
    %1231 = vmatprep.subr.bf16.mxu0 0
    %1232 = vmatpush1.bf16.msra.mxu0 %v1223
    %1233 = vmatprep.subr.bf16.mxu0 0
    %1234 = vmatpush1.bf16.msra.mxu0 0
    %1235 = vmatprep.subr.bf16.mxu0 0
    %1236 = vmatpush1.bf16.msra.mxu0 0
    %1237 = vmatprep.subr.bf16.mxu0 0
    %1238 = vmatpush1.bf16.msra.mxu0 0
    %1239 = vmatprep.subr.bf16.mxu0 0
    %1240 = vmatpush1.bf16.msra.mxu0 0
    %1241 = vmatprep.subr.bf16.mxu0 0
    %1242 = vmatpush1.bf16.msra.mxu0 0
    %1243 = vmatprep.subr.bf16.mxu0 0
    %1244 = vmatpush1.bf16.msra.mxu0 0
    %1245 = vmatprep.subr.bf16.mxu0 0
    %1246 = vmatpush1.bf16.msra.mxu0 0
    %1247 = vmatprep.subr.bf16.mxu0 0
    %1248 = vmatpush1.bf16.msra.mxu0 0
    %1249 = vmatprep.subr.bf16.mxu0 0
    %1250 = vmatpush1.bf16.msra.mxu0 0
    %1251 = vmatprep.subr.bf16.mxu0 0
    %1252 = vmatpush1.bf16.msra.mxu0 0
    %1253 = vmatprep.subr.bf16.mxu0 0
    %1254 = vmatpush1.bf16.msra.mxu0 0
    %1255 = vmatprep.subr.bf16.mxu0 0
    %1256 = vmatpush1.bf16.msra.mxu0 0
    %1257 = vmatprep.subr.bf16.mxu0 0
    %1258 = vmatpush1.bf16.msra.mxu0 0
    %1259 = vmatprep.subr.bf16.mxu0 0
    %1260 = vmatpush1.bf16.msra.mxu0 0
    %1261 = vmatprep.subr.bf16.mxu0 0
    %1262 = vmatpush1.bf16.msra.mxu0 0
    %1263 = vmatprep.mubr.bf16.mxu0 0
    %1264 = vmatmul.mubr.bf16.gmra.mrb[0].mxu0 %v1226
    %v1265 = vpop.f32.mrb[0].mxu0
    %v1266 = vadd.f32 %v1205, %v1265
    %v1267 = vpop.f32.mrb[0].mxu0
    %v1268 = vpop.f32.mrb[0].mxu0
    %v1269 = vadd.f32 %v1208, %v1268
    %v1270 = vpop.f32.mrb[0].mxu0
    %1271 = vmatprep.mubr.bf16.mxu0 0
    %1272 = vmatmul.mubr.bf16.gmra.mrb[0].mxu0 %v1229
    %v1273 = vpop.f32.mrb[0].mxu0
    %v1274 = vadd.f32 %v1213, %v1273
    %v1275 = vpop.f32.mrb[0].mxu0
    %v1276 = vpop.f32.mrb[0].mxu0
    %v1277 = vadd.f32 %v1216, %v1276
    %v1278 = vpop.f32.mrb[0].mxu0
    %1279 = vdwg.mxu0
    %s1280 = scalar_lea.vmem %s3, 64
    %v1281 = vld [vmem:[%s1280] sm:$0xf]
    %v1282 = vld [vmem:[%s1280 + $0x4] sm:$0xf]
    %v1283 = vld [vmem:[%s1280 + $0x8] sm:$0xf]
    %v1284 = vld [vmem:[%s1280 + $0xc] sm:$0xf]
    %v1285 = vld [vmem:[%s1280 + $0x10] sm:$0xf]
    %v1286 = vld [vmem:[%s1280 + $0x14] sm:$0xf]
    %v1287 = vld [vmem:[%s1280 + $0x18] sm:$0xf]
    %v1288 = vld [vmem:[%s1280 + $0x1c] sm:$0xf]
    %s1289 = scalar_lea.vmem %s4, 2
    %v1290 = vld [vmem:[%s1289] sm:$0x1]
    %v1292 = vlaneseq
    %v1293 = vshrl.u32 %v1292, 7
    %v1294 = vsub.s32 0, %v1293
    %v1295 = vrot.slane %v1290, %v1294
    %v1305 = vunpack.c.l.b16 %v1281
    %v1306 = vunpack.c.l.b16 %v1282
    %v1307 = vunpack.c.l.b16 %v1283
    %v1308 = vunpack.c.l.b16 %v1284
    %v1309 = vunpack.c.l.b16 %v1285
    %v1310 = vunpack.c.l.b16 %v1286
    %v1311 = vunpack.c.l.b16 %v1287
    %v1312 = vunpack.c.l.b16 %v1288
    %v1313 = vpack.c.b16 %v1306, %v1305
    %v1314 = vpack.c.b16 %v1308, %v1307
    %v1315 = vpack.c.b16 %v1310, %v1309
    %v1316 = vpack.c.b16 %v1312, %v1311
    %1321 = vmatprep.subr.bf16.mxu0 0
    %1322 = vmatpush1.bf16.msra.mxu0 %v1313
    %1323 = vmatprep.subr.bf16.mxu0 0
    %1324 = vmatpush1.bf16.msra.mxu0 %v1314
    %1325 = vmatprep.subr.bf16.mxu0 0
    %1326 = vmatpush1.bf16.msra.mxu0 %v1315
    %1327 = vmatprep.subr.bf16.mxu0 0
    %1328 = vmatpush1.bf16.msra.mxu0 %v1316
    %1329 = vmatprep.subr.bf16.mxu0 0
    %1330 = vmatpush1.bf16.msra.mxu0 0
    %1331 = vmatprep.subr.bf16.mxu0 0
    %1332 = vmatpush1.bf16.msra.mxu0 0
    %1333 = vmatprep.subr.bf16.mxu0 0
    %1334 = vmatpush1.bf16.msra.mxu0 0
    %1335 = vmatprep.subr.bf16.mxu0 0
    %1336 = vmatpush1.bf16.msra.mxu0 0
    %1337 = vmatprep.subr.bf16.mxu0 0
    %1338 = vmatpush1.bf16.msra.mxu0 0
    %1339 = vmatprep.subr.bf16.mxu0 0
    %1340 = vmatpush1.bf16.msra.mxu0 0
    %1341 = vmatprep.subr.bf16.mxu0 0
    %1342 = vmatpush1.bf16.msra.mxu0 0
    %1343 = vmatprep.subr.bf16.mxu0 0
    %1344 = vmatpush1.bf16.msra.mxu0 0
    %1345 = vmatprep.subr.bf16.mxu0 0
    %1346 = vmatpush1.bf16.msra.mxu0 0
    %1347 = vmatprep.subr.bf16.mxu0 0
    %1348 = vmatpush1.bf16.msra.mxu0 0
    %1349 = vmatprep.subr.bf16.mxu0 0
    %1350 = vmatpush1.bf16.msra.mxu0 0
    %1351 = vmatprep.subr.bf16.mxu0 0
    %1352 = vmatpush1.bf16.msra.mxu0 0
    %1353 = vmatprep.mubr.bf16.mxu0 0
    %1354 = vmatmul.mubr.bf16.gmra.mrb[0].mxu0 %v177
    %v1355 = vpop.f32.mrb[0].mxu0
    %v1356 = vadd.f32 %v1295, %v1355
    %v1357 = vpop.f32.mrb[0].mxu0
    %v1358 = vpop.f32.mrb[0].mxu0
    %v1359 = vadd.f32 %v1295, %v1358
    %v1360 = vpop.f32.mrb[0].mxu0
    %1361 = vmatprep.mubr.bf16.mxu0 0
    %1362 = vmatmul.mubr.bf16.gmra.mrb[0].mxu0 %v180
    %v1363 = vpop.f32.mrb[0].mxu0
    %v1364 = vadd.f32 %v1295, %v1363
    %v1365 = vpop.f32.mrb[0].mxu0
    %v1366 = vpop.f32.mrb[0].mxu0
    %v1367 = vadd.f32 %v1295, %v1366
    %v1368 = vpop.f32.mrb[0].mxu0
    %1369 = vdwg.mxu0
    %s1370 = scalar_lea.vmem %s3, 192
    %v1371 = vld [vmem:[%s1370] sm:$0xf]
    %v1372 = vld [vmem:[%s1370 + $0x4] sm:$0xf]
    %v1373 = vld [vmem:[%s1370 + $0x8] sm:$0xf]
    %v1374 = vld [vmem:[%s1370 + $0xc] sm:$0xf]
    %v1375 = vld [vmem:[%s1370 + $0x10] sm:$0xf]
    %v1376 = vld [vmem:[%s1370 + $0x14] sm:$0xf]
    %v1377 = vld [vmem:[%s1370 + $0x18] sm:$0xf]
    %v1378 = vld [vmem:[%s1370 + $0x1c] sm:$0xf]
    %s1379 = scalar_lea.vmem %s4, 6
    %v1380 = vld [vmem:[%s1379] sm:$0x1]
    %v1382 = vlaneseq
    %v1383 = vshrl.u32 %v1382, 7
    %v1384 = vsub.s32 0, %v1383
    %v1385 = vrot.slane %v1380, %v1384
    %v1395 = vunpack.c.l.b16 %v1371
    %v1396 = vunpack.c.l.b16 %v1372
    %v1397 = vunpack.c.l.b16 %v1373
    %v1398 = vunpack.c.l.b16 %v1374
    %v1399 = vunpack.c.l.b16 %v1375
    %v1400 = vunpack.c.l.b16 %v1376
    %v1401 = vunpack.c.l.b16 %v1377
    %v1402 = vunpack.c.l.b16 %v1378
    %v1403 = vpack.c.b16 %v1396, %v1395
    %v1404 = vpack.c.b16 %v1398, %v1397
    %v1405 = vpack.c.b16 %v1400, %v1399
    %v1406 = vpack.c.b16 %v1402, %v1401
    %1411 = vmatprep.subr.bf16.mxu0 0
    %1412 = vmatpush1.bf16.msra.mxu0 %v1403
    %1413 = vmatprep.subr.bf16.mxu0 0
    %1414 = vmatpush1.bf16.msra.mxu0 %v1404
    %1415 = vmatprep.subr.bf16.mxu0 0
    %1416 = vmatpush1.bf16.msra.mxu0 %v1405
    %1417 = vmatprep.subr.bf16.mxu0 0
    %1418 = vmatpush1.bf16.msra.mxu0 %v1406
    %1419 = vmatprep.subr.bf16.mxu0 0
    %1420 = vmatpush1.bf16.msra.mxu0 0
    %1421 = vmatprep.subr.bf16.mxu0 0
    %1422 = vmatpush1.bf16.msra.mxu0 0
    %1423 = vmatprep.subr.bf16.mxu0 0
    %1424 = vmatpush1.bf16.msra.mxu0 0
    %1425 = vmatprep.subr.bf16.mxu0 0
    %1426 = vmatpush1.bf16.msra.mxu0 0
    %1427 = vmatprep.subr.bf16.mxu0 0
    %1428 = vmatpush1.bf16.msra.mxu0 0
    %1429 = vmatprep.subr.bf16.mxu0 0
    %1430 = vmatpush1.bf16.msra.mxu0 0
    %1431 = vmatprep.subr.bf16.mxu0 0
    %1432 = vmatpush1.bf16.msra.mxu0 0
    %1433 = vmatprep.subr.bf16.mxu0 0
    %1434 = vmatpush1.bf16.msra.mxu0 0
    %1435 = vmatprep.subr.bf16.mxu0 0
    %1436 = vmatpush1.bf16.msra.mxu0 0
    %1437 = vmatprep.subr.bf16.mxu0 0
    %1438 = vmatpush1.bf16.msra.mxu0 0
    %1439 = vmatprep.subr.bf16.mxu0 0
    %1440 = vmatpush1.bf16.msra.mxu0 0
    %1441 = vmatprep.subr.bf16.mxu0 0
    %1442 = vmatpush1.bf16.msra.mxu0 0
    %1443 = vmatprep.mubr.bf16.mxu0 0
    %1444 = vmatmul.mubr.bf16.gmra.mrb[0].mxu0 %v177
    %v1445 = vpop.f32.mrb[0].mxu0
    %v1446 = vadd.f32 %v1385, %v1445
    %v1447 = vpop.f32.mrb[0].mxu0
    %v1448 = vpop.f32.mrb[0].mxu0
    %v1449 = vadd.f32 %v1385, %v1448
    %v1450 = vpop.f32.mrb[0].mxu0
    %1451 = vmatprep.mubr.bf16.mxu0 0
    %1452 = vmatmul.mubr.bf16.gmra.mrb[0].mxu0 %v180
    %v1453 = vpop.f32.mrb[0].mxu0
    %v1454 = vadd.f32 %v1385, %v1453
    %v1455 = vpop.f32.mrb[0].mxu0
    %v1456 = vpop.f32.mrb[0].mxu0
    %v1457 = vadd.f32 %v1385, %v1456
    %v1458 = vpop.f32.mrb[0].mxu0
    %1459 = vdwg.mxu0
    %s1460 = scalar_lea.vmem %s3, 320
    %v1461 = vld [vmem:[%s1460] sm:$0xf]
    %v1462 = vld [vmem:[%s1460 + $0x4] sm:$0xf]
    %v1463 = vld [vmem:[%s1460 + $0x8] sm:$0xf]
    %v1464 = vld [vmem:[%s1460 + $0xc] sm:$0xf]
    %v1465 = vld [vmem:[%s1460 + $0x10] sm:$0xf]
    %v1466 = vld [vmem:[%s1460 + $0x14] sm:$0xf]
    %v1467 = vld [vmem:[%s1460 + $0x18] sm:$0xf]
    %v1468 = vld [vmem:[%s1460 + $0x1c] sm:$0xf]
    %s1469 = scalar_lea.vmem %s4, 10
    %v1470 = vld [vmem:[%s1469] sm:$0x1]
    %v1472 = vlaneseq
    %v1473 = vshrl.u32 %v1472, 7
    %v1474 = vsub.s32 0, %v1473
    %v1475 = vrot.slane %v1470, %v1474
    %v1485 = vunpack.c.l.b16 %v1461
    %v1486 = vunpack.c.l.b16 %v1462
    %v1487 = vunpack.c.l.b16 %v1463
    %v1488 = vunpack.c.l.b16 %v1464
    %v1489 = vunpack.c.l.b16 %v1465
    %v1490 = vunpack.c.l.b16 %v1466
    %v1491 = vunpack.c.l.b16 %v1467
    %v1492 = vunpack.c.l.b16 %v1468
    %v1493 = vpack.c.b16 %v1486, %v1485
    %v1494 = vpack.c.b16 %v1488, %v1487
    %v1495 = vpack.c.b16 %v1490, %v1489
    %v1496 = vpack.c.b16 %v1492, %v1491
    %1501 = vmatprep.subr.bf16.mxu0 0
    %1502 = vmatpush1.bf16.msra.mxu0 %v1493
    %1503 = vmatprep.subr.bf16.mxu0 0
    %1504 = vmatpush1.bf16.msra.mxu0 %v1494
    %1505 = vmatprep.subr.bf16.mxu0 0
    %1506 = vmatpush1.bf16.msra.mxu0 %v1495
    %1507 = vmatprep.subr.bf16.mxu0 0
    %1508 = vmatpush1.bf16.msra.mxu0 %v1496
    %1509 = vmatprep.subr.bf16.mxu0 0
    %1510 = vmatpush1.bf16.msra.mxu0 0
    %1511 = vmatprep.subr.bf16.mxu0 0
    %1512 = vmatpush1.bf16.msra.mxu0 0
    %1513 = vmatprep.subr.bf16.mxu0 0
    %1514 = vmatpush1.bf16.msra.mxu0 0
    %1515 = vmatprep.subr.bf16.mxu0 0
    %1516 = vmatpush1.bf16.msra.mxu0 0
    %1517 = vmatprep.subr.bf16.mxu0 0
    %1518 = vmatpush1.bf16.msra.mxu0 0
    %1519 = vmatprep.subr.bf16.mxu0 0
    %1520 = vmatpush1.bf16.msra.mxu0 0
    %1521 = vmatprep.subr.bf16.mxu0 0
    %1522 = vmatpush1.bf16.msra.mxu0 0
    %1523 = vmatprep.subr.bf16.mxu0 0
    %1524 = vmatpush1.bf16.msra.mxu0 0
    %1525 = vmatprep.subr.bf16.mxu0 0
    %1526 = vmatpush1.bf16.msra.mxu0 0
    %1527 = vmatprep.subr.bf16.mxu0 0
    %1528 = vmatpush1.bf16.msra.mxu0 0
    %1529 = vmatprep.subr.bf16.mxu0 0
    %1530 = vmatpush1.bf16.msra.mxu0 0
    %1531 = vmatprep.subr.bf16.mxu0 0
    %1532 = vmatpush1.bf16.msra.mxu0 0
    %1533 = vmatprep.mubr.bf16.mxu0 0
    %1534 = vmatmul.mubr.bf16.gmra.mrb[0].mxu0 %v177
    %v1535 = vpop.f32.mrb[0].mxu0
    %v1536 = vadd.f32 %v1475, %v1535
    %v1537 = vpop.f32.mrb[0].mxu0
    %v1538 = vpop.f32.mrb[0].mxu0
    %v1539 = vadd.f32 %v1475, %v1538
    %v1540 = vpop.f32.mrb[0].mxu0
    %1541 = vmatprep.mubr.bf16.mxu0 0
    %1542 = vmatmul.mubr.bf16.gmra.mrb[0].mxu0 %v180
    %v1543 = vpop.f32.mrb[0].mxu0
    %v1544 = vadd.f32 %v1475, %v1543
    %v1545 = vpop.f32.mrb[0].mxu0
    %v1546 = vpop.f32.mrb[0].mxu0
    %v1547 = vadd.f32 %v1475, %v1546
    %v1548 = vpop.f32.mrb[0].mxu0
    %1549 = vdwg.mxu0
    %v1550 = vpack.c.bf16 %v1359, %v1356
    %v1551 = vpack.c.bf16 %v1367, %v1364
    %v1552 = vpack.c.bf16 %v1449, %v1446
    %v1553 = vpack.c.bf16 %v1457, %v1454
    %v1554 = vpack.c.bf16 %v1539, %v1536
    %v1555 = vpack.c.bf16 %v1547, %v1544
    %v1557 = vsel %vm71, %v1550, 0
    %v1560 = vsel %vm71, %v1552, 0
    %1562 = vmatprep.subr.bf16.mxu0 0
    %1563 = vmatpush1.bf16.xpose.msra.mxu0 %v1560
    %1564 = vmatprep.subr.bf16.mxu0 0
    %1565 = vmatpush1.bf16.xpose.msra.mxu0 0
    %1566 = vmatprep.subr.bf16.mxu0 0
    %1567 = vmatpush1.bf16.xpose.msra.mxu0 0
    %1568 = vmatprep.subr.bf16.mxu0 0
    %1569 = vmatpush1.bf16.xpose.msra.mxu0 0
    %1570 = vmatprep.subr.bf16.mxu0 0
    %1571 = vmatpush1.bf16.xpose.msra.mxu0 0
    %1572 = vmatprep.subr.bf16.mxu0 0
    %1573 = vmatpush1.bf16.xpose.msra.mxu0 0
    %1574 = vmatprep.subr.bf16.mxu0 0
    %1575 = vmatpush1.bf16.xpose.msra.mxu0 0
    %1576 = vmatprep.subr.bf16.mxu0 0
    %1577 = vmatpush1.bf16.xpose.msra.mxu0 0
    %1578 = vmatprep.subr.bf16.mxu0 0
    %1579 = vmatpush1.bf16.xpose.msra.mxu0 0
    %1580 = vmatprep.subr.bf16.mxu0 0
    %1581 = vmatpush1.bf16.xpose.msra.mxu0 0
    %1582 = vmatprep.subr.bf16.mxu0 0
    %1583 = vmatpush1.bf16.xpose.msra.mxu0 0
    %1584 = vmatprep.subr.bf16.mxu0 0
    %1585 = vmatpush1.bf16.xpose.msra.mxu0 0
    %1586 = vmatprep.subr.bf16.mxu0 0
    %1587 = vmatpush1.bf16.xpose.msra.mxu0 0
    %1588 = vmatprep.subr.bf16.mxu0 0
    %1589 = vmatpush1.bf16.xpose.msra.mxu0 0
    %1590 = vmatprep.subr.bf16.mxu0 0
    %1591 = vmatpush1.bf16.xpose.msra.mxu0 0
    %1592 = vmatprep.subr.bf16.mxu0 0
    %1593 = vmatpush1.bf16.xpose.msra.mxu0 0
    %1594 = vmatprep.mubr.bf16.mxu0 0
    %1595 = vmatmul.mubr.bf16.gmra.mrb[0].mxu0 %v1557
    %v1596 = vpop.f32.mrb[0].mxu0
    %v1597 = vadd.f32 0.0, %v1596
    %v1598 = vpop.f32.mrb[0].mxu0
    %v1599 = vpop.f32.mrb[0].mxu0
    %v1600 = vadd.f32 0.0, %v1599
    %v1601 = vpop.f32.mrb[0].mxu0
    %1602 = vdwg.mxu0
    %v1604 = vsel %vm71, %v1551, 0
    %v1607 = vsel %vm71, %v1553, 0
    %1609 = vmatprep.subr.bf16.mxu0 0
    %1610 = vmatpush1.bf16.xpose.msra.mxu0 %v1607
    %1611 = vmatprep.subr.bf16.mxu0 0
    %1612 = vmatpush1.bf16.xpose.msra.mxu0 0
    %1613 = vmatprep.subr.bf16.mxu0 0
    %1614 = vmatpush1.bf16.xpose.msra.mxu0 0
    %1615 = vmatprep.subr.bf16.mxu0 0
    %1616 = vmatpush1.bf16.xpose.msra.mxu0 0
    %1617 = vmatprep.subr.bf16.mxu0 0
    %1618 = vmatpush1.bf16.xpose.msra.mxu0 0
    %1619 = vmatprep.subr.bf16.mxu0 0
    %1620 = vmatpush1.bf16.xpose.msra.mxu0 0
    %1621 = vmatprep.subr.bf16.mxu0 0
    %1622 = vmatpush1.bf16.xpose.msra.mxu0 0
    %1623 = vmatprep.subr.bf16.mxu0 0
    %1624 = vmatpush1.bf16.xpose.msra.mxu0 0
    %1625 = vmatprep.subr.bf16.mxu0 0
    %1626 = vmatpush1.bf16.xpose.msra.mxu0 0
    %1627 = vmatprep.subr.bf16.mxu0 0
    %1628 = vmatpush1.bf16.xpose.msra.mxu0 0
    %1629 = vmatprep.subr.bf16.mxu0 0
    %1630 = vmatpush1.bf16.xpose.msra.mxu0 0
    %1631 = vmatprep.subr.bf16.mxu0 0
    %1632 = vmatpush1.bf16.xpose.msra.mxu0 0
    %1633 = vmatprep.subr.bf16.mxu0 0
    %1634 = vmatpush1.bf16.xpose.msra.mxu0 0
    %1635 = vmatprep.subr.bf16.mxu0 0
    %1636 = vmatpush1.bf16.xpose.msra.mxu0 0
    %1637 = vmatprep.subr.bf16.mxu0 0
    %1638 = vmatpush1.bf16.xpose.msra.mxu0 0
    %1639 = vmatprep.subr.bf16.mxu0 0
    %1640 = vmatpush1.bf16.xpose.msra.mxu0 0
    %1641 = vmatprep.mubr.bf16.mxu0 0
    %1642 = vmatmul.mubr.bf16.gmra.mrb[0].mxu0 %v1604
    %v1643 = vpop.f32.mrb[0].mxu0
    %v1644 = vadd.f32 0.0, %v1643
    %v1645 = vpop.f32.mrb[0].mxu0
    %v1646 = vpop.f32.mrb[0].mxu0
    %v1647 = vadd.f32 0.0, %v1646
    %v1648 = vpop.f32.mrb[0].mxu0
    %1649 = vdwg.mxu0
    %v1650 = vsel %vm71, %v1597, -inf
    %1651 = vmax.xlane.f32.xlu0 %v1650
    %v1652 = vpop.xlane.xlu0 %1651
    %v1653 = vsel %vm71, %v1600, -inf
    %1654 = vmax.xlane.f32.xlu0 %v1653
    %v1655 = vpop.xlane.xlu0 %1654
    %v1656 = vsel %vm71, %v1644, -inf
    %1657 = vmax.xlane.f32.xlu0 %v1656
    %v1658 = vpop.xlane.xlu0 %1657
    %v1659 = vsel %vm71, %v1647, -inf
    %1660 = vmax.xlane.f32.xlu0 %v1659
    %v1661 = vpop.xlane.xlu0 %1660
    %v1662 = vsub.f32 %v1597, %v1652
    %v1663 = vsub.f32 %v1600, %v1655
    %v1664 = vsub.f32 %v1644, %v1658
    %v1665 = vsub.f32 %v1647, %v1661
    %v1666 = vmul.f32 %v1662, 1.442695
    %v1667 = vpow.pop %v1666
    %v1668 = vmul.f32 %v1663, 1.442695
    %v1669 = vpow.pop %v1668
    %v1670 = vmul.f32 %v1664, 1.442695
    %v1671 = vpow.pop %v1670
    %v1672 = vmul.f32 %v1665, 1.442695
    %v1673 = vpow.pop %v1672
    %v1674 = vsel %vm71, %v1667, 0.0
    %1675 = vadd.xlane.f32.xlu0 %v1674
    %v1676 = vpop.xlane.xlu0 %1675
    %v1677 = vsel %vm71, %v1669, 0.0
    %1678 = vadd.xlane.f32.xlu0 %v1677
    %v1679 = vpop.xlane.xlu0 %1678
    %v1680 = vsel %vm71, %v1671, 0.0
    %1681 = vadd.xlane.f32.xlu0 %v1680
    %v1682 = vpop.xlane.xlu0 %1681
    %v1683 = vsel %vm71, %v1673, 0.0
    %1684 = vadd.xlane.f32.xlu0 %v1683
    %v1685 = vpop.xlane.xlu0 %1684
    %v1686 = vrcp.pop %v1676
    %v1687 = vrcp.pop %v1679
    %v1688 = vrcp.pop %v1682
    %v1689 = vrcp.pop %v1685
    %v1690 = vmul.f32 %v1667, %v1686
    %v1691 = vmul.f32 %v1669, %v1687
    %v1692 = vmul.f32 %v1671, %v1688
    %v1693 = vmul.f32 %v1673, %v1689
    %v1694 = vpack.c.bf16 %v1691, %v1690
    %v1695 = vpack.c.bf16 %v1693, %v1692
    %v1697 = vsel %vm71, %v1694, 0
    %1699 = vmatprep.subr.bf16.mxu0 0
    %1700 = vmatpush1.bf16.msra.mxu0 %v1554
    %1701 = vmatprep.subr.bf16.mxu0 0
    %1702 = vmatpush1.bf16.msra.mxu0 0
    %1703 = vmatprep.subr.bf16.mxu0 0
    %1704 = vmatpush1.bf16.msra.mxu0 0
    %1705 = vmatprep.subr.bf16.mxu0 0
    %1706 = vmatpush1.bf16.msra.mxu0 0
    %1707 = vmatprep.subr.bf16.mxu0 0
    %1708 = vmatpush1.bf16.msra.mxu0 0
    %1709 = vmatprep.subr.bf16.mxu0 0
    %1710 = vmatpush1.bf16.msra.mxu0 0
    %1711 = vmatprep.subr.bf16.mxu0 0
    %1712 = vmatpush1.bf16.msra.mxu0 0
    %1713 = vmatprep.subr.bf16.mxu0 0
    %1714 = vmatpush1.bf16.msra.mxu0 0
    %1715 = vmatprep.subr.bf16.mxu0 0
    %1716 = vmatpush1.bf16.msra.mxu0 0
    %1717 = vmatprep.subr.bf16.mxu0 0
    %1718 = vmatpush1.bf16.msra.mxu0 0
    %1719 = vmatprep.subr.bf16.mxu0 0
    %1720 = vmatpush1.bf16.msra.mxu0 0
    %1721 = vmatprep.subr.bf16.mxu0 0
    %1722 = vmatpush1.bf16.msra.mxu0 0
    %1723 = vmatprep.subr.bf16.mxu0 0
    %1724 = vmatpush1.bf16.msra.mxu0 0
    %1725 = vmatprep.subr.bf16.mxu0 0
    %1726 = vmatpush1.bf16.msra.mxu0 0
    %1727 = vmatprep.subr.bf16.mxu0 0
    %1728 = vmatpush1.bf16.msra.mxu0 0
    %1729 = vmatprep.subr.bf16.mxu0 0
    %1730 = vmatpush1.bf16.msra.mxu0 0
    %1731 = vmatprep.mubr.bf16.mxu0 0
    %1732 = vmatmul.mubr.bf16.gmra.mrb[0].mxu0 %v1697
    %v1733 = vpop.f32.mrb[0].mxu0
    %v1734 = vadd.f32 0.0, %v1733
    %v1735 = vpop.f32.mrb[0].mxu0
    %v1736 = vpop.f32.mrb[0].mxu0
    %v1737 = vadd.f32 0.0, %v1736
    %v1738 = vpop.f32.mrb[0].mxu0
    %1739 = vdwg.mxu0
    %v1741 = vsel %vm71, %v1695, 0
    %1743 = vmatprep.subr.bf16.mxu0 0
    %1744 = vmatpush1.bf16.msra.mxu0 %v1555
    %1745 = vmatprep.subr.bf16.mxu0 0
    %1746 = vmatpush1.bf16.msra.mxu0 0
    %1747 = vmatprep.subr.bf16.mxu0 0
    %1748 = vmatpush1.bf16.msra.mxu0 0
    %1749 = vmatprep.subr.bf16.mxu0 0
    %1750 = vmatpush1.bf16.msra.mxu0 0
    %1751 = vmatprep.subr.bf16.mxu0 0
    %1752 = vmatpush1.bf16.msra.mxu0 0
    %1753 = vmatprep.subr.bf16.mxu0 0
    %1754 = vmatpush1.bf16.msra.mxu0 0
    %1755 = vmatprep.subr.bf16.mxu0 0
    %1756 = vmatpush1.bf16.msra.mxu0 0
    %1757 = vmatprep.subr.bf16.mxu0 0
    %1758 = vmatpush1.bf16.msra.mxu0 0
    %1759 = vmatprep.subr.bf16.mxu0 0
    %1760 = vmatpush1.bf16.msra.mxu0 0
    %1761 = vmatprep.subr.bf16.mxu0 0
    %1762 = vmatpush1.bf16.msra.mxu0 0
    %1763 = vmatprep.subr.bf16.mxu0 0
    %1764 = vmatpush1.bf16.msra.mxu0 0
    %1765 = vmatprep.subr.bf16.mxu0 0
    %1766 = vmatpush1.bf16.msra.mxu0 0
    %1767 = vmatprep.subr.bf16.mxu0 0
    %1768 = vmatpush1.bf16.msra.mxu0 0
    %1769 = vmatprep.subr.bf16.mxu0 0
    %1770 = vmatpush1.bf16.msra.mxu0 0
    %1771 = vmatprep.subr.bf16.mxu0 0
    %1772 = vmatpush1.bf16.msra.mxu0 0
    %1773 = vmatprep.subr.bf16.mxu0 0
    %1774 = vmatpush1.bf16.msra.mxu0 0
    %1775 = vmatprep.mubr.bf16.mxu0 0
    %1776 = vmatmul.mubr.bf16.gmra.mrb[0].mxu0 %v1741
    %v1777 = vpop.f32.mrb[0].mxu0
    %v1778 = vadd.f32 0.0, %v1777
    %v1779 = vpop.f32.mrb[0].mxu0
    %v1780 = vpop.f32.mrb[0].mxu0
    %v1781 = vadd.f32 0.0, %v1780
    %v1782 = vpop.f32.mrb[0].mxu0
    %1783 = vdwg.mxu0
    %v1784 = vpack.c.bf16 %v1737, %v1734
    %v1785 = vpack.c.bf16 %v1781, %v1778
    %s1786 = scalar_lea.vmem %s5, 16
    %v1787 = vld [vmem:[%s1786] sm:$0xf]
    %v1788 = vld [vmem:[%s1786 + $0x4] sm:$0xf]
    %v1791 = vunpack.c.l.b16 %v1787
    %v1792 = vunpack.c.l.b16 %v1788
    %v1793 = vpack.c.b16 %v1792, %v1791
    %v1796 = vsel %vm71, %v1784, 0
    %v1799 = vsel %vm71, %v1785, 0
    %1801 = vmatprep.subr.bf16.mxu0 0
    %1802 = vmatpush1.bf16.msra.mxu0 %v1793
    %1803 = vmatprep.subr.bf16.mxu0 0
    %1804 = vmatpush1.bf16.msra.mxu0 0
    %1805 = vmatprep.subr.bf16.mxu0 0
    %1806 = vmatpush1.bf16.msra.mxu0 0
    %1807 = vmatprep.subr.bf16.mxu0 0
    %1808 = vmatpush1.bf16.msra.mxu0 0
    %1809 = vmatprep.subr.bf16.mxu0 0
    %1810 = vmatpush1.bf16.msra.mxu0 0
    %1811 = vmatprep.subr.bf16.mxu0 0
    %1812 = vmatpush1.bf16.msra.mxu0 0
    %1813 = vmatprep.subr.bf16.mxu0 0
    %1814 = vmatpush1.bf16.msra.mxu0 0
    %1815 = vmatprep.subr.bf16.mxu0 0
    %1816 = vmatpush1.bf16.msra.mxu0 0
    %1817 = vmatprep.subr.bf16.mxu0 0
    %1818 = vmatpush1.bf16.msra.mxu0 0
    %1819 = vmatprep.subr.bf16.mxu0 0
    %1820 = vmatpush1.bf16.msra.mxu0 0
    %1821 = vmatprep.subr.bf16.mxu0 0
    %1822 = vmatpush1.bf16.msra.mxu0 0
    %1823 = vmatprep.subr.bf16.mxu0 0
    %1824 = vmatpush1.bf16.msra.mxu0 0
    %1825 = vmatprep.subr.bf16.mxu0 0
    %1826 = vmatpush1.bf16.msra.mxu0 0
    %1827 = vmatprep.subr.bf16.mxu0 0
    %1828 = vmatpush1.bf16.msra.mxu0 0
    %1829 = vmatprep.subr.bf16.mxu0 0
    %1830 = vmatpush1.bf16.msra.mxu0 0
    %1831 = vmatprep.subr.bf16.mxu0 0
    %1832 = vmatpush1.bf16.msra.mxu0 0
    %1833 = vmatprep.mubr.bf16.mxu0 0
    %1834 = vmatmul.mubr.bf16.gmra.mrb[0].mxu0 %v1796
    %v1835 = vpop.f32.mrb[0].mxu0
    %v1836 = vadd.f32 0.0, %v1835
    %v1837 = vpop.f32.mrb[0].mxu0
    %v1838 = vpop.f32.mrb[0].mxu0
    %v1839 = vadd.f32 0.0, %v1838
    %v1840 = vpop.f32.mrb[0].mxu0
    %1841 = vmatprep.mubr.bf16.mxu0 0
    %1842 = vmatmul.mubr.bf16.gmra.mrb[0].mxu0 %v1799
    %v1843 = vpop.f32.mrb[0].mxu0
    %v1844 = vadd.f32 0.0, %v1843
    %v1845 = vpop.f32.mrb[0].mxu0
    %v1846 = vpop.f32.mrb[0].mxu0
    %v1847 = vadd.f32 0.0, %v1846
    %v1848 = vpop.f32.mrb[0].mxu0
    %1849 = vdwg.mxu0
    %v1850 = vadd.f32 %v1266, %v1836
    %v1851 = vadd.f32 %v1269, %v1839
    %v1852 = vadd.f32 %v1274, %v1844
    %v1853 = vadd.f32 %v1277, %v1847
    %s1854 = scalar_lea.vmem %s3, 96
    %v1855 = vld [vmem:[%s1854] sm:$0xf]
    %v1856 = vld [vmem:[%s1854 + $0x4] sm:$0xf]
    %v1857 = vld [vmem:[%s1854 + $0x8] sm:$0xf]
    %v1858 = vld [vmem:[%s1854 + $0xc] sm:$0xf]
    %v1859 = vld [vmem:[%s1854 + $0x10] sm:$0xf]
    %v1860 = vld [vmem:[%s1854 + $0x14] sm:$0xf]
    %v1861 = vld [vmem:[%s1854 + $0x18] sm:$0xf]
    %v1862 = vld [vmem:[%s1854 + $0x1c] sm:$0xf]
    %s1863 = scalar_lea.vmem %s4, 3
    %v1864 = vld [vmem:[%s1863] sm:$0x1]
    %v1866 = vlaneseq
    %v1867 = vshrl.u32 %v1866, 7
    %v1868 = vsub.s32 0, %v1867
    %v1869 = vrot.slane %v1864, %v1868
    %v1879 = vunpack.c.l.b16 %v1855
    %v1880 = vunpack.c.l.b16 %v1856
    %v1881 = vunpack.c.l.b16 %v1857
    %v1882 = vunpack.c.l.b16 %v1858
    %v1883 = vunpack.c.l.b16 %v1859
    %v1884 = vunpack.c.l.b16 %v1860
    %v1885 = vunpack.c.l.b16 %v1861
    %v1886 = vunpack.c.l.b16 %v1862
    %v1887 = vpack.c.b16 %v1880, %v1879
    %v1888 = vpack.c.b16 %v1882, %v1881
    %v1889 = vpack.c.b16 %v1884, %v1883
    %v1890 = vpack.c.b16 %v1886, %v1885
    %1895 = vmatprep.subr.bf16.mxu0 0
    %1896 = vmatpush1.bf16.msra.mxu0 %v1887
    %1897 = vmatprep.subr.bf16.mxu0 0
    %1898 = vmatpush1.bf16.msra.mxu0 %v1888
    %1899 = vmatprep.subr.bf16.mxu0 0
    %1900 = vmatpush1.bf16.msra.mxu0 %v1889
    %1901 = vmatprep.subr.bf16.mxu0 0
    %1902 = vmatpush1.bf16.msra.mxu0 %v1890
    %1903 = vmatprep.subr.bf16.mxu0 0
    %1904 = vmatpush1.bf16.msra.mxu0 0
    %1905 = vmatprep.subr.bf16.mxu0 0
    %1906 = vmatpush1.bf16.msra.mxu0 0
    %1907 = vmatprep.subr.bf16.mxu0 0
    %1908 = vmatpush1.bf16.msra.mxu0 0
    %1909 = vmatprep.subr.bf16.mxu0 0
    %1910 = vmatpush1.bf16.msra.mxu0 0
    %1911 = vmatprep.subr.bf16.mxu0 0
    %1912 = vmatpush1.bf16.msra.mxu0 0
    %1913 = vmatprep.subr.bf16.mxu0 0
    %1914 = vmatpush1.bf16.msra.mxu0 0
    %1915 = vmatprep.subr.bf16.mxu0 0
    %1916 = vmatpush1.bf16.msra.mxu0 0
    %1917 = vmatprep.subr.bf16.mxu0 0
    %1918 = vmatpush1.bf16.msra.mxu0 0
    %1919 = vmatprep.subr.bf16.mxu0 0
    %1920 = vmatpush1.bf16.msra.mxu0 0
    %1921 = vmatprep.subr.bf16.mxu0 0
    %1922 = vmatpush1.bf16.msra.mxu0 0
    %1923 = vmatprep.subr.bf16.mxu0 0
    %1924 = vmatpush1.bf16.msra.mxu0 0
    %1925 = vmatprep.subr.bf16.mxu0 0
    %1926 = vmatpush1.bf16.msra.mxu0 0
    %1927 = vmatprep.mubr.bf16.mxu0 0
    %1928 = vmatmul.mubr.bf16.gmra.mrb[0].mxu0 %v177
    %v1929 = vpop.f32.mrb[0].mxu0
    %v1930 = vadd.f32 %v1869, %v1929
    %v1931 = vpop.f32.mrb[0].mxu0
    %v1932 = vpop.f32.mrb[0].mxu0
    %v1933 = vadd.f32 %v1869, %v1932
    %v1934 = vpop.f32.mrb[0].mxu0
    %1935 = vmatprep.mubr.bf16.mxu0 0
    %1936 = vmatmul.mubr.bf16.gmra.mrb[0].mxu0 %v180
    %v1937 = vpop.f32.mrb[0].mxu0
    %v1938 = vadd.f32 %v1869, %v1937
    %v1939 = vpop.f32.mrb[0].mxu0
    %v1940 = vpop.f32.mrb[0].mxu0
    %v1941 = vadd.f32 %v1869, %v1940
    %v1942 = vpop.f32.mrb[0].mxu0
    %1943 = vdwg.mxu0
    %s1944 = scalar_lea.vmem %s3, 224
    %v1945 = vld [vmem:[%s1944] sm:$0xf]
    %v1946 = vld [vmem:[%s1944 + $0x4] sm:$0xf]
    %v1947 = vld [vmem:[%s1944 + $0x8] sm:$0xf]
    %v1948 = vld [vmem:[%s1944 + $0xc] sm:$0xf]
    %v1949 = vld [vmem:[%s1944 + $0x10] sm:$0xf]
    %v1950 = vld [vmem:[%s1944 + $0x14] sm:$0xf]
    %v1951 = vld [vmem:[%s1944 + $0x18] sm:$0xf]
    %v1952 = vld [vmem:[%s1944 + $0x1c] sm:$0xf]
    %s1953 = scalar_lea.vmem %s4, 7
    %v1954 = vld [vmem:[%s1953] sm:$0x1]
    %v1956 = vlaneseq
    %v1957 = vshrl.u32 %v1956, 7
    %v1958 = vsub.s32 0, %v1957
    %v1959 = vrot.slane %v1954, %v1958
    %v1969 = vunpack.c.l.b16 %v1945
    %v1970 = vunpack.c.l.b16 %v1946
    %v1971 = vunpack.c.l.b16 %v1947
    %v1972 = vunpack.c.l.b16 %v1948
    %v1973 = vunpack.c.l.b16 %v1949
    %v1974 = vunpack.c.l.b16 %v1950
    %v1975 = vunpack.c.l.b16 %v1951
    %v1976 = vunpack.c.l.b16 %v1952
    %v1977 = vpack.c.b16 %v1970, %v1969
    %v1978 = vpack.c.b16 %v1972, %v1971
    %v1979 = vpack.c.b16 %v1974, %v1973
    %v1980 = vpack.c.b16 %v1976, %v1975
    %1985 = vmatprep.subr.bf16.mxu0 0
    %1986 = vmatpush1.bf16.msra.mxu0 %v1977
    %1987 = vmatprep.subr.bf16.mxu0 0
    %1988 = vmatpush1.bf16.msra.mxu0 %v1978
    %1989 = vmatprep.subr.bf16.mxu0 0
    %1990 = vmatpush1.bf16.msra.mxu0 %v1979
    %1991 = vmatprep.subr.bf16.mxu0 0
    %1992 = vmatpush1.bf16.msra.mxu0 %v1980
    %1993 = vmatprep.subr.bf16.mxu0 0
    %1994 = vmatpush1.bf16.msra.mxu0 0
    %1995 = vmatprep.subr.bf16.mxu0 0
    %1996 = vmatpush1.bf16.msra.mxu0 0
    %1997 = vmatprep.subr.bf16.mxu0 0
    %1998 = vmatpush1.bf16.msra.mxu0 0
    %1999 = vmatprep.subr.bf16.mxu0 0
    %2000 = vmatpush1.bf16.msra.mxu0 0
    %2001 = vmatprep.subr.bf16.mxu0 0
    %2002 = vmatpush1.bf16.msra.mxu0 0
    %2003 = vmatprep.subr.bf16.mxu0 0
    %2004 = vmatpush1.bf16.msra.mxu0 0
    %2005 = vmatprep.subr.bf16.mxu0 0
    %2006 = vmatpush1.bf16.msra.mxu0 0
    %2007 = vmatprep.subr.bf16.mxu0 0
    %2008 = vmatpush1.bf16.msra.mxu0 0
    %2009 = vmatprep.subr.bf16.mxu0 0
    %2010 = vmatpush1.bf16.msra.mxu0 0
    %2011 = vmatprep.subr.bf16.mxu0 0
    %2012 = vmatpush1.bf16.msra.mxu0 0
    %2013 = vmatprep.subr.bf16.mxu0 0
    %2014 = vmatpush1.bf16.msra.mxu0 0
    %2015 = vmatprep.subr.bf16.mxu0 0
    %2016 = vmatpush1.bf16.msra.mxu0 0
    %2017 = vmatprep.mubr.bf16.mxu0 0
    %2018 = vmatmul.mubr.bf16.gmra.mrb[0].mxu0 %v177
    %v2019 = vpop.f32.mrb[0].mxu0
    %v2020 = vadd.f32 %v1959, %v2019
    %v2021 = vpop.f32.mrb[0].mxu0
    %v2022 = vpop.f32.mrb[0].mxu0
    %v2023 = vadd.f32 %v1959, %v2022
    %v2024 = vpop.f32.mrb[0].mxu0
    %2025 = vmatprep.mubr.bf16.mxu0 0
    %2026 = vmatmul.mubr.bf16.gmra.mrb[0].mxu0 %v180
    %v2027 = vpop.f32.mrb[0].mxu0
    %v2028 = vadd.f32 %v1959, %v2027
    %v2029 = vpop.f32.mrb[0].mxu0
    %v2030 = vpop.f32.mrb[0].mxu0
    %v2031 = vadd.f32 %v1959, %v2030
    %v2032 = vpop.f32.mrb[0].mxu0
    %2033 = vdwg.mxu0
    %s2034 = scalar_lea.vmem %s3, 352
    %v2035 = vld [vmem:[%s2034] sm:$0xf]
    %v2036 = vld [vmem:[%s2034 + $0x4] sm:$0xf]
    %v2037 = vld [vmem:[%s2034 + $0x8] sm:$0xf]
    %v2038 = vld [vmem:[%s2034 + $0xc] sm:$0xf]
    %v2039 = vld [vmem:[%s2034 + $0x10] sm:$0xf]
    %v2040 = vld [vmem:[%s2034 + $0x14] sm:$0xf]
    %v2041 = vld [vmem:[%s2034 + $0x18] sm:$0xf]
    %v2042 = vld [vmem:[%s2034 + $0x1c] sm:$0xf]
    %s2043 = scalar_lea.vmem %s4, 11
    %v2044 = vld [vmem:[%s2043] sm:$0x1]
    %v2046 = vlaneseq
    %v2047 = vshrl.u32 %v2046, 7
    %v2048 = vsub.s32 0, %v2047
    %v2049 = vrot.slane %v2044, %v2048
    %v2059 = vunpack.c.l.b16 %v2035
    %v2060 = vunpack.c.l.b16 %v2036
    %v2061 = vunpack.c.l.b16 %v2037
    %v2062 = vunpack.c.l.b16 %v2038
    %v2063 = vunpack.c.l.b16 %v2039
    %v2064 = vunpack.c.l.b16 %v2040
    %v2065 = vunpack.c.l.b16 %v2041
    %v2066 = vunpack.c.l.b16 %v2042
    %v2067 = vpack.c.b16 %v2060, %v2059
    %v2068 = vpack.c.b16 %v2062, %v2061
    %v2069 = vpack.c.b16 %v2064, %v2063
    %v2070 = vpack.c.b16 %v2066, %v2065
    %2075 = vmatprep.subr.bf16.mxu0 0
    %2076 = vmatpush1.bf16.msra.mxu0 %v2067
    %2077 = vmatprep.subr.bf16.mxu0 0
    %2078 = vmatpush1.bf16.msra.mxu0 %v2068
    %2079 = vmatprep.subr.bf16.mxu0 0
    %2080 = vmatpush1.bf16.msra.mxu0 %v2069
    %2081 = vmatprep.subr.bf16.mxu0 0
    %2082 = vmatpush1.bf16.msra.mxu0 %v2070
    %2083 = vmatprep.subr.bf16.mxu0 0
    %2084 = vmatpush1.bf16.msra.mxu0 0
    %2085 = vmatprep.subr.bf16.mxu0 0
    %2086 = vmatpush1.bf16.msra.mxu0 0
    %2087 = vmatprep.subr.bf16.mxu0 0
    %2088 = vmatpush1.bf16.msra.mxu0 0
    %2089 = vmatprep.subr.bf16.mxu0 0
    %2090 = vmatpush1.bf16.msra.mxu0 0
    %2091 = vmatprep.subr.bf16.mxu0 0
    %2092 = vmatpush1.bf16.msra.mxu0 0
    %2093 = vmatprep.subr.bf16.mxu0 0
    %2094 = vmatpush1.bf16.msra.mxu0 0
    %2095 = vmatprep.subr.bf16.mxu0 0
    %2096 = vmatpush1.bf16.msra.mxu0 0
    %2097 = vmatprep.subr.bf16.mxu0 0
    %2098 = vmatpush1.bf16.msra.mxu0 0
    %2099 = vmatprep.subr.bf16.mxu0 0
    %2100 = vmatpush1.bf16.msra.mxu0 0
    %2101 = vmatprep.subr.bf16.mxu0 0
    %2102 = vmatpush1.bf16.msra.mxu0 0
    %2103 = vmatprep.subr.bf16.mxu0 0
    %2104 = vmatpush1.bf16.msra.mxu0 0
    %2105 = vmatprep.subr.bf16.mxu0 0
    %2106 = vmatpush1.bf16.msra.mxu0 0
    %2107 = vmatprep.mubr.bf16.mxu0 0
    %2108 = vmatmul.mubr.bf16.gmra.mrb[0].mxu0 %v177
    %v2109 = vpop.f32.mrb[0].mxu0
    %v2110 = vadd.f32 %v2049, %v2109
    %v2111 = vpop.f32.mrb[0].mxu0
    %v2112 = vpop.f32.mrb[0].mxu0
    %v2113 = vadd.f32 %v2049, %v2112
    %v2114 = vpop.f32.mrb[0].mxu0
    %2115 = vmatprep.mubr.bf16.mxu0 0
    %2116 = vmatmul.mubr.bf16.gmra.mrb[0].mxu0 %v180
    %v2117 = vpop.f32.mrb[0].mxu0
    %v2118 = vadd.f32 %v2049, %v2117
    %v2119 = vpop.f32.mrb[0].mxu0
    %v2120 = vpop.f32.mrb[0].mxu0
    %v2121 = vadd.f32 %v2049, %v2120
    %v2122 = vpop.f32.mrb[0].mxu0
    %2123 = vdwg.mxu0
    %v2124 = vpack.c.bf16 %v1933, %v1930
    %v2125 = vpack.c.bf16 %v1941, %v1938
    %v2126 = vpack.c.bf16 %v2023, %v2020
    %v2127 = vpack.c.bf16 %v2031, %v2028
    %v2128 = vpack.c.bf16 %v2113, %v2110
    %v2129 = vpack.c.bf16 %v2121, %v2118
    %v2131 = vsel %vm71, %v2124, 0
    %v2134 = vsel %vm71, %v2126, 0
    %2136 = vmatprep.subr.bf16.mxu0 0
    %2137 = vmatpush1.bf16.xpose.msra.mxu0 %v2134
    %2138 = vmatprep.subr.bf16.mxu0 0
    %2139 = vmatpush1.bf16.xpose.msra.mxu0 0
    %2140 = vmatprep.subr.bf16.mxu0 0
    %2141 = vmatpush1.bf16.xpose.msra.mxu0 0
    %2142 = vmatprep.subr.bf16.mxu0 0
    %2143 = vmatpush1.bf16.xpose.msra.mxu0 0
    %2144 = vmatprep.subr.bf16.mxu0 0
    %2145 = vmatpush1.bf16.xpose.msra.mxu0 0
    %2146 = vmatprep.subr.bf16.mxu0 0
    %2147 = vmatpush1.bf16.xpose.msra.mxu0 0
    %2148 = vmatprep.subr.bf16.mxu0 0
    %2149 = vmatpush1.bf16.xpose.msra.mxu0 0
    %2150 = vmatprep.subr.bf16.mxu0 0
    %2151 = vmatpush1.bf16.xpose.msra.mxu0 0
    %2152 = vmatprep.subr.bf16.mxu0 0
    %2153 = vmatpush1.bf16.xpose.msra.mxu0 0
    %2154 = vmatprep.subr.bf16.mxu0 0
    %2155 = vmatpush1.bf16.xpose.msra.mxu0 0
    %2156 = vmatprep.subr.bf16.mxu0 0
    %2157 = vmatpush1.bf16.xpose.msra.mxu0 0
    %2158 = vmatprep.subr.bf16.mxu0 0
    %2159 = vmatpush1.bf16.xpose.msra.mxu0 0
    %2160 = vmatprep.subr.bf16.mxu0 0
    %2161 = vmatpush1.bf16.xpose.msra.mxu0 0
    %2162 = vmatprep.subr.bf16.mxu0 0
    %2163 = vmatpush1.bf16.xpose.msra.mxu0 0
    %2164 = vmatprep.subr.bf16.mxu0 0
    %2165 = vmatpush1.bf16.xpose.msra.mxu0 0
    %2166 = vmatprep.subr.bf16.mxu0 0
    %2167 = vmatpush1.bf16.xpose.msra.mxu0 0
    %2168 = vmatprep.mubr.bf16.mxu0 0
    %2169 = vmatmul.mubr.bf16.gmra.mrb[0].mxu0 %v2131
    %v2170 = vpop.f32.mrb[0].mxu0
    %v2171 = vadd.f32 0.0, %v2170
    %v2172 = vpop.f32.mrb[0].mxu0
    %v2173 = vpop.f32.mrb[0].mxu0
    %v2174 = vadd.f32 0.0, %v2173
    %v2175 = vpop.f32.mrb[0].mxu0
    %2176 = vdwg.mxu0
    %v2178 = vsel %vm71, %v2125, 0
    %v2181 = vsel %vm71, %v2127, 0
    %2183 = vmatprep.subr.bf16.mxu0 0
    %2184 = vmatpush1.bf16.xpose.msra.mxu0 %v2181
    %2185 = vmatprep.subr.bf16.mxu0 0
    %2186 = vmatpush1.bf16.xpose.msra.mxu0 0
    %2187 = vmatprep.subr.bf16.mxu0 0
    %2188 = vmatpush1.bf16.xpose.msra.mxu0 0
    %2189 = vmatprep.subr.bf16.mxu0 0
    %2190 = vmatpush1.bf16.xpose.msra.mxu0 0
    %2191 = vmatprep.subr.bf16.mxu0 0
    %2192 = vmatpush1.bf16.xpose.msra.mxu0 0
    %2193 = vmatprep.subr.bf16.mxu0 0
    %2194 = vmatpush1.bf16.xpose.msra.mxu0 0
    %2195 = vmatprep.subr.bf16.mxu0 0
    %2196 = vmatpush1.bf16.xpose.msra.mxu0 0
    %2197 = vmatprep.subr.bf16.mxu0 0
    %2198 = vmatpush1.bf16.xpose.msra.mxu0 0
    %2199 = vmatprep.subr.bf16.mxu0 0
    %2200 = vmatpush1.bf16.xpose.msra.mxu0 0
    %2201 = vmatprep.subr.bf16.mxu0 0
    %2202 = vmatpush1.bf16.xpose.msra.mxu0 0
    %2203 = vmatprep.subr.bf16.mxu0 0
    %2204 = vmatpush1.bf16.xpose.msra.mxu0 0
    %2205 = vmatprep.subr.bf16.mxu0 0
    %2206 = vmatpush1.bf16.xpose.msra.mxu0 0
    %2207 = vmatprep.subr.bf16.mxu0 0
    %2208 = vmatpush1.bf16.xpose.msra.mxu0 0
    %2209 = vmatprep.subr.bf16.mxu0 0
    %2210 = vmatpush1.bf16.xpose.msra.mxu0 0
    %2211 = vmatprep.subr.bf16.mxu0 0
    %2212 = vmatpush1.bf16.xpose.msra.mxu0 0
    %2213 = vmatprep.subr.bf16.mxu0 0
    %2214 = vmatpush1.bf16.xpose.msra.mxu0 0
    %2215 = vmatprep.mubr.bf16.mxu0 0
    %2216 = vmatmul.mubr.bf16.gmra.mrb[0].mxu0 %v2178
    %v2217 = vpop.f32.mrb[0].mxu0
    %v2218 = vadd.f32 0.0, %v2217
    %v2219 = vpop.f32.mrb[0].mxu0
    %v2220 = vpop.f32.mrb[0].mxu0
    %v2221 = vadd.f32 0.0, %v2220
    %v2222 = vpop.f32.mrb[0].mxu0
    %2223 = vdwg.mxu0
    %v2224 = vsel %vm71, %v2171, -inf
    %2225 = vmax.xlane.f32.xlu0 %v2224
    %v2226 = vpop.xlane.xlu0 %2225
    %v2227 = vsel %vm71, %v2174, -inf
    %2228 = vmax.xlane.f32.xlu0 %v2227
    %v2229 = vpop.xlane.xlu0 %2228
    %v2230 = vsel %vm71, %v2218, -inf
    %2231 = vmax.xlane.f32.xlu0 %v2230
    %v2232 = vpop.xlane.xlu0 %2231
    %v2233 = vsel %vm71, %v2221, -inf
    %2234 = vmax.xlane.f32.xlu0 %v2233
    %v2235 = vpop.xlane.xlu0 %2234
    %v2236 = vsub.f32 %v2171, %v2226
    %v2237 = vsub.f32 %v2174, %v2229
    %v2238 = vsub.f32 %v2218, %v2232
    %v2239 = vsub.f32 %v2221, %v2235
    %v2240 = vmul.f32 %v2236, 1.442695
    %v2241 = vpow.pop %v2240
    %v2242 = vmul.f32 %v2237, 1.442695
    %v2243 = vpow.pop %v2242
    %v2244 = vmul.f32 %v2238, 1.442695
    %v2245 = vpow.pop %v2244
    %v2246 = vmul.f32 %v2239, 1.442695
    %v2247 = vpow.pop %v2246
    %v2248 = vsel %vm71, %v2241, 0.0
    %2249 = vadd.xlane.f32.xlu0 %v2248
    %v2250 = vpop.xlane.xlu0 %2249
    %v2251 = vsel %vm71, %v2243, 0.0
    %2252 = vadd.xlane.f32.xlu0 %v2251
    %v2253 = vpop.xlane.xlu0 %2252
    %v2254 = vsel %vm71, %v2245, 0.0
    %2255 = vadd.xlane.f32.xlu0 %v2254
    %v2256 = vpop.xlane.xlu0 %2255
    %v2257 = vsel %vm71, %v2247, 0.0
    %2258 = vadd.xlane.f32.xlu0 %v2257
    %v2259 = vpop.xlane.xlu0 %2258
    %v2260 = vrcp.pop %v2250
    %v2261 = vrcp.pop %v2253
    %v2262 = vrcp.pop %v2256
    %v2263 = vrcp.pop %v2259
    %v2264 = vmul.f32 %v2241, %v2260
    %v2265 = vmul.f32 %v2243, %v2261
    %v2266 = vmul.f32 %v2245, %v2262
    %v2267 = vmul.f32 %v2247, %v2263
    %v2268 = vpack.c.bf16 %v2265, %v2264
    %v2269 = vpack.c.bf16 %v2267, %v2266
    %v2271 = vsel %vm71, %v2268, 0
    %2273 = vmatprep.subr.bf16.mxu0 0
    %2274 = vmatpush1.bf16.msra.mxu0 %v2128
    %2275 = vmatprep.subr.bf16.mxu0 0
    %2276 = vmatpush1.bf16.msra.mxu0 0
    %2277 = vmatprep.subr.bf16.mxu0 0
    %2278 = vmatpush1.bf16.msra.mxu0 0
    %2279 = vmatprep.subr.bf16.mxu0 0
    %2280 = vmatpush1.bf16.msra.mxu0 0
    %2281 = vmatprep.subr.bf16.mxu0 0
    %2282 = vmatpush1.bf16.msra.mxu0 0
    %2283 = vmatprep.subr.bf16.mxu0 0
    %2284 = vmatpush1.bf16.msra.mxu0 0
    %2285 = vmatprep.subr.bf16.mxu0 0
    %2286 = vmatpush1.bf16.msra.mxu0 0
    %2287 = vmatprep.subr.bf16.mxu0 0
    %2288 = vmatpush1.bf16.msra.mxu0 0
    %2289 = vmatprep.subr.bf16.mxu0 0
    %2290 = vmatpush1.bf16.msra.mxu0 0
    %2291 = vmatprep.subr.bf16.mxu0 0
    %2292 = vmatpush1.bf16.msra.mxu0 0
    %2293 = vmatprep.subr.bf16.mxu0 0
    %2294 = vmatpush1.bf16.msra.mxu0 0
    %2295 = vmatprep.subr.bf16.mxu0 0
    %2296 = vmatpush1.bf16.msra.mxu0 0
    %2297 = vmatprep.subr.bf16.mxu0 0
    %2298 = vmatpush1.bf16.msra.mxu0 0
    %2299 = vmatprep.subr.bf16.mxu0 0
    %2300 = vmatpush1.bf16.msra.mxu0 0
    %2301 = vmatprep.subr.bf16.mxu0 0
    %2302 = vmatpush1.bf16.msra.mxu0 0
    %2303 = vmatprep.subr.bf16.mxu0 0
    %2304 = vmatpush1.bf16.msra.mxu0 0
    %2305 = vmatprep.mubr.bf16.mxu0 0
    %2306 = vmatmul.mubr.bf16.gmra.mrb[0].mxu0 %v2271
    %v2307 = vpop.f32.mrb[0].mxu0
    %v2308 = vadd.f32 0.0, %v2307
    %v2309 = vpop.f32.mrb[0].mxu0
    %v2310 = vpop.f32.mrb[0].mxu0
    %v2311 = vadd.f32 0.0, %v2310
    %v2312 = vpop.f32.mrb[0].mxu0
    %2313 = vdwg.mxu0
    %v2315 = vsel %vm71, %v2269, 0
    %2317 = vmatprep.subr.bf16.mxu0 0
    %2318 = vmatpush1.bf16.msra.mxu0 %v2129
    %2319 = vmatprep.subr.bf16.mxu0 0
    %2320 = vmatpush1.bf16.msra.mxu0 0
    %2321 = vmatprep.subr.bf16.mxu0 0
    %2322 = vmatpush1.bf16.msra.mxu0 0
    %2323 = vmatprep.subr.bf16.mxu0 0
    %2324 = vmatpush1.bf16.msra.mxu0 0
    %2325 = vmatprep.subr.bf16.mxu0 0
    %2326 = vmatpush1.bf16.msra.mxu0 0
    %2327 = vmatprep.subr.bf16.mxu0 0
    %2328 = vmatpush1.bf16.msra.mxu0 0
    %2329 = vmatprep.subr.bf16.mxu0 0
    %2330 = vmatpush1.bf16.msra.mxu0 0
    %2331 = vmatprep.subr.bf16.mxu0 0
    %2332 = vmatpush1.bf16.msra.mxu0 0
    %2333 = vmatprep.subr.bf16.mxu0 0
    %2334 = vmatpush1.bf16.msra.mxu0 0
    %2335 = vmatprep.subr.bf16.mxu0 0
    %2336 = vmatpush1.bf16.msra.mxu0 0
    %2337 = vmatprep.subr.bf16.mxu0 0
    %2338 = vmatpush1.bf16.msra.mxu0 0
    %2339 = vmatprep.subr.bf16.mxu0 0
    %2340 = vmatpush1.bf16.msra.mxu0 0
    %2341 = vmatprep.subr.bf16.mxu0 0
    %2342 = vmatpush1.bf16.msra.mxu0 0
    %2343 = vmatprep.subr.bf16.mxu0 0
    %2344 = vmatpush1.bf16.msra.mxu0 0
    %2345 = vmatprep.subr.bf16.mxu0 0
    %2346 = vmatpush1.bf16.msra.mxu0 0
    %2347 = vmatprep.subr.bf16.mxu0 0
    %2348 = vmatpush1.bf16.msra.mxu0 0
    %2349 = vmatprep.mubr.bf16.mxu0 0
    %2350 = vmatmul.mubr.bf16.gmra.mrb[0].mxu0 %v2315
    %v2351 = vpop.f32.mrb[0].mxu0
    %v2352 = vadd.f32 0.0, %v2351
    %v2353 = vpop.f32.mrb[0].mxu0
    %v2354 = vpop.f32.mrb[0].mxu0
    %v2355 = vadd.f32 0.0, %v2354
    %v2356 = vpop.f32.mrb[0].mxu0
    %2357 = vdwg.mxu0
    %v2358 = vpack.c.bf16 %v2311, %v2308
    %v2359 = vpack.c.bf16 %v2355, %v2352
    %s2360 = scalar_lea.vmem %s5, 24
    %v2361 = vld [vmem:[%s2360] sm:$0xf]
    %v2362 = vld [vmem:[%s2360 + $0x4] sm:$0xf]
    %v2365 = vunpack.c.l.b16 %v2361
    %v2366 = vunpack.c.l.b16 %v2362
    %v2367 = vpack.c.b16 %v2366, %v2365
    %v2370 = vsel %vm71, %v2358, 0
    %v2373 = vsel %vm71, %v2359, 0
    %2375 = vmatprep.subr.bf16.mxu0 0
    %2376 = vmatpush1.bf16.msra.mxu0 %v2367
    %2377 = vmatprep.subr.bf16.mxu0 0
    %2378 = vmatpush1.bf16.msra.mxu0 0
    %2379 = vmatprep.subr.bf16.mxu0 0
    %2380 = vmatpush1.bf16.msra.mxu0 0
    %2381 = vmatprep.subr.bf16.mxu0 0
    %2382 = vmatpush1.bf16.msra.mxu0 0
    %2383 = vmatprep.subr.bf16.mxu0 0
    %2384 = vmatpush1.bf16.msra.mxu0 0
    %2385 = vmatprep.subr.bf16.mxu0 0
    %2386 = vmatpush1.bf16.msra.mxu0 0
    %2387 = vmatprep.subr.bf16.mxu0 0
    %2388 = vmatpush1.bf16.msra.mxu0 0
    %2389 = vmatprep.subr.bf16.mxu0 0
    %2390 = vmatpush1.bf16.msra.mxu0 0
    %2391 = vmatprep.subr.bf16.mxu0 0
    %2392 = vmatpush1.bf16.msra.mxu0 0
    %2393 = vmatprep.subr.bf16.mxu0 0
    %2394 = vmatpush1.bf16.msra.mxu0 0
    %2395 = vmatprep.subr.bf16.mxu0 0
    %2396 = vmatpush1.bf16.msra.mxu0 0
    %2397 = vmatprep.subr.bf16.mxu0 0
    %2398 = vmatpush1.bf16.msra.mxu0 0
    %2399 = vmatprep.subr.bf16.mxu0 0
    %2400 = vmatpush1.bf16.msra.mxu0 0
    %2401 = vmatprep.subr.bf16.mxu0 0
    %2402 = vmatpush1.bf16.msra.mxu0 0
    %2403 = vmatprep.subr.bf16.mxu0 0
    %2404 = vmatpush1.bf16.msra.mxu0 0
    %2405 = vmatprep.subr.bf16.mxu0 0
    %2406 = vmatpush1.bf16.msra.mxu0 0
    %2407 = vmatprep.mubr.bf16.mxu0 0
    %2408 = vmatmul.mubr.bf16.gmra.mrb[0].mxu0 %v2370
    %v2409 = vpop.f32.mrb[0].mxu0
    %v2410 = vadd.f32 0.0, %v2409
    %v2411 = vpop.f32.mrb[0].mxu0
    %v2412 = vpop.f32.mrb[0].mxu0
    %v2413 = vadd.f32 0.0, %v2412
    %v2414 = vpop.f32.mrb[0].mxu0
    %2415 = vmatprep.mubr.bf16.mxu0 0
    %2416 = vmatmul.mubr.bf16.gmra.mrb[0].mxu0 %v2373
    %v2417 = vpop.f32.mrb[0].mxu0
    %v2418 = vadd.f32 0.0, %v2417
    %v2419 = vpop.f32.mrb[0].mxu0
    %v2420 = vpop.f32.mrb[0].mxu0
    %v2421 = vadd.f32 0.0, %v2420
    %v2422 = vpop.f32.mrb[0].mxu0
    %2423 = vdwg.mxu0
    %v2424 = vadd.f32 %v1850, %v2410
    %v2425 = vadd.f32 %v1851, %v2413
    %v2426 = vadd.f32 %v1852, %v2418
    %v2427 = vadd.f32 %v1853, %v2421
    %v2428 = vlaneseq
    %v2429 = vshrl.u32 %v2428, 7
    %v2430 = vsub.s32 0, %v2429
    %v2431 = vrot.slane %v133, %v2430
    %v2432 = vadd.f32 %v2424, %v2431
    %v2433 = vadd.f32 %v2425, %v2431
    %v2434 = vadd.f32 %v2426, %v2431
    %v2435 = vadd.f32 %v2427, %v2431
    %v2436 = vadd.f32 %v129, %v2432
    %v2437 = vadd.f32 %v130, %v2433
    %v2438 = vadd.f32 %v131, %v2434
    %v2439 = vadd.f32 %v132, %v2435
    %v2440 = vsel %vm175, %v2436, 0.0
    %2441 = vadd.xlane.f32.xlu0 %v2440
    %v2442 = vpop.xlane.xlu0 %2441
    %v2443 = vsel %vm175, %v2437, 0.0
    %2444 = vadd.xlane.f32.xlu0 %v2443
    %v2445 = vpop.xlane.xlu0 %2444
    %v2446 = vsel %vm175, %v2438, 0.0
    %2447 = vadd.xlane.f32.xlu0 %v2446
    %v2448 = vpop.xlane.xlu0 %2447
    %v2449 = vsel %vm175, %v2439, 0.0
    %2450 = vadd.xlane.f32.xlu0 %v2449
    %v2451 = vpop.xlane.xlu0 %2450
    %v2452 = vrcp.pop 64.0
    %v2453 = vmul.f32 %v2442, %v2452
    %v2454 = vmul.f32 %v2445, %v2452
    %v2455 = vmul.f32 %v2448, %v2452
    %v2456 = vmul.f32 %v2451, %v2452
    %v2457 = vsub.f32 %v2436, %v2453
    %v2458 = vsub.f32 %v2437, %v2454
    %v2459 = vsub.f32 %v2438, %v2455
    %v2460 = vsub.f32 %v2439, %v2456
    %v2461 = vmul.f32 %v2457, %v2457
    %v2462 = vmul.f32 %v2458, %v2458
    %v2463 = vmul.f32 %v2459, %v2459
    %v2464 = vmul.f32 %v2460, %v2460
    %v2465 = vsel %vm175, %v2461, 0.0
    %2466 = vadd.xlane.f32.xlu0 %v2465
    %v2467 = vpop.xlane.xlu0 %2466
    %v2468 = vsel %vm175, %v2462, 0.0
    %2469 = vadd.xlane.f32.xlu0 %v2468
    %v2470 = vpop.xlane.xlu0 %2469
    %v2471 = vsel %vm175, %v2463, 0.0
    %2472 = vadd.xlane.f32.xlu0 %v2471
    %v2473 = vpop.xlane.xlu0 %2472
    %v2474 = vsel %vm175, %v2464, 0.0
    %2475 = vadd.xlane.f32.xlu0 %v2474
    %v2476 = vpop.xlane.xlu0 %2475
    %v2477 = vmul.f32 %v2467, %v2452
    %v2478 = vmul.f32 %v2470, %v2452
    %v2479 = vmul.f32 %v2473, %v2452
    %v2480 = vmul.f32 %v2476, %v2452
    %v2481 = vadd.f32 %v2477, 1e-05
    %v2482 = vadd.f32 %v2478, 1e-05
    %v2483 = vadd.f32 %v2479, 1e-05
    %v2484 = vadd.f32 %v2480, 1e-05
    %v2485 = vrsqrt.pop %v2481
    %v2486 = vrsqrt.pop %v2482
    %v2487 = vrsqrt.pop %v2483
    %v2488 = vrsqrt.pop %v2484
    %v2489 = vmul.f32 %v2457, %v2485
    %v2490 = vmul.f32 %v2458, %v2486
    %v2491 = vmul.f32 %v2459, %v2487
    %v2492 = vmul.f32 %v2460, %v2488
    %v2493 = vlaneseq
    %v2494 = vshrl.u32 %v2493, 7
    %v2495 = vsub.s32 1, %v2494
    %v2496 = vrot.slane %v133, %v2495
    %v2497 = vmul.f32 %v2489, %v2496
    %v2498 = vmul.f32 %v2490, %v2496
    %v2499 = vmul.f32 %v2491, %v2496
    %v2500 = vmul.f32 %v2492, %v2496
    %v2501 = vlaneseq
    %v2502 = vshrl.u32 %v2501, 7
    %v2503 = vsub.s32 2, %v2502
    %v2504 = vrot.slane %v133, %v2503
    %v2505 = vadd.f32 %v2497, %v2504
    %v2506 = vadd.f32 %v2498, %v2504
    %v2507 = vadd.f32 %v2499, %v2504
    %v2508 = vadd.f32 %v2500, %v2504
    %v2509 = vpack.c.bf16 %v2506, %v2505
    %v2510 = vpack.c.bf16 %v2508, %v2507
    %v2511 = vld [vmem:[%s6] sm:$0xf]
    %v2512 = vld [vmem:[%s6 + $0x4] sm:$0xf]
    %v2513 = vld [vmem:[%s6 + $0x8] sm:$0xf]
    %v2514 = vld [vmem:[%s6 + $0xc] sm:$0xf]
    %v2515 = vld [vmem:[%s6 + $0x10] sm:$0xf]
    %v2516 = vld [vmem:[%s6 + $0x14] sm:$0xf]
    %v2517 = vld [vmem:[%s6 + $0x18] sm:$0xf]
    %v2518 = vld [vmem:[%s6 + $0x1c] sm:$0xf]
    %v2519 = vld [vmem:[%s7] sm:$0x1]
    %v2521 = vlaneseq
    %v2522 = vshrl.u32 %v2521, 7
    %v2523 = vsub.s32 0, %v2522
    %v2524 = vrot.slane %v2519, %v2523
    %v2534 = vunpack.c.l.b16 %v2511
    %v2535 = vunpack.c.l.b16 %v2512
    %v2536 = vunpack.c.l.b16 %v2513
    %v2537 = vunpack.c.l.b16 %v2514
    %v2538 = vunpack.c.l.b16 %v2515
    %v2539 = vunpack.c.l.b16 %v2516
    %v2540 = vunpack.c.l.b16 %v2517
    %v2541 = vunpack.c.l.b16 %v2518
    %v2542 = vpack.c.b16 %v2535, %v2534
    %v2543 = vpack.c.b16 %v2537, %v2536
    %v2544 = vpack.c.b16 %v2539, %v2538
    %v2545 = vpack.c.b16 %v2541, %v2540
    %v2551 = vsel %vm175, %v2509, 0
    %v2554 = vsel %vm175, %v2510, 0
    %2556 = vmatprep.subr.bf16.mxu0 0
    %2557 = vmatpush1.bf16.msra.mxu0 %v2542
    %2558 = vmatprep.subr.bf16.mxu0 0
    %2559 = vmatpush1.bf16.msra.mxu0 %v2543
    %2560 = vmatprep.subr.bf16.mxu0 0
    %2561 = vmatpush1.bf16.msra.mxu0 %v2544
    %2562 = vmatprep.subr.bf16.mxu0 0
    %2563 = vmatpush1.bf16.msra.mxu0 %v2545
    %2564 = vmatprep.subr.bf16.mxu0 0
    %2565 = vmatpush1.bf16.msra.mxu0 0
    %2566 = vmatprep.subr.bf16.mxu0 0
    %2567 = vmatpush1.bf16.msra.mxu0 0
    %2568 = vmatprep.subr.bf16.mxu0 0
    %2569 = vmatpush1.bf16.msra.mxu0 0
    %2570 = vmatprep.subr.bf16.mxu0 0
    %2571 = vmatpush1.bf16.msra.mxu0 0
    %2572 = vmatprep.subr.bf16.mxu0 0
    %2573 = vmatpush1.bf16.msra.mxu0 0
    %2574 = vmatprep.subr.bf16.mxu0 0
    %2575 = vmatpush1.bf16.msra.mxu0 0
    %2576 = vmatprep.subr.bf16.mxu0 0
    %2577 = vmatpush1.bf16.msra.mxu0 0
    %2578 = vmatprep.subr.bf16.mxu0 0
    %2579 = vmatpush1.bf16.msra.mxu0 0
    %2580 = vmatprep.subr.bf16.mxu0 0
    %2581 = vmatpush1.bf16.msra.mxu0 0
    %2582 = vmatprep.subr.bf16.mxu0 0
    %2583 = vmatpush1.bf16.msra.mxu0 0
    %2584 = vmatprep.subr.bf16.mxu0 0
    %2585 = vmatpush1.bf16.msra.mxu0 0
    %2586 = vmatprep.subr.bf16.mxu0 0
    %2587 = vmatpush1.bf16.msra.mxu0 0
    %2588 = vmatprep.mubr.bf16.mxu0 0
    %2589 = vmatmul.mubr.bf16.gmra.mrb[0].mxu0 %v2551
    %v2590 = vpop.f32.mrb[0].mxu0
    %v2591 = vadd.f32 %v2524, %v2590
    %v2592 = vpop.f32.mrb[0].mxu0
    %v2593 = vpop.f32.mrb[0].mxu0
    %v2594 = vadd.f32 %v2524, %v2593
    %v2595 = vpop.f32.mrb[0].mxu0
    %2596 = vmatprep.mubr.bf16.mxu0 0
    %2597 = vmatmul.mubr.bf16.gmra.mrb[0].mxu0 %v2554
    %v2598 = vpop.f32.mrb[0].mxu0
    %v2599 = vadd.f32 %v2524, %v2598
    %v2600 = vpop.f32.mrb[0].mxu0
    %v2601 = vpop.f32.mrb[0].mxu0
    %v2602 = vadd.f32 %v2524, %v2601
    %v2603 = vpop.f32.mrb[0].mxu0
    %2604 = vdwg.mxu0
    %v2605 = vmax.f32 %v2591, 0.0
    %v2606 = vmax.f32 %v2594, 0.0
    %v2607 = vmax.f32 %v2599, 0.0
    %v2608 = vmax.f32 %v2602, 0.0
    %v2609 = vpack.c.bf16 %v2606, %v2605
    %v2610 = vpack.c.bf16 %v2608, %v2607
    %v2611 = vld [vmem:[%s8] sm:$0xf]
    %v2612 = vld [vmem:[%s8 + $0x4] sm:$0xf]
    %v2613 = vld [vmem:[%s8 + $0x8] sm:$0xf]
    %v2614 = vld [vmem:[%s8 + $0xc] sm:$0xf]
    %v2615 = vld [vmem:[%s8 + $0x10] sm:$0xf]
    %v2616 = vld [vmem:[%s8 + $0x14] sm:$0xf]
    %v2617 = vld [vmem:[%s8 + $0x18] sm:$0xf]
    %v2618 = vld [vmem:[%s8 + $0x1c] sm:$0xf]
    %v2619 = vld [vmem:[%s8 + $0x20] sm:$0xf]
    %v2620 = vld [vmem:[%s8 + $0x24] sm:$0xf]
    %v2621 = vld [vmem:[%s8 + $0x28] sm:$0xf]
    %v2622 = vld [vmem:[%s8 + $0x2c] sm:$0xf]
    %v2623 = vld [vmem:[%s8 + $0x30] sm:$0xf]
    %v2624 = vld [vmem:[%s8 + $0x34] sm:$0xf]
    %v2625 = vld [vmem:[%s8 + $0x38] sm:$0xf]
    %v2626 = vld [vmem:[%s8 + $0x3c] sm:$0xf]
    %v2627 = vlaneseq
    %v2628 = vshrl.u32 %v2627, 7
    %v2629 = vsub.s32 3, %v2628
    %v2630 = vrot.slane %v133, %v2629
    %v2647 = vunpack.c.l.b16 %v2611
    %v2648 = vunpack.c.l.b16 %v2612
    %v2649 = vunpack.c.l.b16 %v2613
    %v2650 = vunpack.c.l.b16 %v2614
    %v2651 = vunpack.c.l.b16 %v2615
    %v2652 = vunpack.c.l.b16 %v2616
    %v2653 = vunpack.c.l.b16 %v2617
    %v2654 = vunpack.c.l.b16 %v2618
    %v2655 = vunpack.c.l.b16 %v2619
    %v2656 = vunpack.c.l.b16 %v2620
    %v2657 = vunpack.c.l.b16 %v2621
    %v2658 = vunpack.c.l.b16 %v2622
    %v2659 = vunpack.c.l.b16 %v2623
    %v2660 = vunpack.c.l.b16 %v2624
    %v2661 = vunpack.c.l.b16 %v2625
    %v2662 = vunpack.c.l.b16 %v2626
    %v2663 = vpack.c.b16 %v2648, %v2647
    %v2664 = vpack.c.b16 %v2650, %v2649
    %v2665 = vpack.c.b16 %v2652, %v2651
    %v2666 = vpack.c.b16 %v2654, %v2653
    %v2667 = vpack.c.b16 %v2656, %v2655
    %v2668 = vpack.c.b16 %v2658, %v2657
    %v2669 = vpack.c.b16 %v2660, %v2659
    %v2670 = vpack.c.b16 %v2662, %v2661
    %2679 = vmatprep.subr.bf16.mxu0 0
    %2680 = vmatpush1.bf16.msra.mxu0 %v2663
    %2681 = vmatprep.subr.bf16.mxu0 0
    %2682 = vmatpush1.bf16.msra.mxu0 %v2664
    %2683 = vmatprep.subr.bf16.mxu0 0
    %2684 = vmatpush1.bf16.msra.mxu0 %v2665
    %2685 = vmatprep.subr.bf16.mxu0 0
    %2686 = vmatpush1.bf16.msra.mxu0 %v2666
    %2687 = vmatprep.subr.bf16.mxu0 0
    %2688 = vmatpush1.bf16.msra.mxu0 %v2667
    %2689 = vmatprep.subr.bf16.mxu0 0
    %2690 = vmatpush1.bf16.msra.mxu0 %v2668
    %2691 = vmatprep.subr.bf16.mxu0 0
    %2692 = vmatpush1.bf16.msra.mxu0 %v2669
    %2693 = vmatprep.subr.bf16.mxu0 0
    %2694 = vmatpush1.bf16.msra.mxu0 %v2670
    %2695 = vmatprep.subr.bf16.mxu0 0
    %2696 = vmatpush1.bf16.msra.mxu0 0
    %2697 = vmatprep.subr.bf16.mxu0 0
    %2698 = vmatpush1.bf16.msra.mxu0 0
    %2699 = vmatprep.subr.bf16.mxu0 0
    %2700 = vmatpush1.bf16.msra.mxu0 0
    %2701 = vmatprep.subr.bf16.mxu0 0
    %2702 = vmatpush1.bf16.msra.mxu0 0
    %2703 = vmatprep.subr.bf16.mxu0 0
    %2704 = vmatpush1.bf16.msra.mxu0 0
    %2705 = vmatprep.subr.bf16.mxu0 0
    %2706 = vmatpush1.bf16.msra.mxu0 0
    %2707 = vmatprep.subr.bf16.mxu0 0
    %2708 = vmatpush1.bf16.msra.mxu0 0
    %2709 = vmatprep.subr.bf16.mxu0 0
    %2710 = vmatpush1.bf16.msra.mxu0 0
    %2711 = vmatprep.mubr.bf16.mxu0 0
    %2712 = vmatmul.mubr.bf16.gmra.mrb[0].mxu0 %v2609
    %v2713 = vpop.f32.mrb[0].mxu0
    %v2714 = vadd.f32 %v2630, %v2713
    %v2715 = vpop.f32.mrb[0].mxu0
    %v2716 = vpop.f32.mrb[0].mxu0
    %v2717 = vadd.f32 %v2630, %v2716
    %v2718 = vpop.f32.mrb[0].mxu0
    %2719 = vmatprep.mubr.bf16.mxu0 0
    %2720 = vmatmul.mubr.bf16.gmra.mrb[0].mxu0 %v2610
    %v2721 = vpop.f32.mrb[0].mxu0
    %v2722 = vadd.f32 %v2630, %v2721
    %v2723 = vpop.f32.mrb[0].mxu0
    %v2724 = vpop.f32.mrb[0].mxu0
    %v2725 = vadd.f32 %v2630, %v2724
    %v2726 = vpop.f32.mrb[0].mxu0
    %2727 = vdwg.mxu0
    %v2728 = vadd.f32 %v2505, %v2714
    %v2729 = vadd.f32 %v2506, %v2717
    %v2730 = vadd.f32 %v2507, %v2722
    %v2731 = vadd.f32 %v2508, %v2725
    %v2732 = vsel %vm175, %v2728, 0.0
    %2733 = vadd.xlane.f32.xlu0 %v2732
    %v2734 = vpop.xlane.xlu0 %2733
    %v2735 = vsel %vm175, %v2729, 0.0
    %2736 = vadd.xlane.f32.xlu0 %v2735
    %v2737 = vpop.xlane.xlu0 %2736
    %v2738 = vsel %vm175, %v2730, 0.0
    %2739 = vadd.xlane.f32.xlu0 %v2738
    %v2740 = vpop.xlane.xlu0 %2739
    %v2741 = vsel %vm175, %v2731, 0.0
    %2742 = vadd.xlane.f32.xlu0 %v2741
    %v2743 = vpop.xlane.xlu0 %2742
    %v2744 = vmul.f32 %v2734, %v2452
    %v2745 = vmul.f32 %v2737, %v2452
    %v2746 = vmul.f32 %v2740, %v2452
    %v2747 = vmul.f32 %v2743, %v2452
    %v2748 = vsub.f32 %v2728, %v2744
    %v2749 = vsub.f32 %v2729, %v2745
    %v2750 = vsub.f32 %v2730, %v2746
    %v2751 = vsub.f32 %v2731, %v2747
    %v2752 = vmul.f32 %v2748, %v2748
    %v2753 = vmul.f32 %v2749, %v2749
    %v2754 = vmul.f32 %v2750, %v2750
    %v2755 = vmul.f32 %v2751, %v2751
    %v2756 = vsel %vm175, %v2752, 0.0
    %2757 = vadd.xlane.f32.xlu0 %v2756
    %v2758 = vpop.xlane.xlu0 %2757
    %v2759 = vsel %vm175, %v2753, 0.0
    %2760 = vadd.xlane.f32.xlu0 %v2759
    %v2761 = vpop.xlane.xlu0 %2760
    %v2762 = vsel %vm175, %v2754, 0.0
    %2763 = vadd.xlane.f32.xlu0 %v2762
    %v2764 = vpop.xlane.xlu0 %2763
    %v2765 = vsel %vm175, %v2755, 0.0
    %2766 = vadd.xlane.f32.xlu0 %v2765
    %v2767 = vpop.xlane.xlu0 %2766
    %v2768 = vmul.f32 %v2758, %v2452
    %v2769 = vmul.f32 %v2761, %v2452
    %v2770 = vmul.f32 %v2764, %v2452
    %v2771 = vmul.f32 %v2767, %v2452
    %v2772 = vadd.f32 %v2768, 1e-05
    %v2773 = vadd.f32 %v2769, 1e-05
    %v2774 = vadd.f32 %v2770, 1e-05
    %v2775 = vadd.f32 %v2771, 1e-05
    %v2776 = vrsqrt.pop %v2772
    %v2777 = vrsqrt.pop %v2773
    %v2778 = vrsqrt.pop %v2774
    %v2779 = vrsqrt.pop %v2775
    %v2780 = vmul.f32 %v2748, %v2776
    %v2781 = vmul.f32 %v2749, %v2777
    %v2782 = vmul.f32 %v2750, %v2778
    %v2783 = vmul.f32 %v2751, %v2779
    %v2784 = vlaneseq
    %v2785 = vshrl.u32 %v2784, 7
    %v2786 = vsub.s32 4, %v2785
    %v2787 = vrot.slane %v133, %v2786
    %v2788 = vmul.f32 %v2780, %v2787
    %v2789 = vmul.f32 %v2781, %v2787
    %v2790 = vmul.f32 %v2782, %v2787
    %v2791 = vmul.f32 %v2783, %v2787
    %v2792 = vlaneseq
    %v2793 = vshrl.u32 %v2792, 7
    %v2794 = vsub.s32 5, %v2793
    %v2795 = vrot.slane %v133, %v2794
    %v2796 = vadd.f32 %v2788, %v2795
    %v2797 = vadd.f32 %v2789, %v2795
    %v2798 = vadd.f32 %v2790, %v2795
    %v2799 = vadd.f32 %v2791, %v2795
    %s2800 = scalar_lea.vmem %s9, 8
    %v2801 = vld [vmem:[%s2800] sm:$0x3f]
    %v2802 = vpack.c.bf16 %v2797, %v2796
    %v2803 = vpack.c.bf16 %v2799, %v2798
    %s2804 = scalar_lea.vmem %s3, 384
    %v2805 = vld [vmem:[%s2804] sm:$0xf]
    %v2806 = vld [vmem:[%s2804 + $0x4] sm:$0xf]
    %v2807 = vld [vmem:[%s2804 + $0x8] sm:$0xf]
    %v2808 = vld [vmem:[%s2804 + $0xc] sm:$0xf]
    %v2809 = vld [vmem:[%s2804 + $0x10] sm:$0xf]
    %v2810 = vld [vmem:[%s2804 + $0x14] sm:$0xf]
    %v2811 = vld [vmem:[%s2804 + $0x18] sm:$0xf]
    %v2812 = vld [vmem:[%s2804 + $0x1c] sm:$0xf]
    %s2813 = scalar_lea.vmem %s4, 12
    %v2814 = vld [vmem:[%s2813] sm:$0x1]
    %v2816 = vlaneseq
    %v2817 = vshrl.u32 %v2816, 7
    %v2818 = vsub.s32 0, %v2817
    %v2819 = vrot.slane %v2814, %v2818
    %v2829 = vunpack.c.l.b16 %v2805
    %v2830 = vunpack.c.l.b16 %v2806
    %v2831 = vunpack.c.l.b16 %v2807
    %v2832 = vunpack.c.l.b16 %v2808
    %v2833 = vunpack.c.l.b16 %v2809
    %v2834 = vunpack.c.l.b16 %v2810
    %v2835 = vunpack.c.l.b16 %v2811
    %v2836 = vunpack.c.l.b16 %v2812
    %v2837 = vpack.c.b16 %v2830, %v2829
    %v2838 = vpack.c.b16 %v2832, %v2831
    %v2839 = vpack.c.b16 %v2834, %v2833
    %v2840 = vpack.c.b16 %v2836, %v2835
    %v2846 = vsel %vm175, %v2802, 0
    %v2849 = vsel %vm175, %v2803, 0
    %2851 = vmatprep.subr.bf16.mxu0 0
    %2852 = vmatpush1.bf16.msra.mxu0 %v2837
    %2853 = vmatprep.subr.bf16.mxu0 0
    %2854 = vmatpush1.bf16.msra.mxu0 %v2838
    %2855 = vmatprep.subr.bf16.mxu0 0
    %2856 = vmatpush1.bf16.msra.mxu0 %v2839
    %2857 = vmatprep.subr.bf16.mxu0 0
    %2858 = vmatpush1.bf16.msra.mxu0 %v2840
    %2859 = vmatprep.subr.bf16.mxu0 0
    %2860 = vmatpush1.bf16.msra.mxu0 0
    %2861 = vmatprep.subr.bf16.mxu0 0
    %2862 = vmatpush1.bf16.msra.mxu0 0
    %2863 = vmatprep.subr.bf16.mxu0 0
    %2864 = vmatpush1.bf16.msra.mxu0 0
    %2865 = vmatprep.subr.bf16.mxu0 0
    %2866 = vmatpush1.bf16.msra.mxu0 0
    %2867 = vmatprep.subr.bf16.mxu0 0
    %2868 = vmatpush1.bf16.msra.mxu0 0
    %2869 = vmatprep.subr.bf16.mxu0 0
    %2870 = vmatpush1.bf16.msra.mxu0 0
    %2871 = vmatprep.subr.bf16.mxu0 0
    %2872 = vmatpush1.bf16.msra.mxu0 0
    %2873 = vmatprep.subr.bf16.mxu0 0
    %2874 = vmatpush1.bf16.msra.mxu0 0
    %2875 = vmatprep.subr.bf16.mxu0 0
    %2876 = vmatpush1.bf16.msra.mxu0 0
    %2877 = vmatprep.subr.bf16.mxu0 0
    %2878 = vmatpush1.bf16.msra.mxu0 0
    %2879 = vmatprep.subr.bf16.mxu0 0
    %2880 = vmatpush1.bf16.msra.mxu0 0
    %2881 = vmatprep.subr.bf16.mxu0 0
    %2882 = vmatpush1.bf16.msra.mxu0 0
    %2883 = vmatprep.mubr.bf16.mxu0 0
    %2884 = vmatmul.mubr.bf16.gmra.mrb[0].mxu0 %v2846
    %v2885 = vpop.f32.mrb[0].mxu0
    %v2886 = vadd.f32 %v2819, %v2885
    %v2887 = vpop.f32.mrb[0].mxu0
    %v2888 = vpop.f32.mrb[0].mxu0
    %v2889 = vadd.f32 %v2819, %v2888
    %v2890 = vpop.f32.mrb[0].mxu0
    %2891 = vmatprep.mubr.bf16.mxu0 0
    %2892 = vmatmul.mubr.bf16.gmra.mrb[0].mxu0 %v2849
    %v2893 = vpop.f32.mrb[0].mxu0
    %v2894 = vadd.f32 %v2819, %v2893
    %v2895 = vpop.f32.mrb[0].mxu0
    %v2896 = vpop.f32.mrb[0].mxu0
    %v2897 = vadd.f32 %v2819, %v2896
    %v2898 = vpop.f32.mrb[0].mxu0
    %2899 = vdwg.mxu0
    %s2900 = scalar_lea.vmem %s3, 512
    %v2901 = vld [vmem:[%s2900] sm:$0xf]
    %v2902 = vld [vmem:[%s2900 + $0x4] sm:$0xf]
    %v2903 = vld [vmem:[%s2900 + $0x8] sm:$0xf]
    %v2904 = vld [vmem:[%s2900 + $0xc] sm:$0xf]
    %v2905 = vld [vmem:[%s2900 + $0x10] sm:$0xf]
    %v2906 = vld [vmem:[%s2900 + $0x14] sm:$0xf]
    %v2907 = vld [vmem:[%s2900 + $0x18] sm:$0xf]
    %v2908 = vld [vmem:[%s2900 + $0x1c] sm:$0xf]
    %s2909 = scalar_lea.vmem %s4, 16
    %v2910 = vld [vmem:[%s2909] sm:$0x1]
    %v2912 = vlaneseq
    %v2913 = vshrl.u32 %v2912, 7
    %v2914 = vsub.s32 0, %v2913
    %v2915 = vrot.slane %v2910, %v2914
    %v2925 = vunpack.c.l.b16 %v2901
    %v2926 = vunpack.c.l.b16 %v2902
    %v2927 = vunpack.c.l.b16 %v2903
    %v2928 = vunpack.c.l.b16 %v2904
    %v2929 = vunpack.c.l.b16 %v2905
    %v2930 = vunpack.c.l.b16 %v2906
    %v2931 = vunpack.c.l.b16 %v2907
    %v2932 = vunpack.c.l.b16 %v2908
    %v2933 = vpack.c.b16 %v2926, %v2925
    %v2934 = vpack.c.b16 %v2928, %v2927
    %v2935 = vpack.c.b16 %v2930, %v2929
    %v2936 = vpack.c.b16 %v2932, %v2931
    %2941 = vmatprep.subr.bf16.mxu0 0
    %2942 = vmatpush1.bf16.msra.mxu0 %v2933
    %2943 = vmatprep.subr.bf16.mxu0 0
    %2944 = vmatpush1.bf16.msra.mxu0 %v2934
    %2945 = vmatprep.subr.bf16.mxu0 0
    %2946 = vmatpush1.bf16.msra.mxu0 %v2935
    %2947 = vmatprep.subr.bf16.mxu0 0
    %2948 = vmatpush1.bf16.msra.mxu0 %v2936
    %2949 = vmatprep.subr.bf16.mxu0 0
    %2950 = vmatpush1.bf16.msra.mxu0 0
    %2951 = vmatprep.subr.bf16.mxu0 0
    %2952 = vmatpush1.bf16.msra.mxu0 0
    %2953 = vmatprep.subr.bf16.mxu0 0
    %2954 = vmatpush1.bf16.msra.mxu0 0
    %2955 = vmatprep.subr.bf16.mxu0 0
    %2956 = vmatpush1.bf16.msra.mxu0 0
    %2957 = vmatprep.subr.bf16.mxu0 0
    %2958 = vmatpush1.bf16.msra.mxu0 0
    %2959 = vmatprep.subr.bf16.mxu0 0
    %2960 = vmatpush1.bf16.msra.mxu0 0
    %2961 = vmatprep.subr.bf16.mxu0 0
    %2962 = vmatpush1.bf16.msra.mxu0 0
    %2963 = vmatprep.subr.bf16.mxu0 0
    %2964 = vmatpush1.bf16.msra.mxu0 0
    %2965 = vmatprep.subr.bf16.mxu0 0
    %2966 = vmatpush1.bf16.msra.mxu0 0
    %2967 = vmatprep.subr.bf16.mxu0 0
    %2968 = vmatpush1.bf16.msra.mxu0 0
    %2969 = vmatprep.subr.bf16.mxu0 0
    %2970 = vmatpush1.bf16.msra.mxu0 0
    %2971 = vmatprep.subr.bf16.mxu0 0
    %2972 = vmatpush1.bf16.msra.mxu0 0
    %2973 = vmatprep.mubr.bf16.mxu0 0
    %2974 = vmatmul.mubr.bf16.gmra.mrb[0].mxu0 %v2846
    %v2975 = vpop.f32.mrb[0].mxu0
    %v2976 = vadd.f32 %v2915, %v2975
    %v2977 = vpop.f32.mrb[0].mxu0
    %v2978 = vpop.f32.mrb[0].mxu0
    %v2979 = vadd.f32 %v2915, %v2978
    %v2980 = vpop.f32.mrb[0].mxu0
    %2981 = vmatprep.mubr.bf16.mxu0 0
    %2982 = vmatmul.mubr.bf16.gmra.mrb[0].mxu0 %v2849
    %v2983 = vpop.f32.mrb[0].mxu0
    %v2984 = vadd.f32 %v2915, %v2983
    %v2985 = vpop.f32.mrb[0].mxu0
    %v2986 = vpop.f32.mrb[0].mxu0
    %v2987 = vadd.f32 %v2915, %v2986
    %v2988 = vpop.f32.mrb[0].mxu0
    %2989 = vdwg.mxu0
    %s2990 = scalar_lea.vmem %s3, 640
    %v2991 = vld [vmem:[%s2990] sm:$0xf]
    %v2992 = vld [vmem:[%s2990 + $0x4] sm:$0xf]
    %v2993 = vld [vmem:[%s2990 + $0x8] sm:$0xf]
    %v2994 = vld [vmem:[%s2990 + $0xc] sm:$0xf]
    %v2995 = vld [vmem:[%s2990 + $0x10] sm:$0xf]
    %v2996 = vld [vmem:[%s2990 + $0x14] sm:$0xf]
    %v2997 = vld [vmem:[%s2990 + $0x18] sm:$0xf]
    %v2998 = vld [vmem:[%s2990 + $0x1c] sm:$0xf]
    %s2999 = scalar_lea.vmem %s4, 20
    %v3000 = vld [vmem:[%s2999] sm:$0x1]
    %v3002 = vlaneseq
    %v3003 = vshrl.u32 %v3002, 7
    %v3004 = vsub.s32 0, %v3003
    %v3005 = vrot.slane %v3000, %v3004
    %v3015 = vunpack.c.l.b16 %v2991
    %v3016 = vunpack.c.l.b16 %v2992
    %v3017 = vunpack.c.l.b16 %v2993
    %v3018 = vunpack.c.l.b16 %v2994
    %v3019 = vunpack.c.l.b16 %v2995
    %v3020 = vunpack.c.l.b16 %v2996
    %v3021 = vunpack.c.l.b16 %v2997
    %v3022 = vunpack.c.l.b16 %v2998
    %v3023 = vpack.c.b16 %v3016, %v3015
    %v3024 = vpack.c.b16 %v3018, %v3017
    %v3025 = vpack.c.b16 %v3020, %v3019
    %v3026 = vpack.c.b16 %v3022, %v3021
    %3031 = vmatprep.subr.bf16.mxu0 0
    %3032 = vmatpush1.bf16.msra.mxu0 %v3023
    %3033 = vmatprep.subr.bf16.mxu0 0
    %3034 = vmatpush1.bf16.msra.mxu0 %v3024
    %3035 = vmatprep.subr.bf16.mxu0 0
    %3036 = vmatpush1.bf16.msra.mxu0 %v3025
    %3037 = vmatprep.subr.bf16.mxu0 0
    %3038 = vmatpush1.bf16.msra.mxu0 %v3026
    %3039 = vmatprep.subr.bf16.mxu0 0
    %3040 = vmatpush1.bf16.msra.mxu0 0
    %3041 = vmatprep.subr.bf16.mxu0 0
    %3042 = vmatpush1.bf16.msra.mxu0 0
    %3043 = vmatprep.subr.bf16.mxu0 0
    %3044 = vmatpush1.bf16.msra.mxu0 0
    %3045 = vmatprep.subr.bf16.mxu0 0
    %3046 = vmatpush1.bf16.msra.mxu0 0
    %3047 = vmatprep.subr.bf16.mxu0 0
    %3048 = vmatpush1.bf16.msra.mxu0 0
    %3049 = vmatprep.subr.bf16.mxu0 0
    %3050 = vmatpush1.bf16.msra.mxu0 0
    %3051 = vmatprep.subr.bf16.mxu0 0
    %3052 = vmatpush1.bf16.msra.mxu0 0
    %3053 = vmatprep.subr.bf16.mxu0 0
    %3054 = vmatpush1.bf16.msra.mxu0 0
    %3055 = vmatprep.subr.bf16.mxu0 0
    %3056 = vmatpush1.bf16.msra.mxu0 0
    %3057 = vmatprep.subr.bf16.mxu0 0
    %3058 = vmatpush1.bf16.msra.mxu0 0
    %3059 = vmatprep.subr.bf16.mxu0 0
    %3060 = vmatpush1.bf16.msra.mxu0 0
    %3061 = vmatprep.subr.bf16.mxu0 0
    %3062 = vmatpush1.bf16.msra.mxu0 0
    %3063 = vmatprep.mubr.bf16.mxu0 0
    %3064 = vmatmul.mubr.bf16.gmra.mrb[0].mxu0 %v2846
    %v3065 = vpop.f32.mrb[0].mxu0
    %v3066 = vadd.f32 %v3005, %v3065
    %v3067 = vpop.f32.mrb[0].mxu0
    %v3068 = vpop.f32.mrb[0].mxu0
    %v3069 = vadd.f32 %v3005, %v3068
    %v3070 = vpop.f32.mrb[0].mxu0
    %3071 = vmatprep.mubr.bf16.mxu0 0
    %3072 = vmatmul.mubr.bf16.gmra.mrb[0].mxu0 %v2849
    %v3073 = vpop.f32.mrb[0].mxu0
    %v3074 = vadd.f32 %v3005, %v3073
    %v3075 = vpop.f32.mrb[0].mxu0
    %v3076 = vpop.f32.mrb[0].mxu0
    %v3077 = vadd.f32 %v3005, %v3076
    %v3078 = vpop.f32.mrb[0].mxu0
    %3079 = vdwg.mxu0
    %v3080 = vpack.c.bf16 %v2889, %v2886
    %v3081 = vpack.c.bf16 %v2897, %v2894
    %v3082 = vpack.c.bf16 %v2979, %v2976
    %v3083 = vpack.c.bf16 %v2987, %v2984
    %v3084 = vpack.c.bf16 %v3069, %v3066
    %v3085 = vpack.c.bf16 %v3077, %v3074
    %v3087 = vsel %vm71, %v3080, 0
    %v3090 = vsel %vm71, %v3082, 0
    %3092 = vmatprep.subr.bf16.mxu0 0
    %3093 = vmatpush1.bf16.xpose.msra.mxu0 %v3090
    %3094 = vmatprep.subr.bf16.mxu0 0
    %3095 = vmatpush1.bf16.xpose.msra.mxu0 0
    %3096 = vmatprep.subr.bf16.mxu0 0
    %3097 = vmatpush1.bf16.xpose.msra.mxu0 0
    %3098 = vmatprep.subr.bf16.mxu0 0
    %3099 = vmatpush1.bf16.xpose.msra.mxu0 0
    %3100 = vmatprep.subr.bf16.mxu0 0
    %3101 = vmatpush1.bf16.xpose.msra.mxu0 0
    %3102 = vmatprep.subr.bf16.mxu0 0
    %3103 = vmatpush1.bf16.xpose.msra.mxu0 0
    %3104 = vmatprep.subr.bf16.mxu0 0
    %3105 = vmatpush1.bf16.xpose.msra.mxu0 0
    %3106 = vmatprep.subr.bf16.mxu0 0
    %3107 = vmatpush1.bf16.xpose.msra.mxu0 0
    %3108 = vmatprep.subr.bf16.mxu0 0
    %3109 = vmatpush1.bf16.xpose.msra.mxu0 0
    %3110 = vmatprep.subr.bf16.mxu0 0
    %3111 = vmatpush1.bf16.xpose.msra.mxu0 0
    %3112 = vmatprep.subr.bf16.mxu0 0
    %3113 = vmatpush1.bf16.xpose.msra.mxu0 0
    %3114 = vmatprep.subr.bf16.mxu0 0
    %3115 = vmatpush1.bf16.xpose.msra.mxu0 0
    %3116 = vmatprep.subr.bf16.mxu0 0
    %3117 = vmatpush1.bf16.xpose.msra.mxu0 0
    %3118 = vmatprep.subr.bf16.mxu0 0
    %3119 = vmatpush1.bf16.xpose.msra.mxu0 0
    %3120 = vmatprep.subr.bf16.mxu0 0
    %3121 = vmatpush1.bf16.xpose.msra.mxu0 0
    %3122 = vmatprep.subr.bf16.mxu0 0
    %3123 = vmatpush1.bf16.xpose.msra.mxu0 0
    %3124 = vmatprep.mubr.bf16.mxu0 0
    %3125 = vmatmul.mubr.bf16.gmra.mrb[0].mxu0 %v3087
    %v3126 = vpop.f32.mrb[0].mxu0
    %v3127 = vadd.f32 0.0, %v3126
    %v3128 = vpop.f32.mrb[0].mxu0
    %v3129 = vpop.f32.mrb[0].mxu0
    %v3130 = vadd.f32 0.0, %v3129
    %v3131 = vpop.f32.mrb[0].mxu0
    %3132 = vdwg.mxu0
    %v3134 = vsel %vm71, %v3081, 0
    %v3137 = vsel %vm71, %v3083, 0
    %3139 = vmatprep.subr.bf16.mxu0 0
    %3140 = vmatpush1.bf16.xpose.msra.mxu0 %v3137
    %3141 = vmatprep.subr.bf16.mxu0 0
    %3142 = vmatpush1.bf16.xpose.msra.mxu0 0
    %3143 = vmatprep.subr.bf16.mxu0 0
    %3144 = vmatpush1.bf16.xpose.msra.mxu0 0
    %3145 = vmatprep.subr.bf16.mxu0 0
    %3146 = vmatpush1.bf16.xpose.msra.mxu0 0
    %3147 = vmatprep.subr.bf16.mxu0 0
    %3148 = vmatpush1.bf16.xpose.msra.mxu0 0
    %3149 = vmatprep.subr.bf16.mxu0 0
    %3150 = vmatpush1.bf16.xpose.msra.mxu0 0
    %3151 = vmatprep.subr.bf16.mxu0 0
    %3152 = vmatpush1.bf16.xpose.msra.mxu0 0
    %3153 = vmatprep.subr.bf16.mxu0 0
    %3154 = vmatpush1.bf16.xpose.msra.mxu0 0
    %3155 = vmatprep.subr.bf16.mxu0 0
    %3156 = vmatpush1.bf16.xpose.msra.mxu0 0
    %3157 = vmatprep.subr.bf16.mxu0 0
    %3158 = vmatpush1.bf16.xpose.msra.mxu0 0
    %3159 = vmatprep.subr.bf16.mxu0 0
    %3160 = vmatpush1.bf16.xpose.msra.mxu0 0
    %3161 = vmatprep.subr.bf16.mxu0 0
    %3162 = vmatpush1.bf16.xpose.msra.mxu0 0
    %3163 = vmatprep.subr.bf16.mxu0 0
    %3164 = vmatpush1.bf16.xpose.msra.mxu0 0
    %3165 = vmatprep.subr.bf16.mxu0 0
    %3166 = vmatpush1.bf16.xpose.msra.mxu0 0
    %3167 = vmatprep.subr.bf16.mxu0 0
    %3168 = vmatpush1.bf16.xpose.msra.mxu0 0
    %3169 = vmatprep.subr.bf16.mxu0 0
    %3170 = vmatpush1.bf16.xpose.msra.mxu0 0
    %3171 = vmatprep.mubr.bf16.mxu0 0
    %3172 = vmatmul.mubr.bf16.gmra.mrb[0].mxu0 %v3134
    %v3173 = vpop.f32.mrb[0].mxu0
    %v3174 = vadd.f32 0.0, %v3173
    %v3175 = vpop.f32.mrb[0].mxu0
    %v3176 = vpop.f32.mrb[0].mxu0
    %v3177 = vadd.f32 0.0, %v3176
    %v3178 = vpop.f32.mrb[0].mxu0
    %3179 = vdwg.mxu0
    %v3180 = vsel %vm71, %v3127, -inf
    %3181 = vmax.xlane.f32.xlu0 %v3180
    %v3182 = vpop.xlane.xlu0 %3181
    %v3183 = vsel %vm71, %v3130, -inf
    %3184 = vmax.xlane.f32.xlu0 %v3183
    %v3185 = vpop.xlane.xlu0 %3184
    %v3186 = vsel %vm71, %v3174, -inf
    %3187 = vmax.xlane.f32.xlu0 %v3186
    %v3188 = vpop.xlane.xlu0 %3187
    %v3189 = vsel %vm71, %v3177, -inf
    %3190 = vmax.xlane.f32.xlu0 %v3189
    %v3191 = vpop.xlane.xlu0 %3190
    %v3192 = vsub.f32 %v3127, %v3182
    %v3193 = vsub.f32 %v3130, %v3185
    %v3194 = vsub.f32 %v3174, %v3188
    %v3195 = vsub.f32 %v3177, %v3191
    %v3196 = vmul.f32 %v3192, 1.442695
    %v3197 = vpow.pop %v3196
    %v3198 = vmul.f32 %v3193, 1.442695
    %v3199 = vpow.pop %v3198
    %v3200 = vmul.f32 %v3194, 1.442695
    %v3201 = vpow.pop %v3200
    %v3202 = vmul.f32 %v3195, 1.442695
    %v3203 = vpow.pop %v3202
    %v3204 = vsel %vm71, %v3197, 0.0
    %3205 = vadd.xlane.f32.xlu0 %v3204
    %v3206 = vpop.xlane.xlu0 %3205
    %v3207 = vsel %vm71, %v3199, 0.0
    %3208 = vadd.xlane.f32.xlu0 %v3207
    %v3209 = vpop.xlane.xlu0 %3208
    %v3210 = vsel %vm71, %v3201, 0.0
    %3211 = vadd.xlane.f32.xlu0 %v3210
    %v3212 = vpop.xlane.xlu0 %3211
    %v3213 = vsel %vm71, %v3203, 0.0
    %3214 = vadd.xlane.f32.xlu0 %v3213
    %v3215 = vpop.xlane.xlu0 %3214
    %v3216 = vrcp.pop %v3206
    %v3217 = vrcp.pop %v3209
    %v3218 = vrcp.pop %v3212
    %v3219 = vrcp.pop %v3215
    %v3220 = vmul.f32 %v3197, %v3216
    %v3221 = vmul.f32 %v3199, %v3217
    %v3222 = vmul.f32 %v3201, %v3218
    %v3223 = vmul.f32 %v3203, %v3219
    %v3224 = vpack.c.bf16 %v3221, %v3220
    %v3225 = vpack.c.bf16 %v3223, %v3222
    %v3227 = vsel %vm71, %v3224, 0
    %3229 = vmatprep.subr.bf16.mxu0 0
    %3230 = vmatpush1.bf16.msra.mxu0 %v3084
    %3231 = vmatprep.subr.bf16.mxu0 0
    %3232 = vmatpush1.bf16.msra.mxu0 0
    %3233 = vmatprep.subr.bf16.mxu0 0
    %3234 = vmatpush1.bf16.msra.mxu0 0
    %3235 = vmatprep.subr.bf16.mxu0 0
    %3236 = vmatpush1.bf16.msra.mxu0 0
    %3237 = vmatprep.subr.bf16.mxu0 0
    %3238 = vmatpush1.bf16.msra.mxu0 0
    %3239 = vmatprep.subr.bf16.mxu0 0
    %3240 = vmatpush1.bf16.msra.mxu0 0
    %3241 = vmatprep.subr.bf16.mxu0 0
    %3242 = vmatpush1.bf16.msra.mxu0 0
    %3243 = vmatprep.subr.bf16.mxu0 0
    %3244 = vmatpush1.bf16.msra.mxu0 0
    %3245 = vmatprep.subr.bf16.mxu0 0
    %3246 = vmatpush1.bf16.msra.mxu0 0
    %3247 = vmatprep.subr.bf16.mxu0 0
    %3248 = vmatpush1.bf16.msra.mxu0 0
    %3249 = vmatprep.subr.bf16.mxu0 0
    %3250 = vmatpush1.bf16.msra.mxu0 0
    %3251 = vmatprep.subr.bf16.mxu0 0
    %3252 = vmatpush1.bf16.msra.mxu0 0
    %3253 = vmatprep.subr.bf16.mxu0 0
    %3254 = vmatpush1.bf16.msra.mxu0 0
    %3255 = vmatprep.subr.bf16.mxu0 0
    %3256 = vmatpush1.bf16.msra.mxu0 0
    %3257 = vmatprep.subr.bf16.mxu0 0
    %3258 = vmatpush1.bf16.msra.mxu0 0
    %3259 = vmatprep.subr.bf16.mxu0 0
    %3260 = vmatpush1.bf16.msra.mxu0 0
    %3261 = vmatprep.mubr.bf16.mxu0 0
    %3262 = vmatmul.mubr.bf16.gmra.mrb[0].mxu0 %v3227
    %v3263 = vpop.f32.mrb[0].mxu0
    %v3264 = vadd.f32 0.0, %v3263
    %v3265 = vpop.f32.mrb[0].mxu0
    %v3266 = vpop.f32.mrb[0].mxu0
    %v3267 = vadd.f32 0.0, %v3266
    %v3268 = vpop.f32.mrb[0].mxu0
    %3269 = vdwg.mxu0
    %v3271 = vsel %vm71, %v3225, 0
    %3273 = vmatprep.subr.bf16.mxu0 0
    %3274 = vmatpush1.bf16.msra.mxu0 %v3085
    %3275 = vmatprep.subr.bf16.mxu0 0
    %3276 = vmatpush1.bf16.msra.mxu0 0
    %3277 = vmatprep.subr.bf16.mxu0 0
    %3278 = vmatpush1.bf16.msra.mxu0 0
    %3279 = vmatprep.subr.bf16.mxu0 0
    %3280 = vmatpush1.bf16.msra.mxu0 0
    %3281 = vmatprep.subr.bf16.mxu0 0
    %3282 = vmatpush1.bf16.msra.mxu0 0
    %3283 = vmatprep.subr.bf16.mxu0 0
    %3284 = vmatpush1.bf16.msra.mxu0 0
    %3285 = vmatprep.subr.bf16.mxu0 0
    %3286 = vmatpush1.bf16.msra.mxu0 0
    %3287 = vmatprep.subr.bf16.mxu0 0
    %3288 = vmatpush1.bf16.msra.mxu0 0
    %3289 = vmatprep.subr.bf16.mxu0 0
    %3290 = vmatpush1.bf16.msra.mxu0 0
    %3291 = vmatprep.subr.bf16.mxu0 0
    %3292 = vmatpush1.bf16.msra.mxu0 0
    %3293 = vmatprep.subr.bf16.mxu0 0
    %3294 = vmatpush1.bf16.msra.mxu0 0
    %3295 = vmatprep.subr.bf16.mxu0 0
    %3296 = vmatpush1.bf16.msra.mxu0 0
    %3297 = vmatprep.subr.bf16.mxu0 0
    %3298 = vmatpush1.bf16.msra.mxu0 0
    %3299 = vmatprep.subr.bf16.mxu0 0
    %3300 = vmatpush1.bf16.msra.mxu0 0
    %3301 = vmatprep.subr.bf16.mxu0 0
    %3302 = vmatpush1.bf16.msra.mxu0 0
    %3303 = vmatprep.subr.bf16.mxu0 0
    %3304 = vmatpush1.bf16.msra.mxu0 0
    %3305 = vmatprep.mubr.bf16.mxu0 0
    %3306 = vmatmul.mubr.bf16.gmra.mrb[0].mxu0 %v3271
    %v3307 = vpop.f32.mrb[0].mxu0
    %v3308 = vadd.f32 0.0, %v3307
    %v3309 = vpop.f32.mrb[0].mxu0
    %v3310 = vpop.f32.mrb[0].mxu0
    %v3311 = vadd.f32 0.0, %v3310
    %v3312 = vpop.f32.mrb[0].mxu0
    %3313 = vdwg.mxu0
    %v3314 = vpack.c.bf16 %v3267, %v3264
    %v3315 = vpack.c.bf16 %v3311, %v3308
    %s3316 = scalar_lea.vmem %s5, 32
    %v3317 = vld [vmem:[%s3316] sm:$0xf]
    %v3318 = vld [vmem:[%s3316 + $0x4] sm:$0xf]
    %s3319 = scalar_lea.vmem %s3, 416
    %v3320 = vld [vmem:[%s3319] sm:$0xf]
    %v3321 = vld [vmem:[%s3319 + $0x4] sm:$0xf]
    %v3322 = vld [vmem:[%s3319 + $0x8] sm:$0xf]
    %v3323 = vld [vmem:[%s3319 + $0xc] sm:$0xf]
    %v3324 = vld [vmem:[%s3319 + $0x10] sm:$0xf]
    %v3325 = vld [vmem:[%s3319 + $0x14] sm:$0xf]
    %v3326 = vld [vmem:[%s3319 + $0x18] sm:$0xf]
    %v3327 = vld [vmem:[%s3319 + $0x1c] sm:$0xf]
    %s3328 = scalar_lea.vmem %s4, 13
    %v3329 = vld [vmem:[%s3328] sm:$0x1]
    %v3331 = vlaneseq
    %v3332 = vshrl.u32 %v3331, 7
    %v3333 = vsub.s32 0, %v3332
    %v3334 = vrot.slane %v3329, %v3333
    %v3344 = vunpack.c.l.b16 %v3320
    %v3345 = vunpack.c.l.b16 %v3321
    %v3346 = vunpack.c.l.b16 %v3322
    %v3347 = vunpack.c.l.b16 %v3323
    %v3348 = vunpack.c.l.b16 %v3324
    %v3349 = vunpack.c.l.b16 %v3325
    %v3350 = vunpack.c.l.b16 %v3326
    %v3351 = vunpack.c.l.b16 %v3327
    %v3352 = vpack.c.b16 %v3345, %v3344
    %v3353 = vpack.c.b16 %v3347, %v3346
    %v3354 = vpack.c.b16 %v3349, %v3348
    %v3355 = vpack.c.b16 %v3351, %v3350
    %3360 = vmatprep.subr.bf16.mxu0 0
    %3361 = vmatpush1.bf16.msra.mxu0 %v3352
    %3362 = vmatprep.subr.bf16.mxu0 0
    %3363 = vmatpush1.bf16.msra.mxu0 %v3353
    %3364 = vmatprep.subr.bf16.mxu0 0
    %3365 = vmatpush1.bf16.msra.mxu0 %v3354
    %3366 = vmatprep.subr.bf16.mxu0 0
    %3367 = vmatpush1.bf16.msra.mxu0 %v3355
    %3368 = vmatprep.subr.bf16.mxu0 0
    %3369 = vmatpush1.bf16.msra.mxu0 0
    %3370 = vmatprep.subr.bf16.mxu0 0
    %3371 = vmatpush1.bf16.msra.mxu0 0
    %3372 = vmatprep.subr.bf16.mxu0 0
    %3373 = vmatpush1.bf16.msra.mxu0 0
    %3374 = vmatprep.subr.bf16.mxu0 0
    %3375 = vmatpush1.bf16.msra.mxu0 0
    %3376 = vmatprep.subr.bf16.mxu0 0
    %3377 = vmatpush1.bf16.msra.mxu0 0
    %3378 = vmatprep.subr.bf16.mxu0 0
    %3379 = vmatpush1.bf16.msra.mxu0 0
    %3380 = vmatprep.subr.bf16.mxu0 0
    %3381 = vmatpush1.bf16.msra.mxu0 0
    %3382 = vmatprep.subr.bf16.mxu0 0
    %3383 = vmatpush1.bf16.msra.mxu0 0
    %3384 = vmatprep.subr.bf16.mxu0 0
    %3385 = vmatpush1.bf16.msra.mxu0 0
    %3386 = vmatprep.subr.bf16.mxu0 0
    %3387 = vmatpush1.bf16.msra.mxu0 0
    %3388 = vmatprep.subr.bf16.mxu0 0
    %3389 = vmatpush1.bf16.msra.mxu0 0
    %3390 = vmatprep.subr.bf16.mxu0 0
    %3391 = vmatpush1.bf16.msra.mxu0 0
    %3392 = vmatprep.mubr.bf16.mxu0 0
    %3393 = vmatmul.mubr.bf16.gmra.mrb[0].mxu0 %v2846
    %v3394 = vpop.f32.mrb[0].mxu0
    %v3395 = vadd.f32 %v3334, %v3394
    %v3396 = vpop.f32.mrb[0].mxu0
    %v3397 = vpop.f32.mrb[0].mxu0
    %v3398 = vadd.f32 %v3334, %v3397
    %v3399 = vpop.f32.mrb[0].mxu0
    %3400 = vmatprep.mubr.bf16.mxu0 0
    %3401 = vmatmul.mubr.bf16.gmra.mrb[0].mxu0 %v2849
    %v3402 = vpop.f32.mrb[0].mxu0
    %v3403 = vadd.f32 %v3334, %v3402
    %v3404 = vpop.f32.mrb[0].mxu0
    %v3405 = vpop.f32.mrb[0].mxu0
    %v3406 = vadd.f32 %v3334, %v3405
    %v3407 = vpop.f32.mrb[0].mxu0
    %3408 = vdwg.mxu0
    %s3409 = scalar_lea.vmem %s3, 544
    %v3410 = vld [vmem:[%s3409] sm:$0xf]
    %v3411 = vld [vmem:[%s3409 + $0x4] sm:$0xf]
    %v3412 = vld [vmem:[%s3409 + $0x8] sm:$0xf]
    %v3413 = vld [vmem:[%s3409 + $0xc] sm:$0xf]
    %v3414 = vld [vmem:[%s3409 + $0x10] sm:$0xf]
    %v3415 = vld [vmem:[%s3409 + $0x14] sm:$0xf]
    %v3416 = vld [vmem:[%s3409 + $0x18] sm:$0xf]
    %v3417 = vld [vmem:[%s3409 + $0x1c] sm:$0xf]
    %s3418 = scalar_lea.vmem %s4, 17
    %v3419 = vld [vmem:[%s3418] sm:$0x1]
    %v3421 = vlaneseq
    %v3422 = vshrl.u32 %v3421, 7
    %v3423 = vsub.s32 0, %v3422
    %v3424 = vrot.slane %v3419, %v3423
    %v3434 = vunpack.c.l.b16 %v3410
    %v3435 = vunpack.c.l.b16 %v3411
    %v3436 = vunpack.c.l.b16 %v3412
    %v3437 = vunpack.c.l.b16 %v3413
    %v3438 = vunpack.c.l.b16 %v3414
    %v3439 = vunpack.c.l.b16 %v3415
    %v3440 = vunpack.c.l.b16 %v3416
    %v3441 = vunpack.c.l.b16 %v3417
    %v3442 = vpack.c.b16 %v3435, %v3434
    %v3443 = vpack.c.b16 %v3437, %v3436
    %v3444 = vpack.c.b16 %v3439, %v3438
    %v3445 = vpack.c.b16 %v3441, %v3440
    %3450 = vmatprep.subr.bf16.mxu0 0
    %3451 = vmatpush1.bf16.msra.mxu0 %v3442
    %3452 = vmatprep.subr.bf16.mxu0 0
    %3453 = vmatpush1.bf16.msra.mxu0 %v3443
    %3454 = vmatprep.subr.bf16.mxu0 0
    %3455 = vmatpush1.bf16.msra.mxu0 %v3444
    %3456 = vmatprep.subr.bf16.mxu0 0
    %3457 = vmatpush1.bf16.msra.mxu0 %v3445
    %3458 = vmatprep.subr.bf16.mxu0 0
    %3459 = vmatpush1.bf16.msra.mxu0 0
    %3460 = vmatprep.subr.bf16.mxu0 0
    %3461 = vmatpush1.bf16.msra.mxu0 0
    %3462 = vmatprep.subr.bf16.mxu0 0
    %3463 = vmatpush1.bf16.msra.mxu0 0
    %3464 = vmatprep.subr.bf16.mxu0 0
    %3465 = vmatpush1.bf16.msra.mxu0 0
    %3466 = vmatprep.subr.bf16.mxu0 0
    %3467 = vmatpush1.bf16.msra.mxu0 0
    %3468 = vmatprep.subr.bf16.mxu0 0
    %3469 = vmatpush1.bf16.msra.mxu0 0
    %3470 = vmatprep.subr.bf16.mxu0 0
    %3471 = vmatpush1.bf16.msra.mxu0 0
    %3472 = vmatprep.subr.bf16.mxu0 0
    %3473 = vmatpush1.bf16.msra.mxu0 0
    %3474 = vmatprep.subr.bf16.mxu0 0
    %3475 = vmatpush1.bf16.msra.mxu0 0
    %3476 = vmatprep.subr.bf16.mxu0 0
    %3477 = vmatpush1.bf16.msra.mxu0 0
    %3478 = vmatprep.subr.bf16.mxu0 0
    %3479 = vmatpush1.bf16.msra.mxu0 0
    %3480 = vmatprep.subr.bf16.mxu0 0
    %3481 = vmatpush1.bf16.msra.mxu0 0
    %3482 = vmatprep.mubr.bf16.mxu0 0
    %3483 = vmatmul.mubr.bf16.gmra.mrb[0].mxu0 %v2846
    %v3484 = vpop.f32.mrb[0].mxu0
    %v3485 = vadd.f32 %v3424, %v3484
    %v3486 = vpop.f32.mrb[0].mxu0
    %v3487 = vpop.f32.mrb[0].mxu0
    %v3488 = vadd.f32 %v3424, %v3487
    %v3489 = vpop.f32.mrb[0].mxu0
    %3490 = vmatprep.mubr.bf16.mxu0 0
    %3491 = vmatmul.mubr.bf16.gmra.mrb[0].mxu0 %v2849
    %v3492 = vpop.f32.mrb[0].mxu0
    %v3493 = vadd.f32 %v3424, %v3492
    %v3494 = vpop.f32.mrb[0].mxu0
    %v3495 = vpop.f32.mrb[0].mxu0
    %v3496 = vadd.f32 %v3424, %v3495
    %v3497 = vpop.f32.mrb[0].mxu0
    %3498 = vdwg.mxu0
    %s3499 = scalar_lea.vmem %s3, 672
    %v3500 = vld [vmem:[%s3499] sm:$0xf]
    %v3501 = vld [vmem:[%s3499 + $0x4] sm:$0xf]
    %v3502 = vld [vmem:[%s3499 + $0x8] sm:$0xf]
    %v3503 = vld [vmem:[%s3499 + $0xc] sm:$0xf]
    %v3504 = vld [vmem:[%s3499 + $0x10] sm:$0xf]
    %v3505 = vld [vmem:[%s3499 + $0x14] sm:$0xf]
    %v3506 = vld [vmem:[%s3499 + $0x18] sm:$0xf]
    %v3507 = vld [vmem:[%s3499 + $0x1c] sm:$0xf]
    %s3508 = scalar_lea.vmem %s4, 21
    %v3509 = vld [vmem:[%s3508] sm:$0x1]
    %v3511 = vlaneseq
    %v3512 = vshrl.u32 %v3511, 7
    %v3513 = vsub.s32 0, %v3512
    %v3514 = vrot.slane %v3509, %v3513
    %v3524 = vunpack.c.l.b16 %v3500
    %v3525 = vunpack.c.l.b16 %v3501
    %v3526 = vunpack.c.l.b16 %v3502
    %v3527 = vunpack.c.l.b16 %v3503
    %v3528 = vunpack.c.l.b16 %v3504
    %v3529 = vunpack.c.l.b16 %v3505
    %v3530 = vunpack.c.l.b16 %v3506
    %v3531 = vunpack.c.l.b16 %v3507
    %v3532 = vpack.c.b16 %v3525, %v3524
    %v3533 = vpack.c.b16 %v3527, %v3526
    %v3534 = vpack.c.b16 %v3529, %v3528
    %v3535 = vpack.c.b16 %v3531, %v3530
    %3540 = vmatprep.subr.bf16.mxu0 0
    %3541 = vmatpush1.bf16.msra.mxu0 %v3532
    %3542 = vmatprep.subr.bf16.mxu0 0
    %3543 = vmatpush1.bf16.msra.mxu0 %v3533
    %3544 = vmatprep.subr.bf16.mxu0 0
    %3545 = vmatpush1.bf16.msra.mxu0 %v3534
    %3546 = vmatprep.subr.bf16.mxu0 0
    %3547 = vmatpush1.bf16.msra.mxu0 %v3535
    %3548 = vmatprep.subr.bf16.mxu0 0
    %3549 = vmatpush1.bf16.msra.mxu0 0
    %3550 = vmatprep.subr.bf16.mxu0 0
    %3551 = vmatpush1.bf16.msra.mxu0 0
    %3552 = vmatprep.subr.bf16.mxu0 0
    %3553 = vmatpush1.bf16.msra.mxu0 0
    %3554 = vmatprep.subr.bf16.mxu0 0
    %3555 = vmatpush1.bf16.msra.mxu0 0
    %3556 = vmatprep.subr.bf16.mxu0 0
    %3557 = vmatpush1.bf16.msra.mxu0 0
    %3558 = vmatprep.subr.bf16.mxu0 0
    %3559 = vmatpush1.bf16.msra.mxu0 0
    %3560 = vmatprep.subr.bf16.mxu0 0
    %3561 = vmatpush1.bf16.msra.mxu0 0
    %3562 = vmatprep.subr.bf16.mxu0 0
    %3563 = vmatpush1.bf16.msra.mxu0 0
    %3564 = vmatprep.subr.bf16.mxu0 0
    %3565 = vmatpush1.bf16.msra.mxu0 0
    %3566 = vmatprep.subr.bf16.mxu0 0
    %3567 = vmatpush1.bf16.msra.mxu0 0
    %3568 = vmatprep.subr.bf16.mxu0 0
    %3569 = vmatpush1.bf16.msra.mxu0 0
    %3570 = vmatprep.subr.bf16.mxu0 0
    %3571 = vmatpush1.bf16.msra.mxu0 0
    %3572 = vmatprep.mubr.bf16.mxu0 0
    %3573 = vmatmul.mubr.bf16.gmra.mrb[0].mxu0 %v2846
    %v3574 = vpop.f32.mrb[0].mxu0
    %v3575 = vadd.f32 %v3514, %v3574
    %v3576 = vpop.f32.mrb[0].mxu0
    %v3577 = vpop.f32.mrb[0].mxu0
    %v3578 = vadd.f32 %v3514, %v3577
    %v3579 = vpop.f32.mrb[0].mxu0
    %3580 = vmatprep.mubr.bf16.mxu0 0
    %3581 = vmatmul.mubr.bf16.gmra.mrb[0].mxu0 %v2849
    %v3582 = vpop.f32.mrb[0].mxu0
    %v3583 = vadd.f32 %v3514, %v3582
    %v3584 = vpop.f32.mrb[0].mxu0
    %v3585 = vpop.f32.mrb[0].mxu0
    %v3586 = vadd.f32 %v3514, %v3585
    %v3587 = vpop.f32.mrb[0].mxu0
    %3588 = vdwg.mxu0
    %v3589 = vpack.c.bf16 %v3398, %v3395
    %v3590 = vpack.c.bf16 %v3406, %v3403
    %v3591 = vpack.c.bf16 %v3488, %v3485
    %v3592 = vpack.c.bf16 %v3496, %v3493
    %v3593 = vpack.c.bf16 %v3578, %v3575
    %v3594 = vpack.c.bf16 %v3586, %v3583
    %v3596 = vsel %vm71, %v3589, 0
    %v3599 = vsel %vm71, %v3591, 0
    %3601 = vmatprep.subr.bf16.mxu0 0
    %3602 = vmatpush1.bf16.xpose.msra.mxu0 %v3599
    %3603 = vmatprep.subr.bf16.mxu0 0
    %3604 = vmatpush1.bf16.xpose.msra.mxu0 0
    %3605 = vmatprep.subr.bf16.mxu0 0
    %3606 = vmatpush1.bf16.xpose.msra.mxu0 0
    %3607 = vmatprep.subr.bf16.mxu0 0
    %3608 = vmatpush1.bf16.xpose.msra.mxu0 0
    %3609 = vmatprep.subr.bf16.mxu0 0
    %3610 = vmatpush1.bf16.xpose.msra.mxu0 0
    %3611 = vmatprep.subr.bf16.mxu0 0
    %3612 = vmatpush1.bf16.xpose.msra.mxu0 0
    %3613 = vmatprep.subr.bf16.mxu0 0
    %3614 = vmatpush1.bf16.xpose.msra.mxu0 0
    %3615 = vmatprep.subr.bf16.mxu0 0
    %3616 = vmatpush1.bf16.xpose.msra.mxu0 0
    %3617 = vmatprep.subr.bf16.mxu0 0
    %3618 = vmatpush1.bf16.xpose.msra.mxu0 0
    %3619 = vmatprep.subr.bf16.mxu0 0
    %3620 = vmatpush1.bf16.xpose.msra.mxu0 0
    %3621 = vmatprep.subr.bf16.mxu0 0
    %3622 = vmatpush1.bf16.xpose.msra.mxu0 0
    %3623 = vmatprep.subr.bf16.mxu0 0
    %3624 = vmatpush1.bf16.xpose.msra.mxu0 0
    %3625 = vmatprep.subr.bf16.mxu0 0
    %3626 = vmatpush1.bf16.xpose.msra.mxu0 0
    %3627 = vmatprep.subr.bf16.mxu0 0
    %3628 = vmatpush1.bf16.xpose.msra.mxu0 0
    %3629 = vmatprep.subr.bf16.mxu0 0
    %3630 = vmatpush1.bf16.xpose.msra.mxu0 0
    %3631 = vmatprep.subr.bf16.mxu0 0
    %3632 = vmatpush1.bf16.xpose.msra.mxu0 0
    %3633 = vmatprep.mubr.bf16.mxu0 0
    %3634 = vmatmul.mubr.bf16.gmra.mrb[0].mxu0 %v3596
    %v3635 = vpop.f32.mrb[0].mxu0
    %v3636 = vadd.f32 0.0, %v3635
    %v3637 = vpop.f32.mrb[0].mxu0
    %v3638 = vpop.f32.mrb[0].mxu0
    %v3639 = vadd.f32 0.0, %v3638
    %v3640 = vpop.f32.mrb[0].mxu0
    %3641 = vdwg.mxu0
    %v3643 = vsel %vm71, %v3590, 0
    %v3646 = vsel %vm71, %v3592, 0
    %3648 = vmatprep.subr.bf16.mxu0 0
    %3649 = vmatpush1.bf16.xpose.msra.mxu0 %v3646
    %3650 = vmatprep.subr.bf16.mxu0 0
    %3651 = vmatpush1.bf16.xpose.msra.mxu0 0
    %3652 = vmatprep.subr.bf16.mxu0 0
    %3653 = vmatpush1.bf16.xpose.msra.mxu0 0
    %3654 = vmatprep.subr.bf16.mxu0 0
    %3655 = vmatpush1.bf16.xpose.msra.mxu0 0
    %3656 = vmatprep.subr.bf16.mxu0 0
    %3657 = vmatpush1.bf16.xpose.msra.mxu0 0
    %3658 = vmatprep.subr.bf16.mxu0 0
    %3659 = vmatpush1.bf16.xpose.msra.mxu0 0
    %3660 = vmatprep.subr.bf16.mxu0 0
    %3661 = vmatpush1.bf16.xpose.msra.mxu0 0
    %3662 = vmatprep.subr.bf16.mxu0 0
    %3663 = vmatpush1.bf16.xpose.msra.mxu0 0
    %3664 = vmatprep.subr.bf16.mxu0 0
    %3665 = vmatpush1.bf16.xpose.msra.mxu0 0
    %3666 = vmatprep.subr.bf16.mxu0 0
    %3667 = vmatpush1.bf16.xpose.msra.mxu0 0
    %3668 = vmatprep.subr.bf16.mxu0 0
    %3669 = vmatpush1.bf16.xpose.msra.mxu0 0
    %3670 = vmatprep.subr.bf16.mxu0 0
    %3671 = vmatpush1.bf16.xpose.msra.mxu0 0
    %3672 = vmatprep.subr.bf16.mxu0 0
    %3673 = vmatpush1.bf16.xpose.msra.mxu0 0
    %3674 = vmatprep.subr.bf16.mxu0 0
    %3675 = vmatpush1.bf16.xpose.msra.mxu0 0
    %3676 = vmatprep.subr.bf16.mxu0 0
    %3677 = vmatpush1.bf16.xpose.msra.mxu0 0
    %3678 = vmatprep.subr.bf16.mxu0 0
    %3679 = vmatpush1.bf16.xpose.msra.mxu0 0
    %3680 = vmatprep.mubr.bf16.mxu0 0
    %3681 = vmatmul.mubr.bf16.gmra.mrb[0].mxu0 %v3643
    %v3682 = vpop.f32.mrb[0].mxu0
    %v3683 = vadd.f32 0.0, %v3682
    %v3684 = vpop.f32.mrb[0].mxu0
    %v3685 = vpop.f32.mrb[0].mxu0
    %v3686 = vadd.f32 0.0, %v3685
    %v3687 = vpop.f32.mrb[0].mxu0
    %3688 = vdwg.mxu0
    %v3689 = vsel %vm71, %v3636, -inf
    %3690 = vmax.xlane.f32.xlu0 %v3689
    %v3691 = vpop.xlane.xlu0 %3690
    %v3692 = vsel %vm71, %v3639, -inf
    %3693 = vmax.xlane.f32.xlu0 %v3692
    %v3694 = vpop.xlane.xlu0 %3693
    %v3695 = vsel %vm71, %v3683, -inf
    %3696 = vmax.xlane.f32.xlu0 %v3695
    %v3697 = vpop.xlane.xlu0 %3696
    %v3698 = vsel %vm71, %v3686, -inf
    %3699 = vmax.xlane.f32.xlu0 %v3698
    %v3700 = vpop.xlane.xlu0 %3699
    %v3701 = vsub.f32 %v3636, %v3691
    %v3702 = vsub.f32 %v3639, %v3694
    %v3703 = vsub.f32 %v3683, %v3697
    %v3704 = vsub.f32 %v3686, %v3700
    %v3705 = vmul.f32 %v3701, 1.442695
    %v3706 = vpow.pop %v3705
    %v3707 = vmul.f32 %v3702, 1.442695
    %v3708 = vpow.pop %v3707
    %v3709 = vmul.f32 %v3703, 1.442695
    %v3710 = vpow.pop %v3709
    %v3711 = vmul.f32 %v3704, 1.442695
    %v3712 = vpow.pop %v3711
    %v3713 = vsel %vm71, %v3706, 0.0
    %3714 = vadd.xlane.f32.xlu0 %v3713
    %v3715 = vpop.xlane.xlu0 %3714
    %v3716 = vsel %vm71, %v3708, 0.0
    %3717 = vadd.xlane.f32.xlu0 %v3716
    %v3718 = vpop.xlane.xlu0 %3717
    %v3719 = vsel %vm71, %v3710, 0.0
    %3720 = vadd.xlane.f32.xlu0 %v3719
    %v3721 = vpop.xlane.xlu0 %3720
    %v3722 = vsel %vm71, %v3712, 0.0
    %3723 = vadd.xlane.f32.xlu0 %v3722
    %v3724 = vpop.xlane.xlu0 %3723
    %v3725 = vrcp.pop %v3715
    %v3726 = vrcp.pop %v3718
    %v3727 = vrcp.pop %v3721
    %v3728 = vrcp.pop %v3724
    %v3729 = vmul.f32 %v3706, %v3725
    %v3730 = vmul.f32 %v3708, %v3726
    %v3731 = vmul.f32 %v3710, %v3727
    %v3732 = vmul.f32 %v3712, %v3728
    %v3733 = vpack.c.bf16 %v3730, %v3729
    %v3734 = vpack.c.bf16 %v3732, %v3731
    %v3736 = vsel %vm71, %v3733, 0
    %3738 = vmatprep.subr.bf16.mxu0 0
    %3739 = vmatpush1.bf16.msra.mxu0 %v3593
    %3740 = vmatprep.subr.bf16.mxu0 0
    %3741 = vmatpush1.bf16.msra.mxu0 0
    %3742 = vmatprep.subr.bf16.mxu0 0
    %3743 = vmatpush1.bf16.msra.mxu0 0
    %3744 = vmatprep.subr.bf16.mxu0 0
    %3745 = vmatpush1.bf16.msra.mxu0 0
    %3746 = vmatprep.subr.bf16.mxu0 0
    %3747 = vmatpush1.bf16.msra.mxu0 0
    %3748 = vmatprep.subr.bf16.mxu0 0
    %3749 = vmatpush1.bf16.msra.mxu0 0
    %3750 = vmatprep.subr.bf16.mxu0 0
    %3751 = vmatpush1.bf16.msra.mxu0 0
    %3752 = vmatprep.subr.bf16.mxu0 0
    %3753 = vmatpush1.bf16.msra.mxu0 0
    %3754 = vmatprep.subr.bf16.mxu0 0
    %3755 = vmatpush1.bf16.msra.mxu0 0
    %3756 = vmatprep.subr.bf16.mxu0 0
    %3757 = vmatpush1.bf16.msra.mxu0 0
    %3758 = vmatprep.subr.bf16.mxu0 0
    %3759 = vmatpush1.bf16.msra.mxu0 0
    %3760 = vmatprep.subr.bf16.mxu0 0
    %3761 = vmatpush1.bf16.msra.mxu0 0
    %3762 = vmatprep.subr.bf16.mxu0 0
    %3763 = vmatpush1.bf16.msra.mxu0 0
    %3764 = vmatprep.subr.bf16.mxu0 0
    %3765 = vmatpush1.bf16.msra.mxu0 0
    %3766 = vmatprep.subr.bf16.mxu0 0
    %3767 = vmatpush1.bf16.msra.mxu0 0
    %3768 = vmatprep.subr.bf16.mxu0 0
    %3769 = vmatpush1.bf16.msra.mxu0 0
    %3770 = vmatprep.mubr.bf16.mxu0 0
    %3771 = vmatmul.mubr.bf16.gmra.mrb[0].mxu0 %v3736
    %v3772 = vpop.f32.mrb[0].mxu0
    %v3773 = vadd.f32 0.0, %v3772
    %v3774 = vpop.f32.mrb[0].mxu0
    %v3775 = vpop.f32.mrb[0].mxu0
    %v3776 = vadd.f32 0.0, %v3775
    %v3777 = vpop.f32.mrb[0].mxu0
    %3778 = vdwg.mxu0
    %v3780 = vsel %vm71, %v3734, 0
    %3782 = vmatprep.subr.bf16.mxu0 0
    %3783 = vmatpush1.bf16.msra.mxu0 %v3594
    %3784 = vmatprep.subr.bf16.mxu0 0
    %3785 = vmatpush1.bf16.msra.mxu0 0
    %3786 = vmatprep.subr.bf16.mxu0 0
    %3787 = vmatpush1.bf16.msra.mxu0 0
    %3788 = vmatprep.subr.bf16.mxu0 0
    %3789 = vmatpush1.bf16.msra.mxu0 0
    %3790 = vmatprep.subr.bf16.mxu0 0
    %3791 = vmatpush1.bf16.msra.mxu0 0
    %3792 = vmatprep.subr.bf16.mxu0 0
    %3793 = vmatpush1.bf16.msra.mxu0 0
    %3794 = vmatprep.subr.bf16.mxu0 0
    %3795 = vmatpush1.bf16.msra.mxu0 0
    %3796 = vmatprep.subr.bf16.mxu0 0
    %3797 = vmatpush1.bf16.msra.mxu0 0
    %3798 = vmatprep.subr.bf16.mxu0 0
    %3799 = vmatpush1.bf16.msra.mxu0 0
    %3800 = vmatprep.subr.bf16.mxu0 0
    %3801 = vmatpush1.bf16.msra.mxu0 0
    %3802 = vmatprep.subr.bf16.mxu0 0
    %3803 = vmatpush1.bf16.msra.mxu0 0
    %3804 = vmatprep.subr.bf16.mxu0 0
    %3805 = vmatpush1.bf16.msra.mxu0 0
    %3806 = vmatprep.subr.bf16.mxu0 0
    %3807 = vmatpush1.bf16.msra.mxu0 0
    %3808 = vmatprep.subr.bf16.mxu0 0
    %3809 = vmatpush1.bf16.msra.mxu0 0
    %3810 = vmatprep.subr.bf16.mxu0 0
    %3811 = vmatpush1.bf16.msra.mxu0 0
    %3812 = vmatprep.subr.bf16.mxu0 0
    %3813 = vmatpush1.bf16.msra.mxu0 0
    %3814 = vmatprep.mubr.bf16.mxu0 0
    %3815 = vmatmul.mubr.bf16.gmra.mrb[0].mxu0 %v3780
    %v3816 = vpop.f32.mrb[0].mxu0
    %v3817 = vadd.f32 0.0, %v3816
    %v3818 = vpop.f32.mrb[0].mxu0
    %v3819 = vpop.f32.mrb[0].mxu0
    %v3820 = vadd.f32 0.0, %v3819
    %v3821 = vpop.f32.mrb[0].mxu0
    %3822 = vdwg.mxu0
    %v3823 = vpack.c.bf16 %v3776, %v3773
    %v3824 = vpack.c.bf16 %v3820, %v3817
    %s3825 = scalar_lea.vmem %s5, 40
    %v3826 = vld [vmem:[%s3825] sm:$0xf]
    %v3827 = vld [vmem:[%s3825 + $0x4] sm:$0xf]
    %v3830 = vunpack.c.l.b16 %v3826
    %v3831 = vunpack.c.l.b16 %v3827
    %v3832 = vpack.c.b16 %v3831, %v3830
    %v3835 = vsel %vm71, %v3823, 0
    %v3838 = vsel %vm71, %v3824, 0
    %3840 = vmatprep.subr.bf16.mxu0 0
    %3841 = vmatpush1.bf16.msra.mxu0 %v3832
    %3842 = vmatprep.subr.bf16.mxu0 0
    %3843 = vmatpush1.bf16.msra.mxu0 0
    %3844 = vmatprep.subr.bf16.mxu0 0
    %3845 = vmatpush1.bf16.msra.mxu0 0
    %3846 = vmatprep.subr.bf16.mxu0 0
    %3847 = vmatpush1.bf16.msra.mxu0 0
    %3848 = vmatprep.subr.bf16.mxu0 0
    %3849 = vmatpush1.bf16.msra.mxu0 0
    %3850 = vmatprep.subr.bf16.mxu0 0
    %3851 = vmatpush1.bf16.msra.mxu0 0
    %3852 = vmatprep.subr.bf16.mxu0 0
    %3853 = vmatpush1.bf16.msra.mxu0 0
    %3854 = vmatprep.subr.bf16.mxu0 0
    %3855 = vmatpush1.bf16.msra.mxu0 0
    %3856 = vmatprep.subr.bf16.mxu0 0
    %3857 = vmatpush1.bf16.msra.mxu0 0
    %3858 = vmatprep.subr.bf16.mxu0 0
    %3859 = vmatpush1.bf16.msra.mxu0 0
    %3860 = vmatprep.subr.bf16.mxu0 0
    %3861 = vmatpush1.bf16.msra.mxu0 0
    %3862 = vmatprep.subr.bf16.mxu0 0
    %3863 = vmatpush1.bf16.msra.mxu0 0
    %3864 = vmatprep.subr.bf16.mxu0 0
    %3865 = vmatpush1.bf16.msra.mxu0 0
    %3866 = vmatprep.subr.bf16.mxu0 0
    %3867 = vmatpush1.bf16.msra.mxu0 0
    %3868 = vmatprep.subr.bf16.mxu0 0
    %3869 = vmatpush1.bf16.msra.mxu0 0
    %3870 = vmatprep.subr.bf16.mxu0 0
    %3871 = vmatpush1.bf16.msra.mxu0 0
    %3872 = vmatprep.mubr.bf16.mxu0 0
    %3873 = vmatmul.mubr.bf16.gmra.mrb[0].mxu0 %v3835
    %v3874 = vpop.f32.mrb[0].mxu0
    %v3875 = vadd.f32 0.0, %v3874
    %v3876 = vpop.f32.mrb[0].mxu0
    %v3877 = vpop.f32.mrb[0].mxu0
    %v3878 = vadd.f32 0.0, %v3877
    %v3879 = vpop.f32.mrb[0].mxu0
    %3880 = vmatprep.mubr.bf16.mxu0 0
    %3881 = vmatmul.mubr.bf16.gmra.mrb[0].mxu0 %v3838
    %v3882 = vpop.f32.mrb[0].mxu0
    %v3883 = vadd.f32 0.0, %v3882
    %v3884 = vpop.f32.mrb[0].mxu0
    %v3885 = vpop.f32.mrb[0].mxu0
    %v3886 = vadd.f32 0.0, %v3885
    %v3887 = vpop.f32.mrb[0].mxu0
    %3888 = vdwg.mxu0
    %v3891 = vunpack.c.l.b16 %v3317
    %v3892 = vunpack.c.l.b16 %v3318
    %v3893 = vpack.c.b16 %v3892, %v3891
    %v3896 = vsel %vm71, %v3314, 0
    %v3899 = vsel %vm71, %v3315, 0
    %3901 = vmatprep.subr.bf16.mxu0 0
    %3902 = vmatpush1.bf16.msra.mxu0 %v3893
    %3903 = vmatprep.subr.bf16.mxu0 0
    %3904 = vmatpush1.bf16.msra.mxu0 0
    %3905 = vmatprep.subr.bf16.mxu0 0
    %3906 = vmatpush1.bf16.msra.mxu0 0
    %3907 = vmatprep.subr.bf16.mxu0 0
    %3908 = vmatpush1.bf16.msra.mxu0 0
    %3909 = vmatprep.subr.bf16.mxu0 0
    %3910 = vmatpush1.bf16.msra.mxu0 0
    %3911 = vmatprep.subr.bf16.mxu0 0
    %3912 = vmatpush1.bf16.msra.mxu0 0
    %3913 = vmatprep.subr.bf16.mxu0 0
    %3914 = vmatpush1.bf16.msra.mxu0 0
    %3915 = vmatprep.subr.bf16.mxu0 0
    %3916 = vmatpush1.bf16.msra.mxu0 0
    %3917 = vmatprep.subr.bf16.mxu0 0
    %3918 = vmatpush1.bf16.msra.mxu0 0
    %3919 = vmatprep.subr.bf16.mxu0 0
    %3920 = vmatpush1.bf16.msra.mxu0 0
    %3921 = vmatprep.subr.bf16.mxu0 0
    %3922 = vmatpush1.bf16.msra.mxu0 0
    %3923 = vmatprep.subr.bf16.mxu0 0
    %3924 = vmatpush1.bf16.msra.mxu0 0
    %3925 = vmatprep.subr.bf16.mxu0 0
    %3926 = vmatpush1.bf16.msra.mxu0 0
    %3927 = vmatprep.subr.bf16.mxu0 0
    %3928 = vmatpush1.bf16.msra.mxu0 0
    %3929 = vmatprep.subr.bf16.mxu0 0
    %3930 = vmatpush1.bf16.msra.mxu0 0
    %3931 = vmatprep.subr.bf16.mxu0 0
    %3932 = vmatpush1.bf16.msra.mxu0 0
    %3933 = vmatprep.mubr.bf16.mxu0 0
    %3934 = vmatmul.mubr.bf16.gmra.mrb[0].mxu0 %v3896
    %v3935 = vpop.f32.mrb[0].mxu0
    %v3936 = vadd.f32 %v3875, %v3935
    %v3937 = vpop.f32.mrb[0].mxu0
    %v3938 = vpop.f32.mrb[0].mxu0
    %v3939 = vadd.f32 %v3878, %v3938
    %v3940 = vpop.f32.mrb[0].mxu0
    %3941 = vmatprep.mubr.bf16.mxu0 0
    %3942 = vmatmul.mubr.bf16.gmra.mrb[0].mxu0 %v3899
    %v3943 = vpop.f32.mrb[0].mxu0
    %v3944 = vadd.f32 %v3883, %v3943
    %v3945 = vpop.f32.mrb[0].mxu0
    %v3946 = vpop.f32.mrb[0].mxu0
    %v3947 = vadd.f32 %v3886, %v3946
    %v3948 = vpop.f32.mrb[0].mxu0
    %3949 = vdwg.mxu0
    %s3950 = scalar_lea.vmem %s3, 448
    %v3951 = vld [vmem:[%s3950] sm:$0xf]
    %v3952 = vld [vmem:[%s3950 + $0x4] sm:$0xf]
    %v3953 = vld [vmem:[%s3950 + $0x8] sm:$0xf]
    %v3954 = vld [vmem:[%s3950 + $0xc] sm:$0xf]
    %v3955 = vld [vmem:[%s3950 + $0x10] sm:$0xf]
    %v3956 = vld [vmem:[%s3950 + $0x14] sm:$0xf]
    %v3957 = vld [vmem:[%s3950 + $0x18] sm:$0xf]
    %v3958 = vld [vmem:[%s3950 + $0x1c] sm:$0xf]
    %s3959 = scalar_lea.vmem %s4, 14
    %v3960 = vld [vmem:[%s3959] sm:$0x1]
    %v3962 = vlaneseq
    %v3963 = vshrl.u32 %v3962, 7
    %v3964 = vsub.s32 0, %v3963
    %v3965 = vrot.slane %v3960, %v3964
    %v3975 = vunpack.c.l.b16 %v3951
    %v3976 = vunpack.c.l.b16 %v3952
    %v3977 = vunpack.c.l.b16 %v3953
    %v3978 = vunpack.c.l.b16 %v3954
    %v3979 = vunpack.c.l.b16 %v3955
    %v3980 = vunpack.c.l.b16 %v3956
    %v3981 = vunpack.c.l.b16 %v3957
    %v3982 = vunpack.c.l.b16 %v3958
    %v3983 = vpack.c.b16 %v3976, %v3975
    %v3984 = vpack.c.b16 %v3978, %v3977
    %v3985 = vpack.c.b16 %v3980, %v3979
    %v3986 = vpack.c.b16 %v3982, %v3981
    %3991 = vmatprep.subr.bf16.mxu0 0
    %3992 = vmatpush1.bf16.msra.mxu0 %v3983
    %3993 = vmatprep.subr.bf16.mxu0 0
    %3994 = vmatpush1.bf16.msra.mxu0 %v3984
    %3995 = vmatprep.subr.bf16.mxu0 0
    %3996 = vmatpush1.bf16.msra.mxu0 %v3985
    %3997 = vmatprep.subr.bf16.mxu0 0
    %3998 = vmatpush1.bf16.msra.mxu0 %v3986
    %3999 = vmatprep.subr.bf16.mxu0 0
    %4000 = vmatpush1.bf16.msra.mxu0 0
    %4001 = vmatprep.subr.bf16.mxu0 0
    %4002 = vmatpush1.bf16.msra.mxu0 0
    %4003 = vmatprep.subr.bf16.mxu0 0
    %4004 = vmatpush1.bf16.msra.mxu0 0
    %4005 = vmatprep.subr.bf16.mxu0 0
    %4006 = vmatpush1.bf16.msra.mxu0 0
    %4007 = vmatprep.subr.bf16.mxu0 0
    %4008 = vmatpush1.bf16.msra.mxu0 0
    %4009 = vmatprep.subr.bf16.mxu0 0
    %4010 = vmatpush1.bf16.msra.mxu0 0
    %4011 = vmatprep.subr.bf16.mxu0 0
    %4012 = vmatpush1.bf16.msra.mxu0 0
    %4013 = vmatprep.subr.bf16.mxu0 0
    %4014 = vmatpush1.bf16.msra.mxu0 0
    %4015 = vmatprep.subr.bf16.mxu0 0
    %4016 = vmatpush1.bf16.msra.mxu0 0
    %4017 = vmatprep.subr.bf16.mxu0 0
    %4018 = vmatpush1.bf16.msra.mxu0 0
    %4019 = vmatprep.subr.bf16.mxu0 0
    %4020 = vmatpush1.bf16.msra.mxu0 0
    %4021 = vmatprep.subr.bf16.mxu0 0
    %4022 = vmatpush1.bf16.msra.mxu0 0
    %4023 = vmatprep.mubr.bf16.mxu0 0
    %4024 = vmatmul.mubr.bf16.gmra.mrb[0].mxu0 %v2846
    %v4025 = vpop.f32.mrb[0].mxu0
    %v4026 = vadd.f32 %v3965, %v4025
    %v4027 = vpop.f32.mrb[0].mxu0
    %v4028 = vpop.f32.mrb[0].mxu0
    %v4029 = vadd.f32 %v3965, %v4028
    %v4030 = vpop.f32.mrb[0].mxu0
    %4031 = vmatprep.mubr.bf16.mxu0 0
    %4032 = vmatmul.mubr.bf16.gmra.mrb[0].mxu0 %v2849
    %v4033 = vpop.f32.mrb[0].mxu0
    %v4034 = vadd.f32 %v3965, %v4033
    %v4035 = vpop.f32.mrb[0].mxu0
    %v4036 = vpop.f32.mrb[0].mxu0
    %v4037 = vadd.f32 %v3965, %v4036
    %v4038 = vpop.f32.mrb[0].mxu0
    %4039 = vdwg.mxu0
    %s4040 = scalar_lea.vmem %s3, 576
    %v4041 = vld [vmem:[%s4040] sm:$0xf]
    %v4042 = vld [vmem:[%s4040 + $0x4] sm:$0xf]
    %v4043 = vld [vmem:[%s4040 + $0x8] sm:$0xf]
    %v4044 = vld [vmem:[%s4040 + $0xc] sm:$0xf]
    %v4045 = vld [vmem:[%s4040 + $0x10] sm:$0xf]
    %v4046 = vld [vmem:[%s4040 + $0x14] sm:$0xf]
    %v4047 = vld [vmem:[%s4040 + $0x18] sm:$0xf]
    %v4048 = vld [vmem:[%s4040 + $0x1c] sm:$0xf]
    %s4049 = scalar_lea.vmem %s4, 18
    %v4050 = vld [vmem:[%s4049] sm:$0x1]
    %v4052 = vlaneseq
    %v4053 = vshrl.u32 %v4052, 7
    %v4054 = vsub.s32 0, %v4053
    %v4055 = vrot.slane %v4050, %v4054
    %v4065 = vunpack.c.l.b16 %v4041
    %v4066 = vunpack.c.l.b16 %v4042
    %v4067 = vunpack.c.l.b16 %v4043
    %v4068 = vunpack.c.l.b16 %v4044
    %v4069 = vunpack.c.l.b16 %v4045
    %v4070 = vunpack.c.l.b16 %v4046
    %v4071 = vunpack.c.l.b16 %v4047
    %v4072 = vunpack.c.l.b16 %v4048
    %v4073 = vpack.c.b16 %v4066, %v4065
    %v4074 = vpack.c.b16 %v4068, %v4067
    %v4075 = vpack.c.b16 %v4070, %v4069
    %v4076 = vpack.c.b16 %v4072, %v4071
    %4081 = vmatprep.subr.bf16.mxu0 0
    %4082 = vmatpush1.bf16.msra.mxu0 %v4073
    %4083 = vmatprep.subr.bf16.mxu0 0
    %4084 = vmatpush1.bf16.msra.mxu0 %v4074
    %4085 = vmatprep.subr.bf16.mxu0 0
    %4086 = vmatpush1.bf16.msra.mxu0 %v4075
    %4087 = vmatprep.subr.bf16.mxu0 0
    %4088 = vmatpush1.bf16.msra.mxu0 %v4076
    %4089 = vmatprep.subr.bf16.mxu0 0
    %4090 = vmatpush1.bf16.msra.mxu0 0
    %4091 = vmatprep.subr.bf16.mxu0 0
    %4092 = vmatpush1.bf16.msra.mxu0 0
    %4093 = vmatprep.subr.bf16.mxu0 0
    %4094 = vmatpush1.bf16.msra.mxu0 0
    %4095 = vmatprep.subr.bf16.mxu0 0
    %4096 = vmatpush1.bf16.msra.mxu0 0
    %4097 = vmatprep.subr.bf16.mxu0 0
    %4098 = vmatpush1.bf16.msra.mxu0 0
    %4099 = vmatprep.subr.bf16.mxu0 0
    %4100 = vmatpush1.bf16.msra.mxu0 0
    %4101 = vmatprep.subr.bf16.mxu0 0
    %4102 = vmatpush1.bf16.msra.mxu0 0
    %4103 = vmatprep.subr.bf16.mxu0 0
    %4104 = vmatpush1.bf16.msra.mxu0 0
    %4105 = vmatprep.subr.bf16.mxu0 0
    %4106 = vmatpush1.bf16.msra.mxu0 0
    %4107 = vmatprep.subr.bf16.mxu0 0
    %4108 = vmatpush1.bf16.msra.mxu0 0
    %4109 = vmatprep.subr.bf16.mxu0 0
    %4110 = vmatpush1.bf16.msra.mxu0 0
    %4111 = vmatprep.subr.bf16.mxu0 0
    %4112 = vmatpush1.bf16.msra.mxu0 0
    %4113 = vmatprep.mubr.bf16.mxu0 0
    %4114 = vmatmul.mubr.bf16.gmra.mrb[0].mxu0 %v2846
    %v4115 = vpop.f32.mrb[0].mxu0
    %v4116 = vadd.f32 %v4055, %v4115
    %v4117 = vpop.f32.mrb[0].mxu0
    %v4118 = vpop.f32.mrb[0].mxu0
    %v4119 = vadd.f32 %v4055, %v4118
    %v4120 = vpop.f32.mrb[0].mxu0
    %4121 = vmatprep.mubr.bf16.mxu0 0
    %4122 = vmatmul.mubr.bf16.gmra.mrb[0].mxu0 %v2849
    %v4123 = vpop.f32.mrb[0].mxu0
    %v4124 = vadd.f32 %v4055, %v4123
    %v4125 = vpop.f32.mrb[0].mxu0
    %v4126 = vpop.f32.mrb[0].mxu0
    %v4127 = vadd.f32 %v4055, %v4126
    %v4128 = vpop.f32.mrb[0].mxu0
    %4129 = vdwg.mxu0
    %s4130 = scalar_lea.vmem %s3, 704
    %v4131 = vld [vmem:[%s4130] sm:$0xf]
    %v4132 = vld [vmem:[%s4130 + $0x4] sm:$0xf]
    %v4133 = vld [vmem:[%s4130 + $0x8] sm:$0xf]
    %v4134 = vld [vmem:[%s4130 + $0xc] sm:$0xf]
    %v4135 = vld [vmem:[%s4130 + $0x10] sm:$0xf]
    %v4136 = vld [vmem:[%s4130 + $0x14] sm:$0xf]
    %v4137 = vld [vmem:[%s4130 + $0x18] sm:$0xf]
    %v4138 = vld [vmem:[%s4130 + $0x1c] sm:$0xf]
    %s4139 = scalar_lea.vmem %s4, 22
    %v4140 = vld [vmem:[%s4139] sm:$0x1]
    %v4142 = vlaneseq
    %v4143 = vshrl.u32 %v4142, 7
    %v4144 = vsub.s32 0, %v4143
    %v4145 = vrot.slane %v4140, %v4144
    %v4155 = vunpack.c.l.b16 %v4131
    %v4156 = vunpack.c.l.b16 %v4132
    %v4157 = vunpack.c.l.b16 %v4133
    %v4158 = vunpack.c.l.b16 %v4134
    %v4159 = vunpack.c.l.b16 %v4135
    %v4160 = vunpack.c.l.b16 %v4136
    %v4161 = vunpack.c.l.b16 %v4137
    %v4162 = vunpack.c.l.b16 %v4138
    %v4163 = vpack.c.b16 %v4156, %v4155
    %v4164 = vpack.c.b16 %v4158, %v4157
    %v4165 = vpack.c.b16 %v4160, %v4159
    %v4166 = vpack.c.b16 %v4162, %v4161
    %4171 = vmatprep.subr.bf16.mxu0 0
    %4172 = vmatpush1.bf16.msra.mxu0 %v4163
    %4173 = vmatprep.subr.bf16.mxu0 0
    %4174 = vmatpush1.bf16.msra.mxu0 %v4164
    %4175 = vmatprep.subr.bf16.mxu0 0
    %4176 = vmatpush1.bf16.msra.mxu0 %v4165
    %4177 = vmatprep.subr.bf16.mxu0 0
    %4178 = vmatpush1.bf16.msra.mxu0 %v4166
    %4179 = vmatprep.subr.bf16.mxu0 0
    %4180 = vmatpush1.bf16.msra.mxu0 0
    %4181 = vmatprep.subr.bf16.mxu0 0
    %4182 = vmatpush1.bf16.msra.mxu0 0
    %4183 = vmatprep.subr.bf16.mxu0 0
    %4184 = vmatpush1.bf16.msra.mxu0 0
    %4185 = vmatprep.subr.bf16.mxu0 0
    %4186 = vmatpush1.bf16.msra.mxu0 0
    %4187 = vmatprep.subr.bf16.mxu0 0
    %4188 = vmatpush1.bf16.msra.mxu0 0
    %4189 = vmatprep.subr.bf16.mxu0 0
    %4190 = vmatpush1.bf16.msra.mxu0 0
    %4191 = vmatprep.subr.bf16.mxu0 0
    %4192 = vmatpush1.bf16.msra.mxu0 0
    %4193 = vmatprep.subr.bf16.mxu0 0
    %4194 = vmatpush1.bf16.msra.mxu0 0
    %4195 = vmatprep.subr.bf16.mxu0 0
    %4196 = vmatpush1.bf16.msra.mxu0 0
    %4197 = vmatprep.subr.bf16.mxu0 0
    %4198 = vmatpush1.bf16.msra.mxu0 0
    %4199 = vmatprep.subr.bf16.mxu0 0
    %4200 = vmatpush1.bf16.msra.mxu0 0
    %4201 = vmatprep.subr.bf16.mxu0 0
    %4202 = vmatpush1.bf16.msra.mxu0 0
    %4203 = vmatprep.mubr.bf16.mxu0 0
    %4204 = vmatmul.mubr.bf16.gmra.mrb[0].mxu0 %v2846
    %v4205 = vpop.f32.mrb[0].mxu0
    %v4206 = vadd.f32 %v4145, %v4205
    %v4207 = vpop.f32.mrb[0].mxu0
    %v4208 = vpop.f32.mrb[0].mxu0
    %v4209 = vadd.f32 %v4145, %v4208
    %v4210 = vpop.f32.mrb[0].mxu0
    %4211 = vmatprep.mubr.bf16.mxu0 0
    %4212 = vmatmul.mubr.bf16.gmra.mrb[0].mxu0 %v2849
    %v4213 = vpop.f32.mrb[0].mxu0
    %v4214 = vadd.f32 %v4145, %v4213
    %v4215 = vpop.f32.mrb[0].mxu0
    %v4216 = vpop.f32.mrb[0].mxu0
    %v4217 = vadd.f32 %v4145, %v4216
    %v4218 = vpop.f32.mrb[0].mxu0
    %4219 = vdwg.mxu0
    %v4220 = vpack.c.bf16 %v4029, %v4026
    %v4221 = vpack.c.bf16 %v4037, %v4034
    %v4222 = vpack.c.bf16 %v4119, %v4116
    %v4223 = vpack.c.bf16 %v4127, %v4124
    %v4224 = vpack.c.bf16 %v4209, %v4206
    %v4225 = vpack.c.bf16 %v4217, %v4214
    %v4227 = vsel %vm71, %v4220, 0
    %v4230 = vsel %vm71, %v4222, 0
    %4232 = vmatprep.subr.bf16.mxu0 0
    %4233 = vmatpush1.bf16.xpose.msra.mxu0 %v4230
    %4234 = vmatprep.subr.bf16.mxu0 0
    %4235 = vmatpush1.bf16.xpose.msra.mxu0 0
    %4236 = vmatprep.subr.bf16.mxu0 0
    %4237 = vmatpush1.bf16.xpose.msra.mxu0 0
    %4238 = vmatprep.subr.bf16.mxu0 0
    %4239 = vmatpush1.bf16.xpose.msra.mxu0 0
    %4240 = vmatprep.subr.bf16.mxu0 0
    %4241 = vmatpush1.bf16.xpose.msra.mxu0 0
    %4242 = vmatprep.subr.bf16.mxu0 0
    %4243 = vmatpush1.bf16.xpose.msra.mxu0 0
    %4244 = vmatprep.subr.bf16.mxu0 0
    %4245 = vmatpush1.bf16.xpose.msra.mxu0 0
    %4246 = vmatprep.subr.bf16.mxu0 0
    %4247 = vmatpush1.bf16.xpose.msra.mxu0 0
    %4248 = vmatprep.subr.bf16.mxu0 0
    %4249 = vmatpush1.bf16.xpose.msra.mxu0 0
    %4250 = vmatprep.subr.bf16.mxu0 0
    %4251 = vmatpush1.bf16.xpose.msra.mxu0 0
    %4252 = vmatprep.subr.bf16.mxu0 0
    %4253 = vmatpush1.bf16.xpose.msra.mxu0 0
    %4254 = vmatprep.subr.bf16.mxu0 0
    %4255 = vmatpush1.bf16.xpose.msra.mxu0 0
    %4256 = vmatprep.subr.bf16.mxu0 0
    %4257 = vmatpush1.bf16.xpose.msra.mxu0 0
    %4258 = vmatprep.subr.bf16.mxu0 0
    %4259 = vmatpush1.bf16.xpose.msra.mxu0 0
    %4260 = vmatprep.subr.bf16.mxu0 0
    %4261 = vmatpush1.bf16.xpose.msra.mxu0 0
    %4262 = vmatprep.subr.bf16.mxu0 0
    %4263 = vmatpush1.bf16.xpose.msra.mxu0 0
    %4264 = vmatprep.mubr.bf16.mxu0 0
    %4265 = vmatmul.mubr.bf16.gmra.mrb[0].mxu0 %v4227
    %v4266 = vpop.f32.mrb[0].mxu0
    %v4267 = vadd.f32 0.0, %v4266
    %v4268 = vpop.f32.mrb[0].mxu0
    %v4269 = vpop.f32.mrb[0].mxu0
    %v4270 = vadd.f32 0.0, %v4269
    %v4271 = vpop.f32.mrb[0].mxu0
    %4272 = vdwg.mxu0
    %v4274 = vsel %vm71, %v4221, 0
    %v4277 = vsel %vm71, %v4223, 0
    %4279 = vmatprep.subr.bf16.mxu0 0
    %4280 = vmatpush1.bf16.xpose.msra.mxu0 %v4277
    %4281 = vmatprep.subr.bf16.mxu0 0
    %4282 = vmatpush1.bf16.xpose.msra.mxu0 0
    %4283 = vmatprep.subr.bf16.mxu0 0
    %4284 = vmatpush1.bf16.xpose.msra.mxu0 0
    %4285 = vmatprep.subr.bf16.mxu0 0
    %4286 = vmatpush1.bf16.xpose.msra.mxu0 0
    %4287 = vmatprep.subr.bf16.mxu0 0
    %4288 = vmatpush1.bf16.xpose.msra.mxu0 0
    %4289 = vmatprep.subr.bf16.mxu0 0
    %4290 = vmatpush1.bf16.xpose.msra.mxu0 0
    %4291 = vmatprep.subr.bf16.mxu0 0
    %4292 = vmatpush1.bf16.xpose.msra.mxu0 0
    %4293 = vmatprep.subr.bf16.mxu0 0
    %4294 = vmatpush1.bf16.xpose.msra.mxu0 0
    %4295 = vmatprep.subr.bf16.mxu0 0
    %4296 = vmatpush1.bf16.xpose.msra.mxu0 0
    %4297 = vmatprep.subr.bf16.mxu0 0
    %4298 = vmatpush1.bf16.xpose.msra.mxu0 0
    %4299 = vmatprep.subr.bf16.mxu0 0
    %4300 = vmatpush1.bf16.xpose.msra.mxu0 0
    %4301 = vmatprep.subr.bf16.mxu0 0
    %4302 = vmatpush1.bf16.xpose.msra.mxu0 0
    %4303 = vmatprep.subr.bf16.mxu0 0
    %4304 = vmatpush1.bf16.xpose.msra.mxu0 0
    %4305 = vmatprep.subr.bf16.mxu0 0
    %4306 = vmatpush1.bf16.xpose.msra.mxu0 0
    %4307 = vmatprep.subr.bf16.mxu0 0
    %4308 = vmatpush1.bf16.xpose.msra.mxu0 0
    %4309 = vmatprep.subr.bf16.mxu0 0
    %4310 = vmatpush1.bf16.xpose.msra.mxu0 0
    %4311 = vmatprep.mubr.bf16.mxu0 0
    %4312 = vmatmul.mubr.bf16.gmra.mrb[0].mxu0 %v4274
    %v4313 = vpop.f32.mrb[0].mxu0
    %v4314 = vadd.f32 0.0, %v4313
    %v4315 = vpop.f32.mrb[0].mxu0
    %v4316 = vpop.f32.mrb[0].mxu0
    %v4317 = vadd.f32 0.0, %v4316
    %v4318 = vpop.f32.mrb[0].mxu0
    %4319 = vdwg.mxu0
    %v4320 = vsel %vm71, %v4267, -inf
    %4321 = vmax.xlane.f32.xlu0 %v4320
    %v4322 = vpop.xlane.xlu0 %4321
    %v4323 = vsel %vm71, %v4270, -inf
    %4324 = vmax.xlane.f32.xlu0 %v4323
    %v4325 = vpop.xlane.xlu0 %4324
    %v4326 = vsel %vm71, %v4314, -inf
    %4327 = vmax.xlane.f32.xlu0 %v4326
    %v4328 = vpop.xlane.xlu0 %4327
    %v4329 = vsel %vm71, %v4317, -inf
    %4330 = vmax.xlane.f32.xlu0 %v4329
    %v4331 = vpop.xlane.xlu0 %4330
    %v4332 = vsub.f32 %v4267, %v4322
    %v4333 = vsub.f32 %v4270, %v4325
    %v4334 = vsub.f32 %v4314, %v4328
    %v4335 = vsub.f32 %v4317, %v4331
    %v4336 = vmul.f32 %v4332, 1.442695
    %v4337 = vpow.pop %v4336
    %v4338 = vmul.f32 %v4333, 1.442695
    %v4339 = vpow.pop %v4338
    %v4340 = vmul.f32 %v4334, 1.442695
    %v4341 = vpow.pop %v4340
    %v4342 = vmul.f32 %v4335, 1.442695
    %v4343 = vpow.pop %v4342
    %v4344 = vsel %vm71, %v4337, 0.0
    %4345 = vadd.xlane.f32.xlu0 %v4344
    %v4346 = vpop.xlane.xlu0 %4345
    %v4347 = vsel %vm71, %v4339, 0.0
    %4348 = vadd.xlane.f32.xlu0 %v4347
    %v4349 = vpop.xlane.xlu0 %4348
    %v4350 = vsel %vm71, %v4341, 0.0
    %4351 = vadd.xlane.f32.xlu0 %v4350
    %v4352 = vpop.xlane.xlu0 %4351
    %v4353 = vsel %vm71, %v4343, 0.0
    %4354 = vadd.xlane.f32.xlu0 %v4353
    %v4355 = vpop.xlane.xlu0 %4354
    %v4356 = vrcp.pop %v4346
    %v4357 = vrcp.pop %v4349
    %v4358 = vrcp.pop %v4352
    %v4359 = vrcp.pop %v4355
    %v4360 = vmul.f32 %v4337, %v4356
    %v4361 = vmul.f32 %v4339, %v4357
    %v4362 = vmul.f32 %v4341, %v4358
    %v4363 = vmul.f32 %v4343, %v4359
    %v4364 = vpack.c.bf16 %v4361, %v4360
    %v4365 = vpack.c.bf16 %v4363, %v4362
    %v4367 = vsel %vm71, %v4364, 0
    %4369 = vmatprep.subr.bf16.mxu0 0
    %4370 = vmatpush1.bf16.msra.mxu0 %v4224
    %4371 = vmatprep.subr.bf16.mxu0 0
    %4372 = vmatpush1.bf16.msra.mxu0 0
    %4373 = vmatprep.subr.bf16.mxu0 0
    %4374 = vmatpush1.bf16.msra.mxu0 0
    %4375 = vmatprep.subr.bf16.mxu0 0
    %4376 = vmatpush1.bf16.msra.mxu0 0
    %4377 = vmatprep.subr.bf16.mxu0 0
    %4378 = vmatpush1.bf16.msra.mxu0 0
    %4379 = vmatprep.subr.bf16.mxu0 0
    %4380 = vmatpush1.bf16.msra.mxu0 0
    %4381 = vmatprep.subr.bf16.mxu0 0
    %4382 = vmatpush1.bf16.msra.mxu0 0
    %4383 = vmatprep.subr.bf16.mxu0 0
    %4384 = vmatpush1.bf16.msra.mxu0 0
    %4385 = vmatprep.subr.bf16.mxu0 0
    %4386 = vmatpush1.bf16.msra.mxu0 0
    %4387 = vmatprep.subr.bf16.mxu0 0
    %4388 = vmatpush1.bf16.msra.mxu0 0
    %4389 = vmatprep.subr.bf16.mxu0 0
    %4390 = vmatpush1.bf16.msra.mxu0 0
    %4391 = vmatprep.subr.bf16.mxu0 0
    %4392 = vmatpush1.bf16.msra.mxu0 0
    %4393 = vmatprep.subr.bf16.mxu0 0
    %4394 = vmatpush1.bf16.msra.mxu0 0
    %4395 = vmatprep.subr.bf16.mxu0 0
    %4396 = vmatpush1.bf16.msra.mxu0 0
    %4397 = vmatprep.subr.bf16.mxu0 0
    %4398 = vmatpush1.bf16.msra.mxu0 0
    %4399 = vmatprep.subr.bf16.mxu0 0
    %4400 = vmatpush1.bf16.msra.mxu0 0
    %4401 = vmatprep.mubr.bf16.mxu0 0
    %4402 = vmatmul.mubr.bf16.gmra.mrb[0].mxu0 %v4367
    %v4403 = vpop.f32.mrb[0].mxu0
    %v4404 = vadd.f32 0.0, %v4403
    %v4405 = vpop.f32.mrb[0].mxu0
    %v4406 = vpop.f32.mrb[0].mxu0
    %v4407 = vadd.f32 0.0, %v4406
    %v4408 = vpop.f32.mrb[0].mxu0
    %4409 = vdwg.mxu0
    %v4411 = vsel %vm71, %v4365, 0
    %4413 = vmatprep.subr.bf16.mxu0 0
    %4414 = vmatpush1.bf16.msra.mxu0 %v4225
    %4415 = vmatprep.subr.bf16.mxu0 0
    %4416 = vmatpush1.bf16.msra.mxu0 0
    %4417 = vmatprep.subr.bf16.mxu0 0
    %4418 = vmatpush1.bf16.msra.mxu0 0
    %4419 = vmatprep.subr.bf16.mxu0 0
    %4420 = vmatpush1.bf16.msra.mxu0 0
    %4421 = vmatprep.subr.bf16.mxu0 0
    %4422 = vmatpush1.bf16.msra.mxu0 0
    %4423 = vmatprep.subr.bf16.mxu0 0
    %4424 = vmatpush1.bf16.msra.mxu0 0
    %4425 = vmatprep.subr.bf16.mxu0 0
    %4426 = vmatpush1.bf16.msra.mxu0 0
    %4427 = vmatprep.subr.bf16.mxu0 0
    %4428 = vmatpush1.bf16.msra.mxu0 0
    %4429 = vmatprep.subr.bf16.mxu0 0
    %4430 = vmatpush1.bf16.msra.mxu0 0
    %4431 = vmatprep.subr.bf16.mxu0 0
    %4432 = vmatpush1.bf16.msra.mxu0 0
    %4433 = vmatprep.subr.bf16.mxu0 0
    %4434 = vmatpush1.bf16.msra.mxu0 0
    %4435 = vmatprep.subr.bf16.mxu0 0
    %4436 = vmatpush1.bf16.msra.mxu0 0
    %4437 = vmatprep.subr.bf16.mxu0 0
    %4438 = vmatpush1.bf16.msra.mxu0 0
    %4439 = vmatprep.subr.bf16.mxu0 0
    %4440 = vmatpush1.bf16.msra.mxu0 0
    %4441 = vmatprep.subr.bf16.mxu0 0
    %4442 = vmatpush1.bf16.msra.mxu0 0
    %4443 = vmatprep.subr.bf16.mxu0 0
    %4444 = vmatpush1.bf16.msra.mxu0 0
    %4445 = vmatprep.mubr.bf16.mxu0 0
    %4446 = vmatmul.mubr.bf16.gmra.mrb[0].mxu0 %v4411
    %v4447 = vpop.f32.mrb[0].mxu0
    %v4448 = vadd.f32 0.0, %v4447
    %v4449 = vpop.f32.mrb[0].mxu0
    %v4450 = vpop.f32.mrb[0].mxu0
    %v4451 = vadd.f32 0.0, %v4450
    %v4452 = vpop.f32.mrb[0].mxu0
    %4453 = vdwg.mxu0
    %v4454 = vpack.c.bf16 %v4407, %v4404
    %v4455 = vpack.c.bf16 %v4451, %v4448
    %s4456 = scalar_lea.vmem %s5, 48
    %v4457 = vld [vmem:[%s4456] sm:$0xf]
    %v4458 = vld [vmem:[%s4456 + $0x4] sm:$0xf]
    %v4461 = vunpack.c.l.b16 %v4457
    %v4462 = vunpack.c.l.b16 %v4458
    %v4463 = vpack.c.b16 %v4462, %v4461
    %v4466 = vsel %vm71, %v4454, 0
    %v4469 = vsel %vm71, %v4455, 0
    %4471 = vmatprep.subr.bf16.mxu0 0
    %4472 = vmatpush1.bf16.msra.mxu0 %v4463
    %4473 = vmatprep.subr.bf16.mxu0 0
    %4474 = vmatpush1.bf16.msra.mxu0 0
    %4475 = vmatprep.subr.bf16.mxu0 0
    %4476 = vmatpush1.bf16.msra.mxu0 0
    %4477 = vmatprep.subr.bf16.mxu0 0
    %4478 = vmatpush1.bf16.msra.mxu0 0
    %4479 = vmatprep.subr.bf16.mxu0 0
    %4480 = vmatpush1.bf16.msra.mxu0 0
    %4481 = vmatprep.subr.bf16.mxu0 0
    %4482 = vmatpush1.bf16.msra.mxu0 0
    %4483 = vmatprep.subr.bf16.mxu0 0
    %4484 = vmatpush1.bf16.msra.mxu0 0
    %4485 = vmatprep.subr.bf16.mxu0 0
    %4486 = vmatpush1.bf16.msra.mxu0 0
    %4487 = vmatprep.subr.bf16.mxu0 0
    %4488 = vmatpush1.bf16.msra.mxu0 0
    %4489 = vmatprep.subr.bf16.mxu0 0
    %4490 = vmatpush1.bf16.msra.mxu0 0
    %4491 = vmatprep.subr.bf16.mxu0 0
    %4492 = vmatpush1.bf16.msra.mxu0 0
    %4493 = vmatprep.subr.bf16.mxu0 0
    %4494 = vmatpush1.bf16.msra.mxu0 0
    %4495 = vmatprep.subr.bf16.mxu0 0
    %4496 = vmatpush1.bf16.msra.mxu0 0
    %4497 = vmatprep.subr.bf16.mxu0 0
    %4498 = vmatpush1.bf16.msra.mxu0 0
    %4499 = vmatprep.subr.bf16.mxu0 0
    %4500 = vmatpush1.bf16.msra.mxu0 0
    %4501 = vmatprep.subr.bf16.mxu0 0
    %4502 = vmatpush1.bf16.msra.mxu0 0
    %4503 = vmatprep.mubr.bf16.mxu0 0
    %4504 = vmatmul.mubr.bf16.gmra.mrb[0].mxu0 %v4466
    %v4505 = vpop.f32.mrb[0].mxu0
    %v4506 = vadd.f32 0.0, %v4505
    %v4507 = vpop.f32.mrb[0].mxu0
    %v4508 = vpop.f32.mrb[0].mxu0
    %v4509 = vadd.f32 0.0, %v4508
    %v4510 = vpop.f32.mrb[0].mxu0
    %4511 = vmatprep.mubr.bf16.mxu0 0
    %4512 = vmatmul.mubr.bf16.gmra.mrb[0].mxu0 %v4469
    %v4513 = vpop.f32.mrb[0].mxu0
    %v4514 = vadd.f32 0.0, %v4513
    %v4515 = vpop.f32.mrb[0].mxu0
    %v4516 = vpop.f32.mrb[0].mxu0
    %v4517 = vadd.f32 0.0, %v4516
    %v4518 = vpop.f32.mrb[0].mxu0
    %4519 = vdwg.mxu0
    %v4520 = vadd.f32 %v3936, %v4506
    %v4521 = vadd.f32 %v3939, %v4509
    %v4522 = vadd.f32 %v3944, %v4514
    %v4523 = vadd.f32 %v3947, %v4517
    %s4524 = scalar_lea.vmem %s3, 480
    %v4525 = vld [vmem:[%s4524] sm:$0xf]
    %v4526 = vld [vmem:[%s4524 + $0x4] sm:$0xf]
    %v4527 = vld [vmem:[%s4524 + $0x8] sm:$0xf]
    %v4528 = vld [vmem:[%s4524 + $0xc] sm:$0xf]
    %v4529 = vld [vmem:[%s4524 + $0x10] sm:$0xf]
    %v4530 = vld [vmem:[%s4524 + $0x14] sm:$0xf]
    %v4531 = vld [vmem:[%s4524 + $0x18] sm:$0xf]
    %v4532 = vld [vmem:[%s4524 + $0x1c] sm:$0xf]
    %s4533 = scalar_lea.vmem %s4, 15
    %v4534 = vld [vmem:[%s4533] sm:$0x1]
    %v4536 = vlaneseq
    %v4537 = vshrl.u32 %v4536, 7
    %v4538 = vsub.s32 0, %v4537
    %v4539 = vrot.slane %v4534, %v4538
    %v4549 = vunpack.c.l.b16 %v4525
    %v4550 = vunpack.c.l.b16 %v4526
    %v4551 = vunpack.c.l.b16 %v4527
    %v4552 = vunpack.c.l.b16 %v4528
    %v4553 = vunpack.c.l.b16 %v4529
    %v4554 = vunpack.c.l.b16 %v4530
    %v4555 = vunpack.c.l.b16 %v4531
    %v4556 = vunpack.c.l.b16 %v4532
    %v4557 = vpack.c.b16 %v4550, %v4549
    %v4558 = vpack.c.b16 %v4552, %v4551
    %v4559 = vpack.c.b16 %v4554, %v4553
    %v4560 = vpack.c.b16 %v4556, %v4555
    %4565 = vmatprep.subr.bf16.mxu0 0
    %4566 = vmatpush1.bf16.msra.mxu0 %v4557
    %4567 = vmatprep.subr.bf16.mxu0 0
    %4568 = vmatpush1.bf16.msra.mxu0 %v4558
    %4569 = vmatprep.subr.bf16.mxu0 0
    %4570 = vmatpush1.bf16.msra.mxu0 %v4559
    %4571 = vmatprep.subr.bf16.mxu0 0
    %4572 = vmatpush1.bf16.msra.mxu0 %v4560
    %4573 = vmatprep.subr.bf16.mxu0 0
    %4574 = vmatpush1.bf16.msra.mxu0 0
    %4575 = vmatprep.subr.bf16.mxu0 0
    %4576 = vmatpush1.bf16.msra.mxu0 0
    %4577 = vmatprep.subr.bf16.mxu0 0
    %4578 = vmatpush1.bf16.msra.mxu0 0
    %4579 = vmatprep.subr.bf16.mxu0 0
    %4580 = vmatpush1.bf16.msra.mxu0 0
    %4581 = vmatprep.subr.bf16.mxu0 0
    %4582 = vmatpush1.bf16.msra.mxu0 0
    %4583 = vmatprep.subr.bf16.mxu0 0
    %4584 = vmatpush1.bf16.msra.mxu0 0
    %4585 = vmatprep.subr.bf16.mxu0 0
    %4586 = vmatpush1.bf16.msra.mxu0 0
    %4587 = vmatprep.subr.bf16.mxu0 0
    %4588 = vmatpush1.bf16.msra.mxu0 0
    %4589 = vmatprep.subr.bf16.mxu0 0
    %4590 = vmatpush1.bf16.msra.mxu0 0
    %4591 = vmatprep.subr.bf16.mxu0 0
    %4592 = vmatpush1.bf16.msra.mxu0 0
    %4593 = vmatprep.subr.bf16.mxu0 0
    %4594 = vmatpush1.bf16.msra.mxu0 0
    %4595 = vmatprep.subr.bf16.mxu0 0
    %4596 = vmatpush1.bf16.msra.mxu0 0
    %4597 = vmatprep.mubr.bf16.mxu0 0
    %4598 = vmatmul.mubr.bf16.gmra.mrb[0].mxu0 %v2846
    %v4599 = vpop.f32.mrb[0].mxu0
    %v4600 = vadd.f32 %v4539, %v4599
    %v4601 = vpop.f32.mrb[0].mxu0
    %v4602 = vpop.f32.mrb[0].mxu0
    %v4603 = vadd.f32 %v4539, %v4602
    %v4604 = vpop.f32.mrb[0].mxu0
    %4605 = vmatprep.mubr.bf16.mxu0 0
    %4606 = vmatmul.mubr.bf16.gmra.mrb[0].mxu0 %v2849
    %v4607 = vpop.f32.mrb[0].mxu0
    %v4608 = vadd.f32 %v4539, %v4607
    %v4609 = vpop.f32.mrb[0].mxu0
    %v4610 = vpop.f32.mrb[0].mxu0
    %v4611 = vadd.f32 %v4539, %v4610
    %v4612 = vpop.f32.mrb[0].mxu0
    %4613 = vdwg.mxu0
    %s4614 = scalar_lea.vmem %s3, 608
    %v4615 = vld [vmem:[%s4614] sm:$0xf]
    %v4616 = vld [vmem:[%s4614 + $0x4] sm:$0xf]
    %v4617 = vld [vmem:[%s4614 + $0x8] sm:$0xf]
    %v4618 = vld [vmem:[%s4614 + $0xc] sm:$0xf]
    %v4619 = vld [vmem:[%s4614 + $0x10] sm:$0xf]
    %v4620 = vld [vmem:[%s4614 + $0x14] sm:$0xf]
    %v4621 = vld [vmem:[%s4614 + $0x18] sm:$0xf]
    %v4622 = vld [vmem:[%s4614 + $0x1c] sm:$0xf]
    %s4623 = scalar_lea.vmem %s4, 19
    %v4624 = vld [vmem:[%s4623] sm:$0x1]
    %v4626 = vlaneseq
    %v4627 = vshrl.u32 %v4626, 7
    %v4628 = vsub.s32 0, %v4627
    %v4629 = vrot.slane %v4624, %v4628
    %v4639 = vunpack.c.l.b16 %v4615
    %v4640 = vunpack.c.l.b16 %v4616
    %v4641 = vunpack.c.l.b16 %v4617
    %v4642 = vunpack.c.l.b16 %v4618
    %v4643 = vunpack.c.l.b16 %v4619
    %v4644 = vunpack.c.l.b16 %v4620
    %v4645 = vunpack.c.l.b16 %v4621
    %v4646 = vunpack.c.l.b16 %v4622
    %v4647 = vpack.c.b16 %v4640, %v4639
    %v4648 = vpack.c.b16 %v4642, %v4641
    %v4649 = vpack.c.b16 %v4644, %v4643
    %v4650 = vpack.c.b16 %v4646, %v4645
    %4655 = vmatprep.subr.bf16.mxu0 0
    %4656 = vmatpush1.bf16.msra.mxu0 %v4647
    %4657 = vmatprep.subr.bf16.mxu0 0
    %4658 = vmatpush1.bf16.msra.mxu0 %v4648
    %4659 = vmatprep.subr.bf16.mxu0 0
    %4660 = vmatpush1.bf16.msra.mxu0 %v4649
    %4661 = vmatprep.subr.bf16.mxu0 0
    %4662 = vmatpush1.bf16.msra.mxu0 %v4650
    %4663 = vmatprep.subr.bf16.mxu0 0
    %4664 = vmatpush1.bf16.msra.mxu0 0
    %4665 = vmatprep.subr.bf16.mxu0 0
    %4666 = vmatpush1.bf16.msra.mxu0 0
    %4667 = vmatprep.subr.bf16.mxu0 0
    %4668 = vmatpush1.bf16.msra.mxu0 0
    %4669 = vmatprep.subr.bf16.mxu0 0
    %4670 = vmatpush1.bf16.msra.mxu0 0
    %4671 = vmatprep.subr.bf16.mxu0 0
    %4672 = vmatpush1.bf16.msra.mxu0 0
    %4673 = vmatprep.subr.bf16.mxu0 0
    %4674 = vmatpush1.bf16.msra.mxu0 0
    %4675 = vmatprep.subr.bf16.mxu0 0
    %4676 = vmatpush1.bf16.msra.mxu0 0
    %4677 = vmatprep.subr.bf16.mxu0 0
    %4678 = vmatpush1.bf16.msra.mxu0 0
    %4679 = vmatprep.subr.bf16.mxu0 0
    %4680 = vmatpush1.bf16.msra.mxu0 0
    %4681 = vmatprep.subr.bf16.mxu0 0
    %4682 = vmatpush1.bf16.msra.mxu0 0
    %4683 = vmatprep.subr.bf16.mxu0 0
    %4684 = vmatpush1.bf16.msra.mxu0 0
    %4685 = vmatprep.subr.bf16.mxu0 0
    %4686 = vmatpush1.bf16.msra.mxu0 0
    %4687 = vmatprep.mubr.bf16.mxu0 0
    %4688 = vmatmul.mubr.bf16.gmra.mrb[0].mxu0 %v2846
    %v4689 = vpop.f32.mrb[0].mxu0
    %v4690 = vadd.f32 %v4629, %v4689
    %v4691 = vpop.f32.mrb[0].mxu0
    %v4692 = vpop.f32.mrb[0].mxu0
    %v4693 = vadd.f32 %v4629, %v4692
    %v4694 = vpop.f32.mrb[0].mxu0
    %4695 = vmatprep.mubr.bf16.mxu0 0
    %4696 = vmatmul.mubr.bf16.gmra.mrb[0].mxu0 %v2849
    %v4697 = vpop.f32.mrb[0].mxu0
    %v4698 = vadd.f32 %v4629, %v4697
    %v4699 = vpop.f32.mrb[0].mxu0
    %v4700 = vpop.f32.mrb[0].mxu0
    %v4701 = vadd.f32 %v4629, %v4700
    %v4702 = vpop.f32.mrb[0].mxu0
    %4703 = vdwg.mxu0
    %s4704 = scalar_lea.vmem %s3, 736
    %v4705 = vld [vmem:[%s4704] sm:$0xf]
    %v4706 = vld [vmem:[%s4704 + $0x4] sm:$0xf]
    %v4707 = vld [vmem:[%s4704 + $0x8] sm:$0xf]
    %v4708 = vld [vmem:[%s4704 + $0xc] sm:$0xf]
    %v4709 = vld [vmem:[%s4704 + $0x10] sm:$0xf]
    %v4710 = vld [vmem:[%s4704 + $0x14] sm:$0xf]
    %v4711 = vld [vmem:[%s4704 + $0x18] sm:$0xf]
    %v4712 = vld [vmem:[%s4704 + $0x1c] sm:$0xf]
    %s4713 = scalar_lea.vmem %s4, 23
    %v4714 = vld [vmem:[%s4713] sm:$0x1]
    %v4716 = vlaneseq
    %v4717 = vshrl.u32 %v4716, 7
    %v4718 = vsub.s32 0, %v4717
    %v4719 = vrot.slane %v4714, %v4718
    %v4729 = vunpack.c.l.b16 %v4705
    %v4730 = vunpack.c.l.b16 %v4706
    %v4731 = vunpack.c.l.b16 %v4707
    %v4732 = vunpack.c.l.b16 %v4708
    %v4733 = vunpack.c.l.b16 %v4709
    %v4734 = vunpack.c.l.b16 %v4710
    %v4735 = vunpack.c.l.b16 %v4711
    %v4736 = vunpack.c.l.b16 %v4712
    %v4737 = vpack.c.b16 %v4730, %v4729
    %v4738 = vpack.c.b16 %v4732, %v4731
    %v4739 = vpack.c.b16 %v4734, %v4733
    %v4740 = vpack.c.b16 %v4736, %v4735
    %4745 = vmatprep.subr.bf16.mxu0 0
    %4746 = vmatpush1.bf16.msra.mxu0 %v4737
    %4747 = vmatprep.subr.bf16.mxu0 0
    %4748 = vmatpush1.bf16.msra.mxu0 %v4738
    %4749 = vmatprep.subr.bf16.mxu0 0
    %4750 = vmatpush1.bf16.msra.mxu0 %v4739
    %4751 = vmatprep.subr.bf16.mxu0 0
    %4752 = vmatpush1.bf16.msra.mxu0 %v4740
    %4753 = vmatprep.subr.bf16.mxu0 0
    %4754 = vmatpush1.bf16.msra.mxu0 0
    %4755 = vmatprep.subr.bf16.mxu0 0
    %4756 = vmatpush1.bf16.msra.mxu0 0
    %4757 = vmatprep.subr.bf16.mxu0 0
    %4758 = vmatpush1.bf16.msra.mxu0 0
    %4759 = vmatprep.subr.bf16.mxu0 0
    %4760 = vmatpush1.bf16.msra.mxu0 0
    %4761 = vmatprep.subr.bf16.mxu0 0
    %4762 = vmatpush1.bf16.msra.mxu0 0
    %4763 = vmatprep.subr.bf16.mxu0 0
    %4764 = vmatpush1.bf16.msra.mxu0 0
    %4765 = vmatprep.subr.bf16.mxu0 0
    %4766 = vmatpush1.bf16.msra.mxu0 0
    %4767 = vmatprep.subr.bf16.mxu0 0
    %4768 = vmatpush1.bf16.msra.mxu0 0
    %4769 = vmatprep.subr.bf16.mxu0 0
    %4770 = vmatpush1.bf16.msra.mxu0 0
    %4771 = vmatprep.subr.bf16.mxu0 0
    %4772 = vmatpush1.bf16.msra.mxu0 0
    %4773 = vmatprep.subr.bf16.mxu0 0
    %4774 = vmatpush1.bf16.msra.mxu0 0
    %4775 = vmatprep.subr.bf16.mxu0 0
    %4776 = vmatpush1.bf16.msra.mxu0 0
    %4777 = vmatprep.mubr.bf16.mxu0 0
    %4778 = vmatmul.mubr.bf16.gmra.mrb[0].mxu0 %v2846
    %v4779 = vpop.f32.mrb[0].mxu0
    %v4780 = vadd.f32 %v4719, %v4779
    %v4781 = vpop.f32.mrb[0].mxu0
    %v4782 = vpop.f32.mrb[0].mxu0
    %v4783 = vadd.f32 %v4719, %v4782
    %v4784 = vpop.f32.mrb[0].mxu0
    %4785 = vmatprep.mubr.bf16.mxu0 0
    %4786 = vmatmul.mubr.bf16.gmra.mrb[0].mxu0 %v2849
    %v4787 = vpop.f32.mrb[0].mxu0
    %v4788 = vadd.f32 %v4719, %v4787
    %v4789 = vpop.f32.mrb[0].mxu0
    %v4790 = vpop.f32.mrb[0].mxu0
    %v4791 = vadd.f32 %v4719, %v4790
    %v4792 = vpop.f32.mrb[0].mxu0
    %4793 = vdwg.mxu0
    %v4794 = vpack.c.bf16 %v4603, %v4600
    %v4795 = vpack.c.bf16 %v4611, %v4608
    %v4796 = vpack.c.bf16 %v4693, %v4690
    %v4797 = vpack.c.bf16 %v4701, %v4698
    %v4798 = vpack.c.bf16 %v4783, %v4780
    %v4799 = vpack.c.bf16 %v4791, %v4788
    %v4801 = vsel %vm71, %v4794, 0
    %v4804 = vsel %vm71, %v4796, 0
    %4806 = vmatprep.subr.bf16.mxu0 0
    %4807 = vmatpush1.bf16.xpose.msra.mxu0 %v4804
    %4808 = vmatprep.subr.bf16.mxu0 0
    %4809 = vmatpush1.bf16.xpose.msra.mxu0 0
    %4810 = vmatprep.subr.bf16.mxu0 0
    %4811 = vmatpush1.bf16.xpose.msra.mxu0 0
    %4812 = vmatprep.subr.bf16.mxu0 0
    %4813 = vmatpush1.bf16.xpose.msra.mxu0 0
    %4814 = vmatprep.subr.bf16.mxu0 0
    %4815 = vmatpush1.bf16.xpose.msra.mxu0 0
    %4816 = vmatprep.subr.bf16.mxu0 0
    %4817 = vmatpush1.bf16.xpose.msra.mxu0 0
    %4818 = vmatprep.subr.bf16.mxu0 0
    %4819 = vmatpush1.bf16.xpose.msra.mxu0 0
    %4820 = vmatprep.subr.bf16.mxu0 0
    %4821 = vmatpush1.bf16.xpose.msra.mxu0 0
    %4822 = vmatprep.subr.bf16.mxu0 0
    %4823 = vmatpush1.bf16.xpose.msra.mxu0 0
    %4824 = vmatprep.subr.bf16.mxu0 0
    %4825 = vmatpush1.bf16.xpose.msra.mxu0 0
    %4826 = vmatprep.subr.bf16.mxu0 0
    %4827 = vmatpush1.bf16.xpose.msra.mxu0 0
    %4828 = vmatprep.subr.bf16.mxu0 0
    %4829 = vmatpush1.bf16.xpose.msra.mxu0 0
    %4830 = vmatprep.subr.bf16.mxu0 0
    %4831 = vmatpush1.bf16.xpose.msra.mxu0 0
    %4832 = vmatprep.subr.bf16.mxu0 0
    %4833 = vmatpush1.bf16.xpose.msra.mxu0 0
    %4834 = vmatprep.subr.bf16.mxu0 0
    %4835 = vmatpush1.bf16.xpose.msra.mxu0 0
    %4836 = vmatprep.subr.bf16.mxu0 0
    %4837 = vmatpush1.bf16.xpose.msra.mxu0 0
    %4838 = vmatprep.mubr.bf16.mxu0 0
    %4839 = vmatmul.mubr.bf16.gmra.mrb[0].mxu0 %v4801
    %v4840 = vpop.f32.mrb[0].mxu0
    %v4841 = vadd.f32 0.0, %v4840
    %v4842 = vpop.f32.mrb[0].mxu0
    %v4843 = vpop.f32.mrb[0].mxu0
    %v4844 = vadd.f32 0.0, %v4843
    %v4845 = vpop.f32.mrb[0].mxu0
    %4846 = vdwg.mxu0
    %v4848 = vsel %vm71, %v4795, 0
    %v4851 = vsel %vm71, %v4797, 0
    %4853 = vmatprep.subr.bf16.mxu0 0
    %4854 = vmatpush1.bf16.xpose.msra.mxu0 %v4851
    %4855 = vmatprep.subr.bf16.mxu0 0
    %4856 = vmatpush1.bf16.xpose.msra.mxu0 0
    %4857 = vmatprep.subr.bf16.mxu0 0
    %4858 = vmatpush1.bf16.xpose.msra.mxu0 0
    %4859 = vmatprep.subr.bf16.mxu0 0
    %4860 = vmatpush1.bf16.xpose.msra.mxu0 0
    %4861 = vmatprep.subr.bf16.mxu0 0
    %4862 = vmatpush1.bf16.xpose.msra.mxu0 0
    %4863 = vmatprep.subr.bf16.mxu0 0
    %4864 = vmatpush1.bf16.xpose.msra.mxu0 0
    %4865 = vmatprep.subr.bf16.mxu0 0
    %4866 = vmatpush1.bf16.xpose.msra.mxu0 0
    %4867 = vmatprep.subr.bf16.mxu0 0
    %4868 = vmatpush1.bf16.xpose.msra.mxu0 0
    %4869 = vmatprep.subr.bf16.mxu0 0
    %4870 = vmatpush1.bf16.xpose.msra.mxu0 0
    %4871 = vmatprep.subr.bf16.mxu0 0
    %4872 = vmatpush1.bf16.xpose.msra.mxu0 0
    %4873 = vmatprep.subr.bf16.mxu0 0
    %4874 = vmatpush1.bf16.xpose.msra.mxu0 0
    %4875 = vmatprep.subr.bf16.mxu0 0
    %4876 = vmatpush1.bf16.xpose.msra.mxu0 0
    %4877 = vmatprep.subr.bf16.mxu0 0
    %4878 = vmatpush1.bf16.xpose.msra.mxu0 0
    %4879 = vmatprep.subr.bf16.mxu0 0
    %4880 = vmatpush1.bf16.xpose.msra.mxu0 0
    %4881 = vmatprep.subr.bf16.mxu0 0
    %4882 = vmatpush1.bf16.xpose.msra.mxu0 0
    %4883 = vmatprep.subr.bf16.mxu0 0
    %4884 = vmatpush1.bf16.xpose.msra.mxu0 0
    %4885 = vmatprep.mubr.bf16.mxu0 0
    %4886 = vmatmul.mubr.bf16.gmra.mrb[0].mxu0 %v4848
    %v4887 = vpop.f32.mrb[0].mxu0
    %v4888 = vadd.f32 0.0, %v4887
    %v4889 = vpop.f32.mrb[0].mxu0
    %v4890 = vpop.f32.mrb[0].mxu0
    %v4891 = vadd.f32 0.0, %v4890
    %v4892 = vpop.f32.mrb[0].mxu0
    %4893 = vdwg.mxu0
    %v4894 = vsel %vm71, %v4841, -inf
    %4895 = vmax.xlane.f32.xlu0 %v4894
    %v4896 = vpop.xlane.xlu0 %4895
    %v4897 = vsel %vm71, %v4844, -inf
    %4898 = vmax.xlane.f32.xlu0 %v4897
    %v4899 = vpop.xlane.xlu0 %4898
    %v4900 = vsel %vm71, %v4888, -inf
    %4901 = vmax.xlane.f32.xlu0 %v4900
    %v4902 = vpop.xlane.xlu0 %4901
    %v4903 = vsel %vm71, %v4891, -inf
    %4904 = vmax.xlane.f32.xlu0 %v4903
    %v4905 = vpop.xlane.xlu0 %4904
    %v4906 = vsub.f32 %v4841, %v4896
    %v4907 = vsub.f32 %v4844, %v4899
    %v4908 = vsub.f32 %v4888, %v4902
    %v4909 = vsub.f32 %v4891, %v4905
    %v4910 = vmul.f32 %v4906, 1.442695
    %v4911 = vpow.pop %v4910
    %v4912 = vmul.f32 %v4907, 1.442695
    %v4913 = vpow.pop %v4912
    %v4914 = vmul.f32 %v4908, 1.442695
    %v4915 = vpow.pop %v4914
    %v4916 = vmul.f32 %v4909, 1.442695
    %v4917 = vpow.pop %v4916
    %v4918 = vsel %vm71, %v4911, 0.0
    %4919 = vadd.xlane.f32.xlu0 %v4918
    %v4920 = vpop.xlane.xlu0 %4919
    %v4921 = vsel %vm71, %v4913, 0.0
    %4922 = vadd.xlane.f32.xlu0 %v4921
    %v4923 = vpop.xlane.xlu0 %4922
    %v4924 = vsel %vm71, %v4915, 0.0
    %4925 = vadd.xlane.f32.xlu0 %v4924
    %v4926 = vpop.xlane.xlu0 %4925
    %v4927 = vsel %vm71, %v4917, 0.0
    %4928 = vadd.xlane.f32.xlu0 %v4927
    %v4929 = vpop.xlane.xlu0 %4928
    %v4930 = vrcp.pop %v4920
    %v4931 = vrcp.pop %v4923
    %v4932 = vrcp.pop %v4926
    %v4933 = vrcp.pop %v4929
    %v4934 = vmul.f32 %v4911, %v4930
    %v4935 = vmul.f32 %v4913, %v4931
    %v4936 = vmul.f32 %v4915, %v4932
    %v4937 = vmul.f32 %v4917, %v4933
    %v4938 = vpack.c.bf16 %v4935, %v4934
    %v4939 = vpack.c.bf16 %v4937, %v4936
    %v4941 = vsel %vm71, %v4938, 0
    %4943 = vmatprep.subr.bf16.mxu0 0
    %4944 = vmatpush1.bf16.msra.mxu0 %v4798
    %4945 = vmatprep.subr.bf16.mxu0 0
    %4946 = vmatpush1.bf16.msra.mxu0 0
    %4947 = vmatprep.subr.bf16.mxu0 0
    %4948 = vmatpush1.bf16.msra.mxu0 0
    %4949 = vmatprep.subr.bf16.mxu0 0
    %4950 = vmatpush1.bf16.msra.mxu0 0
    %4951 = vmatprep.subr.bf16.mxu0 0
    %4952 = vmatpush1.bf16.msra.mxu0 0
    %4953 = vmatprep.subr.bf16.mxu0 0
    %4954 = vmatpush1.bf16.msra.mxu0 0
    %4955 = vmatprep.subr.bf16.mxu0 0
    %4956 = vmatpush1.bf16.msra.mxu0 0
    %4957 = vmatprep.subr.bf16.mxu0 0
    %4958 = vmatpush1.bf16.msra.mxu0 0
    %4959 = vmatprep.subr.bf16.mxu0 0
    %4960 = vmatpush1.bf16.msra.mxu0 0
    %4961 = vmatprep.subr.bf16.mxu0 0
    %4962 = vmatpush1.bf16.msra.mxu0 0
    %4963 = vmatprep.subr.bf16.mxu0 0
    %4964 = vmatpush1.bf16.msra.mxu0 0
    %4965 = vmatprep.subr.bf16.mxu0 0
    %4966 = vmatpush1.bf16.msra.mxu0 0
    %4967 = vmatprep.subr.bf16.mxu0 0
    %4968 = vmatpush1.bf16.msra.mxu0 0
    %4969 = vmatprep.subr.bf16.mxu0 0
    %4970 = vmatpush1.bf16.msra.mxu0 0
    %4971 = vmatprep.subr.bf16.mxu0 0
    %4972 = vmatpush1.bf16.msra.mxu0 0
    %4973 = vmatprep.subr.bf16.mxu0 0
    %4974 = vmatpush1.bf16.msra.mxu0 0
    %4975 = vmatprep.mubr.bf16.mxu0 0
    %4976 = vmatmul.mubr.bf16.gmra.mrb[0].mxu0 %v4941
    %v4977 = vpop.f32.mrb[0].mxu0
    %v4978 = vadd.f32 0.0, %v4977
    %v4979 = vpop.f32.mrb[0].mxu0
    %v4980 = vpop.f32.mrb[0].mxu0
    %v4981 = vadd.f32 0.0, %v4980
    %v4982 = vpop.f32.mrb[0].mxu0
    %4983 = vdwg.mxu0
    %v4985 = vsel %vm71, %v4939, 0
    %4987 = vmatprep.subr.bf16.mxu0 0
    %4988 = vmatpush1.bf16.msra.mxu0 %v4799
    %4989 = vmatprep.subr.bf16.mxu0 0
    %4990 = vmatpush1.bf16.msra.mxu0 0
    %4991 = vmatprep.subr.bf16.mxu0 0
    %4992 = vmatpush1.bf16.msra.mxu0 0
    %4993 = vmatprep.subr.bf16.mxu0 0
    %4994 = vmatpush1.bf16.msra.mxu0 0
    %4995 = vmatprep.subr.bf16.mxu0 0
    %4996 = vmatpush1.bf16.msra.mxu0 0
    %4997 = vmatprep.subr.bf16.mxu0 0
    %4998 = vmatpush1.bf16.msra.mxu0 0
    %4999 = vmatprep.subr.bf16.mxu0 0
    %5000 = vmatpush1.bf16.msra.mxu0 0
    %5001 = vmatprep.subr.bf16.mxu0 0
    %5002 = vmatpush1.bf16.msra.mxu0 0
    %5003 = vmatprep.subr.bf16.mxu0 0
    %5004 = vmatpush1.bf16.msra.mxu0 0
    %5005 = vmatprep.subr.bf16.mxu0 0
    %5006 = vmatpush1.bf16.msra.mxu0 0
    %5007 = vmatprep.subr.bf16.mxu0 0
    %5008 = vmatpush1.bf16.msra.mxu0 0
    %5009 = vmatprep.subr.bf16.mxu0 0
    %5010 = vmatpush1.bf16.msra.mxu0 0
    %5011 = vmatprep.subr.bf16.mxu0 0
    %5012 = vmatpush1.bf16.msra.mxu0 0
    %5013 = vmatprep.subr.bf16.mxu0 0
    %5014 = vmatpush1.bf16.msra.mxu0 0
    %5015 = vmatprep.subr.bf16.mxu0 0
    %5016 = vmatpush1.bf16.msra.mxu0 0
    %5017 = vmatprep.subr.bf16.mxu0 0
    %5018 = vmatpush1.bf16.msra.mxu0 0
    %5019 = vmatprep.mubr.bf16.mxu0 0
    %5020 = vmatmul.mubr.bf16.gmra.mrb[0].mxu0 %v4985
    %v5021 = vpop.f32.mrb[0].mxu0
    %v5022 = vadd.f32 0.0, %v5021
    %v5023 = vpop.f32.mrb[0].mxu0
    %v5024 = vpop.f32.mrb[0].mxu0
    %v5025 = vadd.f32 0.0, %v5024
    %v5026 = vpop.f32.mrb[0].mxu0
    %5027 = vdwg.mxu0
    %v5028 = vpack.c.bf16 %v4981, %v4978
    %v5029 = vpack.c.bf16 %v5025, %v5022
    %s5030 = scalar_lea.vmem %s5, 56
    %v5031 = vld [vmem:[%s5030] sm:$0xf]
    %v5032 = vld [vmem:[%s5030 + $0x4] sm:$0xf]
    %v5035 = vunpack.c.l.b16 %v5031
    %v5036 = vunpack.c.l.b16 %v5032
    %v5037 = vpack.c.b16 %v5036, %v5035
    %v5040 = vsel %vm71, %v5028, 0
    %v5043 = vsel %vm71, %v5029, 0
    %5045 = vmatprep.subr.bf16.mxu0 0
    %5046 = vmatpush1.bf16.msra.mxu0 %v5037
    %5047 = vmatprep.subr.bf16.mxu0 0
    %5048 = vmatpush1.bf16.msra.mxu0 0
    %5049 = vmatprep.subr.bf16.mxu0 0
    %5050 = vmatpush1.bf16.msra.mxu0 0
    %5051 = vmatprep.subr.bf16.mxu0 0
    %5052 = vmatpush1.bf16.msra.mxu0 0
    %5053 = vmatprep.subr.bf16.mxu0 0
    %5054 = vmatpush1.bf16.msra.mxu0 0
    %5055 = vmatprep.subr.bf16.mxu0 0
    %5056 = vmatpush1.bf16.msra.mxu0 0
    %5057 = vmatprep.subr.bf16.mxu0 0
    %5058 = vmatpush1.bf16.msra.mxu0 0
    %5059 = vmatprep.subr.bf16.mxu0 0
    %5060 = vmatpush1.bf16.msra.mxu0 0
    %5061 = vmatprep.subr.bf16.mxu0 0
    %5062 = vmatpush1.bf16.msra.mxu0 0
    %5063 = vmatprep.subr.bf16.mxu0 0
    %5064 = vmatpush1.bf16.msra.mxu0 0
    %5065 = vmatprep.subr.bf16.mxu0 0
    %5066 = vmatpush1.bf16.msra.mxu0 0
    %5067 = vmatprep.subr.bf16.mxu0 0
    %5068 = vmatpush1.bf16.msra.mxu0 0
    %5069 = vmatprep.subr.bf16.mxu0 0
    %5070 = vmatpush1.bf16.msra.mxu0 0
    %5071 = vmatprep.subr.bf16.mxu0 0
    %5072 = vmatpush1.bf16.msra.mxu0 0
    %5073 = vmatprep.subr.bf16.mxu0 0
    %5074 = vmatpush1.bf16.msra.mxu0 0
    %5075 = vmatprep.subr.bf16.mxu0 0
    %5076 = vmatpush1.bf16.msra.mxu0 0
    %5077 = vmatprep.mubr.bf16.mxu0 0
    %5078 = vmatmul.mubr.bf16.gmra.mrb[0].mxu0 %v5040
    %v5079 = vpop.f32.mrb[0].mxu0
    %v5080 = vadd.f32 0.0, %v5079
    %v5081 = vpop.f32.mrb[0].mxu0
    %v5082 = vpop.f32.mrb[0].mxu0
    %v5083 = vadd.f32 0.0, %v5082
    %v5084 = vpop.f32.mrb[0].mxu0
    %5085 = vmatprep.mubr.bf16.mxu0 0
    %5086 = vmatmul.mubr.bf16.gmra.mrb[0].mxu0 %v5043
    %v5087 = vpop.f32.mrb[0].mxu0
    %v5088 = vadd.f32 0.0, %v5087
    %v5089 = vpop.f32.mrb[0].mxu0
    %v5090 = vpop.f32.mrb[0].mxu0
    %v5091 = vadd.f32 0.0, %v5090
    %v5092 = vpop.f32.mrb[0].mxu0
    %5093 = vdwg.mxu0
    %v5094 = vadd.f32 %v4520, %v5080
    %v5095 = vadd.f32 %v4521, %v5083
    %v5096 = vadd.f32 %v4522, %v5088
    %v5097 = vadd.f32 %v4523, %v5091
    %v5098 = vlaneseq
    %v5099 = vshrl.u32 %v5098, 7
    %v5100 = vsub.s32 0, %v5099
    %v5101 = vrot.slane %v2801, %v5100
    %v5102 = vadd.f32 %v5094, %v5101
    %v5103 = vadd.f32 %v5095, %v5101
    %v5104 = vadd.f32 %v5096, %v5101
    %v5105 = vadd.f32 %v5097, %v5101
    %v5106 = vadd.f32 %v2796, %v5102
    %v5107 = vadd.f32 %v2797, %v5103
    %v5108 = vadd.f32 %v2798, %v5104
    %v5109 = vadd.f32 %v2799, %v5105
    %v5110 = vsel %vm175, %v5106, 0.0
    %5111 = vadd.xlane.f32.xlu0 %v5110
    %v5112 = vpop.xlane.xlu0 %5111
    %v5113 = vsel %vm175, %v5107, 0.0
    %5114 = vadd.xlane.f32.xlu0 %v5113
    %v5115 = vpop.xlane.xlu0 %5114
    %v5116 = vsel %vm175, %v5108, 0.0
    %5117 = vadd.xlane.f32.xlu0 %v5116
    %v5118 = vpop.xlane.xlu0 %5117
    %v5119 = vsel %vm175, %v5109, 0.0
    %5120 = vadd.xlane.f32.xlu0 %v5119
    %v5121 = vpop.xlane.xlu0 %5120
    %v5122 = vmul.f32 %v5112, %v2452
    %v5123 = vmul.f32 %v5115, %v2452
    %v5124 = vmul.f32 %v5118, %v2452
    %v5125 = vmul.f32 %v5121, %v2452
    %v5126 = vsub.f32 %v5106, %v5122
    %v5127 = vsub.f32 %v5107, %v5123
    %v5128 = vsub.f32 %v5108, %v5124
    %v5129 = vsub.f32 %v5109, %v5125
    %v5130 = vmul.f32 %v5126, %v5126
    %v5131 = vmul.f32 %v5127, %v5127
    %v5132 = vmul.f32 %v5128, %v5128
    %v5133 = vmul.f32 %v5129, %v5129
    %v5134 = vsel %vm175, %v5130, 0.0
    %5135 = vadd.xlane.f32.xlu0 %v5134
    %v5136 = vpop.xlane.xlu0 %5135
    %v5137 = vsel %vm175, %v5131, 0.0
    %5138 = vadd.xlane.f32.xlu0 %v5137
    %v5139 = vpop.xlane.xlu0 %5138
    %v5140 = vsel %vm175, %v5132, 0.0
    %5141 = vadd.xlane.f32.xlu0 %v5140
    %v5142 = vpop.xlane.xlu0 %5141
    %v5143 = vsel %vm175, %v5133, 0.0
    %5144 = vadd.xlane.f32.xlu0 %v5143
    %v5145 = vpop.xlane.xlu0 %5144
    %v5146 = vmul.f32 %v5136, %v2452
    %v5147 = vmul.f32 %v5139, %v2452
    %v5148 = vmul.f32 %v5142, %v2452
    %v5149 = vmul.f32 %v5145, %v2452
    %v5150 = vadd.f32 %v5146, 1e-05
    %v5151 = vadd.f32 %v5147, 1e-05
    %v5152 = vadd.f32 %v5148, 1e-05
    %v5153 = vadd.f32 %v5149, 1e-05
    %v5154 = vrsqrt.pop %v5150
    %v5155 = vrsqrt.pop %v5151
    %v5156 = vrsqrt.pop %v5152
    %v5157 = vrsqrt.pop %v5153
    %v5158 = vmul.f32 %v5126, %v5154
    %v5159 = vmul.f32 %v5127, %v5155
    %v5160 = vmul.f32 %v5128, %v5156
    %v5161 = vmul.f32 %v5129, %v5157
    %v5162 = vlaneseq
    %v5163 = vshrl.u32 %v5162, 7
    %v5164 = vsub.s32 1, %v5163
    %v5165 = vrot.slane %v2801, %v5164
    %v5166 = vmul.f32 %v5158, %v5165
    %v5167 = vmul.f32 %v5159, %v5165
    %v5168 = vmul.f32 %v5160, %v5165
    %v5169 = vmul.f32 %v5161, %v5165
    %v5170 = vlaneseq
    %v5171 = vshrl.u32 %v5170, 7
    %v5172 = vsub.s32 2, %v5171
    %v5173 = vrot.slane %v2801, %v5172
    %v5174 = vadd.f32 %v5166, %v5173
    %v5175 = vadd.f32 %v5167, %v5173
    %v5176 = vadd.f32 %v5168, %v5173
    %v5177 = vadd.f32 %v5169, %v5173
    %v5178 = vpack.c.bf16 %v5175, %v5174
    %v5179 = vpack.c.bf16 %v5177, %v5176
    %s5180 = scalar_lea.vmem %s6, 32
    %v5181 = vld [vmem:[%s5180] sm:$0xf]
    %v5182 = vld [vmem:[%s5180 + $0x4] sm:$0xf]
    %v5183 = vld [vmem:[%s5180 + $0x8] sm:$0xf]
    %v5184 = vld [vmem:[%s5180 + $0xc] sm:$0xf]
    %v5185 = vld [vmem:[%s5180 + $0x10] sm:$0xf]
    %v5186 = vld [vmem:[%s5180 + $0x14] sm:$0xf]
    %v5187 = vld [vmem:[%s5180 + $0x18] sm:$0xf]
    %v5188 = vld [vmem:[%s5180 + $0x1c] sm:$0xf]
    %s5189 = scalar_lea.vmem %s7, 1
    %v5190 = vld [vmem:[%s5189] sm:$0x1]
    %v5192 = vlaneseq
    %v5193 = vshrl.u32 %v5192, 7
    %v5194 = vsub.s32 0, %v5193
    %v5195 = vrot.slane %v5190, %v5194
    %v5205 = vunpack.c.l.b16 %v5181
    %v5206 = vunpack.c.l.b16 %v5182
    %v5207 = vunpack.c.l.b16 %v5183
    %v5208 = vunpack.c.l.b16 %v5184
    %v5209 = vunpack.c.l.b16 %v5185
    %v5210 = vunpack.c.l.b16 %v5186
    %v5211 = vunpack.c.l.b16 %v5187
    %v5212 = vunpack.c.l.b16 %v5188
    %v5213 = vpack.c.b16 %v5206, %v5205
    %v5214 = vpack.c.b16 %v5208, %v5207
    %v5215 = vpack.c.b16 %v5210, %v5209
    %v5216 = vpack.c.b16 %v5212, %v5211
    %v5222 = vsel %vm175, %v5178, 0
    %v5225 = vsel %vm175, %v5179, 0
    %5227 = vmatprep.subr.bf16.mxu0 0
    %5228 = vmatpush1.bf16.msra.mxu0 %v5213
    %5229 = vmatprep.subr.bf16.mxu0 0
    %5230 = vmatpush1.bf16.msra.mxu0 %v5214
    %5231 = vmatprep.subr.bf16.mxu0 0
    %5232 = vmatpush1.bf16.msra.mxu0 %v5215
    %5233 = vmatprep.subr.bf16.mxu0 0
    %5234 = vmatpush1.bf16.msra.mxu0 %v5216
    %5235 = vmatprep.subr.bf16.mxu0 0
    %5236 = vmatpush1.bf16.msra.mxu0 0
    %5237 = vmatprep.subr.bf16.mxu0 0
    %5238 = vmatpush1.bf16.msra.mxu0 0
    %5239 = vmatprep.subr.bf16.mxu0 0
    %5240 = vmatpush1.bf16.msra.mxu0 0
    %5241 = vmatprep.subr.bf16.mxu0 0
    %5242 = vmatpush1.bf16.msra.mxu0 0
    %5243 = vmatprep.subr.bf16.mxu0 0
    %5244 = vmatpush1.bf16.msra.mxu0 0
    %5245 = vmatprep.subr.bf16.mxu0 0
    %5246 = vmatpush1.bf16.msra.mxu0 0
    %5247 = vmatprep.subr.bf16.mxu0 0
    %5248 = vmatpush1.bf16.msra.mxu0 0
    %5249 = vmatprep.subr.bf16.mxu0 0
    %5250 = vmatpush1.bf16.msra.mxu0 0
    %5251 = vmatprep.subr.bf16.mxu0 0
    %5252 = vmatpush1.bf16.msra.mxu0 0
    %5253 = vmatprep.subr.bf16.mxu0 0
    %5254 = vmatpush1.bf16.msra.mxu0 0
    %5255 = vmatprep.subr.bf16.mxu0 0
    %5256 = vmatpush1.bf16.msra.mxu0 0
    %5257 = vmatprep.subr.bf16.mxu0 0
    %5258 = vmatpush1.bf16.msra.mxu0 0
    %5259 = vmatprep.mubr.bf16.mxu0 0
    %5260 = vmatmul.mubr.bf16.gmra.mrb[0].mxu0 %v5222
    %v5261 = vpop.f32.mrb[0].mxu0
    %v5262 = vadd.f32 %v5195, %v5261
    %v5263 = vpop.f32.mrb[0].mxu0
    %v5264 = vpop.f32.mrb[0].mxu0
    %v5265 = vadd.f32 %v5195, %v5264
    %v5266 = vpop.f32.mrb[0].mxu0
    %5267 = vmatprep.mubr.bf16.mxu0 0
    %5268 = vmatmul.mubr.bf16.gmra.mrb[0].mxu0 %v5225
    %v5269 = vpop.f32.mrb[0].mxu0
    %v5270 = vadd.f32 %v5195, %v5269
    %v5271 = vpop.f32.mrb[0].mxu0
    %v5272 = vpop.f32.mrb[0].mxu0
    %v5273 = vadd.f32 %v5195, %v5272
    %v5274 = vpop.f32.mrb[0].mxu0
    %5275 = vdwg.mxu0
    %v5276 = vmax.f32 %v5262, 0.0
    %v5277 = vmax.f32 %v5265, 0.0
    %v5278 = vmax.f32 %v5270, 0.0
    %v5279 = vmax.f32 %v5273, 0.0
    %v5280 = vpack.c.bf16 %v5277, %v5276
    %v5281 = vpack.c.bf16 %v5279, %v5278
    %s5282 = scalar_lea.vmem %s8, 64
    %v5283 = vld [vmem:[%s5282] sm:$0xf]
    %v5284 = vld [vmem:[%s5282 + $0x4] sm:$0xf]
    %v5285 = vld [vmem:[%s5282 + $0x8] sm:$0xf]
    %v5286 = vld [vmem:[%s5282 + $0xc] sm:$0xf]
    %v5287 = vld [vmem:[%s5282 + $0x10] sm:$0xf]
    %v5288 = vld [vmem:[%s5282 + $0x14] sm:$0xf]
    %v5289 = vld [vmem:[%s5282 + $0x18] sm:$0xf]
    %v5290 = vld [vmem:[%s5282 + $0x1c] sm:$0xf]
    %v5291 = vld [vmem:[%s5282 + $0x20] sm:$0xf]
    %v5292 = vld [vmem:[%s5282 + $0x24] sm:$0xf]
    %v5293 = vld [vmem:[%s5282 + $0x28] sm:$0xf]
    %v5294 = vld [vmem:[%s5282 + $0x2c] sm:$0xf]
    %v5295 = vld [vmem:[%s5282 + $0x30] sm:$0xf]
    %v5296 = vld [vmem:[%s5282 + $0x34] sm:$0xf]
    %v5297 = vld [vmem:[%s5282 + $0x38] sm:$0xf]
    %v5298 = vld [vmem:[%s5282 + $0x3c] sm:$0xf]
    %v5299 = vlaneseq
    %v5300 = vshrl.u32 %v5299, 7
    %v5301 = vsub.s32 3, %v5300
    %v5302 = vrot.slane %v2801, %v5301
    %v5319 = vunpack.c.l.b16 %v5283
    %v5320 = vunpack.c.l.b16 %v5284
    %v5321 = vunpack.c.l.b16 %v5285
    %v5322 = vunpack.c.l.b16 %v5286
    %v5323 = vunpack.c.l.b16 %v5287
    %v5324 = vunpack.c.l.b16 %v5288
    %v5325 = vunpack.c.l.b16 %v5289
    %v5326 = vunpack.c.l.b16 %v5290
    %v5327 = vunpack.c.l.b16 %v5291
    %v5328 = vunpack.c.l.b16 %v5292
    %v5329 = vunpack.c.l.b16 %v5293
    %v5330 = vunpack.c.l.b16 %v5294
    %v5331 = vunpack.c.l.b16 %v5295
    %v5332 = vunpack.c.l.b16 %v5296
    %v5333 = vunpack.c.l.b16 %v5297
    %v5334 = vunpack.c.l.b16 %v5298
    %v5335 = vpack.c.b16 %v5320, %v5319
    %v5336 = vpack.c.b16 %v5322, %v5321
    %v5337 = vpack.c.b16 %v5324, %v5323
    %v5338 = vpack.c.b16 %v5326, %v5325
    %v5339 = vpack.c.b16 %v5328, %v5327
    %v5340 = vpack.c.b16 %v5330, %v5329
    %v5341 = vpack.c.b16 %v5332, %v5331
    %v5342 = vpack.c.b16 %v5334, %v5333
    %5351 = vmatprep.subr.bf16.mxu0 0
    %5352 = vmatpush1.bf16.msra.mxu0 %v5335
    %5353 = vmatprep.subr.bf16.mxu0 0
    %5354 = vmatpush1.bf16.msra.mxu0 %v5336
    %5355 = vmatprep.subr.bf16.mxu0 0
    %5356 = vmatpush1.bf16.msra.mxu0 %v5337
    %5357 = vmatprep.subr.bf16.mxu0 0
    %5358 = vmatpush1.bf16.msra.mxu0 %v5338
    %5359 = vmatprep.subr.bf16.mxu0 0
    %5360 = vmatpush1.bf16.msra.mxu0 %v5339
    %5361 = vmatprep.subr.bf16.mxu0 0
    %5362 = vmatpush1.bf16.msra.mxu0 %v5340
    %5363 = vmatprep.subr.bf16.mxu0 0
    %5364 = vmatpush1.bf16.msra.mxu0 %v5341
    %5365 = vmatprep.subr.bf16.mxu0 0
    %5366 = vmatpush1.bf16.msra.mxu0 %v5342
    %5367 = vmatprep.subr.bf16.mxu0 0
    %5368 = vmatpush1.bf16.msra.mxu0 0
    %5369 = vmatprep.subr.bf16.mxu0 0
    %5370 = vmatpush1.bf16.msra.mxu0 0
    %5371 = vmatprep.subr.bf16.mxu0 0
    %5372 = vmatpush1.bf16.msra.mxu0 0
    %5373 = vmatprep.subr.bf16.mxu0 0
    %5374 = vmatpush1.bf16.msra.mxu0 0
    %5375 = vmatprep.subr.bf16.mxu0 0
    %5376 = vmatpush1.bf16.msra.mxu0 0
    %5377 = vmatprep.subr.bf16.mxu0 0
    %5378 = vmatpush1.bf16.msra.mxu0 0
    %5379 = vmatprep.subr.bf16.mxu0 0
    %5380 = vmatpush1.bf16.msra.mxu0 0
    %5381 = vmatprep.subr.bf16.mxu0 0
    %5382 = vmatpush1.bf16.msra.mxu0 0
    %5383 = vmatprep.mubr.bf16.mxu0 0
    %5384 = vmatmul.mubr.bf16.gmra.mrb[0].mxu0 %v5280
    %v5385 = vpop.f32.mrb[0].mxu0
    %v5386 = vadd.f32 %v5302, %v5385
    %v5387 = vpop.f32.mrb[0].mxu0
    %v5388 = vpop.f32.mrb[0].mxu0
    %v5389 = vadd.f32 %v5302, %v5388
    %v5390 = vpop.f32.mrb[0].mxu0
    %5391 = vmatprep.mubr.bf16.mxu0 0
    %5392 = vmatmul.mubr.bf16.gmra.mrb[0].mxu0 %v5281
    %v5393 = vpop.f32.mrb[0].mxu0
    %v5394 = vadd.f32 %v5302, %v5393
    %v5395 = vpop.f32.mrb[0].mxu0
    %v5396 = vpop.f32.mrb[0].mxu0
    %v5397 = vadd.f32 %v5302, %v5396
    %v5398 = vpop.f32.mrb[0].mxu0
    %5399 = vdwg.mxu0
    %v5400 = vadd.f32 %v5174, %v5386
    %v5401 = vadd.f32 %v5175, %v5389
    %v5402 = vadd.f32 %v5176, %v5394
    %v5403 = vadd.f32 %v5177, %v5397
    %v5404 = vsel %vm175, %v5400, 0.0
    %5405 = vadd.xlane.f32.xlu0 %v5404
    %v5406 = vpop.xlane.xlu0 %5405
    %v5407 = vsel %vm175, %v5401, 0.0
    %5408 = vadd.xlane.f32.xlu0 %v5407
    %v5409 = vpop.xlane.xlu0 %5408
    %v5410 = vsel %vm175, %v5402, 0.0
    %5411 = vadd.xlane.f32.xlu0 %v5410
    %v5412 = vpop.xlane.xlu0 %5411
    %v5413 = vsel %vm175, %v5403, 0.0
    %5414 = vadd.xlane.f32.xlu0 %v5413
    %v5415 = vpop.xlane.xlu0 %5414
    %v5416 = vmul.f32 %v5406, %v2452
    %v5417 = vmul.f32 %v5409, %v2452
    %v5418 = vmul.f32 %v5412, %v2452
    %v5419 = vmul.f32 %v5415, %v2452
    %v5420 = vsub.f32 %v5400, %v5416
    %v5421 = vsub.f32 %v5401, %v5417
    %v5422 = vsub.f32 %v5402, %v5418
    %v5423 = vsub.f32 %v5403, %v5419
    %v5424 = vmul.f32 %v5420, %v5420
    %v5425 = vmul.f32 %v5421, %v5421
    %v5426 = vmul.f32 %v5422, %v5422
    %v5427 = vmul.f32 %v5423, %v5423
    %v5428 = vsel %vm175, %v5424, 0.0
    %5429 = vadd.xlane.f32.xlu0 %v5428
    %v5430 = vpop.xlane.xlu0 %5429
    %v5431 = vsel %vm175, %v5425, 0.0
    %5432 = vadd.xlane.f32.xlu0 %v5431
    %v5433 = vpop.xlane.xlu0 %5432
    %v5434 = vsel %vm175, %v5426, 0.0
    %5435 = vadd.xlane.f32.xlu0 %v5434
    %v5436 = vpop.xlane.xlu0 %5435
    %v5437 = vsel %vm175, %v5427, 0.0
    %5438 = vadd.xlane.f32.xlu0 %v5437
    %v5439 = vpop.xlane.xlu0 %5438
    %v5440 = vmul.f32 %v5430, %v2452
    %v5441 = vmul.f32 %v5433, %v2452
    %v5442 = vmul.f32 %v5436, %v2452
    %v5443 = vmul.f32 %v5439, %v2452
    %v5444 = vadd.f32 %v5440, 1e-05
    %v5445 = vadd.f32 %v5441, 1e-05
    %v5446 = vadd.f32 %v5442, 1e-05
    %v5447 = vadd.f32 %v5443, 1e-05
    %v5448 = vrsqrt.pop %v5444
    %v5449 = vrsqrt.pop %v5445
    %v5450 = vrsqrt.pop %v5446
    %v5451 = vrsqrt.pop %v5447
    %v5452 = vmul.f32 %v5420, %v5448
    %v5453 = vmul.f32 %v5421, %v5449
    %v5454 = vmul.f32 %v5422, %v5450
    %v5455 = vmul.f32 %v5423, %v5451
    %v5456 = vlaneseq
    %v5457 = vshrl.u32 %v5456, 7
    %v5458 = vsub.s32 4, %v5457
    %v5459 = vrot.slane %v2801, %v5458
    %v5460 = vmul.f32 %v5452, %v5459
    %v5461 = vmul.f32 %v5453, %v5459
    %v5462 = vmul.f32 %v5454, %v5459
    %v5463 = vmul.f32 %v5455, %v5459
    %v5464 = vlaneseq
    %v5465 = vshrl.u32 %v5464, 7
    %v5466 = vsub.s32 5, %v5465
    %v5467 = vrot.slane %v2801, %v5466
    %v5468 = vadd.f32 %v5460, %v5467
    %v5469 = vadd.f32 %v5461, %v5467
    %v5470 = vadd.f32 %v5462, %v5467
    %v5471 = vadd.f32 %v5463, %v5467
    %v5472 = vld [vmem:[%s10] sm:$0x1]
    %v5473 = vld [vmem:[%s11] sm:$0x1]
    %v5474 = vsel %vm175, %v5468, 0.0
    %5475 = vadd.xlane.f32.xlu0 %v5474
    %v5476 = vpop.xlane.xlu0 %5475
    %v5477 = vsel %vm175, %v5469, 0.0
    %5478 = vadd.xlane.f32.xlu0 %v5477
    %v5479 = vpop.xlane.xlu0 %5478
    %v5480 = vsel %vm175, %v5470, 0.0
    %5481 = vadd.xlane.f32.xlu0 %v5480
    %v5482 = vpop.xlane.xlu0 %5481
    %v5483 = vsel %vm175, %v5471, 0.0
    %5484 = vadd.xlane.f32.xlu0 %v5483
    %v5485 = vpop.xlane.xlu0 %5484
    %v5486 = vmul.f32 %v5476, %v2452
    %v5487 = vmul.f32 %v5479, %v2452
    %v5488 = vmul.f32 %v5482, %v2452
    %v5489 = vmul.f32 %v5485, %v2452
    %v5490 = vsub.f32 %v5468, %v5486
    %v5491 = vsub.f32 %v5469, %v5487
    %v5492 = vsub.f32 %v5470, %v5488
    %v5493 = vsub.f32 %v5471, %v5489
    %v5494 = vmul.f32 %v5490, %v5490
    %v5495 = vmul.f32 %v5491, %v5491
    %v5496 = vmul.f32 %v5492, %v5492
    %v5497 = vmul.f32 %v5493, %v5493
    %v5498 = vsel %vm175, %v5494, 0.0
    %5499 = vadd.xlane.f32.xlu0 %v5498
    %v5500 = vpop.xlane.xlu0 %5499
    %v5501 = vsel %vm175, %v5495, 0.0
    %5502 = vadd.xlane.f32.xlu0 %v5501
    %v5503 = vpop.xlane.xlu0 %5502
    %v5504 = vsel %vm175, %v5496, 0.0
    %5505 = vadd.xlane.f32.xlu0 %v5504
    %v5506 = vpop.xlane.xlu0 %5505
    %v5507 = vsel %vm175, %v5497, 0.0
    %5508 = vadd.xlane.f32.xlu0 %v5507
    %v5509 = vpop.xlane.xlu0 %5508
    %v5510 = vmul.f32 %v5500, %v2452
    %v5511 = vmul.f32 %v5503, %v2452
    %v5512 = vmul.f32 %v5506, %v2452
    %v5513 = vmul.f32 %v5509, %v2452
    %v5514 = vadd.f32 %v5510, 1e-05
    %v5515 = vadd.f32 %v5511, 1e-05
    %v5516 = vadd.f32 %v5512, 1e-05
    %v5517 = vadd.f32 %v5513, 1e-05
    %v5518 = vrsqrt.pop %v5514
    %v5519 = vrsqrt.pop %v5515
    %v5520 = vrsqrt.pop %v5516
    %v5521 = vrsqrt.pop %v5517
    %v5522 = vmul.f32 %v5490, %v5518
    %v5523 = vmul.f32 %v5491, %v5519
    %v5524 = vmul.f32 %v5492, %v5520
    %v5525 = vmul.f32 %v5493, %v5521
    %v5527 = vlaneseq
    %v5528 = vshrl.u32 %v5527, 7
    %v5529 = vsub.s32 0, %v5528
    %v5530 = vrot.slane %v5472, %v5529
    %v5532 = vmul.f32 %v5522, %v5530
    %v5533 = vmul.f32 %v5523, %v5530
    %v5534 = vmul.f32 %v5524, %v5530
    %v5535 = vmul.f32 %v5525, %v5530
    %v5537 = vlaneseq
    %v5538 = vshrl.u32 %v5537, 7
    %v5539 = vsub.s32 0, %v5538
    %v5540 = vrot.slane %v5473, %v5539
    %v5542 = vadd.f32 %v5532, %v5540
    %v5543 = vadd.f32 %v5533, %v5540
    %v5544 = vadd.f32 %v5534, %v5540
    %v5545 = vadd.f32 %v5535, %v5540
    %v5546 = vpack.c.bf16 %v5543, %v5542
    %v5547 = vpack.c.bf16 %v5545, %v5544
    %v5548 = vld [vmem:[%s12] sm:$0xf]
    %v5549 = vld [vmem:[%s12 + $0x4] sm:$0xf]
    %v5550 = vld [vmem:[%s12 + $0x8] sm:$0xf]
    %v5551 = vld [vmem:[%s12 + $0xc] sm:$0xf]
    %v5552 = vld [vmem:[%s12 + $0x10] sm:$0xf]
    %v5553 = vld [vmem:[%s12 + $0x14] sm:$0xf]
    %v5554 = vld [vmem:[%s12 + $0x18] sm:$0xf]
    %v5555 = vld [vmem:[%s12 + $0x1c] sm:$0xf]
    %v5556 = vld [vmem:[%s13] sm:$0x1]
    %v5558 = vlaneseq
    %v5559 = vshrl.u32 %v5558, 7
    %v5560 = vsub.s32 0, %v5559
    %v5561 = vrot.slane %v5556, %v5560
    %v5571 = vunpack.c.l.b16 %v5548
    %v5572 = vunpack.c.l.b16 %v5549
    %v5573 = vunpack.c.l.b16 %v5550
    %v5574 = vunpack.c.l.b16 %v5551
    %v5575 = vunpack.c.l.b16 %v5552
    %v5576 = vunpack.c.l.b16 %v5553
    %v5577 = vunpack.c.l.b16 %v5554
    %v5578 = vunpack.c.l.b16 %v5555
    %v5579 = vpack.c.b16 %v5572, %v5571
    %v5580 = vpack.c.b16 %v5574, %v5573
    %v5581 = vpack.c.b16 %v5576, %v5575
    %v5582 = vpack.c.b16 %v5578, %v5577
    %v5588 = vsel %vm175, %v5546, 0
    %v5591 = vsel %vm175, %v5547, 0
    %5593 = vmatprep.subr.bf16.mxu0 0
    %5594 = vmatpush1.bf16.msra.mxu0 %v5579
    %5595 = vmatprep.subr.bf16.mxu0 0
    %5596 = vmatpush1.bf16.msra.mxu0 %v5580
    %5597 = vmatprep.subr.bf16.mxu0 0
    %5598 = vmatpush1.bf16.msra.mxu0 %v5581
    %5599 = vmatprep.subr.bf16.mxu0 0
    %5600 = vmatpush1.bf16.msra.mxu0 %v5582
    %5601 = vmatprep.subr.bf16.mxu0 0
    %5602 = vmatpush1.bf16.msra.mxu0 0
    %5603 = vmatprep.subr.bf16.mxu0 0
    %5604 = vmatpush1.bf16.msra.mxu0 0
    %5605 = vmatprep.subr.bf16.mxu0 0
    %5606 = vmatpush1.bf16.msra.mxu0 0
    %5607 = vmatprep.subr.bf16.mxu0 0
    %5608 = vmatpush1.bf16.msra.mxu0 0
    %5609 = vmatprep.subr.bf16.mxu0 0
    %5610 = vmatpush1.bf16.msra.mxu0 0
    %5611 = vmatprep.subr.bf16.mxu0 0
    %5612 = vmatpush1.bf16.msra.mxu0 0
    %5613 = vmatprep.subr.bf16.mxu0 0
    %5614 = vmatpush1.bf16.msra.mxu0 0
    %5615 = vmatprep.subr.bf16.mxu0 0
    %5616 = vmatpush1.bf16.msra.mxu0 0
    %5617 = vmatprep.subr.bf16.mxu0 0
    %5618 = vmatpush1.bf16.msra.mxu0 0
    %5619 = vmatprep.subr.bf16.mxu0 0
    %5620 = vmatpush1.bf16.msra.mxu0 0
    %5621 = vmatprep.subr.bf16.mxu0 0
    %5622 = vmatpush1.bf16.msra.mxu0 0
    %5623 = vmatprep.subr.bf16.mxu0 0
    %5624 = vmatpush1.bf16.msra.mxu0 0
    %5625 = vmatprep.mubr.bf16.mxu0 0
    %5626 = vmatmul.mubr.bf16.gmra.mrb[0].mxu0 %v5588
    %v5627 = vpop.f32.mrb[0].mxu0
    %v5628 = vadd.f32 %v5561, %v5627
    %v5629 = vpop.f32.mrb[0].mxu0
    %v5630 = vpop.f32.mrb[0].mxu0
    %v5631 = vadd.f32 %v5561, %v5630
    %v5632 = vpop.f32.mrb[0].mxu0
    %5633 = vmatprep.mubr.bf16.mxu0 0
    %5634 = vmatmul.mubr.bf16.gmra.mrb[0].mxu0 %v5591
    %v5635 = vpop.f32.mrb[0].mxu0
    %v5636 = vadd.f32 %v5561, %v5635
    %v5637 = vpop.f32.mrb[0].mxu0
    %v5638 = vpop.f32.mrb[0].mxu0
    %v5639 = vadd.f32 %v5561, %v5638
    %v5640 = vpop.f32.mrb[0].mxu0
    %5641 = vdwg.mxu0
    %vm5642 = vcmask 261120
    %5643 = vst.msk [vmem:[#allocation2] sm:$0xff] %vm5642, %v5628
    %5644 = vst.msk [vmem:[#allocation2 + $0x8] sm:$0xff] %vm5642, %v5631
    %5645 = vst.msk [vmem:[#allocation2 + $0x10] sm:$0xff] %vm5642, %v5636
    %5646 = vst.msk [vmem:[#allocation2 + $0x18] sm:$0xff] %vm5642, %v5639
    // Predicated region
    $region58: #{tpu_custom_call.1} parent=1 // pred_check
      _
    $region59: #{tpu_custom_call.1} parent=1 // pred_check_branch
      %5648 = sbr.rel (0) target = $region61
    $region60: #{tpu_custom_call.1} parent=1 // pred_region
      %s5650 = ssub.s32 512, 512
      %5651 = vsyncadd [#allocation3], %s5650
      %s5652 = sshll.u32 [#allocation2], 4
      %s5653 = int_to_ptr.vmem [resolvable:$true] %s5652
      %5658 = dma.vmem_to_hbm [thread:$0]  %s5653, 512, %s14, [#allocation3], 128, 128, 8
    $region61: #{tpu_custom_call.1} parent=1 // pred_fallthru
      _
    // Predicated region
    $region62: #{tpu_custom_call.1} parent=1 // pred_check
      _
    $region63: #{tpu_custom_call.1} parent=1 // pred_check_branch
      %5660 = sbr.rel (0) target = $region65
    $region64: #{tpu_custom_call.1} parent=1 // pred_region
      %5661 = dma.done [#allocation3], 512
    $region65: #{tpu_custom_call.1} parent=1 // pred_fallthru
      _
    %5662 = vsyncpa [#allocation3], 1

</llo_original>
